<compile_context>
chip_gen: v6e
topology: v6e:2x2x1
jax: 0.10.0
libtpu: 0.0.40
codegen_flags: <defaults>
</compile_context>

<pallas_src>
import functools

import jax
import jax.numpy as jnp
from jax.experimental import pallas as pl
from jax.experimental.pallas import tpu as pltpu

SLOPE = 0.01  # nn.LeakyReLU() default negative_slope


# ------------------------------ Pallas kernel (hot path) ------------------------------

def _gemm_bias_act_kernel(x_ref, w_ref, b_ref, o_ref, *, act):
    """One row-tile of a lane-dense GEMM: (tm, K) @ (K, Cout) + bias, fused activation."""
    acc = jnp.dot(x_ref[...], w_ref[...], preferred_element_type=jnp.float32)
    acc = acc + b_ref[...]
    if act in ("lrelu", "lrelu_tanh"):
        acc = jnp.where(acc > 0, acc, SLOPE * acc)
    if act in ("tanh", "lrelu_tanh"):
        acc = jnp.tanh(acc)
    o_ref[...] = acc.astype(o_ref.dtype)


def _gemm_bias_act(x2d, w2d, b2d, act, *, row_tile=256):
    """y = act(x2d @ w2d + b2d) as one pallas_call, gridded over rows of x2d."""
    M, K = x2d.shape
    Cout = w2d.shape[1]
    tm = row_tile if (M % row_tile == 0) else M
    grid = (M // tm,)
    return pl.pallas_call(
        functools.partial(_gemm_bias_act_kernel, act=act),
        out_shape=jax.ShapeDtypeStruct((M, Cout), jnp.float32),
        grid_spec=pltpu.PrefetchScalarGridSpec(
            num_scalar_prefetch=0,
            grid=grid,
            in_specs=[
                pl.BlockSpec((tm, K), lambda i: (i, 0)),       # activation slab tile
                pl.BlockSpec((K, Cout), lambda i: (0, 0)),     # weights (resident)
                pl.BlockSpec((1, Cout), lambda i: (0, 0)),     # bias (resident)
            ],
            out_specs=pl.BlockSpec((tm, Cout), lambda i: (i, 0)),
        ),
        compiler_params=pltpu.CompilerParams(
            dimension_semantics=("parallel",)),                # lets v7x split rows over 2 TCs
    )(x2d, w2d, b2d)


# ---------------------------------- XLA glue helpers ----------------------------------

def _reflect_im2col(x_nhwc):
    """ReflectionPad2d(1) + 3x3 taps as one lane-dense slab (N*H*W, 9*C)."""
    N, H, W, C = x_nhwc.shape
    xp = jnp.pad(x_nhwc, ((0, 0), (1, 1), (1, 1), (0, 0)), mode="reflect")
    taps = [xp[:, dy:dy + H, dx:dx + W, :] for dy in range(3) for dx in range(3)]
    slab = jnp.concatenate(taps, axis=-1)            # (N, H, W, 9*C), channel-minor
    return slab.reshape(N * H * W, 9 * C)


def conv3x3(x_nhwc, w_hwio, b, act):
    """ReflectionPad2d(1) + Conv2d(3,1,0) + fused activation."""
    N, H, W, C = x_nhwc.shape
    Cout = w_hwio.shape[-1]
    slab = _reflect_im2col(x_nhwc)
    w2d = w_hwio.reshape(9 * C, Cout)                # matches (dy,dx)-outer, channel-inner
    y = _gemm_bias_act(slab, w2d, b, act)
    return y.reshape(N, H, W, Cout)


def conv1x1(x_nhwc, w2d, b):
    N, H, W, C = x_nhwc.shape
    Cout = w2d.shape[1]
    y = _gemm_bias_act(x_nhwc.reshape(N * H * W, C), w2d, b, act="none")
    return y.reshape(N, H, W, Cout)


def local_net(x_nhwc, p, final_tanh=False):
    """LocalNet: [refpad -> conv3x3 -> LeakyReLU] x 2 (optionally tanh fused on the end)."""
    x = conv3x3(x_nhwc, p["w1"], p["b1"], act="lrelu")
    x = conv3x3(x, p["w2"], p["b2"], act="lrelu_tanh" if final_tanh else "lrelu")
    return x


def maxpool2x2(x_nhwc):
    return jax.lax.reduce_window(x_nhwc, -jnp.inf, jax.lax.max,
                                 (1, 2, 2, 1), (1, 2, 2, 1), "VALID")


def upsample2x(x_nhwc):
    x = jnp.repeat(x_nhwc, 2, axis=1)
    return jnp.repeat(x, 2, axis=2)


def _match_pad(x, skip):
    """torch F.pad(x, (1,0,0,1)) style fixup when upsampled x is 1 short of the skip."""
    if x.shape[2] != skip.shape[2] and x.shape[1] != skip.shape[1]:
        x = jnp.pad(x, ((0, 0), (0, 1), (1, 0), (0, 0)))
    elif x.shape[1] != skip.shape[1]:
        x = jnp.pad(x, ((0, 0), (0, 1), (0, 0), (0, 0)))
    elif x.shape[2] != skip.shape[2]:
        x = jnp.pad(x, ((0, 0), (0, 0), (1, 0), (0, 0)))
    return x


# --------------------------------- model forward pass ---------------------------------

def unet_forward(params, curr_nchw, prev_nchw, is_initial):
    # inputs are NCHW, like the PyTorch module
    x = curr_nchw if is_initial else jnp.concatenate((curr_nchw, prev_nchw), axis=1)
    x = jnp.transpose(x, (0, 2, 3, 1)).astype(jnp.float32)   # NCHW -> NHWC

    conv1 = local_net(x, params["down1"])                    # (N,16,16,16)
    x = maxpool2x2(conv1)                                    # (N, 8, 8,16)
    conv2 = local_net(x, params["down2"])                    # (N, 8, 8,32)
    x = maxpool2x2(conv2)                                    # (N, 4, 4,32)
    x = local_net(x, params["down3"])                        # (N, 4, 4,32)

    x = conv1x1(upsample2x(x), params["up1x1_1"]["w"], params["up1x1_1"]["b"])
    x = _match_pad(x, conv2)
    x = jnp.concatenate([x, conv2], axis=-1)                 # (N, 8, 8,64)
    x = local_net(x, params["up2"])                          # (N, 8, 8,32)

    x = conv1x1(upsample2x(x), params["up1x1_2"]["w"], params["up1x1_2"]["b"])
    x = _match_pad(x, conv1)
    x = jnp.concatenate([x, conv1], axis=-1)                 # (N,16,16,48)
    x = local_net(x, params["up1"])                          # (N,16,16,16)

    out = local_net(x, params["last"], final_tanh=True)      # (N,16,16, 3), tanh fused
    return jnp.transpose(out, (0, 3, 1, 2))                  # back to NCHW


# --------------------------------- parameter building ---------------------------------

def init_params(key, *, curr_scale=1):
    """Deterministic synthetic init; shapes follow UNetGeneratorTwoLayers.__init__."""
    is_initial = (curr_scale == 0)
    cin0 = 3 if is_initial else 6

    def localnet_p(k, cin, cout):
        k1, k2, k3, k4 = jax.random.split(k, 4)
        s1 = (2.0 / (9 * cin)) ** 0.5
        s2 = (2.0 / (9 * cout)) ** 0.5
        return {"w1": s1 * jax.random.normal(k1, (3, 3, cin, cout), jnp.float32),
                "b1": 0.01 * jax.random.normal(k2, (1, cout), jnp.float32),
                "w2": s2 * jax.random.normal(k3, (3, 3, cout, cout), jnp.float32),
                "b2": 0.01 * jax.random.normal(k4, (1, cout), jnp.float32)}

    def c1x1_p(k, cin, cout):
        k1, k2 = jax.random.split(k)
        s = (2.0 / cin) ** 0.5
        return {"w": s * jax.random.normal(k1, (cin, cout), jnp.float32),
                "b": 0.01 * jax.random.normal(k2, (1, cout), jnp.float32)}

    ks = jax.random.split(key, 8)
    params = {
        "down1": localnet_p(ks[0], cin0, 16),
        "down2": localnet_p(ks[1], 16, 32),
        "down3": localnet_p(ks[2], 32, 32),
        "up1x1_1": c1x1_p(ks[3], 32, 32),
        "up2": localnet_p(ks[4], 64, 32),
        "up1x1_2": c1x1_p(ks[5], 32, 32),
        "up1": localnet_p(ks[6], 48, 16),
        "last": localnet_p(ks[7], 16, 3),
    }
    return params, is_initial


# ---------------------------------- pure-JAX reference ---------------------------------

def _lrelu(x):
    return jnp.where(x > 0, x, SLOPE * x)


def _ref_conv3x3(x, w, b):
    xp = jnp.pad(x, ((0, 0), (1, 1), (1, 1), (0, 0)), mode="reflect")
    y = jax.lax.conv_general_dilated(
        xp, w, (1, 1), "VALID",
        dimension_numbers=("NHWC", "HWIO", "NHWC"),
        precision=jax.lax.Precision.HIGHEST)
    return y + b.reshape(1, 1, 1, -1)


def reference_forward(params, curr, prev, is_initial):
    x = curr if is_initial else jnp.concatenate((curr, prev), axis=1)
    x = jnp.transpose(x, (0, 2, 3, 1)).astype(jnp.float32)

    def localnet(x, p):
        x = _lrelu(_ref_conv3x3(x, p["w1"], p["b1"]))
        x = _lrelu(_ref_conv3x3(x, p["w2"], p["b2"]))
        return x

    def c1x1(x, p):
        y = jnp.einsum("nhwc,cd->nhwd", x, p["w"],
                       precision=jax.lax.Precision.HIGHEST)
        return y + p["b"].reshape(1, 1, 1, -1)

    conv1 = localnet(x, params["down1"])
    x = maxpool2x2(conv1)
    conv2 = localnet(x, params["down2"])
    x = maxpool2x2(conv2)
    x = localnet(x, params["down3"])
    x = c1x1(upsample2x(x), params["up1x1_1"])
    x = _match_pad(x, conv2)
    x = jnp.concatenate([x, conv2], axis=-1)
    x = localnet(x, params["up2"])
    x = c1x1(upsample2x(x), params["up1x1_2"])
    x = _match_pad(x, conv1)
    x = jnp.concatenate([x, conv1], axis=-1)
    x = localnet(x, params["up1"])
    out = jnp.tanh(localnet(x, params["last"]))
    return jnp.transpose(out, (0, 3, 1, 2))


# ------------------------------------------ main ----------------------------------------

if __name__ == "__main__":
    key = jax.random.PRNGKey(0)
    kp, k1, k2 = jax.random.split(key, 3)

    # opt.curr_scale = 1 -> non-initial scale -> concat(curr, prev) path (6 input channels)
    params, is_initial = init_params(kp, curr_scale=1)

    curr = jax.random.normal(k1, (2, 3, 16, 16), jnp.float32)
    prev = jax.random.normal(k2, (2, 3, 16, 16), jnp.float32)

    fwd = jax.jit(lambda p, c, v: unet_forward(p, c, v, is_initial))
    out = jax.block_until_ready(fwd(params, curr, prev))
    assert out.shape == (2, 3, 16, 16), out.shape

    ref = reference_forward(params, curr, prev, is_initial)
    err = float(jnp.max(jnp.abs(out - ref)))
    assert err < 5e-3, f"mismatch vs JAX reference: {err}"

    print("KERNEL_OK")
</pallas_src>

<mosaic_0001>
module attributes {stable_mosaic.version = 11 : i64} {
  func.func @_gemm_bias_act_kernel(%arg0: i32, %arg1: memref<256x54xf32, #tpu.memory_space<vmem>>, %arg2: memref<54x16xf32, #tpu.memory_space<vmem>>, %arg3: memref<1x16xf32, #tpu.memory_space<vmem>>, %arg4: memref<256x16xf32, #tpu.memory_space<vmem>>) attributes {dimension_semantics = [#tpu.dimension_semantics<parallel>], iteration_bounds = array<i64: 2>, scalar_prefetch = 0 : i64, scratch_operands = 0 : i64, tpu.core_type = #tpu.core_type<tc>, window_params = [{transform_indices = @transform_0, window_bounds = array<i64: 256, 54>}, {pipeline_mode = #tpu.pipeline_mode<synchronous>, transform_indices = @transform_1, window_bounds = array<i64: 54, 16>}, {pipeline_mode = #tpu.pipeline_mode<synchronous>, transform_indices = @transform_2, window_bounds = array<i64: 1, 16>}, {transform_indices = @transform_3, window_bounds = array<i64: 256, 16>}]} {
    %c0 = arith.constant 0 : index
    %c0_0 = arith.constant 0 : index
    %0 = vector.load %arg1[%c0, %c0_0] : memref<256x54xf32, #tpu.memory_space<vmem>>, vector<256x54xf32>
    %c0_1 = arith.constant 0 : index
    %c0_2 = arith.constant 0 : index
    %1 = vector.load %arg2[%c0_1, %c0_2] : memref<54x16xf32, #tpu.memory_space<vmem>>, vector<54x16xf32>
    %cst = arith.constant dense<0.000000e+00> : vector<256x16xf32>
    %2 = tpu.matmul %0, %1, %cst {dimension_numbers = #tpu.dot_dimension_numbers<[1], [0], [0], [1], [0, 0, 1, 1], [], []>} : vector<256x54xf32>, vector<54x16xf32>, vector<256x16xf32> -> vector<256x16xf32>
    %c0_3 = arith.constant 0 : index
    %c0_4 = arith.constant 0 : index
    %3 = vector.load %arg3[%c0_3, %c0_4] : memref<1x16xf32, #tpu.memory_space<vmem>>, vector<1x16xf32>
    %4 = vector.broadcast %3 : vector<1x16xf32> to vector<256x16xf32>
    %5 = arith.addf %2, %4 : vector<256x16xf32>
    %cst_5 = arith.constant 0.000000e+00 : f32
    %6 = vector.broadcast %cst_5 : f32 to vector<256x16xf32>
    %7 = arith.cmpf ogt, %5, %6 : vector<256x16xf32>
    %cst_6 = arith.constant 0.00999999977 : f32
    %8 = vector.broadcast %cst_6 : f32 to vector<256x16xf32>
    %9 = arith.mulf %8, %5 : vector<256x16xf32>
    %10 = arith.select %7, %5, %9 : vector<256x16xi1>, vector<256x16xf32>
    %c0_7 = arith.constant 0 : index
    %c0_8 = arith.constant 0 : index
    %11 = vector.load %arg4[%c0_7, %c0_8] : memref<256x16xf32, #tpu.memory_space<vmem>>, vector<256x16xf32>
    tpu.vector_store %arg4[%c0_7, %c0_8], %10 {strides = array<i32>} : memref<256x16xf32, #tpu.memory_space<vmem>>, vector<256x16xf32>,
    return
  }
  func.func @transform_0(%arg0: i32) -> (i32, i32) {
    %c0_i32 = arith.constant 0 : i32
    %c0_i32_0 = arith.constant 0 : i32
    return %arg0, %c0_i32 : i32, i32
  }
  func.func @transform_1(%arg0: i32) -> (i32, i32) {
    %c0_i32 = arith.constant 0 : i32
    %c0_i32_0 = arith.constant 0 : i32
    %c0_i32_1 = arith.constant 0 : i32
    return %c0_i32, %c0_i32_0 : i32, i32
  }
  func.func @transform_2(%arg0: i32) -> (i32, i32) {
    %c0_i32 = arith.constant 0 : i32
    %c0_i32_0 = arith.constant 0 : i32
    %c0_i32_1 = arith.constant 0 : i32
    return %c0_i32, %c0_i32_0 : i32, i32
  }
  func.func @transform_3(%arg0: i32) -> (i32, i32) {
    %c0_i32 = arith.constant 0 : i32
    %c0_i32_0 = arith.constant 0 : i32
    return %arg0, %c0_i32 : i32, i32
  }
}

module attributes {stable_mosaic.version = 11 : i64} {
  func.func @_gemm_bias_act_kernel(%arg0: i32, %arg1: memref<256x144xf32, #tpu.memory_space<vmem>>, %arg2: memref<144x16xf32, #tpu.memory_space<vmem>>, %arg3: memref<1x16xf32, #tpu.memory_space<vmem>>, %arg4: memref<256x16xf32, #tpu.memory_space<vmem>>) attributes {dimension_semantics = [#tpu.dimension_semantics<parallel>], iteration_bounds = array<i64: 2>, scalar_prefetch = 0 : i64, scratch_operands = 0 : i64, tpu.core_type = #tpu.core_type<tc>, window_params = [{transform_indices = @transform_0, window_bounds = array<i64: 256, 144>}, {pipeline_mode = #tpu.pipeline_mode<synchronous>, transform_indices = @transform_1, window_bounds = array<i64: 144, 16>}, {pipeline_mode = #tpu.pipeline_mode<synchronous>, transform_indices = @transform_2, window_bounds = array<i64: 1, 16>}, {transform_indices = @transform_3, window_bounds = array<i64: 256, 16>}]} {
    %c0 = arith.constant 0 : index
    %c0_0 = arith.constant 0 : index
    %0 = vector.load %arg1[%c0, %c0_0] : memref<256x144xf32, #tpu.memory_space<vmem>>, vector<256x144xf32>
    %c0_1 = arith.constant 0 : index
    %c0_2 = arith.constant 0 : index
    %1 = vector.load %arg2[%c0_1, %c0_2] : memref<144x16xf32, #tpu.memory_space<vmem>>, vector<144x16xf32>
    %cst = arith.constant dense<0.000000e+00> : vector<256x16xf32>
    %2 = tpu.matmul %0, %1, %cst {dimension_numbers = #tpu.dot_dimension_numbers<[1], [0], [0], [1], [0, 0, 1, 1], [], []>} : vector<256x144xf32>, vector<144x16xf32>, vector<256x16xf32> -> vector<256x16xf32>
    %c0_3 = arith.constant 0 : index
    %c0_4 = arith.constant 0 : index
    %3 = vector.load %arg3[%c0_3, %c0_4] : memref<1x16xf32, #tpu.memory_space<vmem>>, vector<1x16xf32>
    %4 = vector.broadcast %3 : vector<1x16xf32> to vector<256x16xf32>
    %5 = arith.addf %2, %4 : vector<256x16xf32>
    %cst_5 = arith.constant 0.000000e+00 : f32
    %6 = vector.broadcast %cst_5 : f32 to vector<256x16xf32>
    %7 = arith.cmpf ogt, %5, %6 : vector<256x16xf32>
    %cst_6 = arith.constant 0.00999999977 : f32
    %8 = vector.broadcast %cst_6 : f32 to vector<256x16xf32>
    %9 = arith.mulf %8, %5 : vector<256x16xf32>
    %10 = arith.select %7, %5, %9 : vector<256x16xi1>, vector<256x16xf32>
    %c0_7 = arith.constant 0 : index
    %c0_8 = arith.constant 0 : index
    %11 = vector.load %arg4[%c0_7, %c0_8] : memref<256x16xf32, #tpu.memory_space<vmem>>, vector<256x16xf32>
    tpu.vector_store %arg4[%c0_7, %c0_8], %10 {strides = array<i32>} : memref<256x16xf32, #tpu.memory_space<vmem>>, vector<256x16xf32>,
    return
  }
  func.func @transform_0(%arg0: i32) -> (i32, i32) {
    %c0_i32 = arith.constant 0 : i32
    %c0_i32_0 = arith.constant 0 : i32
    return %arg0, %c0_i32 : i32, i32
  }
  func.func @transform_1(%arg0: i32) -> (i32, i32) {
    %c0_i32 = arith.constant 0 : i32
    %c0_i32_0 = arith.constant 0 : i32
    %c0_i32_1 = arith.constant 0 : i32
    return %c0_i32, %c0_i32_0 : i32, i32
  }
  func.func @transform_2(%arg0: i32) -> (i32, i32) {
    %c0_i32 = arith.constant 0 : i32
    %c0_i32_0 = arith.constant 0 : i32
    %c0_i32_1 = arith.constant 0 : i32
    return %c0_i32, %c0_i32_0 : i32, i32
  }
  func.func @transform_3(%arg0: i32) -> (i32, i32) {
    %c0_i32 = arith.constant 0 : i32
    %c0_i32_0 = arith.constant 0 : i32
    return %arg0, %c0_i32 : i32, i32
  }
}

module attributes {stable_mosaic.version = 11 : i64} {
  func.func @_gemm_bias_act_kernel(%arg0: i32, %arg1: memref<128x144xf32, #tpu.memory_space<vmem>>, %arg2: memref<144x32xf32, #tpu.memory_space<vmem>>, %arg3: memref<1x32xf32, #tpu.memory_space<vmem>>, %arg4: memref<128x32xf32, #tpu.memory_space<vmem>>) attributes {dimension_semantics = [#tpu.dimension_semantics<parallel>], iteration_bounds = array<i64: 1>, scalar_prefetch = 0 : i64, scratch_operands = 0 : i64, tpu.core_type = #tpu.core_type<tc>, window_params = [{transform_indices = @transform_0, window_bounds = array<i64: 128, 144>}, {pipeline_mode = #tpu.pipeline_mode<synchronous>, transform_indices = @transform_1, window_bounds = array<i64: 144, 32>}, {pipeline_mode = #tpu.pipeline_mode<synchronous>, transform_indices = @transform_2, window_bounds = array<i64: 1, 32>}, {transform_indices = @transform_3, window_bounds = array<i64: 128, 32>}]} {
    %c0 = arith.constant 0 : index
    %c0_0 = arith.constant 0 : index
    %0 = vector.load %arg1[%c0, %c0_0] : memref<128x144xf32, #tpu.memory_space<vmem>>, vector<128x144xf32>
    %c0_1 = arith.constant 0 : index
    %c0_2 = arith.constant 0 : index
    %1 = vector.load %arg2[%c0_1, %c0_2] : memref<144x32xf32, #tpu.memory_space<vmem>>, vector<144x32xf32>
    %cst = arith.constant dense<0.000000e+00> : vector<128x32xf32>
    %2 = tpu.matmul %0, %1, %cst {dimension_numbers = #tpu.dot_dimension_numbers<[1], [0], [0], [1], [0, 0, 1, 1], [], []>} : vector<128x144xf32>, vector<144x32xf32>, vector<128x32xf32> -> vector<128x32xf32>
    %c0_3 = arith.constant 0 : index
    %c0_4 = arith.constant 0 : index
    %3 = vector.load %arg3[%c0_3, %c0_4] : memref<1x32xf32, #tpu.memory_space<vmem>>, vector<1x32xf32>
    %4 = vector.broadcast %3 : vector<1x32xf32> to vector<128x32xf32>
    %5 = arith.addf %2, %4 : vector<128x32xf32>
    %cst_5 = arith.constant 0.000000e+00 : f32
    %6 = vector.broadcast %cst_5 : f32 to vector<128x32xf32>
    %7 = arith.cmpf ogt, %5, %6 : vector<128x32xf32>
    %cst_6 = arith.constant 0.00999999977 : f32
    %8 = vector.broadcast %cst_6 : f32 to vector<128x32xf32>
    %9 = arith.mulf %8, %5 : vector<128x32xf32>
    %10 = arith.select %7, %5, %9 : vector<128x32xi1>, vector<128x32xf32>
    %c0_7 = arith.constant 0 : index
    %c0_8 = arith.constant 0 : index
    %11 = vector.load %arg4[%c0_7, %c0_8] : memref<128x32xf32, #tpu.memory_space<vmem>>, vector<128x32xf32>
    tpu.vector_store %arg4[%c0_7, %c0_8], %10 {strides = array<i32>} : memref<128x32xf32, #tpu.memory_space<vmem>>, vector<128x32xf32>,
    return
  }
  func.func @transform_0(%arg0: i32) -> (i32, i32) {
    %c0_i32 = arith.constant 0 : i32
    %c0_i32_0 = arith.constant 0 : i32
    return %arg0, %c0_i32 : i32, i32
  }
  func.func @transform_1(%arg0: i32) -> (i32, i32) {
    %c0_i32 = arith.constant 0 : i32
    %c0_i32_0 = arith.constant 0 : i32
    %c0_i32_1 = arith.constant 0 : i32
    return %c0_i32, %c0_i32_0 : i32, i32
  }
  func.func @transform_2(%arg0: i32) -> (i32, i32) {
    %c0_i32 = arith.constant 0 : i32
    %c0_i32_0 = arith.constant 0 : i32
    %c0_i32_1 = arith.constant 0 : i32
    return %c0_i32, %c0_i32_0 : i32, i32
  }
  func.func @transform_3(%arg0: i32) -> (i32, i32) {
    %c0_i32 = arith.constant 0 : i32
    %c0_i32_0 = arith.constant 0 : i32
    return %arg0, %c0_i32 : i32, i32
  }
}

module attributes {stable_mosaic.version = 11 : i64} {
  func.func @_gemm_bias_act_kernel(%arg0: i32, %arg1: memref<128x288xf32, #tpu.memory_space<vmem>>, %arg2: memref<288x32xf32, #tpu.memory_space<vmem>>, %arg3: memref<1x32xf32, #tpu.memory_space<vmem>>, %arg4: memref<128x32xf32, #tpu.memory_space<vmem>>) attributes {dimension_semantics = [#tpu.dimension_semantics<parallel>], iteration_bounds = array<i64: 1>, scalar_prefetch = 0 : i64, scratch_operands = 0 : i64, tpu.core_type = #tpu.core_type<tc>, window_params = [{transform_indices = @transform_0, window_bounds = array<i64: 128, 288>}, {pipeline_mode = #tpu.pipeline_mode<synchronous>, transform_indices = @transform_1, window_bounds = array<i64: 288, 32>}, {pipeline_mode = #tpu.pipeline_mode<synchronous>, transform_indices = @transform_2, window_bounds = array<i64: 1, 32>}, {transform_indices = @transform_3, window_bounds = array<i64: 128, 32>}]} {
    %c0 = arith.constant 0 : index
    %c0_0 = arith.constant 0 : index
    %0 = vector.load %arg1[%c0, %c0_0] : memref<128x288xf32, #tpu.memory_space<vmem>>, vector<128x288xf32>
    %c0_1 = arith.constant 0 : index
    %c0_2 = arith.constant 0 : index
    %1 = vector.load %arg2[%c0_1, %c0_2] : memref<288x32xf32, #tpu.memory_space<vmem>>, vector<288x32xf32>
    %cst = arith.constant dense<0.000000e+00> : vector<128x32xf32>
    %2 = tpu.matmul %0, %1, %cst {dimension_numbers = #tpu.dot_dimension_numbers<[1], [0], [0], [1], [0, 0, 1, 1], [], []>} : vector<128x288xf32>, vector<288x32xf32>, vector<128x32xf32> -> vector<128x32xf32>
    %c0_3 = arith.constant 0 : index
    %c0_4 = arith.constant 0 : index
    %3 = vector.load %arg3[%c0_3, %c0_4] : memref<1x32xf32, #tpu.memory_space<vmem>>, vector<1x32xf32>
    %4 = vector.broadcast %3 : vector<1x32xf32> to vector<128x32xf32>
    %5 = arith.addf %2, %4 : vector<128x32xf32>
    %cst_5 = arith.constant 0.000000e+00 : f32
    %6 = vector.broadcast %cst_5 : f32 to vector<128x32xf32>
    %7 = arith.cmpf ogt, %5, %6 : vector<128x32xf32>
    %cst_6 = arith.constant 0.00999999977 : f32
    %8 = vector.broadcast %cst_6 : f32 to vector<128x32xf32>
    %9 = arith.mulf %8, %5 : vector<128x32xf32>
    %10 = arith.select %7, %5, %9 : vector<128x32xi1>, vector<128x32xf32>
    %c0_7 = arith.constant 0 : index
    %c0_8 = arith.constant 0 : index
    %11 = vector.load %arg4[%c0_7, %c0_8] : memref<128x32xf32, #tpu.memory_space<vmem>>, vector<128x32xf32>
    tpu.vector_store %arg4[%c0_7, %c0_8], %10 {strides = array<i32>} : memref<128x32xf32, #tpu.memory_space<vmem>>, vector<128x32xf32>,
    return
  }
  func.func @transform_0(%arg0: i32) -> (i32, i32) {
    %c0_i32 = arith.constant 0 : i32
    %c0_i32_0 = arith.constant 0 : i32
    return %arg0, %c0_i32 : i32, i32
  }
  func.func @transform_1(%arg0: i32) -> (i32, i32) {
    %c0_i32 = arith.constant 0 : i32
    %c0_i32_0 = arith.constant 0 : i32
    %c0_i32_1 = arith.constant 0 : i32
    return %c0_i32, %c0_i32_0 : i32, i32
  }
  func.func @transform_2(%arg0: i32) -> (i32, i32) {
    %c0_i32 = arith.constant 0 : i32
    %c0_i32_0 = arith.constant 0 : i32
    %c0_i32_1 = arith.constant 0 : i32
    return %c0_i32, %c0_i32_0 : i32, i32
  }
  func.func @transform_3(%arg0: i32) -> (i32, i32) {
    %c0_i32 = arith.constant 0 : i32
    %c0_i32_0 = arith.constant 0 : i32
    return %arg0, %c0_i32 : i32, i32
  }
}

module attributes {stable_mosaic.version = 11 : i64} {
  func.func @_gemm_bias_act_kernel(%arg0: i32, %arg1: memref<32x288xf32, #tpu.memory_space<vmem>>, %arg2: memref<288x32xf32, #tpu.memory_space<vmem>>, %arg3: memref<1x32xf32, #tpu.memory_space<vmem>>, %arg4: memref<32x32xf32, #tpu.memory_space<vmem>>) attributes {dimension_semantics = [#tpu.dimension_semantics<parallel>], iteration_bounds = array<i64: 1>, scalar_prefetch = 0 : i64, scratch_operands = 0 : i64, tpu.core_type = #tpu.core_type<tc>, window_params = [{transform_indices = @transform_0, window_bounds = array<i64: 32, 288>}, {pipeline_mode = #tpu.pipeline_mode<synchronous>, transform_indices = @transform_1, window_bounds = array<i64: 288, 32>}, {pipeline_mode = #tpu.pipeline_mode<synchronous>, transform_indices = @transform_2, window_bounds = array<i64: 1, 32>}, {transform_indices = @transform_3, window_bounds = array<i64: 32, 32>}]} {
    %c0 = arith.constant 0 : index
    %c0_0 = arith.constant 0 : index
    %0 = vector.load %arg1[%c0, %c0_0] : memref<32x288xf32, #tpu.memory_space<vmem>>, vector<32x288xf32>
    %c0_1 = arith.constant 0 : index
    %c0_2 = arith.constant 0 : index
    %1 = vector.load %arg2[%c0_1, %c0_2] : memref<288x32xf32, #tpu.memory_space<vmem>>, vector<288x32xf32>
    %cst = arith.constant dense<0.000000e+00> : vector<32x32xf32>
    %2 = tpu.matmul %0, %1, %cst {dimension_numbers = #tpu.dot_dimension_numbers<[1], [0], [0], [1], [0, 0, 1, 1], [], []>} : vector<32x288xf32>, vector<288x32xf32>, vector<32x32xf32> -> vector<32x32xf32>
    %c0_3 = arith.constant 0 : index
    %c0_4 = arith.constant 0 : index
    %3 = vector.load %arg3[%c0_3, %c0_4] : memref<1x32xf32, #tpu.memory_space<vmem>>, vector<1x32xf32>
    %4 = vector.broadcast %3 : vector<1x32xf32> to vector<32x32xf32>
    %5 = arith.addf %2, %4 : vector<32x32xf32>
    %cst_5 = arith.constant 0.000000e+00 : f32
    %6 = vector.broadcast %cst_5 : f32 to vector<32x32xf32>
    %7 = arith.cmpf ogt, %5, %6 : vector<32x32xf32>
    %cst_6 = arith.constant 0.00999999977 : f32
    %8 = vector.broadcast %cst_6 : f32 to vector<32x32xf32>
    %9 = arith.mulf %8, %5 : vector<32x32xf32>
    %10 = arith.select %7, %5, %9 : vector<32x32xi1>, vector<32x32xf32>
    %c0_7 = arith.constant 0 : index
    %c0_8 = arith.constant 0 : index
    %11 = vector.load %arg4[%c0_7, %c0_8] : memref<32x32xf32, #tpu.memory_space<vmem>>, vector<32x32xf32>
    tpu.vector_store %arg4[%c0_7, %c0_8], %10 {strides = array<i32>} : memref<32x32xf32, #tpu.memory_space<vmem>>, vector<32x32xf32>,
    return
  }
  func.func @transform_0(%arg0: i32) -> (i32, i32) {
    %c0_i32 = arith.constant 0 : i32
    %c0_i32_0 = arith.constant 0 : i32
    return %arg0, %c0_i32 : i32, i32
  }
  func.func @transform_1(%arg0: i32) -> (i32, i32) {
    %c0_i32 = arith.constant 0 : i32
    %c0_i32_0 = arith.constant 0 : i32
    %c0_i32_1 = arith.constant 0 : i32
    return %c0_i32, %c0_i32_0 : i32, i32
  }
  func.func @transform_2(%arg0: i32) -> (i32, i32) {
    %c0_i32 = arith.constant 0 : i32
    %c0_i32_0 = arith.constant 0 : i32
    %c0_i32_1 = arith.constant 0 : i32
    return %c0_i32, %c0_i32_0 : i32, i32
  }
  func.func @transform_3(%arg0: i32) -> (i32, i32) {
    %c0_i32 = arith.constant 0 : i32
    %c0_i32_0 = arith.constant 0 : i32
    return %arg0, %c0_i32 : i32, i32
  }
}

module attributes {stable_mosaic.version = 11 : i64} {
  func.func @_gemm_bias_act_kernel(%arg0: i32, %arg1: memref<128x32xf32, #tpu.memory_space<vmem>>, %arg2: memref<32x32xf32, #tpu.memory_space<vmem>>, %arg3: memref<1x32xf32, #tpu.memory_space<vmem>>, %arg4: memref<128x32xf32, #tpu.memory_space<vmem>>) attributes {dimension_semantics = [#tpu.dimension_semantics<parallel>], iteration_bounds = array<i64: 1>, scalar_prefetch = 0 : i64, scratch_operands = 0 : i64, tpu.core_type = #tpu.core_type<tc>, window_params = [{transform_indices = @transform_0, window_bounds = array<i64: 128, 32>}, {pipeline_mode = #tpu.pipeline_mode<synchronous>, transform_indices = @transform_1, window_bounds = array<i64: 32, 32>}, {pipeline_mode = #tpu.pipeline_mode<synchronous>, transform_indices = @transform_2, window_bounds = array<i64: 1, 32>}, {transform_indices = @transform_3, window_bounds = array<i64: 128, 32>}]} {
    %c0 = arith.constant 0 : index
    %c0_0 = arith.constant 0 : index
    %0 = vector.load %arg1[%c0, %c0_0] : memref<128x32xf32, #tpu.memory_space<vmem>>, vector<128x32xf32>
    %c0_1 = arith.constant 0 : index
    %c0_2 = arith.constant 0 : index
    %1 = vector.load %arg2[%c0_1, %c0_2] : memref<32x32xf32, #tpu.memory_space<vmem>>, vector<32x32xf32>
    %cst = arith.constant dense<0.000000e+00> : vector<128x32xf32>
    %2 = tpu.matmul %0, %1, %cst {dimension_numbers = #tpu.dot_dimension_numbers<[1], [0], [0], [1], [0, 0, 1, 1], [], []>} : vector<128x32xf32>, vector<32x32xf32>, vector<128x32xf32> -> vector<128x32xf32>
    %c0_3 = arith.constant 0 : index
    %c0_4 = arith.constant 0 : index
    %3 = vector.load %arg3[%c0_3, %c0_4] : memref<1x32xf32, #tpu.memory_space<vmem>>, vector<1x32xf32>
    %4 = vector.broadcast %3 : vector<1x32xf32> to vector<128x32xf32>
    %5 = arith.addf %2, %4 : vector<128x32xf32>
    %c0_5 = arith.constant 0 : index
    %c0_6 = arith.constant 0 : index
    %6 = vector.load %arg4[%c0_5, %c0_6] : memref<128x32xf32, #tpu.memory_space<vmem>>, vector<128x32xf32>
    tpu.vector_store %arg4[%c0_5, %c0_6], %5 {strides = array<i32>} : memref<128x32xf32, #tpu.memory_space<vmem>>, vector<128x32xf32>,
    return
  }
  func.func @transform_0(%arg0: i32) -> (i32, i32) {
    %c0_i32 = arith.constant 0 : i32
    %c0_i32_0 = arith.constant 0 : i32
    return %arg0, %c0_i32 : i32, i32
  }
  func.func @transform_1(%arg0: i32) -> (i32, i32) {
    %c0_i32 = arith.constant 0 : i32
    %c0_i32_0 = arith.constant 0 : i32
    %c0_i32_1 = arith.constant 0 : i32
    return %c0_i32, %c0_i32_0 : i32, i32
  }
  func.func @transform_2(%arg0: i32) -> (i32, i32) {
    %c0_i32 = arith.constant 0 : i32
    %c0_i32_0 = arith.constant 0 : i32
    %c0_i32_1 = arith.constant 0 : i32
    return %c0_i32, %c0_i32_0 : i32, i32
  }
  func.func @transform_3(%arg0: i32) -> (i32, i32) {
    %c0_i32 = arith.constant 0 : i32
    %c0_i32_0 = arith.constant 0 : i32
    return %arg0, %c0_i32 : i32, i32
  }
}

module attributes {stable_mosaic.version = 11 : i64} {
  func.func @_gemm_bias_act_kernel(%arg0: i32, %arg1: memref<128x576xf32, #tpu.memory_space<vmem>>, %arg2: memref<576x32xf32, #tpu.memory_space<vmem>>, %arg3: memref<1x32xf32, #tpu.memory_space<vmem>>, %arg4: memref<128x32xf32, #tpu.memory_space<vmem>>) attributes {dimension_semantics = [#tpu.dimension_semantics<parallel>], iteration_bounds = array<i64: 1>, scalar_prefetch = 0 : i64, scratch_operands = 0 : i64, tpu.core_type = #tpu.core_type<tc>, window_params = [{transform_indices = @transform_0, window_bounds = array<i64: 128, 576>}, {pipeline_mode = #tpu.pipeline_mode<synchronous>, transform_indices = @transform_1, window_bounds = array<i64: 576, 32>}, {pipeline_mode = #tpu.pipeline_mode<synchronous>, transform_indices = @transform_2, window_bounds = array<i64: 1, 32>}, {transform_indices = @transform_3, window_bounds = array<i64: 128, 32>}]} {
    %c0 = arith.constant 0 : index
    %c0_0 = arith.constant 0 : index
    %0 = vector.load %arg1[%c0, %c0_0] : memref<128x576xf32, #tpu.memory_space<vmem>>, vector<128x576xf32>
    %c0_1 = arith.constant 0 : index
    %c0_2 = arith.constant 0 : index
    %1 = vector.load %arg2[%c0_1, %c0_2] : memref<576x32xf32, #tpu.memory_space<vmem>>, vector<576x32xf32>
    %cst = arith.constant dense<0.000000e+00> : vector<128x32xf32>
    %2 = tpu.matmul %0, %1, %cst {dimension_numbers = #tpu.dot_dimension_numbers<[1], [0], [0], [1], [0, 0, 1, 1], [], []>} : vector<128x576xf32>, vector<576x32xf32>, vector<128x32xf32> -> vector<128x32xf32>
    %c0_3 = arith.constant 0 : index
    %c0_4 = arith.constant 0 : index
    %3 = vector.load %arg3[%c0_3, %c0_4] : memref<1x32xf32, #tpu.memory_space<vmem>>, vector<1x32xf32>
    %4 = vector.broadcast %3 : vector<1x32xf32> to vector<128x32xf32>
    %5 = arith.addf %2, %4 : vector<128x32xf32>
    %cst_5 = arith.constant 0.000000e+00 : f32
    %6 = vector.broadcast %cst_5 : f32 to vector<128x32xf32>
    %7 = arith.cmpf ogt, %5, %6 : vector<128x32xf32>
    %cst_6 = arith.constant 0.00999999977 : f32
    %8 = vector.broadcast %cst_6 : f32 to vector<128x32xf32>
    %9 = arith.mulf %8, %5 : vector<128x32xf32>
    %10 = arith.select %7, %5, %9 : vector<128x32xi1>, vector<128x32xf32>
    %c0_7 = arith.constant 0 : index
    %c0_8 = arith.constant 0 : index
    %11 = vector.load %arg4[%c0_7, %c0_8] : memref<128x32xf32, #tpu.memory_space<vmem>>, vector<128x32xf32>
    tpu.vector_store %arg4[%c0_7, %c0_8], %10 {strides = array<i32>} : memref<128x32xf32, #tpu.memory_space<vmem>>, vector<128x32xf32>,
    return
  }
  func.func @transform_0(%arg0: i32) -> (i32, i32) {
    %c0_i32 = arith.constant 0 : i32
    %c0_i32_0 = arith.constant 0 : i32
    return %arg0, %c0_i32 : i32, i32
  }
  func.func @transform_1(%arg0: i32) -> (i32, i32) {
    %c0_i32 = arith.constant 0 : i32
    %c0_i32_0 = arith.constant 0 : i32
    %c0_i32_1 = arith.constant 0 : i32
    return %c0_i32, %c0_i32_0 : i32, i32
  }
  func.func @transform_2(%arg0: i32) -> (i32, i32) {
    %c0_i32 = arith.constant 0 : i32
    %c0_i32_0 = arith.constant 0 : i32
    %c0_i32_1 = arith.constant 0 : i32
    return %c0_i32, %c0_i32_0 : i32, i32
  }
  func.func @transform_3(%arg0: i32) -> (i32, i32) {
    %c0_i32 = arith.constant 0 : i32
    %c0_i32_0 = arith.constant 0 : i32
    return %arg0, %c0_i32 : i32, i32
  }
}

module attributes {stable_mosaic.version = 11 : i64} {
  func.func @_gemm_bias_act_kernel(%arg0: i32, %arg1: memref<256x32xf32, #tpu.memory_space<vmem>>, %arg2: memref<32x32xf32, #tpu.memory_space<vmem>>, %arg3: memref<1x32xf32, #tpu.memory_space<vmem>>, %arg4: memref<256x32xf32, #tpu.memory_space<vmem>>) attributes {dimension_semantics = [#tpu.dimension_semantics<parallel>], iteration_bounds = array<i64: 2>, scalar_prefetch = 0 : i64, scratch_operands = 0 : i64, tpu.core_type = #tpu.core_type<tc>, window_params = [{transform_indices = @transform_0, window_bounds = array<i64: 256, 32>}, {pipeline_mode = #tpu.pipeline_mode<synchronous>, transform_indices = @transform_1, window_bounds = array<i64: 32, 32>}, {pipeline_mode = #tpu.pipeline_mode<synchronous>, transform_indices = @transform_2, window_bounds = array<i64: 1, 32>}, {transform_indices = @transform_3, window_bounds = array<i64: 256, 32>}]} {
    %c0 = arith.constant 0 : index
    %c0_0 = arith.constant 0 : index
    %0 = vector.load %arg1[%c0, %c0_0] : memref<256x32xf32, #tpu.memory_space<vmem>>, vector<256x32xf32>
    %c0_1 = arith.constant 0 : index
    %c0_2 = arith.constant 0 : index
    %1 = vector.load %arg2[%c0_1, %c0_2] : memref<32x32xf32, #tpu.memory_space<vmem>>, vector<32x32xf32>
    %cst = arith.constant dense<0.000000e+00> : vector<256x32xf32>
    %2 = tpu.matmul %0, %1, %cst {dimension_numbers = #tpu.dot_dimension_numbers<[1], [0], [0], [1], [0, 0, 1, 1], [], []>} : vector<256x32xf32>, vector<32x32xf32>, vector<256x32xf32> -> vector<256x32xf32>
    %c0_3 = arith.constant 0 : index
    %c0_4 = arith.constant 0 : index
    %3 = vector.load %arg3[%c0_3, %c0_4] : memref<1x32xf32, #tpu.memory_space<vmem>>, vector<1x32xf32>
    %4 = vector.broadcast %3 : vector<1x32xf32> to vector<256x32xf32>
    %5 = arith.addf %2, %4 : vector<256x32xf32>
    %c0_5 = arith.constant 0 : index
    %c0_6 = arith.constant 0 : index
    %6 = vector.load %arg4[%c0_5, %c0_6] : memref<256x32xf32, #tpu.memory_space<vmem>>, vector<256x32xf32>
    tpu.vector_store %arg4[%c0_5, %c0_6], %5 {strides = array<i32>} : memref<256x32xf32, #tpu.memory_space<vmem>>, vector<256x32xf32>,
    return
  }
  func.func @transform_0(%arg0: i32) -> (i32, i32) {
    %c0_i32 = arith.constant 0 : i32
    %c0_i32_0 = arith.constant 0 : i32
    return %arg0, %c0_i32 : i32, i32
  }
  func.func @transform_1(%arg0: i32) -> (i32, i32) {
    %c0_i32 = arith.constant 0 : i32
    %c0_i32_0 = arith.constant 0 : i32
    %c0_i32_1 = arith.constant 0 : i32
    return %c0_i32, %c0_i32_0 : i32, i32
  }
  func.func @transform_2(%arg0: i32) -> (i32, i32) {
    %c0_i32 = arith.constant 0 : i32
    %c0_i32_0 = arith.constant 0 : i32
    %c0_i32_1 = arith.constant 0 : i32
    return %c0_i32, %c0_i32_0 : i32, i32
  }
  func.func @transform_3(%arg0: i32) -> (i32, i32) {
    %c0_i32 = arith.constant 0 : i32
    %c0_i32_0 = arith.constant 0 : i32
    return %arg0, %c0_i32 : i32, i32
  }
}

module attributes {stable_mosaic.version = 11 : i64} {
  func.func @_gemm_bias_act_kernel(%arg0: i32, %arg1: memref<256x432xf32, #tpu.memory_space<vmem>>, %arg2: memref<432x16xf32, #tpu.memory_space<vmem>>, %arg3: memref<1x16xf32, #tpu.memory_space<vmem>>, %arg4: memref<256x16xf32, #tpu.memory_space<vmem>>) attributes {dimension_semantics = [#tpu.dimension_semantics<parallel>], iteration_bounds = array<i64: 2>, scalar_prefetch = 0 : i64, scratch_operands = 0 : i64, tpu.core_type = #tpu.core_type<tc>, window_params = [{transform_indices = @transform_0, window_bounds = array<i64: 256, 432>}, {pipeline_mode = #tpu.pipeline_mode<synchronous>, transform_indices = @transform_1, window_bounds = array<i64: 432, 16>}, {pipeline_mode = #tpu.pipeline_mode<synchronous>, transform_indices = @transform_2, window_bounds = array<i64: 1, 16>}, {transform_indices = @transform_3, window_bounds = array<i64: 256, 16>}]} {
    %c0 = arith.constant 0 : index
    %c0_0 = arith.constant 0 : index
    %0 = vector.load %arg1[%c0, %c0_0] : memref<256x432xf32, #tpu.memory_space<vmem>>, vector<256x432xf32>
    %c0_1 = arith.constant 0 : index
    %c0_2 = arith.constant 0 : index
    %1 = vector.load %arg2[%c0_1, %c0_2] : memref<432x16xf32, #tpu.memory_space<vmem>>, vector<432x16xf32>
    %cst = arith.constant dense<0.000000e+00> : vector<256x16xf32>
    %2 = tpu.matmul %0, %1, %cst {dimension_numbers = #tpu.dot_dimension_numbers<[1], [0], [0], [1], [0, 0, 1, 1], [], []>} : vector<256x432xf32>, vector<432x16xf32>, vector<256x16xf32> -> vector<256x16xf32>
    %c0_3 = arith.constant 0 : index
    %c0_4 = arith.constant 0 : index
    %3 = vector.load %arg3[%c0_3, %c0_4] : memref<1x16xf32, #tpu.memory_space<vmem>>, vector<1x16xf32>
    %4 = vector.broadcast %3 : vector<1x16xf32> to vector<256x16xf32>
    %5 = arith.addf %2, %4 : vector<256x16xf32>
    %cst_5 = arith.constant 0.000000e+00 : f32
    %6 = vector.broadcast %cst_5 : f32 to vector<256x16xf32>
    %7 = arith.cmpf ogt, %5, %6 : vector<256x16xf32>
    %cst_6 = arith.constant 0.00999999977 : f32
    %8 = vector.broadcast %cst_6 : f32 to vector<256x16xf32>
    %9 = arith.mulf %8, %5 : vector<256x16xf32>
    %10 = arith.select %7, %5, %9 : vector<256x16xi1>, vector<256x16xf32>
    %c0_7 = arith.constant 0 : index
    %c0_8 = arith.constant 0 : index
    %11 = vector.load %arg4[%c0_7, %c0_8] : memref<256x16xf32, #tpu.memory_space<vmem>>, vector<256x16xf32>
    tpu.vector_store %arg4[%c0_7, %c0_8], %10 {strides = array<i32>} : memref<256x16xf32, #tpu.memory_space<vmem>>, vector<256x16xf32>,
    return
  }
  func.func @transform_0(%arg0: i32) -> (i32, i32) {
    %c0_i32 = arith.constant 0 : i32
    %c0_i32_0 = arith.constant 0 : i32
    return %arg0, %c0_i32 : i32, i32
  }
  func.func @transform_1(%arg0: i32) -> (i32, i32) {
    %c0_i32 = arith.constant 0 : i32
    %c0_i32_0 = arith.constant 0 : i32
    %c0_i32_1 = arith.constant 0 : i32
    return %c0_i32, %c0_i32_0 : i32, i32
  }
  func.func @transform_2(%arg0: i32) -> (i32, i32) {
    %c0_i32 = arith.constant 0 : i32
    %c0_i32_0 = arith.constant 0 : i32
    %c0_i32_1 = arith.constant 0 : i32
    return %c0_i32, %c0_i32_0 : i32, i32
  }
  func.func @transform_3(%arg0: i32) -> (i32, i32) {
    %c0_i32 = arith.constant 0 : i32
    %c0_i32_0 = arith.constant 0 : i32
    return %arg0, %c0_i32 : i32, i32
  }
}

module attributes {stable_mosaic.version = 11 : i64} {
  func.func @_gemm_bias_act_kernel(%arg0: i32, %arg1: memref<256x144xf32, #tpu.memory_space<vmem>>, %arg2: memref<144x3xf32, #tpu.memory_space<vmem>>, %arg3: memref<1x3xf32, #tpu.memory_space<vmem>>, %arg4: memref<256x3xf32, #tpu.memory_space<vmem>>) attributes {dimension_semantics = [#tpu.dimension_semantics<parallel>], iteration_bounds = array<i64: 2>, scalar_prefetch = 0 : i64, scratch_operands = 0 : i64, tpu.core_type = #tpu.core_type<tc>, window_params = [{transform_indices = @transform_0, window_bounds = array<i64: 256, 144>}, {pipeline_mode = #tpu.pipeline_mode<synchronous>, transform_indices = @transform_1, window_bounds = array<i64: 144, 3>}, {pipeline_mode = #tpu.pipeline_mode<synchronous>, transform_indices = @transform_2, window_bounds = array<i64: 1, 3>}, {transform_indices = @transform_3, window_bounds = array<i64: 256, 3>}]} {
    %c0 = arith.constant 0 : index
    %c0_0 = arith.constant 0 : index
    %0 = vector.load %arg1[%c0, %c0_0] : memref<256x144xf32, #tpu.memory_space<vmem>>, vector<256x144xf32>
    %c0_1 = arith.constant 0 : index
    %c0_2 = arith.constant 0 : index
    %1 = vector.load %arg2[%c0_1, %c0_2] : memref<144x3xf32, #tpu.memory_space<vmem>>, vector<144x3xf32>
    %cst = arith.constant dense<0.000000e+00> : vector<256x3xf32>
    %2 = tpu.matmul %0, %1, %cst {dimension_numbers = #tpu.dot_dimension_numbers<[1], [0], [0], [1], [0, 0, 1, 1], [], []>} : vector<256x144xf32>, vector<144x3xf32>, vector<256x3xf32> -> vector<256x3xf32>
    %c0_3 = arith.constant 0 : index
    %c0_4 = arith.constant 0 : index
    %3 = vector.load %arg3[%c0_3, %c0_4] : memref<1x3xf32, #tpu.memory_space<vmem>>, vector<1x3xf32>
    %4 = vector.broadcast %3 : vector<1x3xf32> to vector<256x3xf32>
    %5 = arith.addf %2, %4 : vector<256x3xf32>
    %cst_5 = arith.constant 0.000000e+00 : f32
    %6 = vector.broadcast %cst_5 : f32 to vector<256x3xf32>
    %7 = arith.cmpf ogt, %5, %6 : vector<256x3xf32>
    %cst_6 = arith.constant 0.00999999977 : f32
    %8 = vector.broadcast %cst_6 : f32 to vector<256x3xf32>
    %9 = arith.mulf %8, %5 : vector<256x3xf32>
    %10 = arith.select %7, %5, %9 : vector<256x3xi1>, vector<256x3xf32>
    %c0_7 = arith.constant 0 : index
    %c0_8 = arith.constant 0 : index
    %11 = vector.load %arg4[%c0_7, %c0_8] : memref<256x3xf32, #tpu.memory_space<vmem>>, vector<256x3xf32>
    tpu.vector_store %arg4[%c0_7, %c0_8], %10 {strides = array<i32>} : memref<256x3xf32, #tpu.memory_space<vmem>>, vector<256x3xf32>,
    return
  }
  func.func @transform_0(%arg0: i32) -> (i32, i32) {
    %c0_i32 = arith.constant 0 : i32
    %c0_i32_0 = arith.constant 0 : i32
    return %arg0, %c0_i32 : i32, i32
  }
  func.func @transform_1(%arg0: i32) -> (i32, i32) {
    %c0_i32 = arith.constant 0 : i32
    %c0_i32_0 = arith.constant 0 : i32
    %c0_i32_1 = arith.constant 0 : i32
    return %c0_i32, %c0_i32_0 : i32, i32
  }
  func.func @transform_2(%arg0: i32) -> (i32, i32) {
    %c0_i32 = arith.constant 0 : i32
    %c0_i32_0 = arith.constant 0 : i32
    %c0_i32_1 = arith.constant 0 : i32
    return %c0_i32, %c0_i32_0 : i32, i32
  }
  func.func @transform_3(%arg0: i32) -> (i32, i32) {
    %c0_i32 = arith.constant 0 : i32
    %c0_i32_0 = arith.constant 0 : i32
    return %arg0, %c0_i32 : i32, i32
  }
}

module attributes {stable_mosaic.version = 11 : i64} {
  func.func @_gemm_bias_act_kernel(%arg0: i32, %arg1: memref<256x27xf32, #tpu.memory_space<vmem>>, %arg2: memref<27x3xf32, #tpu.memory_space<vmem>>, %arg3: memref<1x3xf32, #tpu.memory_space<vmem>>, %arg4: memref<256x3xf32, #tpu.memory_space<vmem>>) attributes {dimension_semantics = [#tpu.dimension_semantics<parallel>], iteration_bounds = array<i64: 2>, scalar_prefetch = 0 : i64, scratch_operands = 0 : i64, tpu.core_type = #tpu.core_type<tc>, window_params = [{transform_indices = @transform_0, window_bounds = array<i64: 256, 27>}, {pipeline_mode = #tpu.pipeline_mode<synchronous>, transform_indices = @transform_1, window_bounds = array<i64: 27, 3>}, {pipeline_mode = #tpu.pipeline_mode<synchronous>, transform_indices = @transform_2, window_bounds = array<i64: 1, 3>}, {transform_indices = @transform_3, window_bounds = array<i64: 256, 3>}]} {
    %c0 = arith.constant 0 : index
    %c0_0 = arith.constant 0 : index
    %0 = vector.load %arg1[%c0, %c0_0] : memref<256x27xf32, #tpu.memory_space<vmem>>, vector<256x27xf32>
    %c0_1 = arith.constant 0 : index
    %c0_2 = arith.constant 0 : index
    %1 = vector.load %arg2[%c0_1, %c0_2] : memref<27x3xf32, #tpu.memory_space<vmem>>, vector<27x3xf32>
    %cst = arith.constant dense<0.000000e+00> : vector<256x3xf32>
    %2 = tpu.matmul %0, %1, %cst {dimension_numbers = #tpu.dot_dimension_numbers<[1], [0], [0], [1], [0, 0, 1, 1], [], []>} : vector<256x27xf32>, vector<27x3xf32>, vector<256x3xf32> -> vector<256x3xf32>
    %c0_3 = arith.constant 0 : index
    %c0_4 = arith.constant 0 : index
    %3 = vector.load %arg3[%c0_3, %c0_4] : memref<1x3xf32, #tpu.memory_space<vmem>>, vector<1x3xf32>
    %4 = vector.broadcast %3 : vector<1x3xf32> to vector<256x3xf32>
    %5 = arith.addf %2, %4 : vector<256x3xf32>
    %cst_5 = arith.constant 0.000000e+00 : f32
    %6 = vector.broadcast %cst_5 : f32 to vector<256x3xf32>
    %7 = arith.cmpf ogt, %5, %6 : vector<256x3xf32>
    %cst_6 = arith.constant 0.00999999977 : f32
    %8 = vector.broadcast %cst_6 : f32 to vector<256x3xf32>
    %9 = arith.mulf %8, %5 : vector<256x3xf32>
    %10 = arith.select %7, %5, %9 : vector<256x3xi1>, vector<256x3xf32>
    %11 = math.tanh %10 : vector<256x3xf32>
    %c0_7 = arith.constant 0 : index
    %c0_8 = arith.constant 0 : index
    %12 = vector.load %arg4[%c0_7, %c0_8] : memref<256x3xf32, #tpu.memory_space<vmem>>, vector<256x3xf32>
    tpu.vector_store %arg4[%c0_7, %c0_8], %11 {strides = array<i32>} : memref<256x3xf32, #tpu.memory_space<vmem>>, vector<256x3xf32>,
    return
  }
  func.func @transform_0(%arg0: i32) -> (i32, i32) {
    %c0_i32 = arith.constant 0 : i32
    %c0_i32_0 = arith.constant 0 : i32
    return %arg0, %c0_i32 : i32, i32
  }
  func.func @transform_1(%arg0: i32) -> (i32, i32) {
    %c0_i32 = arith.constant 0 : i32
    %c0_i32_0 = arith.constant 0 : i32
    %c0_i32_1 = arith.constant 0 : i32
    return %c0_i32, %c0_i32_0 : i32, i32
  }
  func.func @transform_2(%arg0: i32) -> (i32, i32) {
    %c0_i32 = arith.constant 0 : i32
    %c0_i32_0 = arith.constant 0 : i32
    %c0_i32_1 = arith.constant 0 : i32
    return %c0_i32, %c0_i32_0 : i32, i32
  }
  func.func @transform_3(%arg0: i32) -> (i32, i32) {
    %c0_i32 = arith.constant 0 : i32
    %c0_i32_0 = arith.constant 0 : i32
    return %arg0, %c0_i32 : i32, i32
  }
}

</mosaic_0001>

<llo_original>
// kernel: _lambda_.14
$region0: #{_lambda_.14}
  #allocation0 [shape = 'u32[]', space=smem, size = 0x4, offset = 0x4, fixed_abs, tag = 'smem constant byte address 0x4 - core index']
  #allocation1 [shape = 'u32[144,128]{1,0:T(1,128)}', space=vmem, size = 0x12000, scoped, tag = 'internal scratch']
  %s0 = inlined_call_operand.vmem [shape: f32[512,54], index: 0, kind: input, shape index: {}]
  %s1 = inlined_call_operand.vmem [shape: f32[54,16], index: 1, kind: input, shape index: {}]
  %s2 = inlined_call_operand.vmem [shape: f32[1,16], index: 2, kind: input, shape index: {}]
  %s3 = inlined_call_operand.vmem [shape: f32[512,16], index: 3, kind: output, shape index: {}]
  %s4 = sld [smem:[#allocation0]]
  $region45: #{_lambda_.14} parent=0
    _
  %s6 = ssub.s32 1, %s4
  %s7 = scalar_select 0, %s6, %s4
  loop: start=0, step=1, limit=4
  $region2: #{_lambda_.14} parent=0 // loop_pre_header
    _
  $region3: #{_lambda_.14} parent=0 // loop_header
    %s9 = sphi 0, %s13
    %p10 = scmp.ge.s32.totalorder %s9, 4
    %s19 = sphi 0, %s21
    %s22 = sphi 0, %s19
    %s23 = sphi 0, %s22
    %s39 = sphi 0, %s23
    %s43 = sphi 0, %s43
    %s45 = sphi 0, %s43
    %s46 = sphi 0, %s45
    %s60 = sphi 0, %s46
    %s64 = sphi 0, %s64
    %s66 = sphi 0, %s64
    %s67 = sphi 0, %s66
    %s81 = sphi 0, %s67
    %s87 = sphi 0, %s89
    %s90 = sphi 0, %s87
    %s91 = sphi 0, %s90
    %s107 = sphi 0, %s91
  $region4: #{_lambda_.14} parent=0 // loop_header_branch
    %12 = sbr.rel (%p10) target = $region8
  $region5: #{_lambda_.14} parent=0 // loop_body
    %s14 = ssub.s32 %s9, 1
    %s15 = ssub.s32 %s9, 2
    %s16 = sadd.s32 %s9, 1
    %s17 = ssub.s32 %s9, %s16
    %p18 = scmp.eq.s32.totalorder %s17, 0
    %s20 = sadd.s32 %s19, 1
    %s21 = scalar_select %p18, %s19, %s20
    %p24 = pneg %p18
    %p25 = scmp.eq.s32.totalorder %s9, 1
    %p26 = por %p24, %p25
    %p27 = scmp.ne.s32.totalorder %s19, %s22
    %p28 = scmp.eq.s32.totalorder %s9, 0
    %p29 = por %p27, %p28
    %p30 = scmp.ne.s32.totalorder %s19, %s22
    %p31 = scmp.eq.s32.totalorder %s14, 1
    %p32 = por %p30, %p31
    %p33 = scmp.ne.s32.totalorder %s22, %s23
    %p34 = scmp.eq.s32.totalorder %s14, 0
    %p35 = por %p33, %p34
    %p36 = scmp.ne.s32.totalorder %s22, %s23
    %p37 = scmp.eq.s32.totalorder %s15, 1
    %p38 = por %p36, %p37
    %p40 = scmp.ne.s32.totalorder %s23, %s39
    %p41 = scmp.eq.s32.totalorder %s15, 0
    %p42 = por %p40, %p41
    %s44 = sadd.s32 %s43, 1
    %p47 = scmp.eq.s32.totalorder %s9, 1
    %p48 = scmp.ne.s32.totalorder %s43, %s45
    %p49 = scmp.eq.s32.totalorder %s9, 0
    %p50 = por %p48, %p49
    %p51 = scmp.ne.s32.totalorder %s43, %s45
    %p52 = scmp.eq.s32.totalorder %s14, 1
    %p53 = por %p51, %p52
    %p54 = scmp.ne.s32.totalorder %s45, %s46
    %p55 = scmp.eq.s32.totalorder %s14, 0
    %p56 = por %p54, %p55
    %p57 = scmp.ne.s32.totalorder %s45, %s46
    %p58 = scmp.eq.s32.totalorder %s15, 1
    %p59 = por %p57, %p58
    %p61 = scmp.ne.s32.totalorder %s46, %s60
    %p62 = scmp.eq.s32.totalorder %s15, 0
    %p63 = por %p61, %p62
    %s65 = sadd.s32 %s64, 1
    %p68 = scmp.eq.s32.totalorder %s9, 1
    %p69 = scmp.ne.s32.totalorder %s64, %s66
    %p70 = scmp.eq.s32.totalorder %s9, 0
    %p71 = por %p69, %p70
    %p72 = scmp.ne.s32.totalorder %s64, %s66
    %p73 = scmp.eq.s32.totalorder %s14, 1
    %p74 = por %p72, %p73
    %p75 = scmp.ne.s32.totalorder %s66, %s67
    %p76 = scmp.eq.s32.totalorder %s14, 0
    %p77 = por %p75, %p76
    %p78 = scmp.ne.s32.totalorder %s66, %s67
    %p79 = scmp.eq.s32.totalorder %s15, 1
    %p80 = por %p78, %p79
    %p82 = scmp.ne.s32.totalorder %s67, %s81
    %p83 = scmp.eq.s32.totalorder %s15, 0
    %p84 = por %p82, %p83
    %s85 = ssub.s32 %s9, %s16
    %p86 = scmp.eq.s32.totalorder %s85, 0
    %s88 = sadd.s32 %s87, 1
    %s89 = scalar_select %p86, %s87, %s88
    %p92 = pneg %p86
    %p93 = scmp.eq.s32.totalorder %s9, 1
    %p94 = por %p92, %p93
    %p95 = scmp.ne.s32.totalorder %s87, %s90
    %p96 = scmp.eq.s32.totalorder %s9, 0
    %p97 = por %p95, %p96
    %p98 = scmp.ne.s32.totalorder %s87, %s90
    %p99 = scmp.eq.s32.totalorder %s14, 1
    %p100 = por %p98, %p99
    %p101 = scmp.ne.s32.totalorder %s90, %s91
    %p102 = scmp.eq.s32.totalorder %s14, 0
    %p103 = por %p101, %p102
    %p104 = scmp.ne.s32.totalorder %s90, %s91
    %p105 = scmp.eq.s32.totalorder %s15, 1
    %p106 = por %p104, %p105
    %p108 = scmp.ne.s32.totalorder %s91, %s107
    %p109 = scmp.eq.s32.totalorder %s15, 0
    %p110 = por %p108, %p109
    %p111 = scmp.le.s32.totalorder 1, %s9
    %p112 = scmp.lt.s32.totalorder %s9, 3
    %p113 = pnand %p111, %p112
    %p114 = pneg %p113
    // Predicated region
    $region9: #{_lambda_.14} parent=5 // pred_check
      _
    $region10: #{_lambda_.14} parent=5 // pred_check_branch
      %116 = sbr.rel (%p113) target = $region12
    $region11: #{_lambda_.14} parent=5 // pred_region
      %s117 = ssub.s32 %s9, 1
      // Predicated region
      $region13: #{_lambda_.14} parent=11 // pred_check
        %p118 = pneg %p56
      $region14: #{_lambda_.14} parent=11 // pred_check_branch
        %120 = sbr.rel (%p118) target = $region16
      $region15: #{_lambda_.14} parent=11 // pred_region
        _
      $region16: #{_lambda_.14} parent=11 // pred_fallthru
        _
      // Predicated region
      $region17: #{_lambda_.14} parent=11 // pred_check
        %p121 = pneg %p77
      $region18: #{_lambda_.14} parent=11 // pred_check_branch
        %123 = sbr.rel (%p121) target = $region20
      $region19: #{_lambda_.14} parent=11 // pred_region
        _
      $region20: #{_lambda_.14} parent=11 // pred_fallthru
        _
    $region12: #{_lambda_.14} parent=5 // pred_fallthru
      _
    %p124 = scmp.lt.s32.totalorder %s9, 2
    // Predicated region
    $region21: #{_lambda_.14} parent=5 // pred_check
      %p125 = pneg %p124
    $region22: #{_lambda_.14} parent=5 // pred_check_branch
      %127 = sbr.rel (%p125) target = $region24
    $region23: #{_lambda_.14} parent=5 // pred_region
      // Predicated region
      $region25: #{_lambda_.14} parent=23 // pred_check
        %p128 = pneg %p29
      $region26: #{_lambda_.14} parent=23 // pred_check_branch
        %130 = sbr.rel (%p128) target = $region28
      $region27: #{_lambda_.14} parent=23 // pred_region
        %s131 = smul.u32 32, %s9
        %p132 = scmp.lt.s32.totalorder %s131, 63
        %s133 = scalar_select %p132, %s131, 63
        %s134 = smul.addr %s133, 8
        %s135 = scalar_lea.vmem %s0, %s134
        %s136 = smul.u32 32, %s9
      $region28: #{_lambda_.14} parent=23 // pred_fallthru
        _
    $region24: #{_lambda_.14} parent=5 // pred_fallthru
      _
    %p137 = scmp.le.s32.totalorder 1, %s9
    %p138 = scmp.lt.s32.totalorder %s9, 3
    %p139 = pnand %p137, %p138
    %p140 = pneg %p139
    // Predicated region
    $region29: #{_lambda_.14} parent=5 // pred_check
      _
    $region30: #{_lambda_.14} parent=5 // pred_check_branch
      %142 = sbr.rel (%p139) target = $region32
    $region31: #{_lambda_.14} parent=5 // pred_region
      %s143 = ssub.s32 %s9, 1
      %s144 = smul.u32 32, %s14
      %p145 = scmp.lt.s32.totalorder %s144, 63
      %s146 = scalar_select %p145, %s144, 63
      %s147 = smul.addr %s146, 8
      %s148 = scalar_lea.vmem %s0, %s147
      %p149 = pneg %p35
      %p150 = pneg %p32
      %p151 = pneg %p56
      %p152 = pneg %p53
      %p153 = pneg %p77
      %p154 = pneg %p74
      %p155 = pneg %p103
      %p156 = pneg %p100
      %s157 = smul.u32 32, %s14
      %p158 = scmp.lt.s32.totalorder %s157, 63
      %s159 = scalar_select %p158, %s157, 63
      %s160 = smul.addr %s159, 8
      %s161 = scalar_lea.vmem %s3, %s160
      %s162 = smul.u32 32, %s14
      %p163 = scmp.lt.s32.totalorder %s162, 63
      %s164 = scalar_select %p163, %s162, 63
      %s165 = smul.addr %s164, 8
      %s166 = scalar_lea.vmem %s0, %s165
      %s167 = smul.u32 32, %s14
      %s168 = smul.u32 32, %s14
      %p169 = scmp.lt.s32.totalorder %s168, 63
      %s170 = scalar_select %p169, %s168, 63
      %s171 = smul.addr %s170, 8
      %s172 = scalar_lea.vmem %s3, %s171
      %s173 = smul.u32 32, %s14
      %v174 = vld [vmem:[%s166] sm:$0xff]
      %v175 = vld [vmem:[%s166 + $0x8] sm:$0xff]
      %v176 = vld [vmem:[%s166 + $0x10] sm:$0xff]
      %v177 = vld [vmem:[%s166 + $0x18] sm:$0xff]
      %v178 = vld [vmem:[%s166 + $0x20] sm:$0xff]
      %v179 = vld [vmem:[%s166 + $0x28] sm:$0xff]
      %v180 = vld [vmem:[%s166 + $0x30] sm:$0xff]
      %v181 = vld [vmem:[%s166 + $0x38] sm:$0xff]
      %v182 = vld [vmem:[%s166 + $0x40] sm:$0xff]
      %v183 = vld [vmem:[%s166 + $0x48] sm:$0xff]
      %v184 = vld [vmem:[%s166 + $0x50] sm:$0xff]
      %v185 = vld [vmem:[%s166 + $0x58] sm:$0xff]
      %v186 = vld [vmem:[%s166 + $0x60] sm:$0xff]
      %v187 = vld [vmem:[%s166 + $0x68] sm:$0xff]
      %v188 = vld [vmem:[%s166 + $0x70] sm:$0xff]
      %v189 = vld [vmem:[%s166 + $0x78] sm:$0xff]
      %v190 = vld [vmem:[%s166 + $0x80] sm:$0xff]
      %v191 = vld [vmem:[%s166 + $0x88] sm:$0xff]
      %v192 = vld [vmem:[%s166 + $0x90] sm:$0xff]
      %v193 = vld [vmem:[%s166 + $0x98] sm:$0xff]
      %v194 = vld [vmem:[%s166 + $0xa0] sm:$0xff]
      %v195 = vld [vmem:[%s166 + $0xa8] sm:$0xff]
      %v196 = vld [vmem:[%s166 + $0xb0] sm:$0xff]
      %v197 = vld [vmem:[%s166 + $0xb8] sm:$0xff]
      %v198 = vld [vmem:[%s166 + $0xc0] sm:$0xff]
      %v199 = vld [vmem:[%s166 + $0xc8] sm:$0xff]
      %v200 = vld [vmem:[%s166 + $0xd0] sm:$0xff]
      %v201 = vld [vmem:[%s166 + $0xd8] sm:$0xff]
      %v202 = vld [vmem:[%s166 + $0xe0] sm:$0xff]
      %v203 = vld [vmem:[%s166 + $0xe8] sm:$0xff]
      %v204 = vld [vmem:[%s166 + $0xf0] sm:$0xff]
      %v205 = vld [vmem:[%s166 + $0xf8] sm:$0xff]
      %v206 = vld [vmem:[%s1] sm:$0xff]
      %v207 = vld [vmem:[%s1 + $0x8] sm:$0xff]
      %v208 = vld [vmem:[%s1 + $0x10] sm:$0xff]
      %v209 = vld [vmem:[%s1 + $0x18] sm:$0xff]
      %v210 = vld [vmem:[%s1 + $0x20] sm:$0xff]
      %v211 = vld [vmem:[%s1 + $0x28] sm:$0xff]
      %v212 = vld [vmem:[%s1 + $0x30] sm:$0x3f]
      %v213 = vld [vmem:[%s2] sm:$0x1]
      %v215 = vlaneseq
      %v216 = vshrl.u32 %v215, 7
      %v217 = vsub.s32 0, %v216
      %v218 = vrot.slane %v213, %v217
      %vm220 = vcmask 441344
      %v222 = vsel %vm220, %v174, 0
      %v225 = vsel %vm220, %v175, 0
      %v228 = vsel %vm220, %v176, 0
      %v231 = vsel %vm220, %v177, 0
      %v234 = vsel %vm220, %v178, 0
      %v237 = vsel %vm220, %v179, 0
      %v240 = vsel %vm220, %v180, 0
      %v243 = vsel %vm220, %v181, 0
      %v246 = vsel %vm220, %v182, 0
      %v249 = vsel %vm220, %v183, 0
      %v252 = vsel %vm220, %v184, 0
      %v255 = vsel %vm220, %v185, 0
      %v258 = vsel %vm220, %v186, 0
      %v261 = vsel %vm220, %v187, 0
      %v264 = vsel %vm220, %v188, 0
      %v267 = vsel %vm220, %v189, 0
      %v270 = vsel %vm220, %v190, 0
      %v273 = vsel %vm220, %v191, 0
      %v276 = vsel %vm220, %v192, 0
      %v279 = vsel %vm220, %v193, 0
      %v282 = vsel %vm220, %v194, 0
      %v285 = vsel %vm220, %v195, 0
      %v288 = vsel %vm220, %v196, 0
      %v291 = vsel %vm220, %v197, 0
      %v294 = vsel %vm220, %v198, 0
      %v297 = vsel %vm220, %v199, 0
      %v300 = vsel %vm220, %v200, 0
      %v303 = vsel %vm220, %v201, 0
      %v306 = vsel %vm220, %v202, 0
      %v309 = vsel %vm220, %v203, 0
      %v312 = vsel %vm220, %v204, 0
      %v315 = vsel %vm220, %v205, 0
      %vm317 = vcmask 1045504
      %v319 = vsel %vm317, %v212, 0
      %321 = vmatprep.subr.mxu0 0.0
      %322 = vmatpush1.msra.mxu0 0.0
      %323 = vmatprep.subr.mxu0 0.0
      %324 = vmatpush1.msra.mxu0 0.0
      %325 = vmatprep.subr.mxu0 0.0
      %326 = vmatpush1.msra.mxu0 0.0
      %327 = vmatprep.subr.mxu0 0.0
      %328 = vmatpush1.msra.mxu0 0.0
      %329 = vmatprep.subr.mxu0 0.0
      %330 = vmatpush1.msra.mxu0 0.0
      %331 = vmatprep.subr.mxu0 0.0
      %332 = vmatpush1.msra.mxu0 0.0
      %333 = vmatprep.subr.mxu0 0.0
      %334 = vmatpush1.msra.mxu0 0.0
      %335 = vmatprep.subr.mxu0 0.0
      %336 = vmatpush1.msra.mxu0 0.0
      %337 = vmatprep.subr.mxu0 0.0
      %338 = vmatpush1.msra.mxu0 0.0
      %339 = vmatprep.subr.mxu0 0.0
      %340 = vmatpush1.msra.mxu0 %v319
      %341 = vmatprep.subr.mxu0 0.0
      %342 = vmatpush1.msra.mxu0 %v211
      %343 = vmatprep.subr.mxu0 0.0
      %344 = vmatpush1.msra.mxu0 %v210
      %345 = vmatprep.subr.mxu0 0.0
      %346 = vmatpush1.msra.mxu0 %v209
      %347 = vmatprep.subr.mxu0 0.0
      %348 = vmatpush1.msra.mxu0 %v208
      %349 = vmatprep.subr.mxu0 0.0
      %350 = vmatpush1.msra.mxu0 %v207
      %351 = vmatprep.subr.mxu0 0.0
      %352 = vmatpush1.msra.mxu0 %v206
      %353 = vmatprep.subr.mxu0 0.0
      %354 = vmatpush2.msra.mxu0 0.0
      %355 = vmatprep.subr.mxu0 0.0
      %356 = vmatpush2.msra.mxu0 0.0
      %357 = vmatprep.subr.mxu0 0.0
      %358 = vmatpush2.msra.mxu0 0.0
      %359 = vmatprep.subr.mxu0 0.0
      %360 = vmatpush2.msra.mxu0 0.0
      %361 = vmatprep.subr.mxu0 0.0
      %362 = vmatpush2.msra.mxu0 0.0
      %363 = vmatprep.subr.mxu0 0.0
      %364 = vmatpush2.msra.mxu0 0.0
      %365 = vmatprep.subr.mxu0 0.0
      %366 = vmatpush2.msra.mxu0 0.0
      %367 = vmatprep.subr.mxu0 0.0
      %368 = vmatpush2.msra.mxu0 0.0
      %369 = vmatprep.subr.mxu0 0.0
      %370 = vmatpush2.msra.mxu0 0.0
      %371 = vmatprep.subr.mxu0 0.0
      %372 = vmatpush2.msra.mxu0 0.0
      %373 = vmatprep.subr.mxu0 0.0
      %374 = vmatpush2.msra.mxu0 0.0
      %375 = vmatprep.subr.mxu0 0.0
      %376 = vmatpush2.msra.mxu0 0.0
      %377 = vmatprep.subr.mxu0 0.0
      %378 = vmatpush2.msra.mxu0 0.0
      %379 = vmatprep.subr.mxu0 0.0
      %380 = vmatpush2.msra.mxu0 0.0
      %381 = vmatprep.subr.mxu0 0.0
      %382 = vmatpush2.msra.mxu0 0.0
      %383 = vmatprep.subr.mxu0 0.0
      %384 = vmatpush2.msra.mxu0 0.0
      %385 = vmatprep.mubr.f32.mxu0 0.0
      %386 = vmatmul.mubr.f32.gmra.mxu0 %v222
      %v387 = vpop.f32.mrf.mxu0
      %v388 = vadd.f32 %v218, %v387
      %v389 = vpop.f32.mrf.mxu0
      %390 = vmatprep.mubr.f32.mxu0 0.0
      %391 = vmatmul.mubr.f32.gmra.mxu0 %v225
      %v392 = vpop.f32.mrf.mxu0
      %v393 = vadd.f32 %v218, %v392
      %v394 = vpop.f32.mrf.mxu0
      %395 = vmatprep.mubr.f32.mxu0 0.0
      %396 = vmatmul.mubr.f32.gmra.mxu0 %v228
      %v397 = vpop.f32.mrf.mxu0
      %v398 = vadd.f32 %v218, %v397
      %v399 = vpop.f32.mrf.mxu0
      %400 = vmatprep.mubr.f32.mxu0 0.0
      %401 = vmatmul.mubr.f32.gmra.mxu0 %v231
      %v402 = vpop.f32.mrf.mxu0
      %v403 = vadd.f32 %v218, %v402
      %v404 = vpop.f32.mrf.mxu0
      %405 = vmatprep.mubr.f32.mxu0 0.0
      %406 = vmatmul.mubr.f32.gmra.mxu0 %v234
      %v407 = vpop.f32.mrf.mxu0
      %v408 = vadd.f32 %v218, %v407
      %v409 = vpop.f32.mrf.mxu0
      %410 = vmatprep.mubr.f32.mxu0 0.0
      %411 = vmatmul.mubr.f32.gmra.mxu0 %v237
      %v412 = vpop.f32.mrf.mxu0
      %v413 = vadd.f32 %v218, %v412
      %v414 = vpop.f32.mrf.mxu0
      %415 = vmatprep.mubr.f32.mxu0 0.0
      %416 = vmatmul.mubr.f32.gmra.mxu0 %v240
      %v417 = vpop.f32.mrf.mxu0
      %v418 = vadd.f32 %v218, %v417
      %v419 = vpop.f32.mrf.mxu0
      %420 = vmatprep.mubr.f32.mxu0 0.0
      %421 = vmatmul.mubr.f32.gmra.mxu0 %v243
      %v422 = vpop.f32.mrf.mxu0
      %v423 = vadd.f32 %v218, %v422
      %v424 = vpop.f32.mrf.mxu0
      %425 = vmatprep.mubr.f32.mxu0 0.0
      %426 = vmatmul.mubr.f32.gmra.mxu0 %v246
      %v427 = vpop.f32.mrf.mxu0
      %v428 = vadd.f32 %v218, %v427
      %v429 = vpop.f32.mrf.mxu0
      %430 = vmatprep.mubr.f32.mxu0 0.0
      %431 = vmatmul.mubr.f32.gmra.mxu0 %v249
      %v432 = vpop.f32.mrf.mxu0
      %v433 = vadd.f32 %v218, %v432
      %v434 = vpop.f32.mrf.mxu0
      %435 = vmatprep.mubr.f32.mxu0 0.0
      %436 = vmatmul.mubr.f32.gmra.mxu0 %v252
      %v437 = vpop.f32.mrf.mxu0
      %v438 = vadd.f32 %v218, %v437
      %v439 = vpop.f32.mrf.mxu0
      %440 = vmatprep.mubr.f32.mxu0 0.0
      %441 = vmatmul.mubr.f32.gmra.mxu0 %v255
      %v442 = vpop.f32.mrf.mxu0
      %v443 = vadd.f32 %v218, %v442
      %v444 = vpop.f32.mrf.mxu0
      %445 = vmatprep.mubr.f32.mxu0 0.0
      %446 = vmatmul.mubr.f32.gmra.mxu0 %v258
      %v447 = vpop.f32.mrf.mxu0
      %v448 = vadd.f32 %v218, %v447
      %v449 = vpop.f32.mrf.mxu0
      %450 = vmatprep.mubr.f32.mxu0 0.0
      %451 = vmatmul.mubr.f32.gmra.mxu0 %v261
      %v452 = vpop.f32.mrf.mxu0
      %v453 = vadd.f32 %v218, %v452
      %v454 = vpop.f32.mrf.mxu0
      %455 = vmatprep.mubr.f32.mxu0 0.0
      %456 = vmatmul.mubr.f32.gmra.mxu0 %v264
      %v457 = vpop.f32.mrf.mxu0
      %v458 = vadd.f32 %v218, %v457
      %v459 = vpop.f32.mrf.mxu0
      %460 = vmatprep.mubr.f32.mxu0 0.0
      %461 = vmatmul.mubr.f32.gmra.mxu0 %v267
      %v462 = vpop.f32.mrf.mxu0
      %v463 = vadd.f32 %v218, %v462
      %v464 = vpop.f32.mrf.mxu0
      %465 = vmatprep.mubr.f32.mxu0 0.0
      %466 = vmatmul.mubr.f32.gmra.mxu0 %v270
      %v467 = vpop.f32.mrf.mxu0
      %v468 = vadd.f32 %v218, %v467
      %v469 = vpop.f32.mrf.mxu0
      %470 = vmatprep.mubr.f32.mxu0 0.0
      %471 = vmatmul.mubr.f32.gmra.mxu0 %v273
      %v472 = vpop.f32.mrf.mxu0
      %v473 = vadd.f32 %v218, %v472
      %v474 = vpop.f32.mrf.mxu0
      %475 = vmatprep.mubr.f32.mxu0 0.0
      %476 = vmatmul.mubr.f32.gmra.mxu0 %v276
      %v477 = vpop.f32.mrf.mxu0
      %v478 = vadd.f32 %v218, %v477
      %v479 = vpop.f32.mrf.mxu0
      %480 = vmatprep.mubr.f32.mxu0 0.0
      %481 = vmatmul.mubr.f32.gmra.mxu0 %v279
      %v482 = vpop.f32.mrf.mxu0
      %v483 = vadd.f32 %v218, %v482
      %v484 = vpop.f32.mrf.mxu0
      %485 = vmatprep.mubr.f32.mxu0 0.0
      %486 = vmatmul.mubr.f32.gmra.mxu0 %v282
      %v487 = vpop.f32.mrf.mxu0
      %v488 = vadd.f32 %v218, %v487
      %v489 = vpop.f32.mrf.mxu0
      %490 = vmatprep.mubr.f32.mxu0 0.0
      %491 = vmatmul.mubr.f32.gmra.mxu0 %v285
      %v492 = vpop.f32.mrf.mxu0
      %v493 = vadd.f32 %v218, %v492
      %v494 = vpop.f32.mrf.mxu0
      %495 = vmatprep.mubr.f32.mxu0 0.0
      %496 = vmatmul.mubr.f32.gmra.mxu0 %v288
      %v497 = vpop.f32.mrf.mxu0
      %v498 = vadd.f32 %v218, %v497
      %v499 = vpop.f32.mrf.mxu0
      %500 = vmatprep.mubr.f32.mxu0 0.0
      %501 = vmatmul.mubr.f32.gmra.mxu0 %v291
      %v502 = vpop.f32.mrf.mxu0
      %v503 = vadd.f32 %v218, %v502
      %v504 = vpop.f32.mrf.mxu0
      %505 = vmatprep.mubr.f32.mxu0 0.0
      %506 = vmatmul.mubr.f32.gmra.mxu0 %v294
      %v507 = vpop.f32.mrf.mxu0
      %v508 = vadd.f32 %v218, %v507
      %v509 = vpop.f32.mrf.mxu0
      %510 = vmatprep.mubr.f32.mxu0 0.0
      %511 = vmatmul.mubr.f32.gmra.mxu0 %v297
      %v512 = vpop.f32.mrf.mxu0
      %v513 = vadd.f32 %v218, %v512
      %v514 = vpop.f32.mrf.mxu0
      %515 = vmatprep.mubr.f32.mxu0 0.0
      %516 = vmatmul.mubr.f32.gmra.mxu0 %v300
      %v517 = vpop.f32.mrf.mxu0
      %v518 = vadd.f32 %v218, %v517
      %v519 = vpop.f32.mrf.mxu0
      %520 = vmatprep.mubr.f32.mxu0 0.0
      %521 = vmatmul.mubr.f32.gmra.mxu0 %v303
      %v522 = vpop.f32.mrf.mxu0
      %v523 = vadd.f32 %v218, %v522
      %v524 = vpop.f32.mrf.mxu0
      %525 = vmatprep.mubr.f32.mxu0 0.0
      %526 = vmatmul.mubr.f32.gmra.mxu0 %v306
      %v527 = vpop.f32.mrf.mxu0
      %v528 = vadd.f32 %v218, %v527
      %v529 = vpop.f32.mrf.mxu0
      %530 = vmatprep.mubr.f32.mxu0 0.0
      %531 = vmatmul.mubr.f32.gmra.mxu0 %v309
      %v532 = vpop.f32.mrf.mxu0
      %v533 = vadd.f32 %v218, %v532
      %v534 = vpop.f32.mrf.mxu0
      %535 = vmatprep.mubr.f32.mxu0 0.0
      %536 = vmatmul.mubr.f32.gmra.mxu0 %v312
      %v537 = vpop.f32.mrf.mxu0
      %v538 = vadd.f32 %v218, %v537
      %v539 = vpop.f32.mrf.mxu0
      %540 = vmatprep.mubr.f32.mxu0 0.0
      %541 = vmatmul.mubr.f32.gmra.mxu0 %v315
      %v542 = vpop.f32.mrf.mxu0
      %v543 = vadd.f32 %v218, %v542
      %v544 = vpop.f32.mrf.mxu0
      %545 = vdwg.mxu0
      %vm546 = vcmp.gt.f32.partialorder %v388, 0.0
      %vm547 = vcmp.gt.f32.partialorder %v393, 0.0
      %vm548 = vcmp.gt.f32.partialorder %v398, 0.0
      %vm549 = vcmp.gt.f32.partialorder %v403, 0.0
      %vm550 = vcmp.gt.f32.partialorder %v408, 0.0
      %vm551 = vcmp.gt.f32.partialorder %v413, 0.0
      %vm552 = vcmp.gt.f32.partialorder %v418, 0.0
      %vm553 = vcmp.gt.f32.partialorder %v423, 0.0
      %vm554 = vcmp.gt.f32.partialorder %v428, 0.0
      %vm555 = vcmp.gt.f32.partialorder %v433, 0.0
      %vm556 = vcmp.gt.f32.partialorder %v438, 0.0
      %vm557 = vcmp.gt.f32.partialorder %v443, 0.0
      %vm558 = vcmp.gt.f32.partialorder %v448, 0.0
      %vm559 = vcmp.gt.f32.partialorder %v453, 0.0
      %vm560 = vcmp.gt.f32.partialorder %v458, 0.0
      %vm561 = vcmp.gt.f32.partialorder %v463, 0.0
      %vm562 = vcmp.gt.f32.partialorder %v468, 0.0
      %vm563 = vcmp.gt.f32.partialorder %v473, 0.0
      %vm564 = vcmp.gt.f32.partialorder %v478, 0.0
      %vm565 = vcmp.gt.f32.partialorder %v483, 0.0
      %vm566 = vcmp.gt.f32.partialorder %v488, 0.0
      %vm567 = vcmp.gt.f32.partialorder %v493, 0.0
      %vm568 = vcmp.gt.f32.partialorder %v498, 0.0
      %vm569 = vcmp.gt.f32.partialorder %v503, 0.0
      %vm570 = vcmp.gt.f32.partialorder %v508, 0.0
      %vm571 = vcmp.gt.f32.partialorder %v513, 0.0
      %vm572 = vcmp.gt.f32.partialorder %v518, 0.0
      %vm573 = vcmp.gt.f32.partialorder %v523, 0.0
      %vm574 = vcmp.gt.f32.partialorder %v528, 0.0
      %vm575 = vcmp.gt.f32.partialorder %v533, 0.0
      %vm576 = vcmp.gt.f32.partialorder %v538, 0.0
      %vm577 = vcmp.gt.f32.partialorder %v543, 0.0
      %v578 = vmul.f32 %v388, 0.01
      %v579 = vmul.f32 %v393, 0.01
      %v580 = vmul.f32 %v398, 0.01
      %v581 = vmul.f32 %v403, 0.01
      %v582 = vmul.f32 %v408, 0.01
      %v583 = vmul.f32 %v413, 0.01
      %v584 = vmul.f32 %v418, 0.01
      %v585 = vmul.f32 %v423, 0.01
      %v586 = vmul.f32 %v428, 0.01
      %v587 = vmul.f32 %v433, 0.01
      %v588 = vmul.f32 %v438, 0.01
      %v589 = vmul.f32 %v443, 0.01
      %v590 = vmul.f32 %v448, 0.01
      %v591 = vmul.f32 %v453, 0.01
      %v592 = vmul.f32 %v458, 0.01
      %v593 = vmul.f32 %v463, 0.01
      %v594 = vmul.f32 %v468, 0.01
      %v595 = vmul.f32 %v473, 0.01
      %v596 = vmul.f32 %v478, 0.01
      %v597 = vmul.f32 %v483, 0.01
      %v598 = vmul.f32 %v488, 0.01
      %v599 = vmul.f32 %v493, 0.01
      %v600 = vmul.f32 %v498, 0.01
      %v601 = vmul.f32 %v503, 0.01
      %v602 = vmul.f32 %v508, 0.01
      %v603 = vmul.f32 %v513, 0.01
      %v604 = vmul.f32 %v518, 0.01
      %v605 = vmul.f32 %v523, 0.01
      %v606 = vmul.f32 %v528, 0.01
      %v607 = vmul.f32 %v533, 0.01
      %v608 = vmul.f32 %v538, 0.01
      %v609 = vmul.f32 %v543, 0.01
      %v610 = vsel %vm546, %v388, %v578
      %v611 = vsel %vm547, %v393, %v579
      %v612 = vsel %vm548, %v398, %v580
      %v613 = vsel %vm549, %v403, %v581
      %v614 = vsel %vm550, %v408, %v582
      %v615 = vsel %vm551, %v413, %v583
      %v616 = vsel %vm552, %v418, %v584
      %v617 = vsel %vm553, %v423, %v585
      %v618 = vsel %vm554, %v428, %v586
      %v619 = vsel %vm555, %v433, %v587
      %v620 = vsel %vm556, %v438, %v588
      %v621 = vsel %vm557, %v443, %v589
      %v622 = vsel %vm558, %v448, %v590
      %v623 = vsel %vm559, %v453, %v591
      %v624 = vsel %vm560, %v458, %v592
      %v625 = vsel %vm561, %v463, %v593
      %v626 = vsel %vm562, %v468, %v594
      %v627 = vsel %vm563, %v473, %v595
      %v628 = vsel %vm564, %v478, %v596
      %v629 = vsel %vm565, %v483, %v597
      %v630 = vsel %vm566, %v488, %v598
      %v631 = vsel %vm567, %v493, %v599
      %v632 = vsel %vm568, %v498, %v600
      %v633 = vsel %vm569, %v503, %v601
      %v634 = vsel %vm570, %v508, %v602
      %v635 = vsel %vm571, %v513, %v603
      %v636 = vsel %vm572, %v518, %v604
      %v637 = vsel %vm573, %v523, %v605
      %v638 = vsel %vm574, %v528, %v606
      %v639 = vsel %vm575, %v533, %v607
      %v640 = vsel %vm576, %v538, %v608
      %v641 = vsel %vm577, %v543, %v609
      %vm642 = vcmask 130048
      %643 = vst.msk [vmem:[%s172] sm:$0xff] %vm642, %v610
      %644 = vst.msk [vmem:[%s172 + $0x8] sm:$0xff] %vm642, %v611
      %645 = vst.msk [vmem:[%s172 + $0x10] sm:$0xff] %vm642, %v612
      %646 = vst.msk [vmem:[%s172 + $0x18] sm:$0xff] %vm642, %v613
      %647 = vst.msk [vmem:[%s172 + $0x20] sm:$0xff] %vm642, %v614
      %648 = vst.msk [vmem:[%s172 + $0x28] sm:$0xff] %vm642, %v615
      %649 = vst.msk [vmem:[%s172 + $0x30] sm:$0xff] %vm642, %v616
      %650 = vst.msk [vmem:[%s172 + $0x38] sm:$0xff] %vm642, %v617
      %651 = vst.msk [vmem:[%s172 + $0x40] sm:$0xff] %vm642, %v618
      %652 = vst.msk [vmem:[%s172 + $0x48] sm:$0xff] %vm642, %v619
      %653 = vst.msk [vmem:[%s172 + $0x50] sm:$0xff] %vm642, %v620
      %654 = vst.msk [vmem:[%s172 + $0x58] sm:$0xff] %vm642, %v621
      %655 = vst.msk [vmem:[%s172 + $0x60] sm:$0xff] %vm642, %v622
      %656 = vst.msk [vmem:[%s172 + $0x68] sm:$0xff] %vm642, %v623
      %657 = vst.msk [vmem:[%s172 + $0x70] sm:$0xff] %vm642, %v624
      %658 = vst.msk [vmem:[%s172 + $0x78] sm:$0xff] %vm642, %v625
      %659 = vst.msk [vmem:[%s172 + $0x80] sm:$0xff] %vm642, %v626
      %660 = vst.msk [vmem:[%s172 + $0x88] sm:$0xff] %vm642, %v627
      %661 = vst.msk [vmem:[%s172 + $0x90] sm:$0xff] %vm642, %v628
      %662 = vst.msk [vmem:[%s172 + $0x98] sm:$0xff] %vm642, %v629
      %663 = vst.msk [vmem:[%s172 + $0xa0] sm:$0xff] %vm642, %v630
      %664 = vst.msk [vmem:[%s172 + $0xa8] sm:$0xff] %vm642, %v631
      %665 = vst.msk [vmem:[%s172 + $0xb0] sm:$0xff] %vm642, %v632
      %666 = vst.msk [vmem:[%s172 + $0xb8] sm:$0xff] %vm642, %v633
      %667 = vst.msk [vmem:[%s172 + $0xc0] sm:$0xff] %vm642, %v634
      %668 = vst.msk [vmem:[%s172 + $0xc8] sm:$0xff] %vm642, %v635
      %669 = vst.msk [vmem:[%s172 + $0xd0] sm:$0xff] %vm642, %v636
      %670 = vst.msk [vmem:[%s172 + $0xd8] sm:$0xff] %vm642, %v637
      %671 = vst.msk [vmem:[%s172 + $0xe0] sm:$0xff] %vm642, %v638
      %672 = vst.msk [vmem:[%s172 + $0xe8] sm:$0xff] %vm642, %v639
      %673 = vst.msk [vmem:[%s172 + $0xf0] sm:$0xff] %vm642, %v640
      %674 = vst.msk [vmem:[%s172 + $0xf8] sm:$0xff] %vm642, %v641
      %s675 = smul.u32 32, %s14
      %p676 = scmp.lt.s32.totalorder %s675, 63
      %s677 = scalar_select %p676, %s675, 63
      %s678 = smul.addr %s677, 8
      %s679 = scalar_lea.vmem %s3, %s678
      // Predicated region
      $region33: #{_lambda_.14} parent=31 // pred_check
        %p680 = pneg %p100
      $region34: #{_lambda_.14} parent=31 // pred_check_branch
        %682 = sbr.rel (%p680) target = $region36
      $region35: #{_lambda_.14} parent=31 // pred_region
        %s683 = smul.u32 32, %s14
      $region36: #{_lambda_.14} parent=31 // pred_fallthru
        _
    $region32: #{_lambda_.14} parent=5 // pred_fallthru
      _
    %p684 = scmp.le.s32.totalorder 2, %s9
    // Predicated region
    $region37: #{_lambda_.14} parent=5 // pred_check
      %p685 = pneg %p684
    $region38: #{_lambda_.14} parent=5 // pred_check_branch
      %687 = sbr.rel (%p685) target = $region40
    $region39: #{_lambda_.14} parent=5 // pred_region
      %s688 = ssub.s32 %s9, 2
      // Predicated region
      $region41: #{_lambda_.14} parent=39 // pred_check
        %p689 = pneg %p106
      $region42: #{_lambda_.14} parent=39 // pred_check_branch
        %691 = sbr.rel (%p689) target = $region44
      $region43: #{_lambda_.14} parent=39 // pred_region
        %s692 = smul.u32 32, %s15
        %p693 = scmp.lt.s32.totalorder %s692, 63
        %s694 = scalar_select %p693, %s692, 63
        %s695 = smul.addr %s694, 8
        %s696 = scalar_lea.vmem %s3, %s695
      $region44: #{_lambda_.14} parent=39 // pred_fallthru
        _
    $region40: #{_lambda_.14} parent=5 // pred_fallthru
      _
  $region6: #{_lambda_.14} parent=0 // loop_footer
    %s13 = sadd.s32 1, %s9
  $region7: #{_lambda_.14} parent=0 // loop_footer_branch
    %8 = sbr.rel target = $region3
  $region8: #{_lambda_.14} parent=0 // loop_exit
    _

// kernel: _lambda_.15
$region0: #{_lambda_.15}
  #allocation0 [shape = 'u32[]', space=smem, size = 0x4, offset = 0x4, fixed_abs, tag = 'smem constant byte address 0x4 - core index']
  #allocation1 [shape = 'u32[144,128]{1,0:T(1,128)}', space=vmem, size = 0x12000, scoped, tag = 'internal scratch']
  %s0 = inlined_call_operand.vmem [shape: f32[512,144], index: 0, kind: input, shape index: {}]
  %s1 = inlined_call_operand.vmem [shape: f32[144,16], index: 1, kind: input, shape index: {}]
  %s2 = inlined_call_operand.vmem [shape: f32[1,16], index: 2, kind: input, shape index: {}]
  %s3 = inlined_call_operand.vmem [shape: f32[512,16], index: 3, kind: output, shape index: {}]
  %s4 = sld [smem:[#allocation0]]
  $region45: #{_lambda_.15} parent=0
    _
  %s6 = ssub.s32 1, %s4
  %s7 = scalar_select 0, %s6, %s4
  loop: start=0, step=1, limit=4
  $region2: #{_lambda_.15} parent=0 // loop_pre_header
    _
  $region3: #{_lambda_.15} parent=0 // loop_header
    %s9 = sphi 0, %s13
    %p10 = scmp.ge.s32.totalorder %s9, 4
    %s19 = sphi 0, %s21
    %s22 = sphi 0, %s19
    %s23 = sphi 0, %s22
    %s39 = sphi 0, %s23
    %s43 = sphi 0, %s43
    %s45 = sphi 0, %s43
    %s46 = sphi 0, %s45
    %s60 = sphi 0, %s46
    %s64 = sphi 0, %s64
    %s66 = sphi 0, %s64
    %s67 = sphi 0, %s66
    %s81 = sphi 0, %s67
    %s87 = sphi 0, %s89
    %s90 = sphi 0, %s87
    %s91 = sphi 0, %s90
    %s107 = sphi 0, %s91
  $region4: #{_lambda_.15} parent=0 // loop_header_branch
    %12 = sbr.rel (%p10) target = $region8
  $region5: #{_lambda_.15} parent=0 // loop_body
    %s14 = ssub.s32 %s9, 1
    %s15 = ssub.s32 %s9, 2
    %s16 = sadd.s32 %s9, 1
    %s17 = ssub.s32 %s9, %s16
    %p18 = scmp.eq.s32.totalorder %s17, 0
    %s20 = sadd.s32 %s19, 1
    %s21 = scalar_select %p18, %s19, %s20
    %p24 = pneg %p18
    %p25 = scmp.eq.s32.totalorder %s9, 1
    %p26 = por %p24, %p25
    %p27 = scmp.ne.s32.totalorder %s19, %s22
    %p28 = scmp.eq.s32.totalorder %s9, 0
    %p29 = por %p27, %p28
    %p30 = scmp.ne.s32.totalorder %s19, %s22
    %p31 = scmp.eq.s32.totalorder %s14, 1
    %p32 = por %p30, %p31
    %p33 = scmp.ne.s32.totalorder %s22, %s23
    %p34 = scmp.eq.s32.totalorder %s14, 0
    %p35 = por %p33, %p34
    %p36 = scmp.ne.s32.totalorder %s22, %s23
    %p37 = scmp.eq.s32.totalorder %s15, 1
    %p38 = por %p36, %p37
    %p40 = scmp.ne.s32.totalorder %s23, %s39
    %p41 = scmp.eq.s32.totalorder %s15, 0
    %p42 = por %p40, %p41
    %s44 = sadd.s32 %s43, 1
    %p47 = scmp.eq.s32.totalorder %s9, 1
    %p48 = scmp.ne.s32.totalorder %s43, %s45
    %p49 = scmp.eq.s32.totalorder %s9, 0
    %p50 = por %p48, %p49
    %p51 = scmp.ne.s32.totalorder %s43, %s45
    %p52 = scmp.eq.s32.totalorder %s14, 1
    %p53 = por %p51, %p52
    %p54 = scmp.ne.s32.totalorder %s45, %s46
    %p55 = scmp.eq.s32.totalorder %s14, 0
    %p56 = por %p54, %p55
    %p57 = scmp.ne.s32.totalorder %s45, %s46
    %p58 = scmp.eq.s32.totalorder %s15, 1
    %p59 = por %p57, %p58
    %p61 = scmp.ne.s32.totalorder %s46, %s60
    %p62 = scmp.eq.s32.totalorder %s15, 0
    %p63 = por %p61, %p62
    %s65 = sadd.s32 %s64, 1
    %p68 = scmp.eq.s32.totalorder %s9, 1
    %p69 = scmp.ne.s32.totalorder %s64, %s66
    %p70 = scmp.eq.s32.totalorder %s9, 0
    %p71 = por %p69, %p70
    %p72 = scmp.ne.s32.totalorder %s64, %s66
    %p73 = scmp.eq.s32.totalorder %s14, 1
    %p74 = por %p72, %p73
    %p75 = scmp.ne.s32.totalorder %s66, %s67
    %p76 = scmp.eq.s32.totalorder %s14, 0
    %p77 = por %p75, %p76
    %p78 = scmp.ne.s32.totalorder %s66, %s67
    %p79 = scmp.eq.s32.totalorder %s15, 1
    %p80 = por %p78, %p79
    %p82 = scmp.ne.s32.totalorder %s67, %s81
    %p83 = scmp.eq.s32.totalorder %s15, 0
    %p84 = por %p82, %p83
    %s85 = ssub.s32 %s9, %s16
    %p86 = scmp.eq.s32.totalorder %s85, 0
    %s88 = sadd.s32 %s87, 1
    %s89 = scalar_select %p86, %s87, %s88
    %p92 = pneg %p86
    %p93 = scmp.eq.s32.totalorder %s9, 1
    %p94 = por %p92, %p93
    %p95 = scmp.ne.s32.totalorder %s87, %s90
    %p96 = scmp.eq.s32.totalorder %s9, 0
    %p97 = por %p95, %p96
    %p98 = scmp.ne.s32.totalorder %s87, %s90
    %p99 = scmp.eq.s32.totalorder %s14, 1
    %p100 = por %p98, %p99
    %p101 = scmp.ne.s32.totalorder %s90, %s91
    %p102 = scmp.eq.s32.totalorder %s14, 0
    %p103 = por %p101, %p102
    %p104 = scmp.ne.s32.totalorder %s90, %s91
    %p105 = scmp.eq.s32.totalorder %s15, 1
    %p106 = por %p104, %p105
    %p108 = scmp.ne.s32.totalorder %s91, %s107
    %p109 = scmp.eq.s32.totalorder %s15, 0
    %p110 = por %p108, %p109
    %p111 = scmp.le.s32.totalorder 1, %s9
    %p112 = scmp.lt.s32.totalorder %s9, 3
    %p113 = pnand %p111, %p112
    %p114 = pneg %p113
    // Predicated region
    $region9: #{_lambda_.15} parent=5 // pred_check
      _
    $region10: #{_lambda_.15} parent=5 // pred_check_branch
      %116 = sbr.rel (%p113) target = $region12
    $region11: #{_lambda_.15} parent=5 // pred_region
      %s117 = ssub.s32 %s9, 1
      // Predicated region
      $region13: #{_lambda_.15} parent=11 // pred_check
        %p118 = pneg %p56
      $region14: #{_lambda_.15} parent=11 // pred_check_branch
        %120 = sbr.rel (%p118) target = $region16
      $region15: #{_lambda_.15} parent=11 // pred_region
        _
      $region16: #{_lambda_.15} parent=11 // pred_fallthru
        _
      // Predicated region
      $region17: #{_lambda_.15} parent=11 // pred_check
        %p121 = pneg %p77
      $region18: #{_lambda_.15} parent=11 // pred_check_branch
        %123 = sbr.rel (%p121) target = $region20
      $region19: #{_lambda_.15} parent=11 // pred_region
        _
      $region20: #{_lambda_.15} parent=11 // pred_fallthru
        _
    $region12: #{_lambda_.15} parent=5 // pred_fallthru
      _
    %p124 = scmp.lt.s32.totalorder %s9, 2
    // Predicated region
    $region21: #{_lambda_.15} parent=5 // pred_check
      %p125 = pneg %p124
    $region22: #{_lambda_.15} parent=5 // pred_check_branch
      %127 = sbr.rel (%p125) target = $region24
    $region23: #{_lambda_.15} parent=5 // pred_region
      // Predicated region
      $region25: #{_lambda_.15} parent=23 // pred_check
        %p128 = pneg %p29
      $region26: #{_lambda_.15} parent=23 // pred_check_branch
        %130 = sbr.rel (%p128) target = $region28
      $region27: #{_lambda_.15} parent=23 // pred_region
        %s131 = smul.u32 32, %s9
        %p132 = scmp.lt.s32.totalorder %s131, 63
        %s133 = scalar_select %p132, %s131, 63
        %s134 = smul.addr %s133, 2
        %s135 = smul.addr %s134, 8
        %s136 = scalar_lea.vmem %s0, %s135
        %s137 = smul.u32 32, %s9
      $region28: #{_lambda_.15} parent=23 // pred_fallthru
        _
    $region24: #{_lambda_.15} parent=5 // pred_fallthru
      _
    %p138 = scmp.le.s32.totalorder 1, %s9
    %p139 = scmp.lt.s32.totalorder %s9, 3
    %p140 = pnand %p138, %p139
    %p141 = pneg %p140
    // Predicated region
    $region29: #{_lambda_.15} parent=5 // pred_check
      _
    $region30: #{_lambda_.15} parent=5 // pred_check_branch
      %143 = sbr.rel (%p140) target = $region32
    $region31: #{_lambda_.15} parent=5 // pred_region
      %s144 = ssub.s32 %s9, 1
      %s145 = smul.u32 32, %s14
      %p146 = scmp.lt.s32.totalorder %s145, 63
      %s147 = scalar_select %p146, %s145, 63
      %s148 = smul.addr %s147, 2
      %s149 = smul.addr %s148, 8
      %s150 = scalar_lea.vmem %s0, %s149
      %p151 = pneg %p35
      %p152 = pneg %p32
      %p153 = pneg %p56
      %p154 = pneg %p53
      %p155 = pneg %p77
      %p156 = pneg %p74
      %p157 = pneg %p103
      %p158 = pneg %p100
      %s159 = smul.u32 32, %s14
      %p160 = scmp.lt.s32.totalorder %s159, 63
      %s161 = scalar_select %p160, %s159, 63
      %s162 = smul.addr %s161, 8
      %s163 = scalar_lea.vmem %s3, %s162
      %s164 = smul.u32 32, %s14
      %p165 = scmp.lt.s32.totalorder %s164, 63
      %s166 = scalar_select %p165, %s164, 63
      %s167 = smul.addr %s166, 2
      %s168 = smul.addr %s167, 8
      %s169 = scalar_lea.vmem %s0, %s168
      %s170 = smul.u32 32, %s14
      %s171 = smul.u32 32, %s14
      %p172 = scmp.lt.s32.totalorder %s171, 63
      %s173 = scalar_select %p172, %s171, 63
      %s174 = smul.addr %s173, 8
      %s175 = scalar_lea.vmem %s3, %s174
      %s176 = smul.u32 32, %s14
      %v177 = vld [vmem:[%s169] sm:$0xff]
      %v178 = vld [vmem:[%s169 + $0x8] sm:$0xff]
      %v179 = vld [vmem:[%s169 + $0x10] sm:$0xff]
      %v180 = vld [vmem:[%s169 + $0x18] sm:$0xff]
      %v181 = vld [vmem:[%s169 + $0x20] sm:$0xff]
      %v182 = vld [vmem:[%s169 + $0x28] sm:$0xff]
      %v183 = vld [vmem:[%s169 + $0x30] sm:$0xff]
      %v184 = vld [vmem:[%s169 + $0x38] sm:$0xff]
      %v185 = vld [vmem:[%s169 + $0x40] sm:$0xff]
      %v186 = vld [vmem:[%s169 + $0x48] sm:$0xff]
      %v187 = vld [vmem:[%s169 + $0x50] sm:$0xff]
      %v188 = vld [vmem:[%s169 + $0x58] sm:$0xff]
      %v189 = vld [vmem:[%s169 + $0x60] sm:$0xff]
      %v190 = vld [vmem:[%s169 + $0x68] sm:$0xff]
      %v191 = vld [vmem:[%s169 + $0x70] sm:$0xff]
      %v192 = vld [vmem:[%s169 + $0x78] sm:$0xff]
      %v193 = vld [vmem:[%s169 + $0x80] sm:$0xff]
      %v194 = vld [vmem:[%s169 + $0x88] sm:$0xff]
      %v195 = vld [vmem:[%s169 + $0x90] sm:$0xff]
      %v196 = vld [vmem:[%s169 + $0x98] sm:$0xff]
      %v197 = vld [vmem:[%s169 + $0xa0] sm:$0xff]
      %v198 = vld [vmem:[%s169 + $0xa8] sm:$0xff]
      %v199 = vld [vmem:[%s169 + $0xb0] sm:$0xff]
      %v200 = vld [vmem:[%s169 + $0xb8] sm:$0xff]
      %v201 = vld [vmem:[%s169 + $0xc0] sm:$0xff]
      %v202 = vld [vmem:[%s169 + $0xc8] sm:$0xff]
      %v203 = vld [vmem:[%s169 + $0xd0] sm:$0xff]
      %v204 = vld [vmem:[%s169 + $0xd8] sm:$0xff]
      %v205 = vld [vmem:[%s169 + $0xe0] sm:$0xff]
      %v206 = vld [vmem:[%s169 + $0xe8] sm:$0xff]
      %v207 = vld [vmem:[%s169 + $0xf0] sm:$0xff]
      %v208 = vld [vmem:[%s169 + $0xf8] sm:$0xff]
      %v209 = vld [vmem:[%s169 + $0x100] sm:$0xff]
      %v210 = vld [vmem:[%s169 + $0x108] sm:$0xff]
      %v211 = vld [vmem:[%s169 + $0x110] sm:$0xff]
      %v212 = vld [vmem:[%s169 + $0x118] sm:$0xff]
      %v213 = vld [vmem:[%s169 + $0x120] sm:$0xff]
      %v214 = vld [vmem:[%s169 + $0x128] sm:$0xff]
      %v215 = vld [vmem:[%s169 + $0x130] sm:$0xff]
      %v216 = vld [vmem:[%s169 + $0x138] sm:$0xff]
      %v217 = vld [vmem:[%s169 + $0x140] sm:$0xff]
      %v218 = vld [vmem:[%s169 + $0x148] sm:$0xff]
      %v219 = vld [vmem:[%s169 + $0x150] sm:$0xff]
      %v220 = vld [vmem:[%s169 + $0x158] sm:$0xff]
      %v221 = vld [vmem:[%s169 + $0x160] sm:$0xff]
      %v222 = vld [vmem:[%s169 + $0x168] sm:$0xff]
      %v223 = vld [vmem:[%s169 + $0x170] sm:$0xff]
      %v224 = vld [vmem:[%s169 + $0x178] sm:$0xff]
      %v225 = vld [vmem:[%s169 + $0x180] sm:$0xff]
      %v226 = vld [vmem:[%s169 + $0x188] sm:$0xff]
      %v227 = vld [vmem:[%s169 + $0x190] sm:$0xff]
      %v228 = vld [vmem:[%s169 + $0x198] sm:$0xff]
      %v229 = vld [vmem:[%s169 + $0x1a0] sm:$0xff]
      %v230 = vld [vmem:[%s169 + $0x1a8] sm:$0xff]
      %v231 = vld [vmem:[%s169 + $0x1b0] sm:$0xff]
      %v232 = vld [vmem:[%s169 + $0x1b8] sm:$0xff]
      %v233 = vld [vmem:[%s169 + $0x1c0] sm:$0xff]
      %v234 = vld [vmem:[%s169 + $0x1c8] sm:$0xff]
      %v235 = vld [vmem:[%s169 + $0x1d0] sm:$0xff]
      %v236 = vld [vmem:[%s169 + $0x1d8] sm:$0xff]
      %v237 = vld [vmem:[%s169 + $0x1e0] sm:$0xff]
      %v238 = vld [vmem:[%s169 + $0x1e8] sm:$0xff]
      %v239 = vld [vmem:[%s169 + $0x1f0] sm:$0xff]
      %v240 = vld [vmem:[%s169 + $0x1f8] sm:$0xff]
      %v241 = vld [vmem:[%s1] sm:$0xff]
      %v242 = vld [vmem:[%s1 + $0x8] sm:$0xff]
      %v243 = vld [vmem:[%s1 + $0x10] sm:$0xff]
      %v244 = vld [vmem:[%s1 + $0x18] sm:$0xff]
      %v245 = vld [vmem:[%s1 + $0x20] sm:$0xff]
      %v246 = vld [vmem:[%s1 + $0x28] sm:$0xff]
      %v247 = vld [vmem:[%s1 + $0x30] sm:$0xff]
      %v248 = vld [vmem:[%s1 + $0x38] sm:$0xff]
      %v249 = vld [vmem:[%s1 + $0x40] sm:$0xff]
      %v250 = vld [vmem:[%s1 + $0x48] sm:$0xff]
      %v251 = vld [vmem:[%s1 + $0x50] sm:$0xff]
      %v252 = vld [vmem:[%s1 + $0x58] sm:$0xff]
      %v253 = vld [vmem:[%s1 + $0x60] sm:$0xff]
      %v254 = vld [vmem:[%s1 + $0x68] sm:$0xff]
      %v255 = vld [vmem:[%s1 + $0x70] sm:$0xff]
      %v256 = vld [vmem:[%s1 + $0x78] sm:$0xff]
      %v257 = vld [vmem:[%s1 + $0x80] sm:$0xff]
      %v258 = vld [vmem:[%s1 + $0x88] sm:$0xff]
      %v259 = vld [vmem:[%s2] sm:$0x1]
      %v261 = vlaneseq
      %v262 = vshrl.u32 %v261, 7
      %v263 = vsub.s32 0, %v262
      %v264 = vrot.slane %v259, %v263
      %vm266 = vcmask 130048
      %v268 = vsel %vm266, %v178, 0
      %v271 = vsel %vm266, %v180, 0
      %v274 = vsel %vm266, %v182, 0
      %v277 = vsel %vm266, %v184, 0
      %v280 = vsel %vm266, %v186, 0
      %v283 = vsel %vm266, %v188, 0
      %v286 = vsel %vm266, %v190, 0
      %v289 = vsel %vm266, %v192, 0
      %v292 = vsel %vm266, %v194, 0
      %v295 = vsel %vm266, %v196, 0
      %v298 = vsel %vm266, %v198, 0
      %v301 = vsel %vm266, %v200, 0
      %v304 = vsel %vm266, %v202, 0
      %v307 = vsel %vm266, %v204, 0
      %v310 = vsel %vm266, %v206, 0
      %v313 = vsel %vm266, %v208, 0
      %v316 = vsel %vm266, %v210, 0
      %v319 = vsel %vm266, %v212, 0
      %v322 = vsel %vm266, %v214, 0
      %v325 = vsel %vm266, %v216, 0
      %v328 = vsel %vm266, %v218, 0
      %v331 = vsel %vm266, %v220, 0
      %v334 = vsel %vm266, %v222, 0
      %v337 = vsel %vm266, %v224, 0
      %v340 = vsel %vm266, %v226, 0
      %v343 = vsel %vm266, %v228, 0
      %v346 = vsel %vm266, %v230, 0
      %v349 = vsel %vm266, %v232, 0
      %v352 = vsel %vm266, %v234, 0
      %v355 = vsel %vm266, %v236, 0
      %v358 = vsel %vm266, %v238, 0
      %v361 = vsel %vm266, %v240, 0
      %363 = vmatprep.subr.mxu0 0.0
      %364 = vmatpush1.msra.mxu0 %v256
      %365 = vmatprep.subr.mxu0 0.0
      %366 = vmatpush1.msra.mxu0 %v255
      %367 = vmatprep.subr.mxu0 0.0
      %368 = vmatpush1.msra.mxu0 %v254
      %369 = vmatprep.subr.mxu0 0.0
      %370 = vmatpush1.msra.mxu0 %v253
      %371 = vmatprep.subr.mxu0 0.0
      %372 = vmatpush1.msra.mxu0 %v252
      %373 = vmatprep.subr.mxu0 0.0
      %374 = vmatpush1.msra.mxu0 %v251
      %375 = vmatprep.subr.mxu0 0.0
      %376 = vmatpush1.msra.mxu0 %v250
      %377 = vmatprep.subr.mxu0 0.0
      %378 = vmatpush1.msra.mxu0 %v249
      %379 = vmatprep.subr.mxu0 0.0
      %380 = vmatpush1.msra.mxu0 %v248
      %381 = vmatprep.subr.mxu0 0.0
      %382 = vmatpush1.msra.mxu0 %v247
      %383 = vmatprep.subr.mxu0 0.0
      %384 = vmatpush1.msra.mxu0 %v246
      %385 = vmatprep.subr.mxu0 0.0
      %386 = vmatpush1.msra.mxu0 %v245
      %387 = vmatprep.subr.mxu0 0.0
      %388 = vmatpush1.msra.mxu0 %v244
      %389 = vmatprep.subr.mxu0 0.0
      %390 = vmatpush1.msra.mxu0 %v243
      %391 = vmatprep.subr.mxu0 0.0
      %392 = vmatpush1.msra.mxu0 %v242
      %393 = vmatprep.subr.mxu0 0.0
      %394 = vmatpush1.msra.mxu0 %v241
      %395 = vmatprep.subr.mxu0 0.0
      %396 = vmatpush2.msra.mxu0 0.0
      %397 = vmatprep.subr.mxu0 0.0
      %398 = vmatpush2.msra.mxu0 0.0
      %399 = vmatprep.subr.mxu0 0.0
      %400 = vmatpush2.msra.mxu0 0.0
      %401 = vmatprep.subr.mxu0 0.0
      %402 = vmatpush2.msra.mxu0 0.0
      %403 = vmatprep.subr.mxu0 0.0
      %404 = vmatpush2.msra.mxu0 0.0
      %405 = vmatprep.subr.mxu0 0.0
      %406 = vmatpush2.msra.mxu0 0.0
      %407 = vmatprep.subr.mxu0 0.0
      %408 = vmatpush2.msra.mxu0 0.0
      %409 = vmatprep.subr.mxu0 0.0
      %410 = vmatpush2.msra.mxu0 0.0
      %411 = vmatprep.subr.mxu0 0.0
      %412 = vmatpush2.msra.mxu0 0.0
      %413 = vmatprep.subr.mxu0 0.0
      %414 = vmatpush2.msra.mxu0 0.0
      %415 = vmatprep.subr.mxu0 0.0
      %416 = vmatpush2.msra.mxu0 0.0
      %417 = vmatprep.subr.mxu0 0.0
      %418 = vmatpush2.msra.mxu0 0.0
      %419 = vmatprep.subr.mxu0 0.0
      %420 = vmatpush2.msra.mxu0 0.0
      %421 = vmatprep.subr.mxu0 0.0
      %422 = vmatpush2.msra.mxu0 0.0
      %423 = vmatprep.subr.mxu0 0.0
      %424 = vmatpush2.msra.mxu0 %v258
      %425 = vmatprep.subr.mxu0 0.0
      %426 = vmatpush2.msra.mxu0 %v257
      %427 = vmatprep.mubr.f32.mxu0 %v268
      %428 = vmatmul.mubr.f32.gmra.mxu0 %v177
      %v429 = vpop.f32.mrf.mxu0
      %v430 = vadd.f32 %v264, %v429
      %v431 = vpop.f32.mrf.mxu0
      %432 = vmatprep.mubr.f32.mxu0 %v271
      %433 = vmatmul.mubr.f32.gmra.mxu0 %v179
      %v434 = vpop.f32.mrf.mxu0
      %v435 = vadd.f32 %v264, %v434
      %v436 = vpop.f32.mrf.mxu0
      %437 = vmatprep.mubr.f32.mxu0 %v274
      %438 = vmatmul.mubr.f32.gmra.mxu0 %v181
      %v439 = vpop.f32.mrf.mxu0
      %v440 = vadd.f32 %v264, %v439
      %v441 = vpop.f32.mrf.mxu0
      %442 = vmatprep.mubr.f32.mxu0 %v277
      %443 = vmatmul.mubr.f32.gmra.mxu0 %v183
      %v444 = vpop.f32.mrf.mxu0
      %v445 = vadd.f32 %v264, %v444
      %v446 = vpop.f32.mrf.mxu0
      %447 = vmatprep.mubr.f32.mxu0 %v280
      %448 = vmatmul.mubr.f32.gmra.mxu0 %v185
      %v449 = vpop.f32.mrf.mxu0
      %v450 = vadd.f32 %v264, %v449
      %v451 = vpop.f32.mrf.mxu0
      %452 = vmatprep.mubr.f32.mxu0 %v283
      %453 = vmatmul.mubr.f32.gmra.mxu0 %v187
      %v454 = vpop.f32.mrf.mxu0
      %v455 = vadd.f32 %v264, %v454
      %v456 = vpop.f32.mrf.mxu0
      %457 = vmatprep.mubr.f32.mxu0 %v286
      %458 = vmatmul.mubr.f32.gmra.mxu0 %v189
      %v459 = vpop.f32.mrf.mxu0
      %v460 = vadd.f32 %v264, %v459
      %v461 = vpop.f32.mrf.mxu0
      %462 = vmatprep.mubr.f32.mxu0 %v289
      %463 = vmatmul.mubr.f32.gmra.mxu0 %v191
      %v464 = vpop.f32.mrf.mxu0
      %v465 = vadd.f32 %v264, %v464
      %v466 = vpop.f32.mrf.mxu0
      %467 = vmatprep.mubr.f32.mxu0 %v292
      %468 = vmatmul.mubr.f32.gmra.mxu0 %v193
      %v469 = vpop.f32.mrf.mxu0
      %v470 = vadd.f32 %v264, %v469
      %v471 = vpop.f32.mrf.mxu0
      %472 = vmatprep.mubr.f32.mxu0 %v295
      %473 = vmatmul.mubr.f32.gmra.mxu0 %v195
      %v474 = vpop.f32.mrf.mxu0
      %v475 = vadd.f32 %v264, %v474
      %v476 = vpop.f32.mrf.mxu0
      %477 = vmatprep.mubr.f32.mxu0 %v298
      %478 = vmatmul.mubr.f32.gmra.mxu0 %v197
      %v479 = vpop.f32.mrf.mxu0
      %v480 = vadd.f32 %v264, %v479
      %v481 = vpop.f32.mrf.mxu0
      %482 = vmatprep.mubr.f32.mxu0 %v301
      %483 = vmatmul.mubr.f32.gmra.mxu0 %v199
      %v484 = vpop.f32.mrf.mxu0
      %v485 = vadd.f32 %v264, %v484
      %v486 = vpop.f32.mrf.mxu0
      %487 = vmatprep.mubr.f32.mxu0 %v304
      %488 = vmatmul.mubr.f32.gmra.mxu0 %v201
      %v489 = vpop.f32.mrf.mxu0
      %v490 = vadd.f32 %v264, %v489
      %v491 = vpop.f32.mrf.mxu0
      %492 = vmatprep.mubr.f32.mxu0 %v307
      %493 = vmatmul.mubr.f32.gmra.mxu0 %v203
      %v494 = vpop.f32.mrf.mxu0
      %v495 = vadd.f32 %v264, %v494
      %v496 = vpop.f32.mrf.mxu0
      %497 = vmatprep.mubr.f32.mxu0 %v310
      %498 = vmatmul.mubr.f32.gmra.mxu0 %v205
      %v499 = vpop.f32.mrf.mxu0
      %v500 = vadd.f32 %v264, %v499
      %v501 = vpop.f32.mrf.mxu0
      %502 = vmatprep.mubr.f32.mxu0 %v313
      %503 = vmatmul.mubr.f32.gmra.mxu0 %v207
      %v504 = vpop.f32.mrf.mxu0
      %v505 = vadd.f32 %v264, %v504
      %v506 = vpop.f32.mrf.mxu0
      %507 = vmatprep.mubr.f32.mxu0 %v316
      %508 = vmatmul.mubr.f32.gmra.mxu0 %v209
      %v509 = vpop.f32.mrf.mxu0
      %v510 = vadd.f32 %v264, %v509
      %v511 = vpop.f32.mrf.mxu0
      %512 = vmatprep.mubr.f32.mxu0 %v319
      %513 = vmatmul.mubr.f32.gmra.mxu0 %v211
      %v514 = vpop.f32.mrf.mxu0
      %v515 = vadd.f32 %v264, %v514
      %v516 = vpop.f32.mrf.mxu0
      %517 = vmatprep.mubr.f32.mxu0 %v322
      %518 = vmatmul.mubr.f32.gmra.mxu0 %v213
      %v519 = vpop.f32.mrf.mxu0
      %v520 = vadd.f32 %v264, %v519
      %v521 = vpop.f32.mrf.mxu0
      %522 = vmatprep.mubr.f32.mxu0 %v325
      %523 = vmatmul.mubr.f32.gmra.mxu0 %v215
      %v524 = vpop.f32.mrf.mxu0
      %v525 = vadd.f32 %v264, %v524
      %v526 = vpop.f32.mrf.mxu0
      %527 = vmatprep.mubr.f32.mxu0 %v328
      %528 = vmatmul.mubr.f32.gmra.mxu0 %v217
      %v529 = vpop.f32.mrf.mxu0
      %v530 = vadd.f32 %v264, %v529
      %v531 = vpop.f32.mrf.mxu0
      %532 = vmatprep.mubr.f32.mxu0 %v331
      %533 = vmatmul.mubr.f32.gmra.mxu0 %v219
      %v534 = vpop.f32.mrf.mxu0
      %v535 = vadd.f32 %v264, %v534
      %v536 = vpop.f32.mrf.mxu0
      %537 = vmatprep.mubr.f32.mxu0 %v334
      %538 = vmatmul.mubr.f32.gmra.mxu0 %v221
      %v539 = vpop.f32.mrf.mxu0
      %v540 = vadd.f32 %v264, %v539
      %v541 = vpop.f32.mrf.mxu0
      %542 = vmatprep.mubr.f32.mxu0 %v337
      %543 = vmatmul.mubr.f32.gmra.mxu0 %v223
      %v544 = vpop.f32.mrf.mxu0
      %v545 = vadd.f32 %v264, %v544
      %v546 = vpop.f32.mrf.mxu0
      %547 = vmatprep.mubr.f32.mxu0 %v340
      %548 = vmatmul.mubr.f32.gmra.mxu0 %v225
      %v549 = vpop.f32.mrf.mxu0
      %v550 = vadd.f32 %v264, %v549
      %v551 = vpop.f32.mrf.mxu0
      %552 = vmatprep.mubr.f32.mxu0 %v343
      %553 = vmatmul.mubr.f32.gmra.mxu0 %v227
      %v554 = vpop.f32.mrf.mxu0
      %v555 = vadd.f32 %v264, %v554
      %v556 = vpop.f32.mrf.mxu0
      %557 = vmatprep.mubr.f32.mxu0 %v346
      %558 = vmatmul.mubr.f32.gmra.mxu0 %v229
      %v559 = vpop.f32.mrf.mxu0
      %v560 = vadd.f32 %v264, %v559
      %v561 = vpop.f32.mrf.mxu0
      %562 = vmatprep.mubr.f32.mxu0 %v349
      %563 = vmatmul.mubr.f32.gmra.mxu0 %v231
      %v564 = vpop.f32.mrf.mxu0
      %v565 = vadd.f32 %v264, %v564
      %v566 = vpop.f32.mrf.mxu0
      %567 = vmatprep.mubr.f32.mxu0 %v352
      %568 = vmatmul.mubr.f32.gmra.mxu0 %v233
      %v569 = vpop.f32.mrf.mxu0
      %v570 = vadd.f32 %v264, %v569
      %v571 = vpop.f32.mrf.mxu0
      %572 = vmatprep.mubr.f32.mxu0 %v355
      %573 = vmatmul.mubr.f32.gmra.mxu0 %v235
      %v574 = vpop.f32.mrf.mxu0
      %v575 = vadd.f32 %v264, %v574
      %v576 = vpop.f32.mrf.mxu0
      %577 = vmatprep.mubr.f32.mxu0 %v358
      %578 = vmatmul.mubr.f32.gmra.mxu0 %v237
      %v579 = vpop.f32.mrf.mxu0
      %v580 = vadd.f32 %v264, %v579
      %v581 = vpop.f32.mrf.mxu0
      %582 = vmatprep.mubr.f32.mxu0 %v361
      %583 = vmatmul.mubr.f32.gmra.mxu0 %v239
      %v584 = vpop.f32.mrf.mxu0
      %v585 = vadd.f32 %v264, %v584
      %v586 = vpop.f32.mrf.mxu0
      %587 = vdwg.mxu0
      %vm588 = vcmp.gt.f32.partialorder %v430, 0.0
      %vm589 = vcmp.gt.f32.partialorder %v435, 0.0
      %vm590 = vcmp.gt.f32.partialorder %v440, 0.0
      %vm591 = vcmp.gt.f32.partialorder %v445, 0.0
      %vm592 = vcmp.gt.f32.partialorder %v450, 0.0
      %vm593 = vcmp.gt.f32.partialorder %v455, 0.0
      %vm594 = vcmp.gt.f32.partialorder %v460, 0.0
      %vm595 = vcmp.gt.f32.partialorder %v465, 0.0
      %vm596 = vcmp.gt.f32.partialorder %v470, 0.0
      %vm597 = vcmp.gt.f32.partialorder %v475, 0.0
      %vm598 = vcmp.gt.f32.partialorder %v480, 0.0
      %vm599 = vcmp.gt.f32.partialorder %v485, 0.0
      %vm600 = vcmp.gt.f32.partialorder %v490, 0.0
      %vm601 = vcmp.gt.f32.partialorder %v495, 0.0
      %vm602 = vcmp.gt.f32.partialorder %v500, 0.0
      %vm603 = vcmp.gt.f32.partialorder %v505, 0.0
      %vm604 = vcmp.gt.f32.partialorder %v510, 0.0
      %vm605 = vcmp.gt.f32.partialorder %v515, 0.0
      %vm606 = vcmp.gt.f32.partialorder %v520, 0.0
      %vm607 = vcmp.gt.f32.partialorder %v525, 0.0
      %vm608 = vcmp.gt.f32.partialorder %v530, 0.0
      %vm609 = vcmp.gt.f32.partialorder %v535, 0.0
      %vm610 = vcmp.gt.f32.partialorder %v540, 0.0
      %vm611 = vcmp.gt.f32.partialorder %v545, 0.0
      %vm612 = vcmp.gt.f32.partialorder %v550, 0.0
      %vm613 = vcmp.gt.f32.partialorder %v555, 0.0
      %vm614 = vcmp.gt.f32.partialorder %v560, 0.0
      %vm615 = vcmp.gt.f32.partialorder %v565, 0.0
      %vm616 = vcmp.gt.f32.partialorder %v570, 0.0
      %vm617 = vcmp.gt.f32.partialorder %v575, 0.0
      %vm618 = vcmp.gt.f32.partialorder %v580, 0.0
      %vm619 = vcmp.gt.f32.partialorder %v585, 0.0
      %v620 = vmul.f32 %v430, 0.01
      %v621 = vmul.f32 %v435, 0.01
      %v622 = vmul.f32 %v440, 0.01
      %v623 = vmul.f32 %v445, 0.01
      %v624 = vmul.f32 %v450, 0.01
      %v625 = vmul.f32 %v455, 0.01
      %v626 = vmul.f32 %v460, 0.01
      %v627 = vmul.f32 %v465, 0.01
      %v628 = vmul.f32 %v470, 0.01
      %v629 = vmul.f32 %v475, 0.01
      %v630 = vmul.f32 %v480, 0.01
      %v631 = vmul.f32 %v485, 0.01
      %v632 = vmul.f32 %v490, 0.01
      %v633 = vmul.f32 %v495, 0.01
      %v634 = vmul.f32 %v500, 0.01
      %v635 = vmul.f32 %v505, 0.01
      %v636 = vmul.f32 %v510, 0.01
      %v637 = vmul.f32 %v515, 0.01
      %v638 = vmul.f32 %v520, 0.01
      %v639 = vmul.f32 %v525, 0.01
      %v640 = vmul.f32 %v530, 0.01
      %v641 = vmul.f32 %v535, 0.01
      %v642 = vmul.f32 %v540, 0.01
      %v643 = vmul.f32 %v545, 0.01
      %v644 = vmul.f32 %v550, 0.01
      %v645 = vmul.f32 %v555, 0.01
      %v646 = vmul.f32 %v560, 0.01
      %v647 = vmul.f32 %v565, 0.01
      %v648 = vmul.f32 %v570, 0.01
      %v649 = vmul.f32 %v575, 0.01
      %v650 = vmul.f32 %v580, 0.01
      %v651 = vmul.f32 %v585, 0.01
      %v652 = vsel %vm588, %v430, %v620
      %v653 = vsel %vm589, %v435, %v621
      %v654 = vsel %vm590, %v440, %v622
      %v655 = vsel %vm591, %v445, %v623
      %v656 = vsel %vm592, %v450, %v624
      %v657 = vsel %vm593, %v455, %v625
      %v658 = vsel %vm594, %v460, %v626
      %v659 = vsel %vm595, %v465, %v627
      %v660 = vsel %vm596, %v470, %v628
      %v661 = vsel %vm597, %v475, %v629
      %v662 = vsel %vm598, %v480, %v630
      %v663 = vsel %vm599, %v485, %v631
      %v664 = vsel %vm600, %v490, %v632
      %v665 = vsel %vm601, %v495, %v633
      %v666 = vsel %vm602, %v500, %v634
      %v667 = vsel %vm603, %v505, %v635
      %v668 = vsel %vm604, %v510, %v636
      %v669 = vsel %vm605, %v515, %v637
      %v670 = vsel %vm606, %v520, %v638
      %v671 = vsel %vm607, %v525, %v639
      %v672 = vsel %vm608, %v530, %v640
      %v673 = vsel %vm609, %v535, %v641
      %v674 = vsel %vm610, %v540, %v642
      %v675 = vsel %vm611, %v545, %v643
      %v676 = vsel %vm612, %v550, %v644
      %v677 = vsel %vm613, %v555, %v645
      %v678 = vsel %vm614, %v560, %v646
      %v679 = vsel %vm615, %v565, %v647
      %v680 = vsel %vm616, %v570, %v648
      %v681 = vsel %vm617, %v575, %v649
      %v682 = vsel %vm618, %v580, %v650
      %v683 = vsel %vm619, %v585, %v651
      %684 = vst.msk [vmem:[%s175] sm:$0xff] %vm266, %v652
      %685 = vst.msk [vmem:[%s175 + $0x8] sm:$0xff] %vm266, %v653
      %686 = vst.msk [vmem:[%s175 + $0x10] sm:$0xff] %vm266, %v654
      %687 = vst.msk [vmem:[%s175 + $0x18] sm:$0xff] %vm266, %v655
      %688 = vst.msk [vmem:[%s175 + $0x20] sm:$0xff] %vm266, %v656
      %689 = vst.msk [vmem:[%s175 + $0x28] sm:$0xff] %vm266, %v657
      %690 = vst.msk [vmem:[%s175 + $0x30] sm:$0xff] %vm266, %v658
      %691 = vst.msk [vmem:[%s175 + $0x38] sm:$0xff] %vm266, %v659
      %692 = vst.msk [vmem:[%s175 + $0x40] sm:$0xff] %vm266, %v660
      %693 = vst.msk [vmem:[%s175 + $0x48] sm:$0xff] %vm266, %v661
      %694 = vst.msk [vmem:[%s175 + $0x50] sm:$0xff] %vm266, %v662
      %695 = vst.msk [vmem:[%s175 + $0x58] sm:$0xff] %vm266, %v663
      %696 = vst.msk [vmem:[%s175 + $0x60] sm:$0xff] %vm266, %v664
      %697 = vst.msk [vmem:[%s175 + $0x68] sm:$0xff] %vm266, %v665
      %698 = vst.msk [vmem:[%s175 + $0x70] sm:$0xff] %vm266, %v666
      %699 = vst.msk [vmem:[%s175 + $0x78] sm:$0xff] %vm266, %v667
      %700 = vst.msk [vmem:[%s175 + $0x80] sm:$0xff] %vm266, %v668
      %701 = vst.msk [vmem:[%s175 + $0x88] sm:$0xff] %vm266, %v669
      %702 = vst.msk [vmem:[%s175 + $0x90] sm:$0xff] %vm266, %v670
      %703 = vst.msk [vmem:[%s175 + $0x98] sm:$0xff] %vm266, %v671
      %704 = vst.msk [vmem:[%s175 + $0xa0] sm:$0xff] %vm266, %v672
      %705 = vst.msk [vmem:[%s175 + $0xa8] sm:$0xff] %vm266, %v673
      %706 = vst.msk [vmem:[%s175 + $0xb0] sm:$0xff] %vm266, %v674
      %707 = vst.msk [vmem:[%s175 + $0xb8] sm:$0xff] %vm266, %v675
      %708 = vst.msk [vmem:[%s175 + $0xc0] sm:$0xff] %vm266, %v676
      %709 = vst.msk [vmem:[%s175 + $0xc8] sm:$0xff] %vm266, %v677
      %710 = vst.msk [vmem:[%s175 + $0xd0] sm:$0xff] %vm266, %v678
      %711 = vst.msk [vmem:[%s175 + $0xd8] sm:$0xff] %vm266, %v679
      %712 = vst.msk [vmem:[%s175 + $0xe0] sm:$0xff] %vm266, %v680
      %713 = vst.msk [vmem:[%s175 + $0xe8] sm:$0xff] %vm266, %v681
      %714 = vst.msk [vmem:[%s175 + $0xf0] sm:$0xff] %vm266, %v682
      %715 = vst.msk [vmem:[%s175 + $0xf8] sm:$0xff] %vm266, %v683
      %s716 = smul.u32 32, %s14
      %p717 = scmp.lt.s32.totalorder %s716, 63
      %s718 = scalar_select %p717, %s716, 63
      %s719 = smul.addr %s718, 8
      %s720 = scalar_lea.vmem %s3, %s719
      // Predicated region
      $region33: #{_lambda_.15} parent=31 // pred_check
        %p721 = pneg %p100
      $region34: #{_lambda_.15} parent=31 // pred_check_branch
        %723 = sbr.rel (%p721) target = $region36
      $region35: #{_lambda_.15} parent=31 // pred_region
        %s724 = smul.u32 32, %s14
      $region36: #{_lambda_.15} parent=31 // pred_fallthru
        _
    $region32: #{_lambda_.15} parent=5 // pred_fallthru
      _
    %p725 = scmp.le.s32.totalorder 2, %s9
    // Predicated region
    $region37: #{_lambda_.15} parent=5 // pred_check
      %p726 = pneg %p725
    $region38: #{_lambda_.15} parent=5 // pred_check_branch
      %728 = sbr.rel (%p726) target = $region40
    $region39: #{_lambda_.15} parent=5 // pred_region
      %s729 = ssub.s32 %s9, 2
      // Predicated region
      $region41: #{_lambda_.15} parent=39 // pred_check
        %p730 = pneg %p106
      $region42: #{_lambda_.15} parent=39 // pred_check_branch
        %732 = sbr.rel (%p730) target = $region44
      $region43: #{_lambda_.15} parent=39 // pred_region
        %s733 = smul.u32 32, %s15
        %p734 = scmp.lt.s32.totalorder %s733, 63
        %s735 = scalar_select %p734, %s733, 63
        %s736 = smul.addr %s735, 8
        %s737 = scalar_lea.vmem %s3, %s736
      $region44: #{_lambda_.15} parent=39 // pred_fallthru
        _
    $region40: #{_lambda_.15} parent=5 // pred_fallthru
      _
  $region6: #{_lambda_.15} parent=0 // loop_footer
    %s13 = sadd.s32 1, %s9
  $region7: #{_lambda_.15} parent=0 // loop_footer_branch
    %8 = sbr.rel target = $region3
  $region8: #{_lambda_.15} parent=0 // loop_exit
    _

// kernel: _lambda_.16
$region0: #{_lambda_.16}
  #allocation0 [shape = 'u32[]', space=smem, size = 0x4, offset = 0x4, fixed_abs, tag = 'smem constant byte address 0x4 - core index']
  #allocation1 [shape = 'u32[144,128]{1,0:T(1,128)}', space=vmem, size = 0x12000, scoped, tag = 'internal scratch']
  %s0 = inlined_call_operand.vmem [shape: f32[128,144], index: 0, kind: input, shape index: {}]
  %s1 = inlined_call_operand.vmem [shape: f32[144,32], index: 1, kind: input, shape index: {}]
  %s2 = inlined_call_operand.vmem [shape: f32[1,32], index: 2, kind: input, shape index: {}]
  %s3 = inlined_call_operand.vmem [shape: f32[128,32], index: 3, kind: output, shape index: {}]
  %s4 = sld [smem:[#allocation0]]
  $region22: #{_lambda_.16} parent=0
    _
  %s6 = ssub.s32 1, %s4
  %s7 = scalar_select 0, %s6, %s4
  // Predicated region
  $region2: #{_lambda_.16} parent=0 // pred_check
    _
  $region3: #{_lambda_.16} parent=0 // pred_check_branch
    %9 = sbr.rel (0) target = $region5
  $region4: #{_lambda_.16} parent=0 // pred_region
    _
  $region5: #{_lambda_.16} parent=0 // pred_fallthru
    _
  // Predicated region
  $region6: #{_lambda_.16} parent=0 // pred_check
    _
  $region7: #{_lambda_.16} parent=0 // pred_check_branch
    %11 = sbr.rel (0) target = $region9
  $region8: #{_lambda_.16} parent=0 // pred_region
    _
  $region9: #{_lambda_.16} parent=0 // pred_fallthru
    _
  // Predicated region
  $region10: #{_lambda_.16} parent=0 // pred_check
    _
  $region11: #{_lambda_.16} parent=0 // pred_check_branch
    %13 = sbr.rel (0) target = $region13
  $region12: #{_lambda_.16} parent=0 // pred_region
    _
  $region13: #{_lambda_.16} parent=0 // pred_fallthru
    _
  %v14 = vld [vmem:[%s0] sm:$0xff]
  %v15 = vld [vmem:[%s0 + $0x8] sm:$0xff]
  %v16 = vld [vmem:[%s0 + $0x10] sm:$0xff]
  %v17 = vld [vmem:[%s0 + $0x18] sm:$0xff]
  %v18 = vld [vmem:[%s0 + $0x20] sm:$0xff]
  %v19 = vld [vmem:[%s0 + $0x28] sm:$0xff]
  %v20 = vld [vmem:[%s0 + $0x30] sm:$0xff]
  %v21 = vld [vmem:[%s0 + $0x38] sm:$0xff]
  %v22 = vld [vmem:[%s0 + $0x40] sm:$0xff]
  %v23 = vld [vmem:[%s0 + $0x48] sm:$0xff]
  %v24 = vld [vmem:[%s0 + $0x50] sm:$0xff]
  %v25 = vld [vmem:[%s0 + $0x58] sm:$0xff]
  %v26 = vld [vmem:[%s0 + $0x60] sm:$0xff]
  %v27 = vld [vmem:[%s0 + $0x68] sm:$0xff]
  %v28 = vld [vmem:[%s0 + $0x70] sm:$0xff]
  %v29 = vld [vmem:[%s0 + $0x78] sm:$0xff]
  %v30 = vld [vmem:[%s0 + $0x80] sm:$0xff]
  %v31 = vld [vmem:[%s0 + $0x88] sm:$0xff]
  %v32 = vld [vmem:[%s0 + $0x90] sm:$0xff]
  %v33 = vld [vmem:[%s0 + $0x98] sm:$0xff]
  %v34 = vld [vmem:[%s0 + $0xa0] sm:$0xff]
  %v35 = vld [vmem:[%s0 + $0xa8] sm:$0xff]
  %v36 = vld [vmem:[%s0 + $0xb0] sm:$0xff]
  %v37 = vld [vmem:[%s0 + $0xb8] sm:$0xff]
  %v38 = vld [vmem:[%s0 + $0xc0] sm:$0xff]
  %v39 = vld [vmem:[%s0 + $0xc8] sm:$0xff]
  %v40 = vld [vmem:[%s0 + $0xd0] sm:$0xff]
  %v41 = vld [vmem:[%s0 + $0xd8] sm:$0xff]
  %v42 = vld [vmem:[%s0 + $0xe0] sm:$0xff]
  %v43 = vld [vmem:[%s0 + $0xe8] sm:$0xff]
  %v44 = vld [vmem:[%s0 + $0xf0] sm:$0xff]
  %v45 = vld [vmem:[%s0 + $0xf8] sm:$0xff]
  %v46 = vld [vmem:[%s1] sm:$0xff]
  %v47 = vld [vmem:[%s1 + $0x8] sm:$0xff]
  %v48 = vld [vmem:[%s1 + $0x10] sm:$0xff]
  %v49 = vld [vmem:[%s1 + $0x18] sm:$0xff]
  %v50 = vld [vmem:[%s1 + $0x20] sm:$0xff]
  %v51 = vld [vmem:[%s1 + $0x28] sm:$0xff]
  %v52 = vld [vmem:[%s1 + $0x30] sm:$0xff]
  %v53 = vld [vmem:[%s1 + $0x38] sm:$0xff]
  %v54 = vld [vmem:[%s1 + $0x40] sm:$0xff]
  %v55 = vld [vmem:[%s1 + $0x48] sm:$0xff]
  %v56 = vld [vmem:[%s1 + $0x50] sm:$0xff]
  %v57 = vld [vmem:[%s1 + $0x58] sm:$0xff]
  %v58 = vld [vmem:[%s1 + $0x60] sm:$0xff]
  %v59 = vld [vmem:[%s1 + $0x68] sm:$0xff]
  %v60 = vld [vmem:[%s1 + $0x70] sm:$0xff]
  %v61 = vld [vmem:[%s1 + $0x78] sm:$0xff]
  %v62 = vld [vmem:[%s1 + $0x80] sm:$0xff]
  %v63 = vld [vmem:[%s1 + $0x88] sm:$0xff]
  %v64 = vld [vmem:[%s2] sm:$0x1]
  %v66 = vlaneseq
  %v67 = vshrl.u32 %v66, 7
  %v68 = vsub.s32 0, %v67
  %v69 = vrot.slane %v64, %v68
  %vm71 = vcmask 130048
  %v73 = vsel %vm71, %v15, 0
  %v76 = vsel %vm71, %v17, 0
  %v79 = vsel %vm71, %v19, 0
  %v82 = vsel %vm71, %v21, 0
  %v85 = vsel %vm71, %v23, 0
  %v88 = vsel %vm71, %v25, 0
  %v91 = vsel %vm71, %v27, 0
  %v94 = vsel %vm71, %v29, 0
  %v97 = vsel %vm71, %v31, 0
  %v100 = vsel %vm71, %v33, 0
  %v103 = vsel %vm71, %v35, 0
  %v106 = vsel %vm71, %v37, 0
  %v109 = vsel %vm71, %v39, 0
  %v112 = vsel %vm71, %v41, 0
  %v115 = vsel %vm71, %v43, 0
  %v118 = vsel %vm71, %v45, 0
  %120 = vmatprep.subr.mxu0 0.0
  %121 = vmatpush1.msra.mxu0 %v61
  %122 = vmatprep.subr.mxu0 0.0
  %123 = vmatpush1.msra.mxu0 %v60
  %124 = vmatprep.subr.mxu0 0.0
  %125 = vmatpush1.msra.mxu0 %v59
  %126 = vmatprep.subr.mxu0 0.0
  %127 = vmatpush1.msra.mxu0 %v58
  %128 = vmatprep.subr.mxu0 0.0
  %129 = vmatpush1.msra.mxu0 %v57
  %130 = vmatprep.subr.mxu0 0.0
  %131 = vmatpush1.msra.mxu0 %v56
  %132 = vmatprep.subr.mxu0 0.0
  %133 = vmatpush1.msra.mxu0 %v55
  %134 = vmatprep.subr.mxu0 0.0
  %135 = vmatpush1.msra.mxu0 %v54
  %136 = vmatprep.subr.mxu0 0.0
  %137 = vmatpush1.msra.mxu0 %v53
  %138 = vmatprep.subr.mxu0 0.0
  %139 = vmatpush1.msra.mxu0 %v52
  %140 = vmatprep.subr.mxu0 0.0
  %141 = vmatpush1.msra.mxu0 %v51
  %142 = vmatprep.subr.mxu0 0.0
  %143 = vmatpush1.msra.mxu0 %v50
  %144 = vmatprep.subr.mxu0 0.0
  %145 = vmatpush1.msra.mxu0 %v49
  %146 = vmatprep.subr.mxu0 0.0
  %147 = vmatpush1.msra.mxu0 %v48
  %148 = vmatprep.subr.mxu0 0.0
  %149 = vmatpush1.msra.mxu0 %v47
  %150 = vmatprep.subr.mxu0 0.0
  %151 = vmatpush1.msra.mxu0 %v46
  %152 = vmatprep.subr.mxu0 0.0
  %153 = vmatpush2.msra.mxu0 0.0
  %154 = vmatprep.subr.mxu0 0.0
  %155 = vmatpush2.msra.mxu0 0.0
  %156 = vmatprep.subr.mxu0 0.0
  %157 = vmatpush2.msra.mxu0 0.0
  %158 = vmatprep.subr.mxu0 0.0
  %159 = vmatpush2.msra.mxu0 0.0
  %160 = vmatprep.subr.mxu0 0.0
  %161 = vmatpush2.msra.mxu0 0.0
  %162 = vmatprep.subr.mxu0 0.0
  %163 = vmatpush2.msra.mxu0 0.0
  %164 = vmatprep.subr.mxu0 0.0
  %165 = vmatpush2.msra.mxu0 0.0
  %166 = vmatprep.subr.mxu0 0.0
  %167 = vmatpush2.msra.mxu0 0.0
  %168 = vmatprep.subr.mxu0 0.0
  %169 = vmatpush2.msra.mxu0 0.0
  %170 = vmatprep.subr.mxu0 0.0
  %171 = vmatpush2.msra.mxu0 0.0
  %172 = vmatprep.subr.mxu0 0.0
  %173 = vmatpush2.msra.mxu0 0.0
  %174 = vmatprep.subr.mxu0 0.0
  %175 = vmatpush2.msra.mxu0 0.0
  %176 = vmatprep.subr.mxu0 0.0
  %177 = vmatpush2.msra.mxu0 0.0
  %178 = vmatprep.subr.mxu0 0.0
  %179 = vmatpush2.msra.mxu0 0.0
  %180 = vmatprep.subr.mxu0 0.0
  %181 = vmatpush2.msra.mxu0 %v63
  %182 = vmatprep.subr.mxu0 0.0
  %183 = vmatpush2.msra.mxu0 %v62
  %184 = vmatprep.mubr.f32.mxu0 %v73
  %185 = vmatmul.mubr.f32.gmra.mxu0 %v14
  %v186 = vpop.f32.mrf.mxu0
  %v187 = vadd.f32 %v69, %v186
  %v188 = vpop.f32.mrf.mxu0
  %189 = vmatprep.mubr.f32.mxu0 %v76
  %190 = vmatmul.mubr.f32.gmra.mxu0 %v16
  %v191 = vpop.f32.mrf.mxu0
  %v192 = vadd.f32 %v69, %v191
  %v193 = vpop.f32.mrf.mxu0
  %194 = vmatprep.mubr.f32.mxu0 %v79
  %195 = vmatmul.mubr.f32.gmra.mxu0 %v18
  %v196 = vpop.f32.mrf.mxu0
  %v197 = vadd.f32 %v69, %v196
  %v198 = vpop.f32.mrf.mxu0
  %199 = vmatprep.mubr.f32.mxu0 %v82
  %200 = vmatmul.mubr.f32.gmra.mxu0 %v20
  %v201 = vpop.f32.mrf.mxu0
  %v202 = vadd.f32 %v69, %v201
  %v203 = vpop.f32.mrf.mxu0
  %204 = vmatprep.mubr.f32.mxu0 %v85
  %205 = vmatmul.mubr.f32.gmra.mxu0 %v22
  %v206 = vpop.f32.mrf.mxu0
  %v207 = vadd.f32 %v69, %v206
  %v208 = vpop.f32.mrf.mxu0
  %209 = vmatprep.mubr.f32.mxu0 %v88
  %210 = vmatmul.mubr.f32.gmra.mxu0 %v24
  %v211 = vpop.f32.mrf.mxu0
  %v212 = vadd.f32 %v69, %v211
  %v213 = vpop.f32.mrf.mxu0
  %214 = vmatprep.mubr.f32.mxu0 %v91
  %215 = vmatmul.mubr.f32.gmra.mxu0 %v26
  %v216 = vpop.f32.mrf.mxu0
  %v217 = vadd.f32 %v69, %v216
  %v218 = vpop.f32.mrf.mxu0
  %219 = vmatprep.mubr.f32.mxu0 %v94
  %220 = vmatmul.mubr.f32.gmra.mxu0 %v28
  %v221 = vpop.f32.mrf.mxu0
  %v222 = vadd.f32 %v69, %v221
  %v223 = vpop.f32.mrf.mxu0
  %224 = vmatprep.mubr.f32.mxu0 %v97
  %225 = vmatmul.mubr.f32.gmra.mxu0 %v30
  %v226 = vpop.f32.mrf.mxu0
  %v227 = vadd.f32 %v69, %v226
  %v228 = vpop.f32.mrf.mxu0
  %229 = vmatprep.mubr.f32.mxu0 %v100
  %230 = vmatmul.mubr.f32.gmra.mxu0 %v32
  %v231 = vpop.f32.mrf.mxu0
  %v232 = vadd.f32 %v69, %v231
  %v233 = vpop.f32.mrf.mxu0
  %234 = vmatprep.mubr.f32.mxu0 %v103
  %235 = vmatmul.mubr.f32.gmra.mxu0 %v34
  %v236 = vpop.f32.mrf.mxu0
  %v237 = vadd.f32 %v69, %v236
  %v238 = vpop.f32.mrf.mxu0
  %239 = vmatprep.mubr.f32.mxu0 %v106
  %240 = vmatmul.mubr.f32.gmra.mxu0 %v36
  %v241 = vpop.f32.mrf.mxu0
  %v242 = vadd.f32 %v69, %v241
  %v243 = vpop.f32.mrf.mxu0
  %244 = vmatprep.mubr.f32.mxu0 %v109
  %245 = vmatmul.mubr.f32.gmra.mxu0 %v38
  %v246 = vpop.f32.mrf.mxu0
  %v247 = vadd.f32 %v69, %v246
  %v248 = vpop.f32.mrf.mxu0
  %249 = vmatprep.mubr.f32.mxu0 %v112
  %250 = vmatmul.mubr.f32.gmra.mxu0 %v40
  %v251 = vpop.f32.mrf.mxu0
  %v252 = vadd.f32 %v69, %v251
  %v253 = vpop.f32.mrf.mxu0
  %254 = vmatprep.mubr.f32.mxu0 %v115
  %255 = vmatmul.mubr.f32.gmra.mxu0 %v42
  %v256 = vpop.f32.mrf.mxu0
  %v257 = vadd.f32 %v69, %v256
  %v258 = vpop.f32.mrf.mxu0
  %259 = vmatprep.mubr.f32.mxu0 %v118
  %260 = vmatmul.mubr.f32.gmra.mxu0 %v44
  %v261 = vpop.f32.mrf.mxu0
  %v262 = vadd.f32 %v69, %v261
  %v263 = vpop.f32.mrf.mxu0
  %264 = vdwg.mxu0
  %vm265 = vcmp.gt.f32.partialorder %v187, 0.0
  %vm266 = vcmp.gt.f32.partialorder %v192, 0.0
  %vm267 = vcmp.gt.f32.partialorder %v197, 0.0
  %vm268 = vcmp.gt.f32.partialorder %v202, 0.0
  %vm269 = vcmp.gt.f32.partialorder %v207, 0.0
  %vm270 = vcmp.gt.f32.partialorder %v212, 0.0
  %vm271 = vcmp.gt.f32.partialorder %v217, 0.0
  %vm272 = vcmp.gt.f32.partialorder %v222, 0.0
  %vm273 = vcmp.gt.f32.partialorder %v227, 0.0
  %vm274 = vcmp.gt.f32.partialorder %v232, 0.0
  %vm275 = vcmp.gt.f32.partialorder %v237, 0.0
  %vm276 = vcmp.gt.f32.partialorder %v242, 0.0
  %vm277 = vcmp.gt.f32.partialorder %v247, 0.0
  %vm278 = vcmp.gt.f32.partialorder %v252, 0.0
  %vm279 = vcmp.gt.f32.partialorder %v257, 0.0
  %vm280 = vcmp.gt.f32.partialorder %v262, 0.0
  %v281 = vmul.f32 %v187, 0.01
  %v282 = vmul.f32 %v192, 0.01
  %v283 = vmul.f32 %v197, 0.01
  %v284 = vmul.f32 %v202, 0.01
  %v285 = vmul.f32 %v207, 0.01
  %v286 = vmul.f32 %v212, 0.01
  %v287 = vmul.f32 %v217, 0.01
  %v288 = vmul.f32 %v222, 0.01
  %v289 = vmul.f32 %v227, 0.01
  %v290 = vmul.f32 %v232, 0.01
  %v291 = vmul.f32 %v237, 0.01
  %v292 = vmul.f32 %v242, 0.01
  %v293 = vmul.f32 %v247, 0.01
  %v294 = vmul.f32 %v252, 0.01
  %v295 = vmul.f32 %v257, 0.01
  %v296 = vmul.f32 %v262, 0.01
  %v297 = vsel %vm265, %v187, %v281
  %v298 = vsel %vm266, %v192, %v282
  %v299 = vsel %vm267, %v197, %v283
  %v300 = vsel %vm268, %v202, %v284
  %v301 = vsel %vm269, %v207, %v285
  %v302 = vsel %vm270, %v212, %v286
  %v303 = vsel %vm271, %v217, %v287
  %v304 = vsel %vm272, %v222, %v288
  %v305 = vsel %vm273, %v227, %v289
  %v306 = vsel %vm274, %v232, %v290
  %v307 = vsel %vm275, %v237, %v291
  %v308 = vsel %vm276, %v242, %v292
  %v309 = vsel %vm277, %v247, %v293
  %v310 = vsel %vm278, %v252, %v294
  %v311 = vsel %vm279, %v257, %v295
  %v312 = vsel %vm280, %v262, %v296
  %vm313 = vcmask 261120
  %314 = vst.msk [vmem:[%s3] sm:$0xff] %vm313, %v297
  %315 = vst.msk [vmem:[%s3 + $0x8] sm:$0xff] %vm313, %v298
  %316 = vst.msk [vmem:[%s3 + $0x10] sm:$0xff] %vm313, %v299
  %317 = vst.msk [vmem:[%s3 + $0x18] sm:$0xff] %vm313, %v300
  %318 = vst.msk [vmem:[%s3 + $0x20] sm:$0xff] %vm313, %v301
  %319 = vst.msk [vmem:[%s3 + $0x28] sm:$0xff] %vm313, %v302
  %320 = vst.msk [vmem:[%s3 + $0x30] sm:$0xff] %vm313, %v303
  %321 = vst.msk [vmem:[%s3 + $0x38] sm:$0xff] %vm313, %v304
  %322 = vst.msk [vmem:[%s3 + $0x40] sm:$0xff] %vm313, %v305
  %323 = vst.msk [vmem:[%s3 + $0x48] sm:$0xff] %vm313, %v306
  %324 = vst.msk [vmem:[%s3 + $0x50] sm:$0xff] %vm313, %v307
  %325 = vst.msk [vmem:[%s3 + $0x58] sm:$0xff] %vm313, %v308
  %326 = vst.msk [vmem:[%s3 + $0x60] sm:$0xff] %vm313, %v309
  %327 = vst.msk [vmem:[%s3 + $0x68] sm:$0xff] %vm313, %v310
  %328 = vst.msk [vmem:[%s3 + $0x70] sm:$0xff] %vm313, %v311
  %329 = vst.msk [vmem:[%s3 + $0x78] sm:$0xff] %vm313, %v312
  // Predicated region
  $region14: #{_lambda_.16} parent=0 // pred_check
    _
  $region15: #{_lambda_.16} parent=0 // pred_check_branch
    %331 = sbr.rel (0) target = $region17
  $region16: #{_lambda_.16} parent=0 // pred_region
    _
  $region17: #{_lambda_.16} parent=0 // pred_fallthru
    _
  // Predicated region
  $region18: #{_lambda_.16} parent=0 // pred_check
    _
  $region19: #{_lambda_.16} parent=0 // pred_check_branch
    %333 = sbr.rel (0) target = $region21
  $region20: #{_lambda_.16} parent=0 // pred_region
    _
  $region21: #{_lambda_.16} parent=0 // pred_fallthru
    _

// kernel: _lambda_.17
$region0: #{_lambda_.17}
  #allocation0 [shape = 'u32[]', space=smem, size = 0x4, offset = 0x4, fixed_abs, tag = 'smem constant byte address 0x4 - core index']
  #allocation1 [shape = 'u32[144,128]{1,0:T(1,128)}', space=vmem, size = 0x12000, scoped, tag = 'internal scratch']
  %s0 = inlined_call_operand.vmem [shape: f32[128,288], index: 0, kind: input, shape index: {}]
  %s1 = inlined_call_operand.vmem [shape: f32[288,32], index: 1, kind: input, shape index: {}]
  %s2 = inlined_call_operand.vmem [shape: f32[1,32], index: 2, kind: input, shape index: {}]
  %s3 = inlined_call_operand.vmem [shape: f32[128,32], index: 3, kind: output, shape index: {}]
  %s4 = sld [smem:[#allocation0]]
  $region22: #{_lambda_.17} parent=0
    _
  %s6 = ssub.s32 1, %s4
  %s7 = scalar_select 0, %s6, %s4
  // Predicated region
  $region2: #{_lambda_.17} parent=0 // pred_check
    _
  $region3: #{_lambda_.17} parent=0 // pred_check_branch
    %9 = sbr.rel (0) target = $region5
  $region4: #{_lambda_.17} parent=0 // pred_region
    _
  $region5: #{_lambda_.17} parent=0 // pred_fallthru
    _
  // Predicated region
  $region6: #{_lambda_.17} parent=0 // pred_check
    _
  $region7: #{_lambda_.17} parent=0 // pred_check_branch
    %11 = sbr.rel (0) target = $region9
  $region8: #{_lambda_.17} parent=0 // pred_region
    _
  $region9: #{_lambda_.17} parent=0 // pred_fallthru
    _
  // Predicated region
  $region10: #{_lambda_.17} parent=0 // pred_check
    _
  $region11: #{_lambda_.17} parent=0 // pred_check_branch
    %13 = sbr.rel (0) target = $region13
  $region12: #{_lambda_.17} parent=0 // pred_region
    _
  $region13: #{_lambda_.17} parent=0 // pred_fallthru
    _
  %v14 = vld [vmem:[%s0] sm:$0xff]
  %v15 = vld [vmem:[%s0 + $0x8] sm:$0xff]
  %v16 = vld [vmem:[%s0 + $0x10] sm:$0xff]
  %v17 = vld [vmem:[%s0 + $0x18] sm:$0xff]
  %v18 = vld [vmem:[%s0 + $0x20] sm:$0xff]
  %v19 = vld [vmem:[%s0 + $0x28] sm:$0xff]
  %v20 = vld [vmem:[%s0 + $0x30] sm:$0xff]
  %v21 = vld [vmem:[%s0 + $0x38] sm:$0xff]
  %v22 = vld [vmem:[%s0 + $0x40] sm:$0xff]
  %v23 = vld [vmem:[%s0 + $0x48] sm:$0xff]
  %v24 = vld [vmem:[%s0 + $0x50] sm:$0xff]
  %v25 = vld [vmem:[%s0 + $0x58] sm:$0xff]
  %v26 = vld [vmem:[%s0 + $0x60] sm:$0xff]
  %v27 = vld [vmem:[%s0 + $0x68] sm:$0xff]
  %v28 = vld [vmem:[%s0 + $0x70] sm:$0xff]
  %v29 = vld [vmem:[%s0 + $0x78] sm:$0xff]
  %v30 = vld [vmem:[%s0 + $0x80] sm:$0xff]
  %v31 = vld [vmem:[%s0 + $0x88] sm:$0xff]
  %v32 = vld [vmem:[%s0 + $0x90] sm:$0xff]
  %v33 = vld [vmem:[%s0 + $0x98] sm:$0xff]
  %v34 = vld [vmem:[%s0 + $0xa0] sm:$0xff]
  %v35 = vld [vmem:[%s0 + $0xa8] sm:$0xff]
  %v36 = vld [vmem:[%s0 + $0xb0] sm:$0xff]
  %v37 = vld [vmem:[%s0 + $0xb8] sm:$0xff]
  %v38 = vld [vmem:[%s0 + $0xc0] sm:$0xff]
  %v39 = vld [vmem:[%s0 + $0xc8] sm:$0xff]
  %v40 = vld [vmem:[%s0 + $0xd0] sm:$0xff]
  %v41 = vld [vmem:[%s0 + $0xd8] sm:$0xff]
  %v42 = vld [vmem:[%s0 + $0xe0] sm:$0xff]
  %v43 = vld [vmem:[%s0 + $0xe8] sm:$0xff]
  %v44 = vld [vmem:[%s0 + $0xf0] sm:$0xff]
  %v45 = vld [vmem:[%s0 + $0xf8] sm:$0xff]
  %v46 = vld [vmem:[%s0 + $0x100] sm:$0xff]
  %v47 = vld [vmem:[%s0 + $0x108] sm:$0xff]
  %v48 = vld [vmem:[%s0 + $0x110] sm:$0xff]
  %v49 = vld [vmem:[%s0 + $0x118] sm:$0xff]
  %v50 = vld [vmem:[%s0 + $0x120] sm:$0xff]
  %v51 = vld [vmem:[%s0 + $0x128] sm:$0xff]
  %v52 = vld [vmem:[%s0 + $0x130] sm:$0xff]
  %v53 = vld [vmem:[%s0 + $0x138] sm:$0xff]
  %v54 = vld [vmem:[%s0 + $0x140] sm:$0xff]
  %v55 = vld [vmem:[%s0 + $0x148] sm:$0xff]
  %v56 = vld [vmem:[%s0 + $0x150] sm:$0xff]
  %v57 = vld [vmem:[%s0 + $0x158] sm:$0xff]
  %v58 = vld [vmem:[%s0 + $0x160] sm:$0xff]
  %v59 = vld [vmem:[%s0 + $0x168] sm:$0xff]
  %v60 = vld [vmem:[%s0 + $0x170] sm:$0xff]
  %v61 = vld [vmem:[%s0 + $0x178] sm:$0xff]
  %v62 = vld [vmem:[%s1] sm:$0xff]
  %v63 = vld [vmem:[%s1 + $0x8] sm:$0xff]
  %v64 = vld [vmem:[%s1 + $0x10] sm:$0xff]
  %v65 = vld [vmem:[%s1 + $0x18] sm:$0xff]
  %v66 = vld [vmem:[%s1 + $0x20] sm:$0xff]
  %v67 = vld [vmem:[%s1 + $0x28] sm:$0xff]
  %v68 = vld [vmem:[%s1 + $0x30] sm:$0xff]
  %v69 = vld [vmem:[%s1 + $0x38] sm:$0xff]
  %v70 = vld [vmem:[%s1 + $0x40] sm:$0xff]
  %v71 = vld [vmem:[%s1 + $0x48] sm:$0xff]
  %v72 = vld [vmem:[%s1 + $0x50] sm:$0xff]
  %v73 = vld [vmem:[%s1 + $0x58] sm:$0xff]
  %v74 = vld [vmem:[%s1 + $0x60] sm:$0xff]
  %v75 = vld [vmem:[%s1 + $0x68] sm:$0xff]
  %v76 = vld [vmem:[%s1 + $0x70] sm:$0xff]
  %v77 = vld [vmem:[%s1 + $0x78] sm:$0xff]
  %v78 = vld [vmem:[%s1 + $0x80] sm:$0xff]
  %v79 = vld [vmem:[%s1 + $0x88] sm:$0xff]
  %v80 = vld [vmem:[%s1 + $0x90] sm:$0xff]
  %v81 = vld [vmem:[%s1 + $0x98] sm:$0xff]
  %v82 = vld [vmem:[%s1 + $0xa0] sm:$0xff]
  %v83 = vld [vmem:[%s1 + $0xa8] sm:$0xff]
  %v84 = vld [vmem:[%s1 + $0xb0] sm:$0xff]
  %v85 = vld [vmem:[%s1 + $0xb8] sm:$0xff]
  %v86 = vld [vmem:[%s1 + $0xc0] sm:$0xff]
  %v87 = vld [vmem:[%s1 + $0xc8] sm:$0xff]
  %v88 = vld [vmem:[%s1 + $0xd0] sm:$0xff]
  %v89 = vld [vmem:[%s1 + $0xd8] sm:$0xff]
  %v90 = vld [vmem:[%s1 + $0xe0] sm:$0xff]
  %v91 = vld [vmem:[%s1 + $0xe8] sm:$0xff]
  %v92 = vld [vmem:[%s1 + $0xf0] sm:$0xff]
  %v93 = vld [vmem:[%s1 + $0xf8] sm:$0xff]
  %v94 = vld [vmem:[%s1 + $0x100] sm:$0xff]
  %v95 = vld [vmem:[%s1 + $0x108] sm:$0xff]
  %v96 = vld [vmem:[%s1 + $0x110] sm:$0xff]
  %v97 = vld [vmem:[%s1 + $0x118] sm:$0xff]
  %v98 = vld [vmem:[%s2] sm:$0x1]
  %v100 = vlaneseq
  %v101 = vshrl.u32 %v100, 7
  %v102 = vsub.s32 0, %v101
  %v103 = vrot.slane %v98, %v102
  %vm105 = vcmask 261120
  %v107 = vsel %vm105, %v16, 0
  %v110 = vsel %vm105, %v19, 0
  %v113 = vsel %vm105, %v22, 0
  %v116 = vsel %vm105, %v25, 0
  %v119 = vsel %vm105, %v28, 0
  %v122 = vsel %vm105, %v31, 0
  %v125 = vsel %vm105, %v34, 0
  %v128 = vsel %vm105, %v37, 0
  %v131 = vsel %vm105, %v40, 0
  %v134 = vsel %vm105, %v43, 0
  %v137 = vsel %vm105, %v46, 0
  %v140 = vsel %vm105, %v49, 0
  %v143 = vsel %vm105, %v52, 0
  %v146 = vsel %vm105, %v55, 0
  %v149 = vsel %vm105, %v58, 0
  %v152 = vsel %vm105, %v61, 0
  %154 = vmatprep.subr.mxu0 0.0
  %155 = vmatpush1.msra.mxu0 %v77
  %156 = vmatprep.subr.mxu0 0.0
  %157 = vmatpush1.msra.mxu0 %v76
  %158 = vmatprep.subr.mxu0 0.0
  %159 = vmatpush1.msra.mxu0 %v75
  %160 = vmatprep.subr.mxu0 0.0
  %161 = vmatpush1.msra.mxu0 %v74
  %162 = vmatprep.subr.mxu0 0.0
  %163 = vmatpush1.msra.mxu0 %v73
  %164 = vmatprep.subr.mxu0 0.0
  %165 = vmatpush1.msra.mxu0 %v72
  %166 = vmatprep.subr.mxu0 0.0
  %167 = vmatpush1.msra.mxu0 %v71
  %168 = vmatprep.subr.mxu0 0.0
  %169 = vmatpush1.msra.mxu0 %v70
  %170 = vmatprep.subr.mxu0 0.0
  %171 = vmatpush1.msra.mxu0 %v69
  %172 = vmatprep.subr.mxu0 0.0
  %173 = vmatpush1.msra.mxu0 %v68
  %174 = vmatprep.subr.mxu0 0.0
  %175 = vmatpush1.msra.mxu0 %v67
  %176 = vmatprep.subr.mxu0 0.0
  %177 = vmatpush1.msra.mxu0 %v66
  %178 = vmatprep.subr.mxu0 0.0
  %179 = vmatpush1.msra.mxu0 %v65
  %180 = vmatprep.subr.mxu0 0.0
  %181 = vmatpush1.msra.mxu0 %v64
  %182 = vmatprep.subr.mxu0 0.0
  %183 = vmatpush1.msra.mxu0 %v63
  %184 = vmatprep.subr.mxu0 0.0
  %185 = vmatpush1.msra.mxu0 %v62
  %186 = vmatprep.subr.mxu0 0.0
  %187 = vmatpush2.msra.mxu0 %v93
  %188 = vmatprep.subr.mxu0 0.0
  %189 = vmatpush2.msra.mxu0 %v92
  %190 = vmatprep.subr.mxu0 0.0
  %191 = vmatpush2.msra.mxu0 %v91
  %192 = vmatprep.subr.mxu0 0.0
  %193 = vmatpush2.msra.mxu0 %v90
  %194 = vmatprep.subr.mxu0 0.0
  %195 = vmatpush2.msra.mxu0 %v89
  %196 = vmatprep.subr.mxu0 0.0
  %197 = vmatpush2.msra.mxu0 %v88
  %198 = vmatprep.subr.mxu0 0.0
  %199 = vmatpush2.msra.mxu0 %v87
  %200 = vmatprep.subr.mxu0 0.0
  %201 = vmatpush2.msra.mxu0 %v86
  %202 = vmatprep.subr.mxu0 0.0
  %203 = vmatpush2.msra.mxu0 %v85
  %204 = vmatprep.subr.mxu0 0.0
  %205 = vmatpush2.msra.mxu0 %v84
  %206 = vmatprep.subr.mxu0 0.0
  %207 = vmatpush2.msra.mxu0 %v83
  %208 = vmatprep.subr.mxu0 0.0
  %209 = vmatpush2.msra.mxu0 %v82
  %210 = vmatprep.subr.mxu0 0.0
  %211 = vmatpush2.msra.mxu0 %v81
  %212 = vmatprep.subr.mxu0 0.0
  %213 = vmatpush2.msra.mxu0 %v80
  %214 = vmatprep.subr.mxu0 0.0
  %215 = vmatpush2.msra.mxu0 %v79
  %216 = vmatprep.subr.mxu0 0.0
  %217 = vmatpush2.msra.mxu0 %v78
  %218 = vmatprep.mubr.f32.mxu0 %v15
  %219 = vmatmul.mubr.f32.gmra.mxu0 %v14
  %v220 = vpop.f32.mrf.mxu0
  %v221 = vadd.f32 %v103, %v220
  %v222 = vpop.f32.mrf.mxu0
  %223 = vmatprep.mubr.f32.mxu0 %v18
  %224 = vmatmul.mubr.f32.gmra.mxu0 %v17
  %v225 = vpop.f32.mrf.mxu0
  %v226 = vadd.f32 %v103, %v225
  %v227 = vpop.f32.mrf.mxu0
  %228 = vmatprep.mubr.f32.mxu0 %v21
  %229 = vmatmul.mubr.f32.gmra.mxu0 %v20
  %v230 = vpop.f32.mrf.mxu0
  %v231 = vadd.f32 %v103, %v230
  %v232 = vpop.f32.mrf.mxu0
  %233 = vmatprep.mubr.f32.mxu0 %v24
  %234 = vmatmul.mubr.f32.gmra.mxu0 %v23
  %v235 = vpop.f32.mrf.mxu0
  %v236 = vadd.f32 %v103, %v235
  %v237 = vpop.f32.mrf.mxu0
  %238 = vmatprep.mubr.f32.mxu0 %v27
  %239 = vmatmul.mubr.f32.gmra.mxu0 %v26
  %v240 = vpop.f32.mrf.mxu0
  %v241 = vadd.f32 %v103, %v240
  %v242 = vpop.f32.mrf.mxu0
  %243 = vmatprep.mubr.f32.mxu0 %v30
  %244 = vmatmul.mubr.f32.gmra.mxu0 %v29
  %v245 = vpop.f32.mrf.mxu0
  %v246 = vadd.f32 %v103, %v245
  %v247 = vpop.f32.mrf.mxu0
  %248 = vmatprep.mubr.f32.mxu0 %v33
  %249 = vmatmul.mubr.f32.gmra.mxu0 %v32
  %v250 = vpop.f32.mrf.mxu0
  %v251 = vadd.f32 %v103, %v250
  %v252 = vpop.f32.mrf.mxu0
  %253 = vmatprep.mubr.f32.mxu0 %v36
  %254 = vmatmul.mubr.f32.gmra.mxu0 %v35
  %v255 = vpop.f32.mrf.mxu0
  %v256 = vadd.f32 %v103, %v255
  %v257 = vpop.f32.mrf.mxu0
  %258 = vmatprep.mubr.f32.mxu0 %v39
  %259 = vmatmul.mubr.f32.gmra.mxu0 %v38
  %v260 = vpop.f32.mrf.mxu0
  %v261 = vadd.f32 %v103, %v260
  %v262 = vpop.f32.mrf.mxu0
  %263 = vmatprep.mubr.f32.mxu0 %v42
  %264 = vmatmul.mubr.f32.gmra.mxu0 %v41
  %v265 = vpop.f32.mrf.mxu0
  %v266 = vadd.f32 %v103, %v265
  %v267 = vpop.f32.mrf.mxu0
  %268 = vmatprep.mubr.f32.mxu0 %v45
  %269 = vmatmul.mubr.f32.gmra.mxu0 %v44
  %v270 = vpop.f32.mrf.mxu0
  %v271 = vadd.f32 %v103, %v270
  %v272 = vpop.f32.mrf.mxu0
  %273 = vmatprep.mubr.f32.mxu0 %v48
  %274 = vmatmul.mubr.f32.gmra.mxu0 %v47
  %v275 = vpop.f32.mrf.mxu0
  %v276 = vadd.f32 %v103, %v275
  %v277 = vpop.f32.mrf.mxu0
  %278 = vmatprep.mubr.f32.mxu0 %v51
  %279 = vmatmul.mubr.f32.gmra.mxu0 %v50
  %v280 = vpop.f32.mrf.mxu0
  %v281 = vadd.f32 %v103, %v280
  %v282 = vpop.f32.mrf.mxu0
  %283 = vmatprep.mubr.f32.mxu0 %v54
  %284 = vmatmul.mubr.f32.gmra.mxu0 %v53
  %v285 = vpop.f32.mrf.mxu0
  %v286 = vadd.f32 %v103, %v285
  %v287 = vpop.f32.mrf.mxu0
  %288 = vmatprep.mubr.f32.mxu0 %v57
  %289 = vmatmul.mubr.f32.gmra.mxu0 %v56
  %v290 = vpop.f32.mrf.mxu0
  %v291 = vadd.f32 %v103, %v290
  %v292 = vpop.f32.mrf.mxu0
  %293 = vmatprep.mubr.f32.mxu0 %v60
  %294 = vmatmul.mubr.f32.gmra.mxu0 %v59
  %v295 = vpop.f32.mrf.mxu0
  %v296 = vadd.f32 %v103, %v295
  %v297 = vpop.f32.mrf.mxu0
  %298 = vdwg.mxu0
  %299 = vmatprep.subr.mxu0 0.0
  %300 = vmatpush1.msra.mxu0 0.0
  %301 = vmatprep.subr.mxu0 0.0
  %302 = vmatpush1.msra.mxu0 0.0
  %303 = vmatprep.subr.mxu0 0.0
  %304 = vmatpush1.msra.mxu0 0.0
  %305 = vmatprep.subr.mxu0 0.0
  %306 = vmatpush1.msra.mxu0 0.0
  %307 = vmatprep.subr.mxu0 0.0
  %308 = vmatpush1.msra.mxu0 0.0
  %309 = vmatprep.subr.mxu0 0.0
  %310 = vmatpush1.msra.mxu0 0.0
  %311 = vmatprep.subr.mxu0 0.0
  %312 = vmatpush1.msra.mxu0 0.0
  %313 = vmatprep.subr.mxu0 0.0
  %314 = vmatpush1.msra.mxu0 0.0
  %315 = vmatprep.subr.mxu0 0.0
  %316 = vmatpush1.msra.mxu0 0.0
  %317 = vmatprep.subr.mxu0 0.0
  %318 = vmatpush1.msra.mxu0 0.0
  %319 = vmatprep.subr.mxu0 0.0
  %320 = vmatpush1.msra.mxu0 0.0
  %321 = vmatprep.subr.mxu0 0.0
  %322 = vmatpush1.msra.mxu0 0.0
  %323 = vmatprep.subr.mxu0 0.0
  %324 = vmatpush1.msra.mxu0 %v97
  %325 = vmatprep.subr.mxu0 0.0
  %326 = vmatpush1.msra.mxu0 %v96
  %327 = vmatprep.subr.mxu0 0.0
  %328 = vmatpush1.msra.mxu0 %v95
  %329 = vmatprep.subr.mxu0 0.0
  %330 = vmatpush1.msra.mxu0 %v94
  %331 = vmatprep.subr.mxu0 0.0
  %332 = vmatpush2.msra.mxu0 0.0
  %333 = vmatprep.subr.mxu0 0.0
  %334 = vmatpush2.msra.mxu0 0.0
  %335 = vmatprep.subr.mxu0 0.0
  %336 = vmatpush2.msra.mxu0 0.0
  %337 = vmatprep.subr.mxu0 0.0
  %338 = vmatpush2.msra.mxu0 0.0
  %339 = vmatprep.subr.mxu0 0.0
  %340 = vmatpush2.msra.mxu0 0.0
  %341 = vmatprep.subr.mxu0 0.0
  %342 = vmatpush2.msra.mxu0 0.0
  %343 = vmatprep.subr.mxu0 0.0
  %344 = vmatpush2.msra.mxu0 0.0
  %345 = vmatprep.subr.mxu0 0.0
  %346 = vmatpush2.msra.mxu0 0.0
  %347 = vmatprep.subr.mxu0 0.0
  %348 = vmatpush2.msra.mxu0 0.0
  %349 = vmatprep.subr.mxu0 0.0
  %350 = vmatpush2.msra.mxu0 0.0
  %351 = vmatprep.subr.mxu0 0.0
  %352 = vmatpush2.msra.mxu0 0.0
  %353 = vmatprep.subr.mxu0 0.0
  %354 = vmatpush2.msra.mxu0 0.0
  %355 = vmatprep.subr.mxu0 0.0
  %356 = vmatpush2.msra.mxu0 0.0
  %357 = vmatprep.subr.mxu0 0.0
  %358 = vmatpush2.msra.mxu0 0.0
  %359 = vmatprep.subr.mxu0 0.0
  %360 = vmatpush2.msra.mxu0 0.0
  %361 = vmatprep.subr.mxu0 0.0
  %362 = vmatpush2.msra.mxu0 0.0
  %363 = vmatprep.mubr.f32.mxu0 0.0
  %364 = vmatmul.mubr.f32.gmra.mxu0 %v107
  %v365 = vpop.f32.mrf.mxu0
  %v366 = vadd.f32 %v221, %v365
  %v367 = vpop.f32.mrf.mxu0
  %368 = vmatprep.mubr.f32.mxu0 0.0
  %369 = vmatmul.mubr.f32.gmra.mxu0 %v110
  %v370 = vpop.f32.mrf.mxu0
  %v371 = vadd.f32 %v226, %v370
  %v372 = vpop.f32.mrf.mxu0
  %373 = vmatprep.mubr.f32.mxu0 0.0
  %374 = vmatmul.mubr.f32.gmra.mxu0 %v113
  %v375 = vpop.f32.mrf.mxu0
  %v376 = vadd.f32 %v231, %v375
  %v377 = vpop.f32.mrf.mxu0
  %378 = vmatprep.mubr.f32.mxu0 0.0
  %379 = vmatmul.mubr.f32.gmra.mxu0 %v116
  %v380 = vpop.f32.mrf.mxu0
  %v381 = vadd.f32 %v236, %v380
  %v382 = vpop.f32.mrf.mxu0
  %383 = vmatprep.mubr.f32.mxu0 0.0
  %384 = vmatmul.mubr.f32.gmra.mxu0 %v119
  %v385 = vpop.f32.mrf.mxu0
  %v386 = vadd.f32 %v241, %v385
  %v387 = vpop.f32.mrf.mxu0
  %388 = vmatprep.mubr.f32.mxu0 0.0
  %389 = vmatmul.mubr.f32.gmra.mxu0 %v122
  %v390 = vpop.f32.mrf.mxu0
  %v391 = vadd.f32 %v246, %v390
  %v392 = vpop.f32.mrf.mxu0
  %393 = vmatprep.mubr.f32.mxu0 0.0
  %394 = vmatmul.mubr.f32.gmra.mxu0 %v125
  %v395 = vpop.f32.mrf.mxu0
  %v396 = vadd.f32 %v251, %v395
  %v397 = vpop.f32.mrf.mxu0
  %398 = vmatprep.mubr.f32.mxu0 0.0
  %399 = vmatmul.mubr.f32.gmra.mxu0 %v128
  %v400 = vpop.f32.mrf.mxu0
  %v401 = vadd.f32 %v256, %v400
  %v402 = vpop.f32.mrf.mxu0
  %403 = vmatprep.mubr.f32.mxu0 0.0
  %404 = vmatmul.mubr.f32.gmra.mxu0 %v131
  %v405 = vpop.f32.mrf.mxu0
  %v406 = vadd.f32 %v261, %v405
  %v407 = vpop.f32.mrf.mxu0
  %408 = vmatprep.mubr.f32.mxu0 0.0
  %409 = vmatmul.mubr.f32.gmra.mxu0 %v134
  %v410 = vpop.f32.mrf.mxu0
  %v411 = vadd.f32 %v266, %v410
  %v412 = vpop.f32.mrf.mxu0
  %413 = vmatprep.mubr.f32.mxu0 0.0
  %414 = vmatmul.mubr.f32.gmra.mxu0 %v137
  %v415 = vpop.f32.mrf.mxu0
  %v416 = vadd.f32 %v271, %v415
  %v417 = vpop.f32.mrf.mxu0
  %418 = vmatprep.mubr.f32.mxu0 0.0
  %419 = vmatmul.mubr.f32.gmra.mxu0 %v140
  %v420 = vpop.f32.mrf.mxu0
  %v421 = vadd.f32 %v276, %v420
  %v422 = vpop.f32.mrf.mxu0
  %423 = vmatprep.mubr.f32.mxu0 0.0
  %424 = vmatmul.mubr.f32.gmra.mxu0 %v143
  %v425 = vpop.f32.mrf.mxu0
  %v426 = vadd.f32 %v281, %v425
  %v427 = vpop.f32.mrf.mxu0
  %428 = vmatprep.mubr.f32.mxu0 0.0
  %429 = vmatmul.mubr.f32.gmra.mxu0 %v146
  %v430 = vpop.f32.mrf.mxu0
  %v431 = vadd.f32 %v286, %v430
  %v432 = vpop.f32.mrf.mxu0
  %433 = vmatprep.mubr.f32.mxu0 0.0
  %434 = vmatmul.mubr.f32.gmra.mxu0 %v149
  %v435 = vpop.f32.mrf.mxu0
  %v436 = vadd.f32 %v291, %v435
  %v437 = vpop.f32.mrf.mxu0
  %438 = vmatprep.mubr.f32.mxu0 0.0
  %439 = vmatmul.mubr.f32.gmra.mxu0 %v152
  %v440 = vpop.f32.mrf.mxu0
  %v441 = vadd.f32 %v296, %v440
  %v442 = vpop.f32.mrf.mxu0
  %443 = vdwg.mxu0
  %vm444 = vcmp.gt.f32.partialorder %v366, 0.0
  %vm445 = vcmp.gt.f32.partialorder %v371, 0.0
  %vm446 = vcmp.gt.f32.partialorder %v376, 0.0
  %vm447 = vcmp.gt.f32.partialorder %v381, 0.0
  %vm448 = vcmp.gt.f32.partialorder %v386, 0.0
  %vm449 = vcmp.gt.f32.partialorder %v391, 0.0
  %vm450 = vcmp.gt.f32.partialorder %v396, 0.0
  %vm451 = vcmp.gt.f32.partialorder %v401, 0.0
  %vm452 = vcmp.gt.f32.partialorder %v406, 0.0
  %vm453 = vcmp.gt.f32.partialorder %v411, 0.0
  %vm454 = vcmp.gt.f32.partialorder %v416, 0.0
  %vm455 = vcmp.gt.f32.partialorder %v421, 0.0
  %vm456 = vcmp.gt.f32.partialorder %v426, 0.0
  %vm457 = vcmp.gt.f32.partialorder %v431, 0.0
  %vm458 = vcmp.gt.f32.partialorder %v436, 0.0
  %vm459 = vcmp.gt.f32.partialorder %v441, 0.0
  %v460 = vmul.f32 %v366, 0.01
  %v461 = vmul.f32 %v371, 0.01
  %v462 = vmul.f32 %v376, 0.01
  %v463 = vmul.f32 %v381, 0.01
  %v464 = vmul.f32 %v386, 0.01
  %v465 = vmul.f32 %v391, 0.01
  %v466 = vmul.f32 %v396, 0.01
  %v467 = vmul.f32 %v401, 0.01
  %v468 = vmul.f32 %v406, 0.01
  %v469 = vmul.f32 %v411, 0.01
  %v470 = vmul.f32 %v416, 0.01
  %v471 = vmul.f32 %v421, 0.01
  %v472 = vmul.f32 %v426, 0.01
  %v473 = vmul.f32 %v431, 0.01
  %v474 = vmul.f32 %v436, 0.01
  %v475 = vmul.f32 %v441, 0.01
  %v476 = vsel %vm444, %v366, %v460
  %v477 = vsel %vm445, %v371, %v461
  %v478 = vsel %vm446, %v376, %v462
  %v479 = vsel %vm447, %v381, %v463
  %v480 = vsel %vm448, %v386, %v464
  %v481 = vsel %vm449, %v391, %v465
  %v482 = vsel %vm450, %v396, %v466
  %v483 = vsel %vm451, %v401, %v467
  %v484 = vsel %vm452, %v406, %v468
  %v485 = vsel %vm453, %v411, %v469
  %v486 = vsel %vm454, %v416, %v470
  %v487 = vsel %vm455, %v421, %v471
  %v488 = vsel %vm456, %v426, %v472
  %v489 = vsel %vm457, %v431, %v473
  %v490 = vsel %vm458, %v436, %v474
  %v491 = vsel %vm459, %v441, %v475
  %492 = vst.msk [vmem:[%s3] sm:$0xff] %vm105, %v476
  %493 = vst.msk [vmem:[%s3 + $0x8] sm:$0xff] %vm105, %v477
  %494 = vst.msk [vmem:[%s3 + $0x10] sm:$0xff] %vm105, %v478
  %495 = vst.msk [vmem:[%s3 + $0x18] sm:$0xff] %vm105, %v479
  %496 = vst.msk [vmem:[%s3 + $0x20] sm:$0xff] %vm105, %v480
  %497 = vst.msk [vmem:[%s3 + $0x28] sm:$0xff] %vm105, %v481
  %498 = vst.msk [vmem:[%s3 + $0x30] sm:$0xff] %vm105, %v482
  %499 = vst.msk [vmem:[%s3 + $0x38] sm:$0xff] %vm105, %v483
  %500 = vst.msk [vmem:[%s3 + $0x40] sm:$0xff] %vm105, %v484
  %501 = vst.msk [vmem:[%s3 + $0x48] sm:$0xff] %vm105, %v485
  %502 = vst.msk [vmem:[%s3 + $0x50] sm:$0xff] %vm105, %v486
  %503 = vst.msk [vmem:[%s3 + $0x58] sm:$0xff] %vm105, %v487
  %504 = vst.msk [vmem:[%s3 + $0x60] sm:$0xff] %vm105, %v488
  %505 = vst.msk [vmem:[%s3 + $0x68] sm:$0xff] %vm105, %v489
  %506 = vst.msk [vmem:[%s3 + $0x70] sm:$0xff] %vm105, %v490
  %507 = vst.msk [vmem:[%s3 + $0x78] sm:$0xff] %vm105, %v491
  // Predicated region
  $region14: #{_lambda_.17} parent=0 // pred_check
    _
  $region15: #{_lambda_.17} parent=0 // pred_check_branch
    %509 = sbr.rel (0) target = $region17
  $region16: #{_lambda_.17} parent=0 // pred_region
    _
  $region17: #{_lambda_.17} parent=0 // pred_fallthru
    _
  // Predicated region
  $region18: #{_lambda_.17} parent=0 // pred_check
    _
  $region19: #{_lambda_.17} parent=0 // pred_check_branch
    %511 = sbr.rel (0) target = $region21
  $region20: #{_lambda_.17} parent=0 // pred_region
    _
  $region21: #{_lambda_.17} parent=0 // pred_fallthru
    _

// kernel: _lambda_.18
$region0: #{_lambda_.18}
  #allocation0 [shape = 'u32[]', space=smem, size = 0x4, offset = 0x4, fixed_abs, tag = 'smem constant byte address 0x4 - core index']
  #allocation1 [shape = 'u32[144,128]{1,0:T(1,128)}', space=vmem, size = 0x12000, scoped, tag = 'internal scratch']
  %s0 = inlined_call_operand.vmem [shape: f32[32,288], index: 0, kind: input, shape index: {}]
  %s1 = inlined_call_operand.vmem [shape: f32[288,32], index: 1, kind: input, shape index: {}]
  %s2 = inlined_call_operand.vmem [shape: f32[1,32], index: 2, kind: input, shape index: {}]
  %s3 = inlined_call_operand.vmem [shape: f32[32,32], index: 3, kind: output, shape index: {}]
  %s4 = sld [smem:[#allocation0]]
  $region22: #{_lambda_.18} parent=0
    _
  %s6 = ssub.s32 1, %s4
  %s7 = scalar_select 0, %s6, %s4
  // Predicated region
  $region2: #{_lambda_.18} parent=0 // pred_check
    _
  $region3: #{_lambda_.18} parent=0 // pred_check_branch
    %9 = sbr.rel (0) target = $region5
  $region4: #{_lambda_.18} parent=0 // pred_region
    _
  $region5: #{_lambda_.18} parent=0 // pred_fallthru
    _
  // Predicated region
  $region6: #{_lambda_.18} parent=0 // pred_check
    _
  $region7: #{_lambda_.18} parent=0 // pred_check_branch
    %11 = sbr.rel (0) target = $region9
  $region8: #{_lambda_.18} parent=0 // pred_region
    _
  $region9: #{_lambda_.18} parent=0 // pred_fallthru
    _
  // Predicated region
  $region10: #{_lambda_.18} parent=0 // pred_check
    _
  $region11: #{_lambda_.18} parent=0 // pred_check_branch
    %13 = sbr.rel (0) target = $region13
  $region12: #{_lambda_.18} parent=0 // pred_region
    _
  $region13: #{_lambda_.18} parent=0 // pred_fallthru
    _
  %v14 = vld [vmem:[%s0] sm:$0xff]
  %v15 = vld [vmem:[%s0 + $0x8] sm:$0xff]
  %v16 = vld [vmem:[%s0 + $0x10] sm:$0xff]
  %v17 = vld [vmem:[%s0 + $0x18] sm:$0xff]
  %v18 = vld [vmem:[%s0 + $0x20] sm:$0xff]
  %v19 = vld [vmem:[%s0 + $0x28] sm:$0xff]
  %v20 = vld [vmem:[%s0 + $0x30] sm:$0xff]
  %v21 = vld [vmem:[%s0 + $0x38] sm:$0xff]
  %v22 = vld [vmem:[%s0 + $0x40] sm:$0xff]
  %v23 = vld [vmem:[%s0 + $0x48] sm:$0xff]
  %v24 = vld [vmem:[%s0 + $0x50] sm:$0xff]
  %v25 = vld [vmem:[%s0 + $0x58] sm:$0xff]
  %v26 = vld [vmem:[%s1] sm:$0xff]
  %v27 = vld [vmem:[%s1 + $0x8] sm:$0xff]
  %v28 = vld [vmem:[%s1 + $0x10] sm:$0xff]
  %v29 = vld [vmem:[%s1 + $0x18] sm:$0xff]
  %v30 = vld [vmem:[%s1 + $0x20] sm:$0xff]
  %v31 = vld [vmem:[%s1 + $0x28] sm:$0xff]
  %v32 = vld [vmem:[%s1 + $0x30] sm:$0xff]
  %v33 = vld [vmem:[%s1 + $0x38] sm:$0xff]
  %v34 = vld [vmem:[%s1 + $0x40] sm:$0xff]
  %v35 = vld [vmem:[%s1 + $0x48] sm:$0xff]
  %v36 = vld [vmem:[%s1 + $0x50] sm:$0xff]
  %v37 = vld [vmem:[%s1 + $0x58] sm:$0xff]
  %v38 = vld [vmem:[%s1 + $0x60] sm:$0xff]
  %v39 = vld [vmem:[%s1 + $0x68] sm:$0xff]
  %v40 = vld [vmem:[%s1 + $0x70] sm:$0xff]
  %v41 = vld [vmem:[%s1 + $0x78] sm:$0xff]
  %v42 = vld [vmem:[%s1 + $0x80] sm:$0xff]
  %v43 = vld [vmem:[%s1 + $0x88] sm:$0xff]
  %v44 = vld [vmem:[%s1 + $0x90] sm:$0xff]
  %v45 = vld [vmem:[%s1 + $0x98] sm:$0xff]
  %v46 = vld [vmem:[%s1 + $0xa0] sm:$0xff]
  %v47 = vld [vmem:[%s1 + $0xa8] sm:$0xff]
  %v48 = vld [vmem:[%s1 + $0xb0] sm:$0xff]
  %v49 = vld [vmem:[%s1 + $0xb8] sm:$0xff]
  %v50 = vld [vmem:[%s1 + $0xc0] sm:$0xff]
  %v51 = vld [vmem:[%s1 + $0xc8] sm:$0xff]
  %v52 = vld [vmem:[%s1 + $0xd0] sm:$0xff]
  %v53 = vld [vmem:[%s1 + $0xd8] sm:$0xff]
  %v54 = vld [vmem:[%s1 + $0xe0] sm:$0xff]
  %v55 = vld [vmem:[%s1 + $0xe8] sm:$0xff]
  %v56 = vld [vmem:[%s1 + $0xf0] sm:$0xff]
  %v57 = vld [vmem:[%s1 + $0xf8] sm:$0xff]
  %v58 = vld [vmem:[%s1 + $0x100] sm:$0xff]
  %v59 = vld [vmem:[%s1 + $0x108] sm:$0xff]
  %v60 = vld [vmem:[%s1 + $0x110] sm:$0xff]
  %v61 = vld [vmem:[%s1 + $0x118] sm:$0xff]
  %v62 = vld [vmem:[%s2] sm:$0x1]
  %v64 = vlaneseq
  %v65 = vshrl.u32 %v64, 7
  %v66 = vsub.s32 0, %v65
  %v67 = vrot.slane %v62, %v66
  %vm69 = vcmask 261120
  %v71 = vsel %vm69, %v16, 0
  %v74 = vsel %vm69, %v19, 0
  %v77 = vsel %vm69, %v22, 0
  %v80 = vsel %vm69, %v25, 0
  %82 = vmatprep.subr.mxu0 0.0
  %83 = vmatpush1.msra.mxu0 %v41
  %84 = vmatprep.subr.mxu0 0.0
  %85 = vmatpush1.msra.mxu0 %v40
  %86 = vmatprep.subr.mxu0 0.0
  %87 = vmatpush1.msra.mxu0 %v39
  %88 = vmatprep.subr.mxu0 0.0
  %89 = vmatpush1.msra.mxu0 %v38
  %90 = vmatprep.subr.mxu0 0.0
  %91 = vmatpush1.msra.mxu0 %v37
  %92 = vmatprep.subr.mxu0 0.0
  %93 = vmatpush1.msra.mxu0 %v36
  %94 = vmatprep.subr.mxu0 0.0
  %95 = vmatpush1.msra.mxu0 %v35
  %96 = vmatprep.subr.mxu0 0.0
  %97 = vmatpush1.msra.mxu0 %v34
  %98 = vmatprep.subr.mxu0 0.0
  %99 = vmatpush1.msra.mxu0 %v33
  %100 = vmatprep.subr.mxu0 0.0
  %101 = vmatpush1.msra.mxu0 %v32
  %102 = vmatprep.subr.mxu0 0.0
  %103 = vmatpush1.msra.mxu0 %v31
  %104 = vmatprep.subr.mxu0 0.0
  %105 = vmatpush1.msra.mxu0 %v30
  %106 = vmatprep.subr.mxu0 0.0
  %107 = vmatpush1.msra.mxu0 %v29
  %108 = vmatprep.subr.mxu0 0.0
  %109 = vmatpush1.msra.mxu0 %v28
  %110 = vmatprep.subr.mxu0 0.0
  %111 = vmatpush1.msra.mxu0 %v27
  %112 = vmatprep.subr.mxu0 0.0
  %113 = vmatpush1.msra.mxu0 %v26
  %114 = vmatprep.subr.mxu0 0.0
  %115 = vmatpush2.msra.mxu0 %v57
  %116 = vmatprep.subr.mxu0 0.0
  %117 = vmatpush2.msra.mxu0 %v56
  %118 = vmatprep.subr.mxu0 0.0
  %119 = vmatpush2.msra.mxu0 %v55
  %120 = vmatprep.subr.mxu0 0.0
  %121 = vmatpush2.msra.mxu0 %v54
  %122 = vmatprep.subr.mxu0 0.0
  %123 = vmatpush2.msra.mxu0 %v53
  %124 = vmatprep.subr.mxu0 0.0
  %125 = vmatpush2.msra.mxu0 %v52
  %126 = vmatprep.subr.mxu0 0.0
  %127 = vmatpush2.msra.mxu0 %v51
  %128 = vmatprep.subr.mxu0 0.0
  %129 = vmatpush2.msra.mxu0 %v50
  %130 = vmatprep.subr.mxu0 0.0
  %131 = vmatpush2.msra.mxu0 %v49
  %132 = vmatprep.subr.mxu0 0.0
  %133 = vmatpush2.msra.mxu0 %v48
  %134 = vmatprep.subr.mxu0 0.0
  %135 = vmatpush2.msra.mxu0 %v47
  %136 = vmatprep.subr.mxu0 0.0
  %137 = vmatpush2.msra.mxu0 %v46
  %138 = vmatprep.subr.mxu0 0.0
  %139 = vmatpush2.msra.mxu0 %v45
  %140 = vmatprep.subr.mxu0 0.0
  %141 = vmatpush2.msra.mxu0 %v44
  %142 = vmatprep.subr.mxu0 0.0
  %143 = vmatpush2.msra.mxu0 %v43
  %144 = vmatprep.subr.mxu0 0.0
  %145 = vmatpush2.msra.mxu0 %v42
  %146 = vmatprep.mubr.f32.mxu0 %v15
  %147 = vmatmul.mubr.f32.gmra.mxu0 %v14
  %v148 = vpop.f32.mrf.mxu0
  %v149 = vadd.f32 %v67, %v148
  %v150 = vpop.f32.mrf.mxu0
  %151 = vmatprep.mubr.f32.mxu0 %v18
  %152 = vmatmul.mubr.f32.gmra.mxu0 %v17
  %v153 = vpop.f32.mrf.mxu0
  %v154 = vadd.f32 %v67, %v153
  %v155 = vpop.f32.mrf.mxu0
  %156 = vmatprep.mubr.f32.mxu0 %v21
  %157 = vmatmul.mubr.f32.gmra.mxu0 %v20
  %v158 = vpop.f32.mrf.mxu0
  %v159 = vadd.f32 %v67, %v158
  %v160 = vpop.f32.mrf.mxu0
  %161 = vmatprep.mubr.f32.mxu0 %v24
  %162 = vmatmul.mubr.f32.gmra.mxu0 %v23
  %v163 = vpop.f32.mrf.mxu0
  %v164 = vadd.f32 %v67, %v163
  %v165 = vpop.f32.mrf.mxu0
  %166 = vdwg.mxu0
  %167 = vmatprep.subr.mxu0 0.0
  %168 = vmatpush1.msra.mxu0 0.0
  %169 = vmatprep.subr.mxu0 0.0
  %170 = vmatpush1.msra.mxu0 0.0
  %171 = vmatprep.subr.mxu0 0.0
  %172 = vmatpush1.msra.mxu0 0.0
  %173 = vmatprep.subr.mxu0 0.0
  %174 = vmatpush1.msra.mxu0 0.0
  %175 = vmatprep.subr.mxu0 0.0
  %176 = vmatpush1.msra.mxu0 0.0
  %177 = vmatprep.subr.mxu0 0.0
  %178 = vmatpush1.msra.mxu0 0.0
  %179 = vmatprep.subr.mxu0 0.0
  %180 = vmatpush1.msra.mxu0 0.0
  %181 = vmatprep.subr.mxu0 0.0
  %182 = vmatpush1.msra.mxu0 0.0
  %183 = vmatprep.subr.mxu0 0.0
  %184 = vmatpush1.msra.mxu0 0.0
  %185 = vmatprep.subr.mxu0 0.0
  %186 = vmatpush1.msra.mxu0 0.0
  %187 = vmatprep.subr.mxu0 0.0
  %188 = vmatpush1.msra.mxu0 0.0
  %189 = vmatprep.subr.mxu0 0.0
  %190 = vmatpush1.msra.mxu0 0.0
  %191 = vmatprep.subr.mxu0 0.0
  %192 = vmatpush1.msra.mxu0 %v61
  %193 = vmatprep.subr.mxu0 0.0
  %194 = vmatpush1.msra.mxu0 %v60
  %195 = vmatprep.subr.mxu0 0.0
  %196 = vmatpush1.msra.mxu0 %v59
  %197 = vmatprep.subr.mxu0 0.0
  %198 = vmatpush1.msra.mxu0 %v58
  %199 = vmatprep.subr.mxu0 0.0
  %200 = vmatpush2.msra.mxu0 0.0
  %201 = vmatprep.subr.mxu0 0.0
  %202 = vmatpush2.msra.mxu0 0.0
  %203 = vmatprep.subr.mxu0 0.0
  %204 = vmatpush2.msra.mxu0 0.0
  %205 = vmatprep.subr.mxu0 0.0
  %206 = vmatpush2.msra.mxu0 0.0
  %207 = vmatprep.subr.mxu0 0.0
  %208 = vmatpush2.msra.mxu0 0.0
  %209 = vmatprep.subr.mxu0 0.0
  %210 = vmatpush2.msra.mxu0 0.0
  %211 = vmatprep.subr.mxu0 0.0
  %212 = vmatpush2.msra.mxu0 0.0
  %213 = vmatprep.subr.mxu0 0.0
  %214 = vmatpush2.msra.mxu0 0.0
  %215 = vmatprep.subr.mxu0 0.0
  %216 = vmatpush2.msra.mxu0 0.0
  %217 = vmatprep.subr.mxu0 0.0
  %218 = vmatpush2.msra.mxu0 0.0
  %219 = vmatprep.subr.mxu0 0.0
  %220 = vmatpush2.msra.mxu0 0.0
  %221 = vmatprep.subr.mxu0 0.0
  %222 = vmatpush2.msra.mxu0 0.0
  %223 = vmatprep.subr.mxu0 0.0
  %224 = vmatpush2.msra.mxu0 0.0
  %225 = vmatprep.subr.mxu0 0.0
  %226 = vmatpush2.msra.mxu0 0.0
  %227 = vmatprep.subr.mxu0 0.0
  %228 = vmatpush2.msra.mxu0 0.0
  %229 = vmatprep.subr.mxu0 0.0
  %230 = vmatpush2.msra.mxu0 0.0
  %231 = vmatprep.mubr.f32.mxu0 0.0
  %232 = vmatmul.mubr.f32.gmra.mxu0 %v71
  %v233 = vpop.f32.mrf.mxu0
  %v234 = vadd.f32 %v149, %v233
  %v235 = vpop.f32.mrf.mxu0
  %236 = vmatprep.mubr.f32.mxu0 0.0
  %237 = vmatmul.mubr.f32.gmra.mxu0 %v74
  %v238 = vpop.f32.mrf.mxu0
  %v239 = vadd.f32 %v154, %v238
  %v240 = vpop.f32.mrf.mxu0
  %241 = vmatprep.mubr.f32.mxu0 0.0
  %242 = vmatmul.mubr.f32.gmra.mxu0 %v77
  %v243 = vpop.f32.mrf.mxu0
  %v244 = vadd.f32 %v159, %v243
  %v245 = vpop.f32.mrf.mxu0
  %246 = vmatprep.mubr.f32.mxu0 0.0
  %247 = vmatmul.mubr.f32.gmra.mxu0 %v80
  %v248 = vpop.f32.mrf.mxu0
  %v249 = vadd.f32 %v164, %v248
  %v250 = vpop.f32.mrf.mxu0
  %251 = vdwg.mxu0
  %vm252 = vcmp.gt.f32.partialorder %v234, 0.0
  %vm253 = vcmp.gt.f32.partialorder %v239, 0.0
  %vm254 = vcmp.gt.f32.partialorder %v244, 0.0
  %vm255 = vcmp.gt.f32.partialorder %v249, 0.0
  %v256 = vmul.f32 %v234, 0.01
  %v257 = vmul.f32 %v239, 0.01
  %v258 = vmul.f32 %v244, 0.01
  %v259 = vmul.f32 %v249, 0.01
  %v260 = vsel %vm252, %v234, %v256
  %v261 = vsel %vm253, %v239, %v257
  %v262 = vsel %vm254, %v244, %v258
  %v263 = vsel %vm255, %v249, %v259
  %264 = vst.msk [vmem:[%s3] sm:$0xff] %vm69, %v260
  %265 = vst.msk [vmem:[%s3 + $0x8] sm:$0xff] %vm69, %v261
  %266 = vst.msk [vmem:[%s3 + $0x10] sm:$0xff] %vm69, %v262
  %267 = vst.msk [vmem:[%s3 + $0x18] sm:$0xff] %vm69, %v263
  // Predicated region
  $region14: #{_lambda_.18} parent=0 // pred_check
    _
  $region15: #{_lambda_.18} parent=0 // pred_check_branch
    %269 = sbr.rel (0) target = $region17
  $region16: #{_lambda_.18} parent=0 // pred_region
    _
  $region17: #{_lambda_.18} parent=0 // pred_fallthru
    _
  // Predicated region
  $region18: #{_lambda_.18} parent=0 // pred_check
    _
  $region19: #{_lambda_.18} parent=0 // pred_check_branch
    %271 = sbr.rel (0) target = $region21
  $region20: #{_lambda_.18} parent=0 // pred_region
    _
  $region21: #{_lambda_.18} parent=0 // pred_fallthru
    _

// kernel: _lambda_.20
$region0: #{_lambda_.20}
  #allocation0 [shape = 'u32[]', space=smem, size = 0x4, offset = 0x4, fixed_abs, tag = 'smem constant byte address 0x4 - core index']
  #allocation1 [shape = 'u32[144,128]{1,0:T(1,128)}', space=vmem, size = 0x12000, scoped, tag = 'internal scratch']
  %s0 = inlined_call_operand.vmem [shape: f32[128,32], index: 0, kind: input, shape index: {}]
  %s1 = inlined_call_operand.vmem [shape: f32[32,32], index: 1, kind: input, shape index: {}]
  %s2 = inlined_call_operand.vmem [shape: f32[1,32], index: 2, kind: input, shape index: {}]
  %s3 = inlined_call_operand.vmem [shape: f32[128,32], index: 3, kind: output, shape index: {}]
  %s4 = sld [smem:[#allocation0]]
  $region22: #{_lambda_.20} parent=0
    _
  %s6 = ssub.s32 1, %s4
  %s7 = scalar_select 0, %s6, %s4
  // Predicated region
  $region2: #{_lambda_.20} parent=0 // pred_check
    _
  $region3: #{_lambda_.20} parent=0 // pred_check_branch
    %9 = sbr.rel (0) target = $region5
  $region4: #{_lambda_.20} parent=0 // pred_region
    _
  $region5: #{_lambda_.20} parent=0 // pred_fallthru
    _
  // Predicated region
  $region6: #{_lambda_.20} parent=0 // pred_check
    _
  $region7: #{_lambda_.20} parent=0 // pred_check_branch
    %11 = sbr.rel (0) target = $region9
  $region8: #{_lambda_.20} parent=0 // pred_region
    _
  $region9: #{_lambda_.20} parent=0 // pred_fallthru
    _
  // Predicated region
  $region10: #{_lambda_.20} parent=0 // pred_check
    _
  $region11: #{_lambda_.20} parent=0 // pred_check_branch
    %13 = sbr.rel (0) target = $region13
  $region12: #{_lambda_.20} parent=0 // pred_region
    _
  $region13: #{_lambda_.20} parent=0 // pred_fallthru
    _
  %v14 = vld [vmem:[%s0] sm:$0xff]
  %v15 = vld [vmem:[%s0 + $0x8] sm:$0xff]
  %v16 = vld [vmem:[%s0 + $0x10] sm:$0xff]
  %v17 = vld [vmem:[%s0 + $0x18] sm:$0xff]
  %v18 = vld [vmem:[%s0 + $0x20] sm:$0xff]
  %v19 = vld [vmem:[%s0 + $0x28] sm:$0xff]
  %v20 = vld [vmem:[%s0 + $0x30] sm:$0xff]
  %v21 = vld [vmem:[%s0 + $0x38] sm:$0xff]
  %v22 = vld [vmem:[%s0 + $0x40] sm:$0xff]
  %v23 = vld [vmem:[%s0 + $0x48] sm:$0xff]
  %v24 = vld [vmem:[%s0 + $0x50] sm:$0xff]
  %v25 = vld [vmem:[%s0 + $0x58] sm:$0xff]
  %v26 = vld [vmem:[%s0 + $0x60] sm:$0xff]
  %v27 = vld [vmem:[%s0 + $0x68] sm:$0xff]
  %v28 = vld [vmem:[%s0 + $0x70] sm:$0xff]
  %v29 = vld [vmem:[%s0 + $0x78] sm:$0xff]
  %v30 = vld [vmem:[%s1] sm:$0xff]
  %v31 = vld [vmem:[%s1 + $0x8] sm:$0xff]
  %v32 = vld [vmem:[%s1 + $0x10] sm:$0xff]
  %v33 = vld [vmem:[%s1 + $0x18] sm:$0xff]
  %v34 = vld [vmem:[%s2] sm:$0x1]
  %v36 = vlaneseq
  %v37 = vshrl.u32 %v36, 7
  %v38 = vsub.s32 0, %v37
  %v39 = vrot.slane %v34, %v38
  %vm41 = vcmask 261120
  %v43 = vsel %vm41, %v14, 0
  %v46 = vsel %vm41, %v15, 0
  %v49 = vsel %vm41, %v16, 0
  %v52 = vsel %vm41, %v17, 0
  %v55 = vsel %vm41, %v18, 0
  %v58 = vsel %vm41, %v19, 0
  %v61 = vsel %vm41, %v20, 0
  %v64 = vsel %vm41, %v21, 0
  %v67 = vsel %vm41, %v22, 0
  %v70 = vsel %vm41, %v23, 0
  %v73 = vsel %vm41, %v24, 0
  %v76 = vsel %vm41, %v25, 0
  %v79 = vsel %vm41, %v26, 0
  %v82 = vsel %vm41, %v27, 0
  %v85 = vsel %vm41, %v28, 0
  %v88 = vsel %vm41, %v29, 0
  %90 = vmatprep.subr.mxu0 0.0
  %91 = vmatpush1.msra.mxu0 0.0
  %92 = vmatprep.subr.mxu0 0.0
  %93 = vmatpush1.msra.mxu0 0.0
  %94 = vmatprep.subr.mxu0 0.0
  %95 = vmatpush1.msra.mxu0 0.0
  %96 = vmatprep.subr.mxu0 0.0
  %97 = vmatpush1.msra.mxu0 0.0
  %98 = vmatprep.subr.mxu0 0.0
  %99 = vmatpush1.msra.mxu0 0.0
  %100 = vmatprep.subr.mxu0 0.0
  %101 = vmatpush1.msra.mxu0 0.0
  %102 = vmatprep.subr.mxu0 0.0
  %103 = vmatpush1.msra.mxu0 0.0
  %104 = vmatprep.subr.mxu0 0.0
  %105 = vmatpush1.msra.mxu0 0.0
  %106 = vmatprep.subr.mxu0 0.0
  %107 = vmatpush1.msra.mxu0 0.0
  %108 = vmatprep.subr.mxu0 0.0
  %109 = vmatpush1.msra.mxu0 0.0
  %110 = vmatprep.subr.mxu0 0.0
  %111 = vmatpush1.msra.mxu0 0.0
  %112 = vmatprep.subr.mxu0 0.0
  %113 = vmatpush1.msra.mxu0 0.0
  %114 = vmatprep.subr.mxu0 0.0
  %115 = vmatpush1.msra.mxu0 %v33
  %116 = vmatprep.subr.mxu0 0.0
  %117 = vmatpush1.msra.mxu0 %v32
  %118 = vmatprep.subr.mxu0 0.0
  %119 = vmatpush1.msra.mxu0 %v31
  %120 = vmatprep.subr.mxu0 0.0
  %121 = vmatpush1.msra.mxu0 %v30
  %122 = vmatprep.subr.mxu0 0.0
  %123 = vmatpush2.msra.mxu0 0.0
  %124 = vmatprep.subr.mxu0 0.0
  %125 = vmatpush2.msra.mxu0 0.0
  %126 = vmatprep.subr.mxu0 0.0
  %127 = vmatpush2.msra.mxu0 0.0
  %128 = vmatprep.subr.mxu0 0.0
  %129 = vmatpush2.msra.mxu0 0.0
  %130 = vmatprep.subr.mxu0 0.0
  %131 = vmatpush2.msra.mxu0 0.0
  %132 = vmatprep.subr.mxu0 0.0
  %133 = vmatpush2.msra.mxu0 0.0
  %134 = vmatprep.subr.mxu0 0.0
  %135 = vmatpush2.msra.mxu0 0.0
  %136 = vmatprep.subr.mxu0 0.0
  %137 = vmatpush2.msra.mxu0 0.0
  %138 = vmatprep.subr.mxu0 0.0
  %139 = vmatpush2.msra.mxu0 0.0
  %140 = vmatprep.subr.mxu0 0.0
  %141 = vmatpush2.msra.mxu0 0.0
  %142 = vmatprep.subr.mxu0 0.0
  %143 = vmatpush2.msra.mxu0 0.0
  %144 = vmatprep.subr.mxu0 0.0
  %145 = vmatpush2.msra.mxu0 0.0
  %146 = vmatprep.subr.mxu0 0.0
  %147 = vmatpush2.msra.mxu0 0.0
  %148 = vmatprep.subr.mxu0 0.0
  %149 = vmatpush2.msra.mxu0 0.0
  %150 = vmatprep.subr.mxu0 0.0
  %151 = vmatpush2.msra.mxu0 0.0
  %152 = vmatprep.subr.mxu0 0.0
  %153 = vmatpush2.msra.mxu0 0.0
  %154 = vmatprep.mubr.f32.mxu0 0.0
  %155 = vmatmul.mubr.f32.gmra.mxu0 %v43
  %v156 = vpop.f32.mrf.mxu0
  %v157 = vadd.f32 %v39, %v156
  %v158 = vpop.f32.mrf.mxu0
  %159 = vmatprep.mubr.f32.mxu0 0.0
  %160 = vmatmul.mubr.f32.gmra.mxu0 %v46
  %v161 = vpop.f32.mrf.mxu0
  %v162 = vadd.f32 %v39, %v161
  %v163 = vpop.f32.mrf.mxu0
  %164 = vmatprep.mubr.f32.mxu0 0.0
  %165 = vmatmul.mubr.f32.gmra.mxu0 %v49
  %v166 = vpop.f32.mrf.mxu0
  %v167 = vadd.f32 %v39, %v166
  %v168 = vpop.f32.mrf.mxu0
  %169 = vmatprep.mubr.f32.mxu0 0.0
  %170 = vmatmul.mubr.f32.gmra.mxu0 %v52
  %v171 = vpop.f32.mrf.mxu0
  %v172 = vadd.f32 %v39, %v171
  %v173 = vpop.f32.mrf.mxu0
  %174 = vmatprep.mubr.f32.mxu0 0.0
  %175 = vmatmul.mubr.f32.gmra.mxu0 %v55
  %v176 = vpop.f32.mrf.mxu0
  %v177 = vadd.f32 %v39, %v176
  %v178 = vpop.f32.mrf.mxu0
  %179 = vmatprep.mubr.f32.mxu0 0.0
  %180 = vmatmul.mubr.f32.gmra.mxu0 %v58
  %v181 = vpop.f32.mrf.mxu0
  %v182 = vadd.f32 %v39, %v181
  %v183 = vpop.f32.mrf.mxu0
  %184 = vmatprep.mubr.f32.mxu0 0.0
  %185 = vmatmul.mubr.f32.gmra.mxu0 %v61
  %v186 = vpop.f32.mrf.mxu0
  %v187 = vadd.f32 %v39, %v186
  %v188 = vpop.f32.mrf.mxu0
  %189 = vmatprep.mubr.f32.mxu0 0.0
  %190 = vmatmul.mubr.f32.gmra.mxu0 %v64
  %v191 = vpop.f32.mrf.mxu0
  %v192 = vadd.f32 %v39, %v191
  %v193 = vpop.f32.mrf.mxu0
  %194 = vmatprep.mubr.f32.mxu0 0.0
  %195 = vmatmul.mubr.f32.gmra.mxu0 %v67
  %v196 = vpop.f32.mrf.mxu0
  %v197 = vadd.f32 %v39, %v196
  %v198 = vpop.f32.mrf.mxu0
  %199 = vmatprep.mubr.f32.mxu0 0.0
  %200 = vmatmul.mubr.f32.gmra.mxu0 %v70
  %v201 = vpop.f32.mrf.mxu0
  %v202 = vadd.f32 %v39, %v201
  %v203 = vpop.f32.mrf.mxu0
  %204 = vmatprep.mubr.f32.mxu0 0.0
  %205 = vmatmul.mubr.f32.gmra.mxu0 %v73
  %v206 = vpop.f32.mrf.mxu0
  %v207 = vadd.f32 %v39, %v206
  %v208 = vpop.f32.mrf.mxu0
  %209 = vmatprep.mubr.f32.mxu0 0.0
  %210 = vmatmul.mubr.f32.gmra.mxu0 %v76
  %v211 = vpop.f32.mrf.mxu0
  %v212 = vadd.f32 %v39, %v211
  %v213 = vpop.f32.mrf.mxu0
  %214 = vmatprep.mubr.f32.mxu0 0.0
  %215 = vmatmul.mubr.f32.gmra.mxu0 %v79
  %v216 = vpop.f32.mrf.mxu0
  %v217 = vadd.f32 %v39, %v216
  %v218 = vpop.f32.mrf.mxu0
  %219 = vmatprep.mubr.f32.mxu0 0.0
  %220 = vmatmul.mubr.f32.gmra.mxu0 %v82
  %v221 = vpop.f32.mrf.mxu0
  %v222 = vadd.f32 %v39, %v221
  %v223 = vpop.f32.mrf.mxu0
  %224 = vmatprep.mubr.f32.mxu0 0.0
  %225 = vmatmul.mubr.f32.gmra.mxu0 %v85
  %v226 = vpop.f32.mrf.mxu0
  %v227 = vadd.f32 %v39, %v226
  %v228 = vpop.f32.mrf.mxu0
  %229 = vmatprep.mubr.f32.mxu0 0.0
  %230 = vmatmul.mubr.f32.gmra.mxu0 %v88
  %v231 = vpop.f32.mrf.mxu0
  %v232 = vadd.f32 %v39, %v231
  %v233 = vpop.f32.mrf.mxu0
  %234 = vdwg.mxu0
  %235 = vst.msk [vmem:[%s3] sm:$0xff] %vm41, %v157
  %236 = vst.msk [vmem:[%s3 + $0x8] sm:$0xff] %vm41, %v162
  %237 = vst.msk [vmem:[%s3 + $0x10] sm:$0xff] %vm41, %v167
  %238 = vst.msk [vmem:[%s3 + $0x18] sm:$0xff] %vm41, %v172
  %239 = vst.msk [vmem:[%s3 + $0x20] sm:$0xff] %vm41, %v177
  %240 = vst.msk [vmem:[%s3 + $0x28] sm:$0xff] %vm41, %v182
  %241 = vst.msk [vmem:[%s3 + $0x30] sm:$0xff] %vm41, %v187
  %242 = vst.msk [vmem:[%s3 + $0x38] sm:$0xff] %vm41, %v192
  %243 = vst.msk [vmem:[%s3 + $0x40] sm:$0xff] %vm41, %v197
  %244 = vst.msk [vmem:[%s3 + $0x48] sm:$0xff] %vm41, %v202
  %245 = vst.msk [vmem:[%s3 + $0x50] sm:$0xff] %vm41, %v207
  %246 = vst.msk [vmem:[%s3 + $0x58] sm:$0xff] %vm41, %v212
  %247 = vst.msk [vmem:[%s3 + $0x60] sm:$0xff] %vm41, %v217
  %248 = vst.msk [vmem:[%s3 + $0x68] sm:$0xff] %vm41, %v222
  %249 = vst.msk [vmem:[%s3 + $0x70] sm:$0xff] %vm41, %v227
  %250 = vst.msk [vmem:[%s3 + $0x78] sm:$0xff] %vm41, %v232
  // Predicated region
  $region14: #{_lambda_.20} parent=0 // pred_check
    _
  $region15: #{_lambda_.20} parent=0 // pred_check_branch
    %252 = sbr.rel (0) target = $region17
  $region16: #{_lambda_.20} parent=0 // pred_region
    _
  $region17: #{_lambda_.20} parent=0 // pred_fallthru
    _
  // Predicated region
  $region18: #{_lambda_.20} parent=0 // pred_check
    _
  $region19: #{_lambda_.20} parent=0 // pred_check_branch
    %254 = sbr.rel (0) target = $region21
  $region20: #{_lambda_.20} parent=0 // pred_region
    _
  $region21: #{_lambda_.20} parent=0 // pred_fallthru
    _

// kernel: _lambda_.21
$region0: #{_lambda_.21}
  #allocation0 [shape = 'u32[]', space=smem, size = 0x4, offset = 0x4, fixed_abs, tag = 'smem constant byte address 0x4 - core index']
  #allocation1 [shape = 'u32[144,128]{1,0:T(1,128)}', space=vmem, size = 0x12000, scoped, tag = 'internal scratch']
  %s0 = inlined_call_operand.vmem [shape: f32[128,576], index: 0, kind: input, shape index: {}]
  %s1 = inlined_call_operand.vmem [shape: f32[576,32], index: 1, kind: input, shape index: {}]
  %s2 = inlined_call_operand.vmem [shape: f32[1,32], index: 2, kind: input, shape index: {}]
  %s3 = inlined_call_operand.vmem [shape: f32[128,32], index: 3, kind: output, shape index: {}]
  %s4 = sld [smem:[#allocation0]]
  $region22: #{_lambda_.21} parent=0
    _
  %s6 = ssub.s32 1, %s4
  %s7 = scalar_select 0, %s6, %s4
  // Predicated region
  $region2: #{_lambda_.21} parent=0 // pred_check
    _
  $region3: #{_lambda_.21} parent=0 // pred_check_branch
    %9 = sbr.rel (0) target = $region5
  $region4: #{_lambda_.21} parent=0 // pred_region
    _
  $region5: #{_lambda_.21} parent=0 // pred_fallthru
    _
  // Predicated region
  $region6: #{_lambda_.21} parent=0 // pred_check
    _
  $region7: #{_lambda_.21} parent=0 // pred_check_branch
    %11 = sbr.rel (0) target = $region9
  $region8: #{_lambda_.21} parent=0 // pred_region
    _
  $region9: #{_lambda_.21} parent=0 // pred_fallthru
    _
  // Predicated region
  $region10: #{_lambda_.21} parent=0 // pred_check
    _
  $region11: #{_lambda_.21} parent=0 // pred_check_branch
    %13 = sbr.rel (0) target = $region13
  $region12: #{_lambda_.21} parent=0 // pred_region
    _
  $region13: #{_lambda_.21} parent=0 // pred_fallthru
    _
  %v14 = vld [vmem:[%s0] sm:$0xff]
  %v15 = vld [vmem:[%s0 + $0x8] sm:$0xff]
  %v16 = vld [vmem:[%s0 + $0x10] sm:$0xff]
  %v17 = vld [vmem:[%s0 + $0x18] sm:$0xff]
  %v18 = vld [vmem:[%s0 + $0x20] sm:$0xff]
  %v19 = vld [vmem:[%s0 + $0x28] sm:$0xff]
  %v20 = vld [vmem:[%s0 + $0x30] sm:$0xff]
  %v21 = vld [vmem:[%s0 + $0x38] sm:$0xff]
  %v22 = vld [vmem:[%s0 + $0x40] sm:$0xff]
  %v23 = vld [vmem:[%s0 + $0x48] sm:$0xff]
  %v24 = vld [vmem:[%s0 + $0x50] sm:$0xff]
  %v25 = vld [vmem:[%s0 + $0x58] sm:$0xff]
  %v26 = vld [vmem:[%s0 + $0x60] sm:$0xff]
  %v27 = vld [vmem:[%s0 + $0x68] sm:$0xff]
  %v28 = vld [vmem:[%s0 + $0x70] sm:$0xff]
  %v29 = vld [vmem:[%s0 + $0x78] sm:$0xff]
  %v30 = vld [vmem:[%s0 + $0x80] sm:$0xff]
  %v31 = vld [vmem:[%s0 + $0x88] sm:$0xff]
  %v32 = vld [vmem:[%s0 + $0x90] sm:$0xff]
  %v33 = vld [vmem:[%s0 + $0x98] sm:$0xff]
  %v34 = vld [vmem:[%s0 + $0xa0] sm:$0xff]
  %v35 = vld [vmem:[%s0 + $0xa8] sm:$0xff]
  %v36 = vld [vmem:[%s0 + $0xb0] sm:$0xff]
  %v37 = vld [vmem:[%s0 + $0xb8] sm:$0xff]
  %v38 = vld [vmem:[%s0 + $0xc0] sm:$0xff]
  %v39 = vld [vmem:[%s0 + $0xc8] sm:$0xff]
  %v40 = vld [vmem:[%s0 + $0xd0] sm:$0xff]
  %v41 = vld [vmem:[%s0 + $0xd8] sm:$0xff]
  %v42 = vld [vmem:[%s0 + $0xe0] sm:$0xff]
  %v43 = vld [vmem:[%s0 + $0xe8] sm:$0xff]
  %v44 = vld [vmem:[%s0 + $0xf0] sm:$0xff]
  %v45 = vld [vmem:[%s0 + $0xf8] sm:$0xff]
  %v46 = vld [vmem:[%s0 + $0x100] sm:$0xff]
  %v47 = vld [vmem:[%s0 + $0x108] sm:$0xff]
  %v48 = vld [vmem:[%s0 + $0x110] sm:$0xff]
  %v49 = vld [vmem:[%s0 + $0x118] sm:$0xff]
  %v50 = vld [vmem:[%s0 + $0x120] sm:$0xff]
  %v51 = vld [vmem:[%s0 + $0x128] sm:$0xff]
  %v52 = vld [vmem:[%s0 + $0x130] sm:$0xff]
  %v53 = vld [vmem:[%s0 + $0x138] sm:$0xff]
  %v54 = vld [vmem:[%s0 + $0x140] sm:$0xff]
  %v55 = vld [vmem:[%s0 + $0x148] sm:$0xff]
  %v56 = vld [vmem:[%s0 + $0x150] sm:$0xff]
  %v57 = vld [vmem:[%s0 + $0x158] sm:$0xff]
  %v58 = vld [vmem:[%s0 + $0x160] sm:$0xff]
  %v59 = vld [vmem:[%s0 + $0x168] sm:$0xff]
  %v60 = vld [vmem:[%s0 + $0x170] sm:$0xff]
  %v61 = vld [vmem:[%s0 + $0x178] sm:$0xff]
  %v62 = vld [vmem:[%s0 + $0x180] sm:$0xff]
  %v63 = vld [vmem:[%s0 + $0x188] sm:$0xff]
  %v64 = vld [vmem:[%s0 + $0x190] sm:$0xff]
  %v65 = vld [vmem:[%s0 + $0x198] sm:$0xff]
  %v66 = vld [vmem:[%s0 + $0x1a0] sm:$0xff]
  %v67 = vld [vmem:[%s0 + $0x1a8] sm:$0xff]
  %v68 = vld [vmem:[%s0 + $0x1b0] sm:$0xff]
  %v69 = vld [vmem:[%s0 + $0x1b8] sm:$0xff]
  %v70 = vld [vmem:[%s0 + $0x1c0] sm:$0xff]
  %v71 = vld [vmem:[%s0 + $0x1c8] sm:$0xff]
  %v72 = vld [vmem:[%s0 + $0x1d0] sm:$0xff]
  %v73 = vld [vmem:[%s0 + $0x1d8] sm:$0xff]
  %v74 = vld [vmem:[%s0 + $0x1e0] sm:$0xff]
  %v75 = vld [vmem:[%s0 + $0x1e8] sm:$0xff]
  %v76 = vld [vmem:[%s0 + $0x1f0] sm:$0xff]
  %v77 = vld [vmem:[%s0 + $0x1f8] sm:$0xff]
  %v78 = vld [vmem:[%s0 + $0x200] sm:$0xff]
  %v79 = vld [vmem:[%s0 + $0x208] sm:$0xff]
  %v80 = vld [vmem:[%s0 + $0x210] sm:$0xff]
  %v81 = vld [vmem:[%s0 + $0x218] sm:$0xff]
  %v82 = vld [vmem:[%s0 + $0x220] sm:$0xff]
  %v83 = vld [vmem:[%s0 + $0x228] sm:$0xff]
  %v84 = vld [vmem:[%s0 + $0x230] sm:$0xff]
  %v85 = vld [vmem:[%s0 + $0x238] sm:$0xff]
  %v86 = vld [vmem:[%s0 + $0x240] sm:$0xff]
  %v87 = vld [vmem:[%s0 + $0x248] sm:$0xff]
  %v88 = vld [vmem:[%s0 + $0x250] sm:$0xff]
  %v89 = vld [vmem:[%s0 + $0x258] sm:$0xff]
  %v90 = vld [vmem:[%s0 + $0x260] sm:$0xff]
  %v91 = vld [vmem:[%s0 + $0x268] sm:$0xff]
  %v92 = vld [vmem:[%s0 + $0x270] sm:$0xff]
  %v93 = vld [vmem:[%s0 + $0x278] sm:$0xff]
  %v94 = vld [vmem:[%s1] sm:$0xff]
  %v95 = vld [vmem:[%s1 + $0x8] sm:$0xff]
  %v96 = vld [vmem:[%s1 + $0x10] sm:$0xff]
  %v97 = vld [vmem:[%s1 + $0x18] sm:$0xff]
  %v98 = vld [vmem:[%s1 + $0x20] sm:$0xff]
  %v99 = vld [vmem:[%s1 + $0x28] sm:$0xff]
  %v100 = vld [vmem:[%s1 + $0x30] sm:$0xff]
  %v101 = vld [vmem:[%s1 + $0x38] sm:$0xff]
  %v102 = vld [vmem:[%s1 + $0x40] sm:$0xff]
  %v103 = vld [vmem:[%s1 + $0x48] sm:$0xff]
  %v104 = vld [vmem:[%s1 + $0x50] sm:$0xff]
  %v105 = vld [vmem:[%s1 + $0x58] sm:$0xff]
  %v106 = vld [vmem:[%s1 + $0x60] sm:$0xff]
  %v107 = vld [vmem:[%s1 + $0x68] sm:$0xff]
  %v108 = vld [vmem:[%s1 + $0x70] sm:$0xff]
  %v109 = vld [vmem:[%s1 + $0x78] sm:$0xff]
  %v110 = vld [vmem:[%s1 + $0x80] sm:$0xff]
  %v111 = vld [vmem:[%s1 + $0x88] sm:$0xff]
  %v112 = vld [vmem:[%s1 + $0x90] sm:$0xff]
  %v113 = vld [vmem:[%s1 + $0x98] sm:$0xff]
  %v114 = vld [vmem:[%s1 + $0xa0] sm:$0xff]
  %v115 = vld [vmem:[%s1 + $0xa8] sm:$0xff]
  %v116 = vld [vmem:[%s1 + $0xb0] sm:$0xff]
  %v117 = vld [vmem:[%s1 + $0xb8] sm:$0xff]
  %v118 = vld [vmem:[%s1 + $0xc0] sm:$0xff]
  %v119 = vld [vmem:[%s1 + $0xc8] sm:$0xff]
  %v120 = vld [vmem:[%s1 + $0xd0] sm:$0xff]
  %v121 = vld [vmem:[%s1 + $0xd8] sm:$0xff]
  %v122 = vld [vmem:[%s1 + $0xe0] sm:$0xff]
  %v123 = vld [vmem:[%s1 + $0xe8] sm:$0xff]
  %v124 = vld [vmem:[%s1 + $0xf0] sm:$0xff]
  %v125 = vld [vmem:[%s1 + $0xf8] sm:$0xff]
  %v126 = vld [vmem:[%s1 + $0x100] sm:$0xff]
  %v127 = vld [vmem:[%s1 + $0x108] sm:$0xff]
  %v128 = vld [vmem:[%s1 + $0x110] sm:$0xff]
  %v129 = vld [vmem:[%s1 + $0x118] sm:$0xff]
  %v130 = vld [vmem:[%s1 + $0x120] sm:$0xff]
  %v131 = vld [vmem:[%s1 + $0x128] sm:$0xff]
  %v132 = vld [vmem:[%s1 + $0x130] sm:$0xff]
  %v133 = vld [vmem:[%s1 + $0x138] sm:$0xff]
  %v134 = vld [vmem:[%s1 + $0x140] sm:$0xff]
  %v135 = vld [vmem:[%s1 + $0x148] sm:$0xff]
  %v136 = vld [vmem:[%s1 + $0x150] sm:$0xff]
  %v137 = vld [vmem:[%s1 + $0x158] sm:$0xff]
  %v138 = vld [vmem:[%s1 + $0x160] sm:$0xff]
  %v139 = vld [vmem:[%s1 + $0x168] sm:$0xff]
  %v140 = vld [vmem:[%s1 + $0x170] sm:$0xff]
  %v141 = vld [vmem:[%s1 + $0x178] sm:$0xff]
  %v142 = vld [vmem:[%s1 + $0x180] sm:$0xff]
  %v143 = vld [vmem:[%s1 + $0x188] sm:$0xff]
  %v144 = vld [vmem:[%s1 + $0x190] sm:$0xff]
  %v145 = vld [vmem:[%s1 + $0x198] sm:$0xff]
  %v146 = vld [vmem:[%s1 + $0x1a0] sm:$0xff]
  %v147 = vld [vmem:[%s1 + $0x1a8] sm:$0xff]
  %v148 = vld [vmem:[%s1 + $0x1b0] sm:$0xff]
  %v149 = vld [vmem:[%s1 + $0x1b8] sm:$0xff]
  %v150 = vld [vmem:[%s1 + $0x1c0] sm:$0xff]
  %v151 = vld [vmem:[%s1 + $0x1c8] sm:$0xff]
  %v152 = vld [vmem:[%s1 + $0x1d0] sm:$0xff]
  %v153 = vld [vmem:[%s1 + $0x1d8] sm:$0xff]
  %v154 = vld [vmem:[%s1 + $0x1e0] sm:$0xff]
  %v155 = vld [vmem:[%s1 + $0x1e8] sm:$0xff]
  %v156 = vld [vmem:[%s1 + $0x1f0] sm:$0xff]
  %v157 = vld [vmem:[%s1 + $0x1f8] sm:$0xff]
  %v158 = vld [vmem:[%s1 + $0x200] sm:$0xff]
  %v159 = vld [vmem:[%s1 + $0x208] sm:$0xff]
  %v160 = vld [vmem:[%s1 + $0x210] sm:$0xff]
  %v161 = vld [vmem:[%s1 + $0x218] sm:$0xff]
  %v162 = vld [vmem:[%s1 + $0x220] sm:$0xff]
  %v163 = vld [vmem:[%s1 + $0x228] sm:$0xff]
  %v164 = vld [vmem:[%s1 + $0x230] sm:$0xff]
  %v165 = vld [vmem:[%s1 + $0x238] sm:$0xff]
  %v166 = vld [vmem:[%s2] sm:$0x1]
  %v168 = vlaneseq
  %v169 = vshrl.u32 %v168, 7
  %v170 = vsub.s32 0, %v169
  %v171 = vrot.slane %v166, %v170
  %vm173 = vcmask 523264
  %v175 = vsel %vm173, %v18, 0
  %v178 = vsel %vm173, %v23, 0
  %v181 = vsel %vm173, %v28, 0
  %v184 = vsel %vm173, %v33, 0
  %v187 = vsel %vm173, %v38, 0
  %v190 = vsel %vm173, %v43, 0
  %v193 = vsel %vm173, %v48, 0
  %v196 = vsel %vm173, %v53, 0
  %v199 = vsel %vm173, %v58, 0
  %v202 = vsel %vm173, %v63, 0
  %v205 = vsel %vm173, %v68, 0
  %v208 = vsel %vm173, %v73, 0
  %v211 = vsel %vm173, %v78, 0
  %v214 = vsel %vm173, %v83, 0
  %v217 = vsel %vm173, %v88, 0
  %v220 = vsel %vm173, %v93, 0
  %222 = vmatprep.subr.mxu0 0.0
  %223 = vmatpush1.msra.mxu0 %v109
  %224 = vmatprep.subr.mxu0 0.0
  %225 = vmatpush1.msra.mxu0 %v108
  %226 = vmatprep.subr.mxu0 0.0
  %227 = vmatpush1.msra.mxu0 %v107
  %228 = vmatprep.subr.mxu0 0.0
  %229 = vmatpush1.msra.mxu0 %v106
  %230 = vmatprep.subr.mxu0 0.0
  %231 = vmatpush1.msra.mxu0 %v105
  %232 = vmatprep.subr.mxu0 0.0
  %233 = vmatpush1.msra.mxu0 %v104
  %234 = vmatprep.subr.mxu0 0.0
  %235 = vmatpush1.msra.mxu0 %v103
  %236 = vmatprep.subr.mxu0 0.0
  %237 = vmatpush1.msra.mxu0 %v102
  %238 = vmatprep.subr.mxu0 0.0
  %239 = vmatpush1.msra.mxu0 %v101
  %240 = vmatprep.subr.mxu0 0.0
  %241 = vmatpush1.msra.mxu0 %v100
  %242 = vmatprep.subr.mxu0 0.0
  %243 = vmatpush1.msra.mxu0 %v99
  %244 = vmatprep.subr.mxu0 0.0
  %245 = vmatpush1.msra.mxu0 %v98
  %246 = vmatprep.subr.mxu0 0.0
  %247 = vmatpush1.msra.mxu0 %v97
  %248 = vmatprep.subr.mxu0 0.0
  %249 = vmatpush1.msra.mxu0 %v96
  %250 = vmatprep.subr.mxu0 0.0
  %251 = vmatpush1.msra.mxu0 %v95
  %252 = vmatprep.subr.mxu0 0.0
  %253 = vmatpush1.msra.mxu0 %v94
  %254 = vmatprep.subr.mxu0 0.0
  %255 = vmatpush2.msra.mxu0 %v125
  %256 = vmatprep.subr.mxu0 0.0
  %257 = vmatpush2.msra.mxu0 %v124
  %258 = vmatprep.subr.mxu0 0.0
  %259 = vmatpush2.msra.mxu0 %v123
  %260 = vmatprep.subr.mxu0 0.0
  %261 = vmatpush2.msra.mxu0 %v122
  %262 = vmatprep.subr.mxu0 0.0
  %263 = vmatpush2.msra.mxu0 %v121
  %264 = vmatprep.subr.mxu0 0.0
  %265 = vmatpush2.msra.mxu0 %v120
  %266 = vmatprep.subr.mxu0 0.0
  %267 = vmatpush2.msra.mxu0 %v119
  %268 = vmatprep.subr.mxu0 0.0
  %269 = vmatpush2.msra.mxu0 %v118
  %270 = vmatprep.subr.mxu0 0.0
  %271 = vmatpush2.msra.mxu0 %v117
  %272 = vmatprep.subr.mxu0 0.0
  %273 = vmatpush2.msra.mxu0 %v116
  %274 = vmatprep.subr.mxu0 0.0
  %275 = vmatpush2.msra.mxu0 %v115
  %276 = vmatprep.subr.mxu0 0.0
  %277 = vmatpush2.msra.mxu0 %v114
  %278 = vmatprep.subr.mxu0 0.0
  %279 = vmatpush2.msra.mxu0 %v113
  %280 = vmatprep.subr.mxu0 0.0
  %281 = vmatpush2.msra.mxu0 %v112
  %282 = vmatprep.subr.mxu0 0.0
  %283 = vmatpush2.msra.mxu0 %v111
  %284 = vmatprep.subr.mxu0 0.0
  %285 = vmatpush2.msra.mxu0 %v110
  %286 = vmatprep.mubr.f32.mxu0 %v15
  %287 = vmatmul.mubr.f32.gmra.mxu0 %v14
  %v288 = vpop.f32.mrf.mxu0
  %v289 = vadd.f32 %v171, %v288
  %v290 = vpop.f32.mrf.mxu0
  %291 = vmatprep.mubr.f32.mxu0 %v20
  %292 = vmatmul.mubr.f32.gmra.mxu0 %v19
  %v293 = vpop.f32.mrf.mxu0
  %v294 = vadd.f32 %v171, %v293
  %v295 = vpop.f32.mrf.mxu0
  %296 = vmatprep.mubr.f32.mxu0 %v25
  %297 = vmatmul.mubr.f32.gmra.mxu0 %v24
  %v298 = vpop.f32.mrf.mxu0
  %v299 = vadd.f32 %v171, %v298
  %v300 = vpop.f32.mrf.mxu0
  %301 = vmatprep.mubr.f32.mxu0 %v30
  %302 = vmatmul.mubr.f32.gmra.mxu0 %v29
  %v303 = vpop.f32.mrf.mxu0
  %v304 = vadd.f32 %v171, %v303
  %v305 = vpop.f32.mrf.mxu0
  %306 = vmatprep.mubr.f32.mxu0 %v35
  %307 = vmatmul.mubr.f32.gmra.mxu0 %v34
  %v308 = vpop.f32.mrf.mxu0
  %v309 = vadd.f32 %v171, %v308
  %v310 = vpop.f32.mrf.mxu0
  %311 = vmatprep.mubr.f32.mxu0 %v40
  %312 = vmatmul.mubr.f32.gmra.mxu0 %v39
  %v313 = vpop.f32.mrf.mxu0
  %v314 = vadd.f32 %v171, %v313
  %v315 = vpop.f32.mrf.mxu0
  %316 = vmatprep.mubr.f32.mxu0 %v45
  %317 = vmatmul.mubr.f32.gmra.mxu0 %v44
  %v318 = vpop.f32.mrf.mxu0
  %v319 = vadd.f32 %v171, %v318
  %v320 = vpop.f32.mrf.mxu0
  %321 = vmatprep.mubr.f32.mxu0 %v50
  %322 = vmatmul.mubr.f32.gmra.mxu0 %v49
  %v323 = vpop.f32.mrf.mxu0
  %v324 = vadd.f32 %v171, %v323
  %v325 = vpop.f32.mrf.mxu0
  %326 = vmatprep.mubr.f32.mxu0 %v55
  %327 = vmatmul.mubr.f32.gmra.mxu0 %v54
  %v328 = vpop.f32.mrf.mxu0
  %v329 = vadd.f32 %v171, %v328
  %v330 = vpop.f32.mrf.mxu0
  %331 = vmatprep.mubr.f32.mxu0 %v60
  %332 = vmatmul.mubr.f32.gmra.mxu0 %v59
  %v333 = vpop.f32.mrf.mxu0
  %v334 = vadd.f32 %v171, %v333
  %v335 = vpop.f32.mrf.mxu0
  %336 = vmatprep.mubr.f32.mxu0 %v65
  %337 = vmatmul.mubr.f32.gmra.mxu0 %v64
  %v338 = vpop.f32.mrf.mxu0
  %v339 = vadd.f32 %v171, %v338
  %v340 = vpop.f32.mrf.mxu0
  %341 = vmatprep.mubr.f32.mxu0 %v70
  %342 = vmatmul.mubr.f32.gmra.mxu0 %v69
  %v343 = vpop.f32.mrf.mxu0
  %v344 = vadd.f32 %v171, %v343
  %v345 = vpop.f32.mrf.mxu0
  %346 = vmatprep.mubr.f32.mxu0 %v75
  %347 = vmatmul.mubr.f32.gmra.mxu0 %v74
  %v348 = vpop.f32.mrf.mxu0
  %v349 = vadd.f32 %v171, %v348
  %v350 = vpop.f32.mrf.mxu0
  %351 = vmatprep.mubr.f32.mxu0 %v80
  %352 = vmatmul.mubr.f32.gmra.mxu0 %v79
  %v353 = vpop.f32.mrf.mxu0
  %v354 = vadd.f32 %v171, %v353
  %v355 = vpop.f32.mrf.mxu0
  %356 = vmatprep.mubr.f32.mxu0 %v85
  %357 = vmatmul.mubr.f32.gmra.mxu0 %v84
  %v358 = vpop.f32.mrf.mxu0
  %v359 = vadd.f32 %v171, %v358
  %v360 = vpop.f32.mrf.mxu0
  %361 = vmatprep.mubr.f32.mxu0 %v90
  %362 = vmatmul.mubr.f32.gmra.mxu0 %v89
  %v363 = vpop.f32.mrf.mxu0
  %v364 = vadd.f32 %v171, %v363
  %v365 = vpop.f32.mrf.mxu0
  %366 = vdwg.mxu0
  %367 = vmatprep.subr.mxu0 0.0
  %368 = vmatpush1.msra.mxu0 %v141
  %369 = vmatprep.subr.mxu0 0.0
  %370 = vmatpush1.msra.mxu0 %v140
  %371 = vmatprep.subr.mxu0 0.0
  %372 = vmatpush1.msra.mxu0 %v139
  %373 = vmatprep.subr.mxu0 0.0
  %374 = vmatpush1.msra.mxu0 %v138
  %375 = vmatprep.subr.mxu0 0.0
  %376 = vmatpush1.msra.mxu0 %v137
  %377 = vmatprep.subr.mxu0 0.0
  %378 = vmatpush1.msra.mxu0 %v136
  %379 = vmatprep.subr.mxu0 0.0
  %380 = vmatpush1.msra.mxu0 %v135
  %381 = vmatprep.subr.mxu0 0.0
  %382 = vmatpush1.msra.mxu0 %v134
  %383 = vmatprep.subr.mxu0 0.0
  %384 = vmatpush1.msra.mxu0 %v133
  %385 = vmatprep.subr.mxu0 0.0
  %386 = vmatpush1.msra.mxu0 %v132
  %387 = vmatprep.subr.mxu0 0.0
  %388 = vmatpush1.msra.mxu0 %v131
  %389 = vmatprep.subr.mxu0 0.0
  %390 = vmatpush1.msra.mxu0 %v130
  %391 = vmatprep.subr.mxu0 0.0
  %392 = vmatpush1.msra.mxu0 %v129
  %393 = vmatprep.subr.mxu0 0.0
  %394 = vmatpush1.msra.mxu0 %v128
  %395 = vmatprep.subr.mxu0 0.0
  %396 = vmatpush1.msra.mxu0 %v127
  %397 = vmatprep.subr.mxu0 0.0
  %398 = vmatpush1.msra.mxu0 %v126
  %399 = vmatprep.subr.mxu0 0.0
  %400 = vmatpush2.msra.mxu0 %v157
  %401 = vmatprep.subr.mxu0 0.0
  %402 = vmatpush2.msra.mxu0 %v156
  %403 = vmatprep.subr.mxu0 0.0
  %404 = vmatpush2.msra.mxu0 %v155
  %405 = vmatprep.subr.mxu0 0.0
  %406 = vmatpush2.msra.mxu0 %v154
  %407 = vmatprep.subr.mxu0 0.0
  %408 = vmatpush2.msra.mxu0 %v153
  %409 = vmatprep.subr.mxu0 0.0
  %410 = vmatpush2.msra.mxu0 %v152
  %411 = vmatprep.subr.mxu0 0.0
  %412 = vmatpush2.msra.mxu0 %v151
  %413 = vmatprep.subr.mxu0 0.0
  %414 = vmatpush2.msra.mxu0 %v150
  %415 = vmatprep.subr.mxu0 0.0
  %416 = vmatpush2.msra.mxu0 %v149
  %417 = vmatprep.subr.mxu0 0.0
  %418 = vmatpush2.msra.mxu0 %v148
  %419 = vmatprep.subr.mxu0 0.0
  %420 = vmatpush2.msra.mxu0 %v147
  %421 = vmatprep.subr.mxu0 0.0
  %422 = vmatpush2.msra.mxu0 %v146
  %423 = vmatprep.subr.mxu0 0.0
  %424 = vmatpush2.msra.mxu0 %v145
  %425 = vmatprep.subr.mxu0 0.0
  %426 = vmatpush2.msra.mxu0 %v144
  %427 = vmatprep.subr.mxu0 0.0
  %428 = vmatpush2.msra.mxu0 %v143
  %429 = vmatprep.subr.mxu0 0.0
  %430 = vmatpush2.msra.mxu0 %v142
  %431 = vmatprep.mubr.f32.mxu0 %v17
  %432 = vmatmul.mubr.f32.gmra.mxu0 %v16
  %v433 = vpop.f32.mrf.mxu0
  %v434 = vadd.f32 %v289, %v433
  %v435 = vpop.f32.mrf.mxu0
  %436 = vmatprep.mubr.f32.mxu0 %v22
  %437 = vmatmul.mubr.f32.gmra.mxu0 %v21
  %v438 = vpop.f32.mrf.mxu0
  %v439 = vadd.f32 %v294, %v438
  %v440 = vpop.f32.mrf.mxu0
  %441 = vmatprep.mubr.f32.mxu0 %v27
  %442 = vmatmul.mubr.f32.gmra.mxu0 %v26
  %v443 = vpop.f32.mrf.mxu0
  %v444 = vadd.f32 %v299, %v443
  %v445 = vpop.f32.mrf.mxu0
  %446 = vmatprep.mubr.f32.mxu0 %v32
  %447 = vmatmul.mubr.f32.gmra.mxu0 %v31
  %v448 = vpop.f32.mrf.mxu0
  %v449 = vadd.f32 %v304, %v448
  %v450 = vpop.f32.mrf.mxu0
  %451 = vmatprep.mubr.f32.mxu0 %v37
  %452 = vmatmul.mubr.f32.gmra.mxu0 %v36
  %v453 = vpop.f32.mrf.mxu0
  %v454 = vadd.f32 %v309, %v453
  %v455 = vpop.f32.mrf.mxu0
  %456 = vmatprep.mubr.f32.mxu0 %v42
  %457 = vmatmul.mubr.f32.gmra.mxu0 %v41
  %v458 = vpop.f32.mrf.mxu0
  %v459 = vadd.f32 %v314, %v458
  %v460 = vpop.f32.mrf.mxu0
  %461 = vmatprep.mubr.f32.mxu0 %v47
  %462 = vmatmul.mubr.f32.gmra.mxu0 %v46
  %v463 = vpop.f32.mrf.mxu0
  %v464 = vadd.f32 %v319, %v463
  %v465 = vpop.f32.mrf.mxu0
  %466 = vmatprep.mubr.f32.mxu0 %v52
  %467 = vmatmul.mubr.f32.gmra.mxu0 %v51
  %v468 = vpop.f32.mrf.mxu0
  %v469 = vadd.f32 %v324, %v468
  %v470 = vpop.f32.mrf.mxu0
  %471 = vmatprep.mubr.f32.mxu0 %v57
  %472 = vmatmul.mubr.f32.gmra.mxu0 %v56
  %v473 = vpop.f32.mrf.mxu0
  %v474 = vadd.f32 %v329, %v473
  %v475 = vpop.f32.mrf.mxu0
  %476 = vmatprep.mubr.f32.mxu0 %v62
  %477 = vmatmul.mubr.f32.gmra.mxu0 %v61
  %v478 = vpop.f32.mrf.mxu0
  %v479 = vadd.f32 %v334, %v478
  %v480 = vpop.f32.mrf.mxu0
  %481 = vmatprep.mubr.f32.mxu0 %v67
  %482 = vmatmul.mubr.f32.gmra.mxu0 %v66
  %v483 = vpop.f32.mrf.mxu0
  %v484 = vadd.f32 %v339, %v483
  %v485 = vpop.f32.mrf.mxu0
  %486 = vmatprep.mubr.f32.mxu0 %v72
  %487 = vmatmul.mubr.f32.gmra.mxu0 %v71
  %v488 = vpop.f32.mrf.mxu0
  %v489 = vadd.f32 %v344, %v488
  %v490 = vpop.f32.mrf.mxu0
  %491 = vmatprep.mubr.f32.mxu0 %v77
  %492 = vmatmul.mubr.f32.gmra.mxu0 %v76
  %v493 = vpop.f32.mrf.mxu0
  %v494 = vadd.f32 %v349, %v493
  %v495 = vpop.f32.mrf.mxu0
  %496 = vmatprep.mubr.f32.mxu0 %v82
  %497 = vmatmul.mubr.f32.gmra.mxu0 %v81
  %v498 = vpop.f32.mrf.mxu0
  %v499 = vadd.f32 %v354, %v498
  %v500 = vpop.f32.mrf.mxu0
  %501 = vmatprep.mubr.f32.mxu0 %v87
  %502 = vmatmul.mubr.f32.gmra.mxu0 %v86
  %v503 = vpop.f32.mrf.mxu0
  %v504 = vadd.f32 %v359, %v503
  %v505 = vpop.f32.mrf.mxu0
  %506 = vmatprep.mubr.f32.mxu0 %v92
  %507 = vmatmul.mubr.f32.gmra.mxu0 %v91
  %v508 = vpop.f32.mrf.mxu0
  %v509 = vadd.f32 %v364, %v508
  %v510 = vpop.f32.mrf.mxu0
  %511 = vdwg.mxu0
  %512 = vmatprep.subr.mxu0 0.0
  %513 = vmatpush1.msra.mxu0 0.0
  %514 = vmatprep.subr.mxu0 0.0
  %515 = vmatpush1.msra.mxu0 0.0
  %516 = vmatprep.subr.mxu0 0.0
  %517 = vmatpush1.msra.mxu0 0.0
  %518 = vmatprep.subr.mxu0 0.0
  %519 = vmatpush1.msra.mxu0 0.0
  %520 = vmatprep.subr.mxu0 0.0
  %521 = vmatpush1.msra.mxu0 0.0
  %522 = vmatprep.subr.mxu0 0.0
  %523 = vmatpush1.msra.mxu0 0.0
  %524 = vmatprep.subr.mxu0 0.0
  %525 = vmatpush1.msra.mxu0 0.0
  %526 = vmatprep.subr.mxu0 0.0
  %527 = vmatpush1.msra.mxu0 0.0
  %528 = vmatprep.subr.mxu0 0.0
  %529 = vmatpush1.msra.mxu0 %v165
  %530 = vmatprep.subr.mxu0 0.0
  %531 = vmatpush1.msra.mxu0 %v164
  %532 = vmatprep.subr.mxu0 0.0
  %533 = vmatpush1.msra.mxu0 %v163
  %534 = vmatprep.subr.mxu0 0.0
  %535 = vmatpush1.msra.mxu0 %v162
  %536 = vmatprep.subr.mxu0 0.0
  %537 = vmatpush1.msra.mxu0 %v161
  %538 = vmatprep.subr.mxu0 0.0
  %539 = vmatpush1.msra.mxu0 %v160
  %540 = vmatprep.subr.mxu0 0.0
  %541 = vmatpush1.msra.mxu0 %v159
  %542 = vmatprep.subr.mxu0 0.0
  %543 = vmatpush1.msra.mxu0 %v158
  %544 = vmatprep.subr.mxu0 0.0
  %545 = vmatpush2.msra.mxu0 0.0
  %546 = vmatprep.subr.mxu0 0.0
  %547 = vmatpush2.msra.mxu0 0.0
  %548 = vmatprep.subr.mxu0 0.0
  %549 = vmatpush2.msra.mxu0 0.0
  %550 = vmatprep.subr.mxu0 0.0
  %551 = vmatpush2.msra.mxu0 0.0
  %552 = vmatprep.subr.mxu0 0.0
  %553 = vmatpush2.msra.mxu0 0.0
  %554 = vmatprep.subr.mxu0 0.0
  %555 = vmatpush2.msra.mxu0 0.0
  %556 = vmatprep.subr.mxu0 0.0
  %557 = vmatpush2.msra.mxu0 0.0
  %558 = vmatprep.subr.mxu0 0.0
  %559 = vmatpush2.msra.mxu0 0.0
  %560 = vmatprep.subr.mxu0 0.0
  %561 = vmatpush2.msra.mxu0 0.0
  %562 = vmatprep.subr.mxu0 0.0
  %563 = vmatpush2.msra.mxu0 0.0
  %564 = vmatprep.subr.mxu0 0.0
  %565 = vmatpush2.msra.mxu0 0.0
  %566 = vmatprep.subr.mxu0 0.0
  %567 = vmatpush2.msra.mxu0 0.0
  %568 = vmatprep.subr.mxu0 0.0
  %569 = vmatpush2.msra.mxu0 0.0
  %570 = vmatprep.subr.mxu0 0.0
  %571 = vmatpush2.msra.mxu0 0.0
  %572 = vmatprep.subr.mxu0 0.0
  %573 = vmatpush2.msra.mxu0 0.0
  %574 = vmatprep.subr.mxu0 0.0
  %575 = vmatpush2.msra.mxu0 0.0
  %576 = vmatprep.mubr.f32.mxu0 0.0
  %577 = vmatmul.mubr.f32.gmra.mxu0 %v175
  %v578 = vpop.f32.mrf.mxu0
  %v579 = vadd.f32 %v434, %v578
  %v580 = vpop.f32.mrf.mxu0
  %581 = vmatprep.mubr.f32.mxu0 0.0
  %582 = vmatmul.mubr.f32.gmra.mxu0 %v178
  %v583 = vpop.f32.mrf.mxu0
  %v584 = vadd.f32 %v439, %v583
  %v585 = vpop.f32.mrf.mxu0
  %586 = vmatprep.mubr.f32.mxu0 0.0
  %587 = vmatmul.mubr.f32.gmra.mxu0 %v181
  %v588 = vpop.f32.mrf.mxu0
  %v589 = vadd.f32 %v444, %v588
  %v590 = vpop.f32.mrf.mxu0
  %591 = vmatprep.mubr.f32.mxu0 0.0
  %592 = vmatmul.mubr.f32.gmra.mxu0 %v184
  %v593 = vpop.f32.mrf.mxu0
  %v594 = vadd.f32 %v449, %v593
  %v595 = vpop.f32.mrf.mxu0
  %596 = vmatprep.mubr.f32.mxu0 0.0
  %597 = vmatmul.mubr.f32.gmra.mxu0 %v187
  %v598 = vpop.f32.mrf.mxu0
  %v599 = vadd.f32 %v454, %v598
  %v600 = vpop.f32.mrf.mxu0
  %601 = vmatprep.mubr.f32.mxu0 0.0
  %602 = vmatmul.mubr.f32.gmra.mxu0 %v190
  %v603 = vpop.f32.mrf.mxu0
  %v604 = vadd.f32 %v459, %v603
  %v605 = vpop.f32.mrf.mxu0
  %606 = vmatprep.mubr.f32.mxu0 0.0
  %607 = vmatmul.mubr.f32.gmra.mxu0 %v193
  %v608 = vpop.f32.mrf.mxu0
  %v609 = vadd.f32 %v464, %v608
  %v610 = vpop.f32.mrf.mxu0
  %611 = vmatprep.mubr.f32.mxu0 0.0
  %612 = vmatmul.mubr.f32.gmra.mxu0 %v196
  %v613 = vpop.f32.mrf.mxu0
  %v614 = vadd.f32 %v469, %v613
  %v615 = vpop.f32.mrf.mxu0
  %616 = vmatprep.mubr.f32.mxu0 0.0
  %617 = vmatmul.mubr.f32.gmra.mxu0 %v199
  %v618 = vpop.f32.mrf.mxu0
  %v619 = vadd.f32 %v474, %v618
  %v620 = vpop.f32.mrf.mxu0
  %621 = vmatprep.mubr.f32.mxu0 0.0
  %622 = vmatmul.mubr.f32.gmra.mxu0 %v202
  %v623 = vpop.f32.mrf.mxu0
  %v624 = vadd.f32 %v479, %v623
  %v625 = vpop.f32.mrf.mxu0
  %626 = vmatprep.mubr.f32.mxu0 0.0
  %627 = vmatmul.mubr.f32.gmra.mxu0 %v205
  %v628 = vpop.f32.mrf.mxu0
  %v629 = vadd.f32 %v484, %v628
  %v630 = vpop.f32.mrf.mxu0
  %631 = vmatprep.mubr.f32.mxu0 0.0
  %632 = vmatmul.mubr.f32.gmra.mxu0 %v208
  %v633 = vpop.f32.mrf.mxu0
  %v634 = vadd.f32 %v489, %v633
  %v635 = vpop.f32.mrf.mxu0
  %636 = vmatprep.mubr.f32.mxu0 0.0
  %637 = vmatmul.mubr.f32.gmra.mxu0 %v211
  %v638 = vpop.f32.mrf.mxu0
  %v639 = vadd.f32 %v494, %v638
  %v640 = vpop.f32.mrf.mxu0
  %641 = vmatprep.mubr.f32.mxu0 0.0
  %642 = vmatmul.mubr.f32.gmra.mxu0 %v214
  %v643 = vpop.f32.mrf.mxu0
  %v644 = vadd.f32 %v499, %v643
  %v645 = vpop.f32.mrf.mxu0
  %646 = vmatprep.mubr.f32.mxu0 0.0
  %647 = vmatmul.mubr.f32.gmra.mxu0 %v217
  %v648 = vpop.f32.mrf.mxu0
  %v649 = vadd.f32 %v504, %v648
  %v650 = vpop.f32.mrf.mxu0
  %651 = vmatprep.mubr.f32.mxu0 0.0
  %652 = vmatmul.mubr.f32.gmra.mxu0 %v220
  %v653 = vpop.f32.mrf.mxu0
  %v654 = vadd.f32 %v509, %v653
  %v655 = vpop.f32.mrf.mxu0
  %656 = vdwg.mxu0
  %vm657 = vcmp.gt.f32.partialorder %v579, 0.0
  %vm658 = vcmp.gt.f32.partialorder %v584, 0.0
  %vm659 = vcmp.gt.f32.partialorder %v589, 0.0
  %vm660 = vcmp.gt.f32.partialorder %v594, 0.0
  %vm661 = vcmp.gt.f32.partialorder %v599, 0.0
  %vm662 = vcmp.gt.f32.partialorder %v604, 0.0
  %vm663 = vcmp.gt.f32.partialorder %v609, 0.0
  %vm664 = vcmp.gt.f32.partialorder %v614, 0.0
  %vm665 = vcmp.gt.f32.partialorder %v619, 0.0
  %vm666 = vcmp.gt.f32.partialorder %v624, 0.0
  %vm667 = vcmp.gt.f32.partialorder %v629, 0.0
  %vm668 = vcmp.gt.f32.partialorder %v634, 0.0
  %vm669 = vcmp.gt.f32.partialorder %v639, 0.0
  %vm670 = vcmp.gt.f32.partialorder %v644, 0.0
  %vm671 = vcmp.gt.f32.partialorder %v649, 0.0
  %vm672 = vcmp.gt.f32.partialorder %v654, 0.0
  %v673 = vmul.f32 %v579, 0.01
  %v674 = vmul.f32 %v584, 0.01
  %v675 = vmul.f32 %v589, 0.01
  %v676 = vmul.f32 %v594, 0.01
  %v677 = vmul.f32 %v599, 0.01
  %v678 = vmul.f32 %v604, 0.01
  %v679 = vmul.f32 %v609, 0.01
  %v680 = vmul.f32 %v614, 0.01
  %v681 = vmul.f32 %v619, 0.01
  %v682 = vmul.f32 %v624, 0.01
  %v683 = vmul.f32 %v629, 0.01
  %v684 = vmul.f32 %v634, 0.01
  %v685 = vmul.f32 %v639, 0.01
  %v686 = vmul.f32 %v644, 0.01
  %v687 = vmul.f32 %v649, 0.01
  %v688 = vmul.f32 %v654, 0.01
  %v689 = vsel %vm657, %v579, %v673
  %v690 = vsel %vm658, %v584, %v674
  %v691 = vsel %vm659, %v589, %v675
  %v692 = vsel %vm660, %v594, %v676
  %v693 = vsel %vm661, %v599, %v677
  %v694 = vsel %vm662, %v604, %v678
  %v695 = vsel %vm663, %v609, %v679
  %v696 = vsel %vm664, %v614, %v680
  %v697 = vsel %vm665, %v619, %v681
  %v698 = vsel %vm666, %v624, %v682
  %v699 = vsel %vm667, %v629, %v683
  %v700 = vsel %vm668, %v634, %v684
  %v701 = vsel %vm669, %v639, %v685
  %v702 = vsel %vm670, %v644, %v686
  %v703 = vsel %vm671, %v649, %v687
  %v704 = vsel %vm672, %v654, %v688
  %vm705 = vcmask 261120
  %706 = vst.msk [vmem:[%s3] sm:$0xff] %vm705, %v689
  %707 = vst.msk [vmem:[%s3 + $0x8] sm:$0xff] %vm705, %v690
  %708 = vst.msk [vmem:[%s3 + $0x10] sm:$0xff] %vm705, %v691
  %709 = vst.msk [vmem:[%s3 + $0x18] sm:$0xff] %vm705, %v692
  %710 = vst.msk [vmem:[%s3 + $0x20] sm:$0xff] %vm705, %v693
  %711 = vst.msk [vmem:[%s3 + $0x28] sm:$0xff] %vm705, %v694
  %712 = vst.msk [vmem:[%s3 + $0x30] sm:$0xff] %vm705, %v695
  %713 = vst.msk [vmem:[%s3 + $0x38] sm:$0xff] %vm705, %v696
  %714 = vst.msk [vmem:[%s3 + $0x40] sm:$0xff] %vm705, %v697
  %715 = vst.msk [vmem:[%s3 + $0x48] sm:$0xff] %vm705, %v698
  %716 = vst.msk [vmem:[%s3 + $0x50] sm:$0xff] %vm705, %v699
  %717 = vst.msk [vmem:[%s3 + $0x58] sm:$0xff] %vm705, %v700
  %718 = vst.msk [vmem:[%s3 + $0x60] sm:$0xff] %vm705, %v701
  %719 = vst.msk [vmem:[%s3 + $0x68] sm:$0xff] %vm705, %v702
  %720 = vst.msk [vmem:[%s3 + $0x70] sm:$0xff] %vm705, %v703
  %721 = vst.msk [vmem:[%s3 + $0x78] sm:$0xff] %vm705, %v704
  // Predicated region
  $region14: #{_lambda_.21} parent=0 // pred_check
    _
  $region15: #{_lambda_.21} parent=0 // pred_check_branch
    %723 = sbr.rel (0) target = $region17
  $region16: #{_lambda_.21} parent=0 // pred_region
    _
  $region17: #{_lambda_.21} parent=0 // pred_fallthru
    _
  // Predicated region
  $region18: #{_lambda_.21} parent=0 // pred_check
    _
  $region19: #{_lambda_.21} parent=0 // pred_check_branch
    %725 = sbr.rel (0) target = $region21
  $region20: #{_lambda_.21} parent=0 // pred_region
    _
  $region21: #{_lambda_.21} parent=0 // pred_fallthru
    _

// kernel: _lambda_.23
$region0: #{_lambda_.23}
  #allocation0 [shape = 'u32[]', space=smem, size = 0x4, offset = 0x4, fixed_abs, tag = 'smem constant byte address 0x4 - core index']
  #allocation1 [shape = 'u32[144,128]{1,0:T(1,128)}', space=vmem, size = 0x12000, scoped, tag = 'internal scratch']
  %s0 = inlined_call_operand.vmem [shape: f32[512,32], index: 0, kind: input, shape index: {}]
  %s1 = inlined_call_operand.vmem [shape: f32[32,32], index: 1, kind: input, shape index: {}]
  %s2 = inlined_call_operand.vmem [shape: f32[1,32], index: 2, kind: input, shape index: {}]
  %s3 = inlined_call_operand.vmem [shape: f32[512,32], index: 3, kind: output, shape index: {}]
  %s4 = sld [smem:[#allocation0]]
  $region45: #{_lambda_.23} parent=0
    _
  %s6 = ssub.s32 1, %s4
  %s7 = scalar_select 0, %s6, %s4
  loop: start=0, step=1, limit=4
  $region2: #{_lambda_.23} parent=0 // loop_pre_header
    _
  $region3: #{_lambda_.23} parent=0 // loop_header
    %s9 = sphi 0, %s13
    %p10 = scmp.ge.s32.totalorder %s9, 4
    %s19 = sphi 0, %s21
    %s22 = sphi 0, %s19
    %s23 = sphi 0, %s22
    %s39 = sphi 0, %s23
    %s43 = sphi 0, %s43
    %s45 = sphi 0, %s43
    %s46 = sphi 0, %s45
    %s60 = sphi 0, %s46
    %s64 = sphi 0, %s64
    %s66 = sphi 0, %s64
    %s67 = sphi 0, %s66
    %s81 = sphi 0, %s67
    %s87 = sphi 0, %s89
    %s90 = sphi 0, %s87
    %s91 = sphi 0, %s90
    %s107 = sphi 0, %s91
  $region4: #{_lambda_.23} parent=0 // loop_header_branch
    %12 = sbr.rel (%p10) target = $region8
  $region5: #{_lambda_.23} parent=0 // loop_body
    %s14 = ssub.s32 %s9, 1
    %s15 = ssub.s32 %s9, 2
    %s16 = sadd.s32 %s9, 1
    %s17 = ssub.s32 %s9, %s16
    %p18 = scmp.eq.s32.totalorder %s17, 0
    %s20 = sadd.s32 %s19, 1
    %s21 = scalar_select %p18, %s19, %s20
    %p24 = pneg %p18
    %p25 = scmp.eq.s32.totalorder %s9, 1
    %p26 = por %p24, %p25
    %p27 = scmp.ne.s32.totalorder %s19, %s22
    %p28 = scmp.eq.s32.totalorder %s9, 0
    %p29 = por %p27, %p28
    %p30 = scmp.ne.s32.totalorder %s19, %s22
    %p31 = scmp.eq.s32.totalorder %s14, 1
    %p32 = por %p30, %p31
    %p33 = scmp.ne.s32.totalorder %s22, %s23
    %p34 = scmp.eq.s32.totalorder %s14, 0
    %p35 = por %p33, %p34
    %p36 = scmp.ne.s32.totalorder %s22, %s23
    %p37 = scmp.eq.s32.totalorder %s15, 1
    %p38 = por %p36, %p37
    %p40 = scmp.ne.s32.totalorder %s23, %s39
    %p41 = scmp.eq.s32.totalorder %s15, 0
    %p42 = por %p40, %p41
    %s44 = sadd.s32 %s43, 1
    %p47 = scmp.eq.s32.totalorder %s9, 1
    %p48 = scmp.ne.s32.totalorder %s43, %s45
    %p49 = scmp.eq.s32.totalorder %s9, 0
    %p50 = por %p48, %p49
    %p51 = scmp.ne.s32.totalorder %s43, %s45
    %p52 = scmp.eq.s32.totalorder %s14, 1
    %p53 = por %p51, %p52
    %p54 = scmp.ne.s32.totalorder %s45, %s46
    %p55 = scmp.eq.s32.totalorder %s14, 0
    %p56 = por %p54, %p55
    %p57 = scmp.ne.s32.totalorder %s45, %s46
    %p58 = scmp.eq.s32.totalorder %s15, 1
    %p59 = por %p57, %p58
    %p61 = scmp.ne.s32.totalorder %s46, %s60
    %p62 = scmp.eq.s32.totalorder %s15, 0
    %p63 = por %p61, %p62
    %s65 = sadd.s32 %s64, 1
    %p68 = scmp.eq.s32.totalorder %s9, 1
    %p69 = scmp.ne.s32.totalorder %s64, %s66
    %p70 = scmp.eq.s32.totalorder %s9, 0
    %p71 = por %p69, %p70
    %p72 = scmp.ne.s32.totalorder %s64, %s66
    %p73 = scmp.eq.s32.totalorder %s14, 1
    %p74 = por %p72, %p73
    %p75 = scmp.ne.s32.totalorder %s66, %s67
    %p76 = scmp.eq.s32.totalorder %s14, 0
    %p77 = por %p75, %p76
    %p78 = scmp.ne.s32.totalorder %s66, %s67
    %p79 = scmp.eq.s32.totalorder %s15, 1
    %p80 = por %p78, %p79
    %p82 = scmp.ne.s32.totalorder %s67, %s81
    %p83 = scmp.eq.s32.totalorder %s15, 0
    %p84 = por %p82, %p83
    %s85 = ssub.s32 %s9, %s16
    %p86 = scmp.eq.s32.totalorder %s85, 0
    %s88 = sadd.s32 %s87, 1
    %s89 = scalar_select %p86, %s87, %s88
    %p92 = pneg %p86
    %p93 = scmp.eq.s32.totalorder %s9, 1
    %p94 = por %p92, %p93
    %p95 = scmp.ne.s32.totalorder %s87, %s90
    %p96 = scmp.eq.s32.totalorder %s9, 0
    %p97 = por %p95, %p96
    %p98 = scmp.ne.s32.totalorder %s87, %s90
    %p99 = scmp.eq.s32.totalorder %s14, 1
    %p100 = por %p98, %p99
    %p101 = scmp.ne.s32.totalorder %s90, %s91
    %p102 = scmp.eq.s32.totalorder %s14, 0
    %p103 = por %p101, %p102
    %p104 = scmp.ne.s32.totalorder %s90, %s91
    %p105 = scmp.eq.s32.totalorder %s15, 1
    %p106 = por %p104, %p105
    %p108 = scmp.ne.s32.totalorder %s91, %s107
    %p109 = scmp.eq.s32.totalorder %s15, 0
    %p110 = por %p108, %p109
    %p111 = scmp.le.s32.totalorder 1, %s9
    %p112 = scmp.lt.s32.totalorder %s9, 3
    %p113 = pnand %p111, %p112
    %p114 = pneg %p113
    // Predicated region
    $region9: #{_lambda_.23} parent=5 // pred_check
      _
    $region10: #{_lambda_.23} parent=5 // pred_check_branch
      %116 = sbr.rel (%p113) target = $region12
    $region11: #{_lambda_.23} parent=5 // pred_region
      %s117 = ssub.s32 %s9, 1
      // Predicated region
      $region13: #{_lambda_.23} parent=11 // pred_check
        %p118 = pneg %p56
      $region14: #{_lambda_.23} parent=11 // pred_check_branch
        %120 = sbr.rel (%p118) target = $region16
      $region15: #{_lambda_.23} parent=11 // pred_region
        _
      $region16: #{_lambda_.23} parent=11 // pred_fallthru
        _
      // Predicated region
      $region17: #{_lambda_.23} parent=11 // pred_check
        %p121 = pneg %p77
      $region18: #{_lambda_.23} parent=11 // pred_check_branch
        %123 = sbr.rel (%p121) target = $region20
      $region19: #{_lambda_.23} parent=11 // pred_region
        _
      $region20: #{_lambda_.23} parent=11 // pred_fallthru
        _
    $region12: #{_lambda_.23} parent=5 // pred_fallthru
      _
    %p124 = scmp.lt.s32.totalorder %s9, 2
    // Predicated region
    $region21: #{_lambda_.23} parent=5 // pred_check
      %p125 = pneg %p124
    $region22: #{_lambda_.23} parent=5 // pred_check_branch
      %127 = sbr.rel (%p125) target = $region24
    $region23: #{_lambda_.23} parent=5 // pred_region
      // Predicated region
      $region25: #{_lambda_.23} parent=23 // pred_check
        %p128 = pneg %p29
      $region26: #{_lambda_.23} parent=23 // pred_check_branch
        %130 = sbr.rel (%p128) target = $region28
      $region27: #{_lambda_.23} parent=23 // pred_region
        %s131 = smul.u32 32, %s9
        %p132 = scmp.lt.s32.totalorder %s131, 63
        %s133 = scalar_select %p132, %s131, 63
        %s134 = smul.addr %s133, 8
        %s135 = scalar_lea.vmem %s0, %s134
        %s136 = smul.u32 32, %s9
      $region28: #{_lambda_.23} parent=23 // pred_fallthru
        _
    $region24: #{_lambda_.23} parent=5 // pred_fallthru
      _
    %p137 = scmp.le.s32.totalorder 1, %s9
    %p138 = scmp.lt.s32.totalorder %s9, 3
    %p139 = pnand %p137, %p138
    %p140 = pneg %p139
    // Predicated region
    $region29: #{_lambda_.23} parent=5 // pred_check
      _
    $region30: #{_lambda_.23} parent=5 // pred_check_branch
      %142 = sbr.rel (%p139) target = $region32
    $region31: #{_lambda_.23} parent=5 // pred_region
      %s143 = ssub.s32 %s9, 1
      %s144 = smul.u32 32, %s14
      %p145 = scmp.lt.s32.totalorder %s144, 63
      %s146 = scalar_select %p145, %s144, 63
      %s147 = smul.addr %s146, 8
      %s148 = scalar_lea.vmem %s0, %s147
      %p149 = pneg %p35
      %p150 = pneg %p32
      %p151 = pneg %p56
      %p152 = pneg %p53
      %p153 = pneg %p77
      %p154 = pneg %p74
      %p155 = pneg %p103
      %p156 = pneg %p100
      %s157 = smul.u32 32, %s14
      %p158 = scmp.lt.s32.totalorder %s157, 63
      %s159 = scalar_select %p158, %s157, 63
      %s160 = smul.addr %s159, 8
      %s161 = scalar_lea.vmem %s3, %s160
      %s162 = smul.u32 32, %s14
      %p163 = scmp.lt.s32.totalorder %s162, 63
      %s164 = scalar_select %p163, %s162, 63
      %s165 = smul.addr %s164, 8
      %s166 = scalar_lea.vmem %s0, %s165
      %s167 = smul.u32 32, %s14
      %s168 = smul.u32 32, %s14
      %p169 = scmp.lt.s32.totalorder %s168, 63
      %s170 = scalar_select %p169, %s168, 63
      %s171 = smul.addr %s170, 8
      %s172 = scalar_lea.vmem %s3, %s171
      %s173 = smul.u32 32, %s14
      %v174 = vld [vmem:[%s166] sm:$0xff]
      %v175 = vld [vmem:[%s166 + $0x8] sm:$0xff]
      %v176 = vld [vmem:[%s166 + $0x10] sm:$0xff]
      %v177 = vld [vmem:[%s166 + $0x18] sm:$0xff]
      %v178 = vld [vmem:[%s166 + $0x20] sm:$0xff]
      %v179 = vld [vmem:[%s166 + $0x28] sm:$0xff]
      %v180 = vld [vmem:[%s166 + $0x30] sm:$0xff]
      %v181 = vld [vmem:[%s166 + $0x38] sm:$0xff]
      %v182 = vld [vmem:[%s166 + $0x40] sm:$0xff]
      %v183 = vld [vmem:[%s166 + $0x48] sm:$0xff]
      %v184 = vld [vmem:[%s166 + $0x50] sm:$0xff]
      %v185 = vld [vmem:[%s166 + $0x58] sm:$0xff]
      %v186 = vld [vmem:[%s166 + $0x60] sm:$0xff]
      %v187 = vld [vmem:[%s166 + $0x68] sm:$0xff]
      %v188 = vld [vmem:[%s166 + $0x70] sm:$0xff]
      %v189 = vld [vmem:[%s166 + $0x78] sm:$0xff]
      %v190 = vld [vmem:[%s166 + $0x80] sm:$0xff]
      %v191 = vld [vmem:[%s166 + $0x88] sm:$0xff]
      %v192 = vld [vmem:[%s166 + $0x90] sm:$0xff]
      %v193 = vld [vmem:[%s166 + $0x98] sm:$0xff]
      %v194 = vld [vmem:[%s166 + $0xa0] sm:$0xff]
      %v195 = vld [vmem:[%s166 + $0xa8] sm:$0xff]
      %v196 = vld [vmem:[%s166 + $0xb0] sm:$0xff]
      %v197 = vld [vmem:[%s166 + $0xb8] sm:$0xff]
      %v198 = vld [vmem:[%s166 + $0xc0] sm:$0xff]
      %v199 = vld [vmem:[%s166 + $0xc8] sm:$0xff]
      %v200 = vld [vmem:[%s166 + $0xd0] sm:$0xff]
      %v201 = vld [vmem:[%s166 + $0xd8] sm:$0xff]
      %v202 = vld [vmem:[%s166 + $0xe0] sm:$0xff]
      %v203 = vld [vmem:[%s166 + $0xe8] sm:$0xff]
      %v204 = vld [vmem:[%s166 + $0xf0] sm:$0xff]
      %v205 = vld [vmem:[%s166 + $0xf8] sm:$0xff]
      %v206 = vld [vmem:[%s1] sm:$0xff]
      %v207 = vld [vmem:[%s1 + $0x8] sm:$0xff]
      %v208 = vld [vmem:[%s1 + $0x10] sm:$0xff]
      %v209 = vld [vmem:[%s1 + $0x18] sm:$0xff]
      %v210 = vld [vmem:[%s2] sm:$0x1]
      %v212 = vlaneseq
      %v213 = vshrl.u32 %v212, 7
      %v214 = vsub.s32 0, %v213
      %v215 = vrot.slane %v210, %v214
      %vm217 = vcmask 261120
      %v219 = vsel %vm217, %v174, 0
      %v222 = vsel %vm217, %v175, 0
      %v225 = vsel %vm217, %v176, 0
      %v228 = vsel %vm217, %v177, 0
      %v231 = vsel %vm217, %v178, 0
      %v234 = vsel %vm217, %v179, 0
      %v237 = vsel %vm217, %v180, 0
      %v240 = vsel %vm217, %v181, 0
      %v243 = vsel %vm217, %v182, 0
      %v246 = vsel %vm217, %v183, 0
      %v249 = vsel %vm217, %v184, 0
      %v252 = vsel %vm217, %v185, 0
      %v255 = vsel %vm217, %v186, 0
      %v258 = vsel %vm217, %v187, 0
      %v261 = vsel %vm217, %v188, 0
      %v264 = vsel %vm217, %v189, 0
      %v267 = vsel %vm217, %v190, 0
      %v270 = vsel %vm217, %v191, 0
      %v273 = vsel %vm217, %v192, 0
      %v276 = vsel %vm217, %v193, 0
      %v279 = vsel %vm217, %v194, 0
      %v282 = vsel %vm217, %v195, 0
      %v285 = vsel %vm217, %v196, 0
      %v288 = vsel %vm217, %v197, 0
      %v291 = vsel %vm217, %v198, 0
      %v294 = vsel %vm217, %v199, 0
      %v297 = vsel %vm217, %v200, 0
      %v300 = vsel %vm217, %v201, 0
      %v303 = vsel %vm217, %v202, 0
      %v306 = vsel %vm217, %v203, 0
      %v309 = vsel %vm217, %v204, 0
      %v312 = vsel %vm217, %v205, 0
      %314 = vmatprep.subr.mxu0 0.0
      %315 = vmatpush1.msra.mxu0 0.0
      %316 = vmatprep.subr.mxu0 0.0
      %317 = vmatpush1.msra.mxu0 0.0
      %318 = vmatprep.subr.mxu0 0.0
      %319 = vmatpush1.msra.mxu0 0.0
      %320 = vmatprep.subr.mxu0 0.0
      %321 = vmatpush1.msra.mxu0 0.0
      %322 = vmatprep.subr.mxu0 0.0
      %323 = vmatpush1.msra.mxu0 0.0
      %324 = vmatprep.subr.mxu0 0.0
      %325 = vmatpush1.msra.mxu0 0.0
      %326 = vmatprep.subr.mxu0 0.0
      %327 = vmatpush1.msra.mxu0 0.0
      %328 = vmatprep.subr.mxu0 0.0
      %329 = vmatpush1.msra.mxu0 0.0
      %330 = vmatprep.subr.mxu0 0.0
      %331 = vmatpush1.msra.mxu0 0.0
      %332 = vmatprep.subr.mxu0 0.0
      %333 = vmatpush1.msra.mxu0 0.0
      %334 = vmatprep.subr.mxu0 0.0
      %335 = vmatpush1.msra.mxu0 0.0
      %336 = vmatprep.subr.mxu0 0.0
      %337 = vmatpush1.msra.mxu0 0.0
      %338 = vmatprep.subr.mxu0 0.0
      %339 = vmatpush1.msra.mxu0 %v209
      %340 = vmatprep.subr.mxu0 0.0
      %341 = vmatpush1.msra.mxu0 %v208
      %342 = vmatprep.subr.mxu0 0.0
      %343 = vmatpush1.msra.mxu0 %v207
      %344 = vmatprep.subr.mxu0 0.0
      %345 = vmatpush1.msra.mxu0 %v206
      %346 = vmatprep.subr.mxu0 0.0
      %347 = vmatpush2.msra.mxu0 0.0
      %348 = vmatprep.subr.mxu0 0.0
      %349 = vmatpush2.msra.mxu0 0.0
      %350 = vmatprep.subr.mxu0 0.0
      %351 = vmatpush2.msra.mxu0 0.0
      %352 = vmatprep.subr.mxu0 0.0
      %353 = vmatpush2.msra.mxu0 0.0
      %354 = vmatprep.subr.mxu0 0.0
      %355 = vmatpush2.msra.mxu0 0.0
      %356 = vmatprep.subr.mxu0 0.0
      %357 = vmatpush2.msra.mxu0 0.0
      %358 = vmatprep.subr.mxu0 0.0
      %359 = vmatpush2.msra.mxu0 0.0
      %360 = vmatprep.subr.mxu0 0.0
      %361 = vmatpush2.msra.mxu0 0.0
      %362 = vmatprep.subr.mxu0 0.0
      %363 = vmatpush2.msra.mxu0 0.0
      %364 = vmatprep.subr.mxu0 0.0
      %365 = vmatpush2.msra.mxu0 0.0
      %366 = vmatprep.subr.mxu0 0.0
      %367 = vmatpush2.msra.mxu0 0.0
      %368 = vmatprep.subr.mxu0 0.0
      %369 = vmatpush2.msra.mxu0 0.0
      %370 = vmatprep.subr.mxu0 0.0
      %371 = vmatpush2.msra.mxu0 0.0
      %372 = vmatprep.subr.mxu0 0.0
      %373 = vmatpush2.msra.mxu0 0.0
      %374 = vmatprep.subr.mxu0 0.0
      %375 = vmatpush2.msra.mxu0 0.0
      %376 = vmatprep.subr.mxu0 0.0
      %377 = vmatpush2.msra.mxu0 0.0
      %378 = vmatprep.mubr.f32.mxu0 0.0
      %379 = vmatmul.mubr.f32.gmra.mxu0 %v219
      %v380 = vpop.f32.mrf.mxu0
      %v381 = vadd.f32 %v215, %v380
      %v382 = vpop.f32.mrf.mxu0
      %383 = vmatprep.mubr.f32.mxu0 0.0
      %384 = vmatmul.mubr.f32.gmra.mxu0 %v222
      %v385 = vpop.f32.mrf.mxu0
      %v386 = vadd.f32 %v215, %v385
      %v387 = vpop.f32.mrf.mxu0
      %388 = vmatprep.mubr.f32.mxu0 0.0
      %389 = vmatmul.mubr.f32.gmra.mxu0 %v225
      %v390 = vpop.f32.mrf.mxu0
      %v391 = vadd.f32 %v215, %v390
      %v392 = vpop.f32.mrf.mxu0
      %393 = vmatprep.mubr.f32.mxu0 0.0
      %394 = vmatmul.mubr.f32.gmra.mxu0 %v228
      %v395 = vpop.f32.mrf.mxu0
      %v396 = vadd.f32 %v215, %v395
      %v397 = vpop.f32.mrf.mxu0
      %398 = vmatprep.mubr.f32.mxu0 0.0
      %399 = vmatmul.mubr.f32.gmra.mxu0 %v231
      %v400 = vpop.f32.mrf.mxu0
      %v401 = vadd.f32 %v215, %v400
      %v402 = vpop.f32.mrf.mxu0
      %403 = vmatprep.mubr.f32.mxu0 0.0
      %404 = vmatmul.mubr.f32.gmra.mxu0 %v234
      %v405 = vpop.f32.mrf.mxu0
      %v406 = vadd.f32 %v215, %v405
      %v407 = vpop.f32.mrf.mxu0
      %408 = vmatprep.mubr.f32.mxu0 0.0
      %409 = vmatmul.mubr.f32.gmra.mxu0 %v237
      %v410 = vpop.f32.mrf.mxu0
      %v411 = vadd.f32 %v215, %v410
      %v412 = vpop.f32.mrf.mxu0
      %413 = vmatprep.mubr.f32.mxu0 0.0
      %414 = vmatmul.mubr.f32.gmra.mxu0 %v240
      %v415 = vpop.f32.mrf.mxu0
      %v416 = vadd.f32 %v215, %v415
      %v417 = vpop.f32.mrf.mxu0
      %418 = vmatprep.mubr.f32.mxu0 0.0
      %419 = vmatmul.mubr.f32.gmra.mxu0 %v243
      %v420 = vpop.f32.mrf.mxu0
      %v421 = vadd.f32 %v215, %v420
      %v422 = vpop.f32.mrf.mxu0
      %423 = vmatprep.mubr.f32.mxu0 0.0
      %424 = vmatmul.mubr.f32.gmra.mxu0 %v246
      %v425 = vpop.f32.mrf.mxu0
      %v426 = vadd.f32 %v215, %v425
      %v427 = vpop.f32.mrf.mxu0
      %428 = vmatprep.mubr.f32.mxu0 0.0
      %429 = vmatmul.mubr.f32.gmra.mxu0 %v249
      %v430 = vpop.f32.mrf.mxu0
      %v431 = vadd.f32 %v215, %v430
      %v432 = vpop.f32.mrf.mxu0
      %433 = vmatprep.mubr.f32.mxu0 0.0
      %434 = vmatmul.mubr.f32.gmra.mxu0 %v252
      %v435 = vpop.f32.mrf.mxu0
      %v436 = vadd.f32 %v215, %v435
      %v437 = vpop.f32.mrf.mxu0
      %438 = vmatprep.mubr.f32.mxu0 0.0
      %439 = vmatmul.mubr.f32.gmra.mxu0 %v255
      %v440 = vpop.f32.mrf.mxu0
      %v441 = vadd.f32 %v215, %v440
      %v442 = vpop.f32.mrf.mxu0
      %443 = vmatprep.mubr.f32.mxu0 0.0
      %444 = vmatmul.mubr.f32.gmra.mxu0 %v258
      %v445 = vpop.f32.mrf.mxu0
      %v446 = vadd.f32 %v215, %v445
      %v447 = vpop.f32.mrf.mxu0
      %448 = vmatprep.mubr.f32.mxu0 0.0
      %449 = vmatmul.mubr.f32.gmra.mxu0 %v261
      %v450 = vpop.f32.mrf.mxu0
      %v451 = vadd.f32 %v215, %v450
      %v452 = vpop.f32.mrf.mxu0
      %453 = vmatprep.mubr.f32.mxu0 0.0
      %454 = vmatmul.mubr.f32.gmra.mxu0 %v264
      %v455 = vpop.f32.mrf.mxu0
      %v456 = vadd.f32 %v215, %v455
      %v457 = vpop.f32.mrf.mxu0
      %458 = vmatprep.mubr.f32.mxu0 0.0
      %459 = vmatmul.mubr.f32.gmra.mxu0 %v267
      %v460 = vpop.f32.mrf.mxu0
      %v461 = vadd.f32 %v215, %v460
      %v462 = vpop.f32.mrf.mxu0
      %463 = vmatprep.mubr.f32.mxu0 0.0
      %464 = vmatmul.mubr.f32.gmra.mxu0 %v270
      %v465 = vpop.f32.mrf.mxu0
      %v466 = vadd.f32 %v215, %v465
      %v467 = vpop.f32.mrf.mxu0
      %468 = vmatprep.mubr.f32.mxu0 0.0
      %469 = vmatmul.mubr.f32.gmra.mxu0 %v273
      %v470 = vpop.f32.mrf.mxu0
      %v471 = vadd.f32 %v215, %v470
      %v472 = vpop.f32.mrf.mxu0
      %473 = vmatprep.mubr.f32.mxu0 0.0
      %474 = vmatmul.mubr.f32.gmra.mxu0 %v276
      %v475 = vpop.f32.mrf.mxu0
      %v476 = vadd.f32 %v215, %v475
      %v477 = vpop.f32.mrf.mxu0
      %478 = vmatprep.mubr.f32.mxu0 0.0
      %479 = vmatmul.mubr.f32.gmra.mxu0 %v279
      %v480 = vpop.f32.mrf.mxu0
      %v481 = vadd.f32 %v215, %v480
      %v482 = vpop.f32.mrf.mxu0
      %483 = vmatprep.mubr.f32.mxu0 0.0
      %484 = vmatmul.mubr.f32.gmra.mxu0 %v282
      %v485 = vpop.f32.mrf.mxu0
      %v486 = vadd.f32 %v215, %v485
      %v487 = vpop.f32.mrf.mxu0
      %488 = vmatprep.mubr.f32.mxu0 0.0
      %489 = vmatmul.mubr.f32.gmra.mxu0 %v285
      %v490 = vpop.f32.mrf.mxu0
      %v491 = vadd.f32 %v215, %v490
      %v492 = vpop.f32.mrf.mxu0
      %493 = vmatprep.mubr.f32.mxu0 0.0
      %494 = vmatmul.mubr.f32.gmra.mxu0 %v288
      %v495 = vpop.f32.mrf.mxu0
      %v496 = vadd.f32 %v215, %v495
      %v497 = vpop.f32.mrf.mxu0
      %498 = vmatprep.mubr.f32.mxu0 0.0
      %499 = vmatmul.mubr.f32.gmra.mxu0 %v291
      %v500 = vpop.f32.mrf.mxu0
      %v501 = vadd.f32 %v215, %v500
      %v502 = vpop.f32.mrf.mxu0
      %503 = vmatprep.mubr.f32.mxu0 0.0
      %504 = vmatmul.mubr.f32.gmra.mxu0 %v294
      %v505 = vpop.f32.mrf.mxu0
      %v506 = vadd.f32 %v215, %v505
      %v507 = vpop.f32.mrf.mxu0
      %508 = vmatprep.mubr.f32.mxu0 0.0
      %509 = vmatmul.mubr.f32.gmra.mxu0 %v297
      %v510 = vpop.f32.mrf.mxu0
      %v511 = vadd.f32 %v215, %v510
      %v512 = vpop.f32.mrf.mxu0
      %513 = vmatprep.mubr.f32.mxu0 0.0
      %514 = vmatmul.mubr.f32.gmra.mxu0 %v300
      %v515 = vpop.f32.mrf.mxu0
      %v516 = vadd.f32 %v215, %v515
      %v517 = vpop.f32.mrf.mxu0
      %518 = vmatprep.mubr.f32.mxu0 0.0
      %519 = vmatmul.mubr.f32.gmra.mxu0 %v303
      %v520 = vpop.f32.mrf.mxu0
      %v521 = vadd.f32 %v215, %v520
      %v522 = vpop.f32.mrf.mxu0
      %523 = vmatprep.mubr.f32.mxu0 0.0
      %524 = vmatmul.mubr.f32.gmra.mxu0 %v306
      %v525 = vpop.f32.mrf.mxu0
      %v526 = vadd.f32 %v215, %v525
      %v527 = vpop.f32.mrf.mxu0
      %528 = vmatprep.mubr.f32.mxu0 0.0
      %529 = vmatmul.mubr.f32.gmra.mxu0 %v309
      %v530 = vpop.f32.mrf.mxu0
      %v531 = vadd.f32 %v215, %v530
      %v532 = vpop.f32.mrf.mxu0
      %533 = vmatprep.mubr.f32.mxu0 0.0
      %534 = vmatmul.mubr.f32.gmra.mxu0 %v312
      %v535 = vpop.f32.mrf.mxu0
      %v536 = vadd.f32 %v215, %v535
      %v537 = vpop.f32.mrf.mxu0
      %538 = vdwg.mxu0
      %539 = vst.msk [vmem:[%s172] sm:$0xff] %vm217, %v381
      %540 = vst.msk [vmem:[%s172 + $0x8] sm:$0xff] %vm217, %v386
      %541 = vst.msk [vmem:[%s172 + $0x10] sm:$0xff] %vm217, %v391
      %542 = vst.msk [vmem:[%s172 + $0x18] sm:$0xff] %vm217, %v396
      %543 = vst.msk [vmem:[%s172 + $0x20] sm:$0xff] %vm217, %v401
      %544 = vst.msk [vmem:[%s172 + $0x28] sm:$0xff] %vm217, %v406
      %545 = vst.msk [vmem:[%s172 + $0x30] sm:$0xff] %vm217, %v411
      %546 = vst.msk [vmem:[%s172 + $0x38] sm:$0xff] %vm217, %v416
      %547 = vst.msk [vmem:[%s172 + $0x40] sm:$0xff] %vm217, %v421
      %548 = vst.msk [vmem:[%s172 + $0x48] sm:$0xff] %vm217, %v426
      %549 = vst.msk [vmem:[%s172 + $0x50] sm:$0xff] %vm217, %v431
      %550 = vst.msk [vmem:[%s172 + $0x58] sm:$0xff] %vm217, %v436
      %551 = vst.msk [vmem:[%s172 + $0x60] sm:$0xff] %vm217, %v441
      %552 = vst.msk [vmem:[%s172 + $0x68] sm:$0xff] %vm217, %v446
      %553 = vst.msk [vmem:[%s172 + $0x70] sm:$0xff] %vm217, %v451
      %554 = vst.msk [vmem:[%s172 + $0x78] sm:$0xff] %vm217, %v456
      %555 = vst.msk [vmem:[%s172 + $0x80] sm:$0xff] %vm217, %v461
      %556 = vst.msk [vmem:[%s172 + $0x88] sm:$0xff] %vm217, %v466
      %557 = vst.msk [vmem:[%s172 + $0x90] sm:$0xff] %vm217, %v471
      %558 = vst.msk [vmem:[%s172 + $0x98] sm:$0xff] %vm217, %v476
      %559 = vst.msk [vmem:[%s172 + $0xa0] sm:$0xff] %vm217, %v481
      %560 = vst.msk [vmem:[%s172 + $0xa8] sm:$0xff] %vm217, %v486
      %561 = vst.msk [vmem:[%s172 + $0xb0] sm:$0xff] %vm217, %v491
      %562 = vst.msk [vmem:[%s172 + $0xb8] sm:$0xff] %vm217, %v496
      %563 = vst.msk [vmem:[%s172 + $0xc0] sm:$0xff] %vm217, %v501
      %564 = vst.msk [vmem:[%s172 + $0xc8] sm:$0xff] %vm217, %v506
      %565 = vst.msk [vmem:[%s172 + $0xd0] sm:$0xff] %vm217, %v511
      %566 = vst.msk [vmem:[%s172 + $0xd8] sm:$0xff] %vm217, %v516
      %567 = vst.msk [vmem:[%s172 + $0xe0] sm:$0xff] %vm217, %v521
      %568 = vst.msk [vmem:[%s172 + $0xe8] sm:$0xff] %vm217, %v526
      %569 = vst.msk [vmem:[%s172 + $0xf0] sm:$0xff] %vm217, %v531
      %570 = vst.msk [vmem:[%s172 + $0xf8] sm:$0xff] %vm217, %v536
      %s571 = smul.u32 32, %s14
      %p572 = scmp.lt.s32.totalorder %s571, 63
      %s573 = scalar_select %p572, %s571, 63
      %s574 = smul.addr %s573, 8
      %s575 = scalar_lea.vmem %s3, %s574
      // Predicated region
      $region33: #{_lambda_.23} parent=31 // pred_check
        %p576 = pneg %p100
      $region34: #{_lambda_.23} parent=31 // pred_check_branch
        %578 = sbr.rel (%p576) target = $region36
      $region35: #{_lambda_.23} parent=31 // pred_region
        %s579 = smul.u32 32, %s14
      $region36: #{_lambda_.23} parent=31 // pred_fallthru
        _
    $region32: #{_lambda_.23} parent=5 // pred_fallthru
      _
    %p580 = scmp.le.s32.totalorder 2, %s9
    // Predicated region
    $region37: #{_lambda_.23} parent=5 // pred_check
      %p581 = pneg %p580
    $region38: #{_lambda_.23} parent=5 // pred_check_branch
      %583 = sbr.rel (%p581) target = $region40
    $region39: #{_lambda_.23} parent=5 // pred_region
      %s584 = ssub.s32 %s9, 2
      // Predicated region
      $region41: #{_lambda_.23} parent=39 // pred_check
        %p585 = pneg %p106
      $region42: #{_lambda_.23} parent=39 // pred_check_branch
        %587 = sbr.rel (%p585) target = $region44
      $region43: #{_lambda_.23} parent=39 // pred_region
        %s588 = smul.u32 32, %s15
        %p589 = scmp.lt.s32.totalorder %s588, 63
        %s590 = scalar_select %p589, %s588, 63
        %s591 = smul.addr %s590, 8
        %s592 = scalar_lea.vmem %s3, %s591
      $region44: #{_lambda_.23} parent=39 // pred_fallthru
        _
    $region40: #{_lambda_.23} parent=5 // pred_fallthru
      _
  $region6: #{_lambda_.23} parent=0 // loop_footer
    %s13 = sadd.s32 1, %s9
  $region7: #{_lambda_.23} parent=0 // loop_footer_branch
    %8 = sbr.rel target = $region3
  $region8: #{_lambda_.23} parent=0 // loop_exit
    _

// kernel: _lambda_.24
$region0: #{_lambda_.24}
  #allocation0 [shape = 'u32[]', space=smem, size = 0x4, offset = 0x4, fixed_abs, tag = 'smem constant byte address 0x4 - core index']
  #allocation1 [shape = 'u32[144,128]{1,0:T(1,128)}', space=vmem, size = 0x12000, scoped, tag = 'internal scratch']
  %s0 = inlined_call_operand.vmem [shape: f32[512,432], index: 0, kind: input, shape index: {}]
  %s1 = inlined_call_operand.vmem [shape: f32[432,16], index: 1, kind: input, shape index: {}]
  %s2 = inlined_call_operand.vmem [shape: f32[1,16], index: 2, kind: input, shape index: {}]
  %s3 = inlined_call_operand.vmem [shape: f32[512,16], index: 3, kind: output, shape index: {}]
  %s4 = sld [smem:[#allocation0]]
  $region45: #{_lambda_.24} parent=0
    _
  %s6 = ssub.s32 1, %s4
  %s7 = scalar_select 0, %s6, %s4
  loop: start=0, step=1, limit=4
  $region2: #{_lambda_.24} parent=0 // loop_pre_header
    _
  $region3: #{_lambda_.24} parent=0 // loop_header
    %s9 = sphi 0, %s13
    %p10 = scmp.ge.s32.totalorder %s9, 4
    %s19 = sphi 0, %s21
    %s22 = sphi 0, %s19
    %s23 = sphi 0, %s22
    %s39 = sphi 0, %s23
    %s43 = sphi 0, %s43
    %s45 = sphi 0, %s43
    %s46 = sphi 0, %s45
    %s60 = sphi 0, %s46
    %s64 = sphi 0, %s64
    %s66 = sphi 0, %s64
    %s67 = sphi 0, %s66
    %s81 = sphi 0, %s67
    %s87 = sphi 0, %s89
    %s90 = sphi 0, %s87
    %s91 = sphi 0, %s90
    %s107 = sphi 0, %s91
  $region4: #{_lambda_.24} parent=0 // loop_header_branch
    %12 = sbr.rel (%p10) target = $region8
  $region5: #{_lambda_.24} parent=0 // loop_body
    %s14 = ssub.s32 %s9, 1
    %s15 = ssub.s32 %s9, 2
    %s16 = sadd.s32 %s9, 1
    %s17 = ssub.s32 %s9, %s16
    %p18 = scmp.eq.s32.totalorder %s17, 0
    %s20 = sadd.s32 %s19, 1
    %s21 = scalar_select %p18, %s19, %s20
    %p24 = pneg %p18
    %p25 = scmp.eq.s32.totalorder %s9, 1
    %p26 = por %p24, %p25
    %p27 = scmp.ne.s32.totalorder %s19, %s22
    %p28 = scmp.eq.s32.totalorder %s9, 0
    %p29 = por %p27, %p28
    %p30 = scmp.ne.s32.totalorder %s19, %s22
    %p31 = scmp.eq.s32.totalorder %s14, 1
    %p32 = por %p30, %p31
    %p33 = scmp.ne.s32.totalorder %s22, %s23
    %p34 = scmp.eq.s32.totalorder %s14, 0
    %p35 = por %p33, %p34
    %p36 = scmp.ne.s32.totalorder %s22, %s23
    %p37 = scmp.eq.s32.totalorder %s15, 1
    %p38 = por %p36, %p37
    %p40 = scmp.ne.s32.totalorder %s23, %s39
    %p41 = scmp.eq.s32.totalorder %s15, 0
    %p42 = por %p40, %p41
    %s44 = sadd.s32 %s43, 1
    %p47 = scmp.eq.s32.totalorder %s9, 1
    %p48 = scmp.ne.s32.totalorder %s43, %s45
    %p49 = scmp.eq.s32.totalorder %s9, 0
    %p50 = por %p48, %p49
    %p51 = scmp.ne.s32.totalorder %s43, %s45
    %p52 = scmp.eq.s32.totalorder %s14, 1
    %p53 = por %p51, %p52
    %p54 = scmp.ne.s32.totalorder %s45, %s46
    %p55 = scmp.eq.s32.totalorder %s14, 0
    %p56 = por %p54, %p55
    %p57 = scmp.ne.s32.totalorder %s45, %s46
    %p58 = scmp.eq.s32.totalorder %s15, 1
    %p59 = por %p57, %p58
    %p61 = scmp.ne.s32.totalorder %s46, %s60
    %p62 = scmp.eq.s32.totalorder %s15, 0
    %p63 = por %p61, %p62
    %s65 = sadd.s32 %s64, 1
    %p68 = scmp.eq.s32.totalorder %s9, 1
    %p69 = scmp.ne.s32.totalorder %s64, %s66
    %p70 = scmp.eq.s32.totalorder %s9, 0
    %p71 = por %p69, %p70
    %p72 = scmp.ne.s32.totalorder %s64, %s66
    %p73 = scmp.eq.s32.totalorder %s14, 1
    %p74 = por %p72, %p73
    %p75 = scmp.ne.s32.totalorder %s66, %s67
    %p76 = scmp.eq.s32.totalorder %s14, 0
    %p77 = por %p75, %p76
    %p78 = scmp.ne.s32.totalorder %s66, %s67
    %p79 = scmp.eq.s32.totalorder %s15, 1
    %p80 = por %p78, %p79
    %p82 = scmp.ne.s32.totalorder %s67, %s81
    %p83 = scmp.eq.s32.totalorder %s15, 0
    %p84 = por %p82, %p83
    %s85 = ssub.s32 %s9, %s16
    %p86 = scmp.eq.s32.totalorder %s85, 0
    %s88 = sadd.s32 %s87, 1
    %s89 = scalar_select %p86, %s87, %s88
    %p92 = pneg %p86
    %p93 = scmp.eq.s32.totalorder %s9, 1
    %p94 = por %p92, %p93
    %p95 = scmp.ne.s32.totalorder %s87, %s90
    %p96 = scmp.eq.s32.totalorder %s9, 0
    %p97 = por %p95, %p96
    %p98 = scmp.ne.s32.totalorder %s87, %s90
    %p99 = scmp.eq.s32.totalorder %s14, 1
    %p100 = por %p98, %p99
    %p101 = scmp.ne.s32.totalorder %s90, %s91
    %p102 = scmp.eq.s32.totalorder %s14, 0
    %p103 = por %p101, %p102
    %p104 = scmp.ne.s32.totalorder %s90, %s91
    %p105 = scmp.eq.s32.totalorder %s15, 1
    %p106 = por %p104, %p105
    %p108 = scmp.ne.s32.totalorder %s91, %s107
    %p109 = scmp.eq.s32.totalorder %s15, 0
    %p110 = por %p108, %p109
    %p111 = scmp.le.s32.totalorder 1, %s9
    %p112 = scmp.lt.s32.totalorder %s9, 3
    %p113 = pnand %p111, %p112
    %p114 = pneg %p113
    // Predicated region
    $region9: #{_lambda_.24} parent=5 // pred_check
      _
    $region10: #{_lambda_.24} parent=5 // pred_check_branch
      %116 = sbr.rel (%p113) target = $region12
    $region11: #{_lambda_.24} parent=5 // pred_region
      %s117 = ssub.s32 %s9, 1
      // Predicated region
      $region13: #{_lambda_.24} parent=11 // pred_check
        %p118 = pneg %p56
      $region14: #{_lambda_.24} parent=11 // pred_check_branch
        %120 = sbr.rel (%p118) target = $region16
      $region15: #{_lambda_.24} parent=11 // pred_region
        _
      $region16: #{_lambda_.24} parent=11 // pred_fallthru
        _
      // Predicated region
      $region17: #{_lambda_.24} parent=11 // pred_check
        %p121 = pneg %p77
      $region18: #{_lambda_.24} parent=11 // pred_check_branch
        %123 = sbr.rel (%p121) target = $region20
      $region19: #{_lambda_.24} parent=11 // pred_region
        _
      $region20: #{_lambda_.24} parent=11 // pred_fallthru
        _
    $region12: #{_lambda_.24} parent=5 // pred_fallthru
      _
    %p124 = scmp.lt.s32.totalorder %s9, 2
    // Predicated region
    $region21: #{_lambda_.24} parent=5 // pred_check
      %p125 = pneg %p124
    $region22: #{_lambda_.24} parent=5 // pred_check_branch
      %127 = sbr.rel (%p125) target = $region24
    $region23: #{_lambda_.24} parent=5 // pred_region
      // Predicated region
      $region25: #{_lambda_.24} parent=23 // pred_check
        %p128 = pneg %p29
      $region26: #{_lambda_.24} parent=23 // pred_check_branch
        %130 = sbr.rel (%p128) target = $region28
      $region27: #{_lambda_.24} parent=23 // pred_region
        %s131 = smul.u32 32, %s9
        %p132 = scmp.lt.s32.totalorder %s131, 63
        %s133 = scalar_select %p132, %s131, 63
        %s134 = smul.addr %s133, 4
        %s135 = smul.addr %s134, 8
        %s136 = scalar_lea.vmem %s0, %s135
        %s137 = smul.u32 32, %s9
      $region28: #{_lambda_.24} parent=23 // pred_fallthru
        _
    $region24: #{_lambda_.24} parent=5 // pred_fallthru
      _
    %p138 = scmp.le.s32.totalorder 1, %s9
    %p139 = scmp.lt.s32.totalorder %s9, 3
    %p140 = pnand %p138, %p139
    %p141 = pneg %p140
    // Predicated region
    $region29: #{_lambda_.24} parent=5 // pred_check
      _
    $region30: #{_lambda_.24} parent=5 // pred_check_branch
      %143 = sbr.rel (%p140) target = $region32
    $region31: #{_lambda_.24} parent=5 // pred_region
      %s144 = ssub.s32 %s9, 1
      %s145 = smul.u32 32, %s14
      %p146 = scmp.lt.s32.totalorder %s145, 63
      %s147 = scalar_select %p146, %s145, 63
      %s148 = smul.addr %s147, 4
      %s149 = smul.addr %s148, 8
      %s150 = scalar_lea.vmem %s0, %s149
      %p151 = pneg %p35
      %p152 = pneg %p32
      %p153 = pneg %p56
      %p154 = pneg %p53
      %p155 = pneg %p77
      %p156 = pneg %p74
      %p157 = pneg %p103
      %p158 = pneg %p100
      %s159 = smul.u32 32, %s14
      %p160 = scmp.lt.s32.totalorder %s159, 63
      %s161 = scalar_select %p160, %s159, 63
      %s162 = smul.addr %s161, 8
      %s163 = scalar_lea.vmem %s3, %s162
      %s164 = smul.u32 32, %s14
      %p165 = scmp.lt.s32.totalorder %s164, 63
      %s166 = scalar_select %p165, %s164, 63
      %s167 = smul.addr %s166, 4
      %s168 = smul.addr %s167, 8
      %s169 = scalar_lea.vmem %s0, %s168
      %s170 = smul.u32 32, %s14
      %s171 = smul.u32 32, %s14
      %p172 = scmp.lt.s32.totalorder %s171, 63
      %s173 = scalar_select %p172, %s171, 63
      %s174 = smul.addr %s173, 8
      %s175 = scalar_lea.vmem %s3, %s174
      %s176 = smul.u32 32, %s14
      %v177 = vld [vmem:[%s169] sm:$0xff]
      %v178 = vld [vmem:[%s169 + $0x8] sm:$0xff]
      %v179 = vld [vmem:[%s169 + $0x10] sm:$0xff]
      %v180 = vld [vmem:[%s169 + $0x18] sm:$0xff]
      %v181 = vld [vmem:[%s169 + $0x20] sm:$0xff]
      %v182 = vld [vmem:[%s169 + $0x28] sm:$0xff]
      %v183 = vld [vmem:[%s169 + $0x30] sm:$0xff]
      %v184 = vld [vmem:[%s169 + $0x38] sm:$0xff]
      %v185 = vld [vmem:[%s169 + $0x40] sm:$0xff]
      %v186 = vld [vmem:[%s169 + $0x48] sm:$0xff]
      %v187 = vld [vmem:[%s169 + $0x50] sm:$0xff]
      %v188 = vld [vmem:[%s169 + $0x58] sm:$0xff]
      %v189 = vld [vmem:[%s169 + $0x60] sm:$0xff]
      %v190 = vld [vmem:[%s169 + $0x68] sm:$0xff]
      %v191 = vld [vmem:[%s169 + $0x70] sm:$0xff]
      %v192 = vld [vmem:[%s169 + $0x78] sm:$0xff]
      %v193 = vld [vmem:[%s169 + $0x80] sm:$0xff]
      %v194 = vld [vmem:[%s169 + $0x88] sm:$0xff]
      %v195 = vld [vmem:[%s169 + $0x90] sm:$0xff]
      %v196 = vld [vmem:[%s169 + $0x98] sm:$0xff]
      %v197 = vld [vmem:[%s169 + $0xa0] sm:$0xff]
      %v198 = vld [vmem:[%s169 + $0xa8] sm:$0xff]
      %v199 = vld [vmem:[%s169 + $0xb0] sm:$0xff]
      %v200 = vld [vmem:[%s169 + $0xb8] sm:$0xff]
      %v201 = vld [vmem:[%s169 + $0xc0] sm:$0xff]
      %v202 = vld [vmem:[%s169 + $0xc8] sm:$0xff]
      %v203 = vld [vmem:[%s169 + $0xd0] sm:$0xff]
      %v204 = vld [vmem:[%s169 + $0xd8] sm:$0xff]
      %v205 = vld [vmem:[%s169 + $0xe0] sm:$0xff]
      %v206 = vld [vmem:[%s169 + $0xe8] sm:$0xff]
      %v207 = vld [vmem:[%s169 + $0xf0] sm:$0xff]
      %v208 = vld [vmem:[%s169 + $0xf8] sm:$0xff]
      %v209 = vld [vmem:[%s169 + $0x100] sm:$0xff]
      %v210 = vld [vmem:[%s169 + $0x108] sm:$0xff]
      %v211 = vld [vmem:[%s169 + $0x110] sm:$0xff]
      %v212 = vld [vmem:[%s169 + $0x118] sm:$0xff]
      %v213 = vld [vmem:[%s169 + $0x120] sm:$0xff]
      %v214 = vld [vmem:[%s169 + $0x128] sm:$0xff]
      %v215 = vld [vmem:[%s169 + $0x130] sm:$0xff]
      %v216 = vld [vmem:[%s169 + $0x138] sm:$0xff]
      %v217 = vld [vmem:[%s169 + $0x140] sm:$0xff]
      %v218 = vld [vmem:[%s169 + $0x148] sm:$0xff]
      %v219 = vld [vmem:[%s169 + $0x150] sm:$0xff]
      %v220 = vld [vmem:[%s169 + $0x158] sm:$0xff]
      %v221 = vld [vmem:[%s169 + $0x160] sm:$0xff]
      %v222 = vld [vmem:[%s169 + $0x168] sm:$0xff]
      %v223 = vld [vmem:[%s169 + $0x170] sm:$0xff]
      %v224 = vld [vmem:[%s169 + $0x178] sm:$0xff]
      %v225 = vld [vmem:[%s169 + $0x180] sm:$0xff]
      %v226 = vld [vmem:[%s169 + $0x188] sm:$0xff]
      %v227 = vld [vmem:[%s169 + $0x190] sm:$0xff]
      %v228 = vld [vmem:[%s169 + $0x198] sm:$0xff]
      %v229 = vld [vmem:[%s169 + $0x1a0] sm:$0xff]
      %v230 = vld [vmem:[%s169 + $0x1a8] sm:$0xff]
      %v231 = vld [vmem:[%s169 + $0x1b0] sm:$0xff]
      %v232 = vld [vmem:[%s169 + $0x1b8] sm:$0xff]
      %v233 = vld [vmem:[%s169 + $0x1c0] sm:$0xff]
      %v234 = vld [vmem:[%s169 + $0x1c8] sm:$0xff]
      %v235 = vld [vmem:[%s169 + $0x1d0] sm:$0xff]
      %v236 = vld [vmem:[%s169 + $0x1d8] sm:$0xff]
      %v237 = vld [vmem:[%s169 + $0x1e0] sm:$0xff]
      %v238 = vld [vmem:[%s169 + $0x1e8] sm:$0xff]
      %v239 = vld [vmem:[%s169 + $0x1f0] sm:$0xff]
      %v240 = vld [vmem:[%s169 + $0x1f8] sm:$0xff]
      %v241 = vld [vmem:[%s169 + $0x200] sm:$0xff]
      %v242 = vld [vmem:[%s169 + $0x208] sm:$0xff]
      %v243 = vld [vmem:[%s169 + $0x210] sm:$0xff]
      %v244 = vld [vmem:[%s169 + $0x218] sm:$0xff]
      %v245 = vld [vmem:[%s169 + $0x220] sm:$0xff]
      %v246 = vld [vmem:[%s169 + $0x228] sm:$0xff]
      %v247 = vld [vmem:[%s169 + $0x230] sm:$0xff]
      %v248 = vld [vmem:[%s169 + $0x238] sm:$0xff]
      %v249 = vld [vmem:[%s169 + $0x240] sm:$0xff]
      %v250 = vld [vmem:[%s169 + $0x248] sm:$0xff]
      %v251 = vld [vmem:[%s169 + $0x250] sm:$0xff]
      %v252 = vld [vmem:[%s169 + $0x258] sm:$0xff]
      %v253 = vld [vmem:[%s169 + $0x260] sm:$0xff]
      %v254 = vld [vmem:[%s169 + $0x268] sm:$0xff]
      %v255 = vld [vmem:[%s169 + $0x270] sm:$0xff]
      %v256 = vld [vmem:[%s169 + $0x278] sm:$0xff]
      %v257 = vld [vmem:[%s169 + $0x280] sm:$0xff]
      %v258 = vld [vmem:[%s169 + $0x288] sm:$0xff]
      %v259 = vld [vmem:[%s169 + $0x290] sm:$0xff]
      %v260 = vld [vmem:[%s169 + $0x298] sm:$0xff]
      %v261 = vld [vmem:[%s169 + $0x2a0] sm:$0xff]
      %v262 = vld [vmem:[%s169 + $0x2a8] sm:$0xff]
      %v263 = vld [vmem:[%s169 + $0x2b0] sm:$0xff]
      %v264 = vld [vmem:[%s169 + $0x2b8] sm:$0xff]
      %v265 = vld [vmem:[%s169 + $0x2c0] sm:$0xff]
      %v266 = vld [vmem:[%s169 + $0x2c8] sm:$0xff]
      %v267 = vld [vmem:[%s169 + $0x2d0] sm:$0xff]
      %v268 = vld [vmem:[%s169 + $0x2d8] sm:$0xff]
      %v269 = vld [vmem:[%s169 + $0x2e0] sm:$0xff]
      %v270 = vld [vmem:[%s169 + $0x2e8] sm:$0xff]
      %v271 = vld [vmem:[%s169 + $0x2f0] sm:$0xff]
      %v272 = vld [vmem:[%s169 + $0x2f8] sm:$0xff]
      %v273 = vld [vmem:[%s169 + $0x300] sm:$0xff]
      %v274 = vld [vmem:[%s169 + $0x308] sm:$0xff]
      %v275 = vld [vmem:[%s169 + $0x310] sm:$0xff]
      %v276 = vld [vmem:[%s169 + $0x318] sm:$0xff]
      %v277 = vld [vmem:[%s169 + $0x320] sm:$0xff]
      %v278 = vld [vmem:[%s169 + $0x328] sm:$0xff]
      %v279 = vld [vmem:[%s169 + $0x330] sm:$0xff]
      %v280 = vld [vmem:[%s169 + $0x338] sm:$0xff]
      %v281 = vld [vmem:[%s169 + $0x340] sm:$0xff]
      %v282 = vld [vmem:[%s169 + $0x348] sm:$0xff]
      %v283 = vld [vmem:[%s169 + $0x350] sm:$0xff]
      %v284 = vld [vmem:[%s169 + $0x358] sm:$0xff]
      %v285 = vld [vmem:[%s169 + $0x360] sm:$0xff]
      %v286 = vld [vmem:[%s169 + $0x368] sm:$0xff]
      %v287 = vld [vmem:[%s169 + $0x370] sm:$0xff]
      %v288 = vld [vmem:[%s169 + $0x378] sm:$0xff]
      %v289 = vld [vmem:[%s169 + $0x380] sm:$0xff]
      %v290 = vld [vmem:[%s169 + $0x388] sm:$0xff]
      %v291 = vld [vmem:[%s169 + $0x390] sm:$0xff]
      %v292 = vld [vmem:[%s169 + $0x398] sm:$0xff]
      %v293 = vld [vmem:[%s169 + $0x3a0] sm:$0xff]
      %v294 = vld [vmem:[%s169 + $0x3a8] sm:$0xff]
      %v295 = vld [vmem:[%s169 + $0x3b0] sm:$0xff]
      %v296 = vld [vmem:[%s169 + $0x3b8] sm:$0xff]
      %v297 = vld [vmem:[%s169 + $0x3c0] sm:$0xff]
      %v298 = vld [vmem:[%s169 + $0x3c8] sm:$0xff]
      %v299 = vld [vmem:[%s169 + $0x3d0] sm:$0xff]
      %v300 = vld [vmem:[%s169 + $0x3d8] sm:$0xff]
      %v301 = vld [vmem:[%s169 + $0x3e0] sm:$0xff]
      %v302 = vld [vmem:[%s169 + $0x3e8] sm:$0xff]
      %v303 = vld [vmem:[%s169 + $0x3f0] sm:$0xff]
      %v304 = vld [vmem:[%s169 + $0x3f8] sm:$0xff]
      %v305 = vld [vmem:[%s1] sm:$0xff]
      %v306 = vld [vmem:[%s1 + $0x8] sm:$0xff]
      %v307 = vld [vmem:[%s1 + $0x10] sm:$0xff]
      %v308 = vld [vmem:[%s1 + $0x18] sm:$0xff]
      %v309 = vld [vmem:[%s1 + $0x20] sm:$0xff]
      %v310 = vld [vmem:[%s1 + $0x28] sm:$0xff]
      %v311 = vld [vmem:[%s1 + $0x30] sm:$0xff]
      %v312 = vld [vmem:[%s1 + $0x38] sm:$0xff]
      %v313 = vld [vmem:[%s1 + $0x40] sm:$0xff]
      %v314 = vld [vmem:[%s1 + $0x48] sm:$0xff]
      %v315 = vld [vmem:[%s1 + $0x50] sm:$0xff]
      %v316 = vld [vmem:[%s1 + $0x58] sm:$0xff]
      %v317 = vld [vmem:[%s1 + $0x60] sm:$0xff]
      %v318 = vld [vmem:[%s1 + $0x68] sm:$0xff]
      %v319 = vld [vmem:[%s1 + $0x70] sm:$0xff]
      %v320 = vld [vmem:[%s1 + $0x78] sm:$0xff]
      %v321 = vld [vmem:[%s1 + $0x80] sm:$0xff]
      %v322 = vld [vmem:[%s1 + $0x88] sm:$0xff]
      %v323 = vld [vmem:[%s1 + $0x90] sm:$0xff]
      %v324 = vld [vmem:[%s1 + $0x98] sm:$0xff]
      %v325 = vld [vmem:[%s1 + $0xa0] sm:$0xff]
      %v326 = vld [vmem:[%s1 + $0xa8] sm:$0xff]
      %v327 = vld [vmem:[%s1 + $0xb0] sm:$0xff]
      %v328 = vld [vmem:[%s1 + $0xb8] sm:$0xff]
      %v329 = vld [vmem:[%s1 + $0xc0] sm:$0xff]
      %v330 = vld [vmem:[%s1 + $0xc8] sm:$0xff]
      %v331 = vld [vmem:[%s1 + $0xd0] sm:$0xff]
      %v332 = vld [vmem:[%s1 + $0xd8] sm:$0xff]
      %v333 = vld [vmem:[%s1 + $0xe0] sm:$0xff]
      %v334 = vld [vmem:[%s1 + $0xe8] sm:$0xff]
      %v335 = vld [vmem:[%s1 + $0xf0] sm:$0xff]
      %v336 = vld [vmem:[%s1 + $0xf8] sm:$0xff]
      %v337 = vld [vmem:[%s1 + $0x100] sm:$0xff]
      %v338 = vld [vmem:[%s1 + $0x108] sm:$0xff]
      %v339 = vld [vmem:[%s1 + $0x110] sm:$0xff]
      %v340 = vld [vmem:[%s1 + $0x118] sm:$0xff]
      %v341 = vld [vmem:[%s1 + $0x120] sm:$0xff]
      %v342 = vld [vmem:[%s1 + $0x128] sm:$0xff]
      %v343 = vld [vmem:[%s1 + $0x130] sm:$0xff]
      %v344 = vld [vmem:[%s1 + $0x138] sm:$0xff]
      %v345 = vld [vmem:[%s1 + $0x140] sm:$0xff]
      %v346 = vld [vmem:[%s1 + $0x148] sm:$0xff]
      %v347 = vld [vmem:[%s1 + $0x150] sm:$0xff]
      %v348 = vld [vmem:[%s1 + $0x158] sm:$0xff]
      %v349 = vld [vmem:[%s1 + $0x160] sm:$0xff]
      %v350 = vld [vmem:[%s1 + $0x168] sm:$0xff]
      %v351 = vld [vmem:[%s1 + $0x170] sm:$0xff]
      %v352 = vld [vmem:[%s1 + $0x178] sm:$0xff]
      %v353 = vld [vmem:[%s1 + $0x180] sm:$0xff]
      %v354 = vld [vmem:[%s1 + $0x188] sm:$0xff]
      %v355 = vld [vmem:[%s1 + $0x190] sm:$0xff]
      %v356 = vld [vmem:[%s1 + $0x198] sm:$0xff]
      %v357 = vld [vmem:[%s1 + $0x1a0] sm:$0xff]
      %v358 = vld [vmem:[%s1 + $0x1a8] sm:$0xff]
      %v359 = vld [vmem:[%s2] sm:$0x1]
      %v361 = vlaneseq
      %v362 = vshrl.u32 %v361, 7
      %v363 = vsub.s32 0, %v362
      %v364 = vrot.slane %v359, %v363
      %vm366 = vcmask 392192
      %v368 = vsel %vm366, %v180, 0
      %v371 = vsel %vm366, %v184, 0
      %v374 = vsel %vm366, %v188, 0
      %v377 = vsel %vm366, %v192, 0
      %v380 = vsel %vm366, %v196, 0
      %v383 = vsel %vm366, %v200, 0
      %v386 = vsel %vm366, %v204, 0
      %v389 = vsel %vm366, %v208, 0
      %v392 = vsel %vm366, %v212, 0
      %v395 = vsel %vm366, %v216, 0
      %v398 = vsel %vm366, %v220, 0
      %v401 = vsel %vm366, %v224, 0
      %v404 = vsel %vm366, %v228, 0
      %v407 = vsel %vm366, %v232, 0
      %v410 = vsel %vm366, %v236, 0
      %v413 = vsel %vm366, %v240, 0
      %v416 = vsel %vm366, %v244, 0
      %v419 = vsel %vm366, %v248, 0
      %v422 = vsel %vm366, %v252, 0
      %v425 = vsel %vm366, %v256, 0
      %v428 = vsel %vm366, %v260, 0
      %v431 = vsel %vm366, %v264, 0
      %v434 = vsel %vm366, %v268, 0
      %v437 = vsel %vm366, %v272, 0
      %v440 = vsel %vm366, %v276, 0
      %v443 = vsel %vm366, %v280, 0
      %v446 = vsel %vm366, %v284, 0
      %v449 = vsel %vm366, %v288, 0
      %v452 = vsel %vm366, %v292, 0
      %v455 = vsel %vm366, %v296, 0
      %v458 = vsel %vm366, %v300, 0
      %v461 = vsel %vm366, %v304, 0
      %463 = vmatprep.subr.mxu0 0.0
      %464 = vmatpush1.msra.mxu0 %v320
      %465 = vmatprep.subr.mxu0 0.0
      %466 = vmatpush1.msra.mxu0 %v319
      %467 = vmatprep.subr.mxu0 0.0
      %468 = vmatpush1.msra.mxu0 %v318
      %469 = vmatprep.subr.mxu0 0.0
      %470 = vmatpush1.msra.mxu0 %v317
      %471 = vmatprep.subr.mxu0 0.0
      %472 = vmatpush1.msra.mxu0 %v316
      %473 = vmatprep.subr.mxu0 0.0
      %474 = vmatpush1.msra.mxu0 %v315
      %475 = vmatprep.subr.mxu0 0.0
      %476 = vmatpush1.msra.mxu0 %v314
      %477 = vmatprep.subr.mxu0 0.0
      %478 = vmatpush1.msra.mxu0 %v313
      %479 = vmatprep.subr.mxu0 0.0
      %480 = vmatpush1.msra.mxu0 %v312
      %481 = vmatprep.subr.mxu0 0.0
      %482 = vmatpush1.msra.mxu0 %v311
      %483 = vmatprep.subr.mxu0 0.0
      %484 = vmatpush1.msra.mxu0 %v310
      %485 = vmatprep.subr.mxu0 0.0
      %486 = vmatpush1.msra.mxu0 %v309
      %487 = vmatprep.subr.mxu0 0.0
      %488 = vmatpush1.msra.mxu0 %v308
      %489 = vmatprep.subr.mxu0 0.0
      %490 = vmatpush1.msra.mxu0 %v307
      %491 = vmatprep.subr.mxu0 0.0
      %492 = vmatpush1.msra.mxu0 %v306
      %493 = vmatprep.subr.mxu0 0.0
      %494 = vmatpush1.msra.mxu0 %v305
      %495 = vmatprep.subr.mxu0 0.0
      %496 = vmatpush2.msra.mxu0 %v336
      %497 = vmatprep.subr.mxu0 0.0
      %498 = vmatpush2.msra.mxu0 %v335
      %499 = vmatprep.subr.mxu0 0.0
      %500 = vmatpush2.msra.mxu0 %v334
      %501 = vmatprep.subr.mxu0 0.0
      %502 = vmatpush2.msra.mxu0 %v333
      %503 = vmatprep.subr.mxu0 0.0
      %504 = vmatpush2.msra.mxu0 %v332
      %505 = vmatprep.subr.mxu0 0.0
      %506 = vmatpush2.msra.mxu0 %v331
      %507 = vmatprep.subr.mxu0 0.0
      %508 = vmatpush2.msra.mxu0 %v330
      %509 = vmatprep.subr.mxu0 0.0
      %510 = vmatpush2.msra.mxu0 %v329
      %511 = vmatprep.subr.mxu0 0.0
      %512 = vmatpush2.msra.mxu0 %v328
      %513 = vmatprep.subr.mxu0 0.0
      %514 = vmatpush2.msra.mxu0 %v327
      %515 = vmatprep.subr.mxu0 0.0
      %516 = vmatpush2.msra.mxu0 %v326
      %517 = vmatprep.subr.mxu0 0.0
      %518 = vmatpush2.msra.mxu0 %v325
      %519 = vmatprep.subr.mxu0 0.0
      %520 = vmatpush2.msra.mxu0 %v324
      %521 = vmatprep.subr.mxu0 0.0
      %522 = vmatpush2.msra.mxu0 %v323
      %523 = vmatprep.subr.mxu0 0.0
      %524 = vmatpush2.msra.mxu0 %v322
      %525 = vmatprep.subr.mxu0 0.0
      %526 = vmatpush2.msra.mxu0 %v321
      %527 = vmatprep.mubr.f32.mxu0 %v178
      %528 = vmatmul.mubr.f32.gmra.mxu0 %v177
      %v529 = vpop.f32.mrf.mxu0
      %v530 = vadd.f32 %v364, %v529
      %v531 = vpop.f32.mrf.mxu0
      %532 = vmatprep.mubr.f32.mxu0 %v182
      %533 = vmatmul.mubr.f32.gmra.mxu0 %v181
      %v534 = vpop.f32.mrf.mxu0
      %v535 = vadd.f32 %v364, %v534
      %v536 = vpop.f32.mrf.mxu0
      %537 = vmatprep.mubr.f32.mxu0 %v186
      %538 = vmatmul.mubr.f32.gmra.mxu0 %v185
      %v539 = vpop.f32.mrf.mxu0
      %v540 = vadd.f32 %v364, %v539
      %v541 = vpop.f32.mrf.mxu0
      %542 = vmatprep.mubr.f32.mxu0 %v190
      %543 = vmatmul.mubr.f32.gmra.mxu0 %v189
      %v544 = vpop.f32.mrf.mxu0
      %v545 = vadd.f32 %v364, %v544
      %v546 = vpop.f32.mrf.mxu0
      %547 = vmatprep.mubr.f32.mxu0 %v194
      %548 = vmatmul.mubr.f32.gmra.mxu0 %v193
      %v549 = vpop.f32.mrf.mxu0
      %v550 = vadd.f32 %v364, %v549
      %v551 = vpop.f32.mrf.mxu0
      %552 = vmatprep.mubr.f32.mxu0 %v198
      %553 = vmatmul.mubr.f32.gmra.mxu0 %v197
      %v554 = vpop.f32.mrf.mxu0
      %v555 = vadd.f32 %v364, %v554
      %v556 = vpop.f32.mrf.mxu0
      %557 = vmatprep.mubr.f32.mxu0 %v202
      %558 = vmatmul.mubr.f32.gmra.mxu0 %v201
      %v559 = vpop.f32.mrf.mxu0
      %v560 = vadd.f32 %v364, %v559
      %v561 = vpop.f32.mrf.mxu0
      %562 = vmatprep.mubr.f32.mxu0 %v206
      %563 = vmatmul.mubr.f32.gmra.mxu0 %v205
      %v564 = vpop.f32.mrf.mxu0
      %v565 = vadd.f32 %v364, %v564
      %v566 = vpop.f32.mrf.mxu0
      %567 = vmatprep.mubr.f32.mxu0 %v210
      %568 = vmatmul.mubr.f32.gmra.mxu0 %v209
      %v569 = vpop.f32.mrf.mxu0
      %v570 = vadd.f32 %v364, %v569
      %v571 = vpop.f32.mrf.mxu0
      %572 = vmatprep.mubr.f32.mxu0 %v214
      %573 = vmatmul.mubr.f32.gmra.mxu0 %v213
      %v574 = vpop.f32.mrf.mxu0
      %v575 = vadd.f32 %v364, %v574
      %v576 = vpop.f32.mrf.mxu0
      %577 = vmatprep.mubr.f32.mxu0 %v218
      %578 = vmatmul.mubr.f32.gmra.mxu0 %v217
      %v579 = vpop.f32.mrf.mxu0
      %v580 = vadd.f32 %v364, %v579
      %v581 = vpop.f32.mrf.mxu0
      %582 = vmatprep.mubr.f32.mxu0 %v222
      %583 = vmatmul.mubr.f32.gmra.mxu0 %v221
      %v584 = vpop.f32.mrf.mxu0
      %v585 = vadd.f32 %v364, %v584
      %v586 = vpop.f32.mrf.mxu0
      %587 = vmatprep.mubr.f32.mxu0 %v226
      %588 = vmatmul.mubr.f32.gmra.mxu0 %v225
      %v589 = vpop.f32.mrf.mxu0
      %v590 = vadd.f32 %v364, %v589
      %v591 = vpop.f32.mrf.mxu0
      %592 = vmatprep.mubr.f32.mxu0 %v230
      %593 = vmatmul.mubr.f32.gmra.mxu0 %v229
      %v594 = vpop.f32.mrf.mxu0
      %v595 = vadd.f32 %v364, %v594
      %v596 = vpop.f32.mrf.mxu0
      %597 = vmatprep.mubr.f32.mxu0 %v234
      %598 = vmatmul.mubr.f32.gmra.mxu0 %v233
      %v599 = vpop.f32.mrf.mxu0
      %v600 = vadd.f32 %v364, %v599
      %v601 = vpop.f32.mrf.mxu0
      %602 = vmatprep.mubr.f32.mxu0 %v238
      %603 = vmatmul.mubr.f32.gmra.mxu0 %v237
      %v604 = vpop.f32.mrf.mxu0
      %v605 = vadd.f32 %v364, %v604
      %v606 = vpop.f32.mrf.mxu0
      %607 = vmatprep.mubr.f32.mxu0 %v242
      %608 = vmatmul.mubr.f32.gmra.mxu0 %v241
      %v609 = vpop.f32.mrf.mxu0
      %v610 = vadd.f32 %v364, %v609
      %v611 = vpop.f32.mrf.mxu0
      %612 = vmatprep.mubr.f32.mxu0 %v246
      %613 = vmatmul.mubr.f32.gmra.mxu0 %v245
      %v614 = vpop.f32.mrf.mxu0
      %v615 = vadd.f32 %v364, %v614
      %v616 = vpop.f32.mrf.mxu0
      %617 = vmatprep.mubr.f32.mxu0 %v250
      %618 = vmatmul.mubr.f32.gmra.mxu0 %v249
      %v619 = vpop.f32.mrf.mxu0
      %v620 = vadd.f32 %v364, %v619
      %v621 = vpop.f32.mrf.mxu0
      %622 = vmatprep.mubr.f32.mxu0 %v254
      %623 = vmatmul.mubr.f32.gmra.mxu0 %v253
      %v624 = vpop.f32.mrf.mxu0
      %v625 = vadd.f32 %v364, %v624
      %v626 = vpop.f32.mrf.mxu0
      %627 = vmatprep.mubr.f32.mxu0 %v258
      %628 = vmatmul.mubr.f32.gmra.mxu0 %v257
      %v629 = vpop.f32.mrf.mxu0
      %v630 = vadd.f32 %v364, %v629
      %v631 = vpop.f32.mrf.mxu0
      %632 = vmatprep.mubr.f32.mxu0 %v262
      %633 = vmatmul.mubr.f32.gmra.mxu0 %v261
      %v634 = vpop.f32.mrf.mxu0
      %v635 = vadd.f32 %v364, %v634
      %v636 = vpop.f32.mrf.mxu0
      %637 = vmatprep.mubr.f32.mxu0 %v266
      %638 = vmatmul.mubr.f32.gmra.mxu0 %v265
      %v639 = vpop.f32.mrf.mxu0
      %v640 = vadd.f32 %v364, %v639
      %v641 = vpop.f32.mrf.mxu0
      %642 = vmatprep.mubr.f32.mxu0 %v270
      %643 = vmatmul.mubr.f32.gmra.mxu0 %v269
      %v644 = vpop.f32.mrf.mxu0
      %v645 = vadd.f32 %v364, %v644
      %v646 = vpop.f32.mrf.mxu0
      %647 = vmatprep.mubr.f32.mxu0 %v274
      %648 = vmatmul.mubr.f32.gmra.mxu0 %v273
      %v649 = vpop.f32.mrf.mxu0
      %v650 = vadd.f32 %v364, %v649
      %v651 = vpop.f32.mrf.mxu0
      %652 = vmatprep.mubr.f32.mxu0 %v278
      %653 = vmatmul.mubr.f32.gmra.mxu0 %v277
      %v654 = vpop.f32.mrf.mxu0
      %v655 = vadd.f32 %v364, %v654
      %v656 = vpop.f32.mrf.mxu0
      %657 = vmatprep.mubr.f32.mxu0 %v282
      %658 = vmatmul.mubr.f32.gmra.mxu0 %v281
      %v659 = vpop.f32.mrf.mxu0
      %v660 = vadd.f32 %v364, %v659
      %v661 = vpop.f32.mrf.mxu0
      %662 = vmatprep.mubr.f32.mxu0 %v286
      %663 = vmatmul.mubr.f32.gmra.mxu0 %v285
      %v664 = vpop.f32.mrf.mxu0
      %v665 = vadd.f32 %v364, %v664
      %v666 = vpop.f32.mrf.mxu0
      %667 = vmatprep.mubr.f32.mxu0 %v290
      %668 = vmatmul.mubr.f32.gmra.mxu0 %v289
      %v669 = vpop.f32.mrf.mxu0
      %v670 = vadd.f32 %v364, %v669
      %v671 = vpop.f32.mrf.mxu0
      %672 = vmatprep.mubr.f32.mxu0 %v294
      %673 = vmatmul.mubr.f32.gmra.mxu0 %v293
      %v674 = vpop.f32.mrf.mxu0
      %v675 = vadd.f32 %v364, %v674
      %v676 = vpop.f32.mrf.mxu0
      %677 = vmatprep.mubr.f32.mxu0 %v298
      %678 = vmatmul.mubr.f32.gmra.mxu0 %v297
      %v679 = vpop.f32.mrf.mxu0
      %v680 = vadd.f32 %v364, %v679
      %v681 = vpop.f32.mrf.mxu0
      %682 = vmatprep.mubr.f32.mxu0 %v302
      %683 = vmatmul.mubr.f32.gmra.mxu0 %v301
      %v684 = vpop.f32.mrf.mxu0
      %v685 = vadd.f32 %v364, %v684
      %v686 = vpop.f32.mrf.mxu0
      %687 = vdwg.mxu0
      %688 = vmatprep.subr.mxu0 0.0
      %689 = vmatpush1.msra.mxu0 %v352
      %690 = vmatprep.subr.mxu0 0.0
      %691 = vmatpush1.msra.mxu0 %v351
      %692 = vmatprep.subr.mxu0 0.0
      %693 = vmatpush1.msra.mxu0 %v350
      %694 = vmatprep.subr.mxu0 0.0
      %695 = vmatpush1.msra.mxu0 %v349
      %696 = vmatprep.subr.mxu0 0.0
      %697 = vmatpush1.msra.mxu0 %v348
      %698 = vmatprep.subr.mxu0 0.0
      %699 = vmatpush1.msra.mxu0 %v347
      %700 = vmatprep.subr.mxu0 0.0
      %701 = vmatpush1.msra.mxu0 %v346
      %702 = vmatprep.subr.mxu0 0.0
      %703 = vmatpush1.msra.mxu0 %v345
      %704 = vmatprep.subr.mxu0 0.0
      %705 = vmatpush1.msra.mxu0 %v344
      %706 = vmatprep.subr.mxu0 0.0
      %707 = vmatpush1.msra.mxu0 %v343
      %708 = vmatprep.subr.mxu0 0.0
      %709 = vmatpush1.msra.mxu0 %v342
      %710 = vmatprep.subr.mxu0 0.0
      %711 = vmatpush1.msra.mxu0 %v341
      %712 = vmatprep.subr.mxu0 0.0
      %713 = vmatpush1.msra.mxu0 %v340
      %714 = vmatprep.subr.mxu0 0.0
      %715 = vmatpush1.msra.mxu0 %v339
      %716 = vmatprep.subr.mxu0 0.0
      %717 = vmatpush1.msra.mxu0 %v338
      %718 = vmatprep.subr.mxu0 0.0
      %719 = vmatpush1.msra.mxu0 %v337
      %720 = vmatprep.subr.mxu0 0.0
      %721 = vmatpush2.msra.mxu0 0.0
      %722 = vmatprep.subr.mxu0 0.0
      %723 = vmatpush2.msra.mxu0 0.0
      %724 = vmatprep.subr.mxu0 0.0
      %725 = vmatpush2.msra.mxu0 0.0
      %726 = vmatprep.subr.mxu0 0.0
      %727 = vmatpush2.msra.mxu0 0.0
      %728 = vmatprep.subr.mxu0 0.0
      %729 = vmatpush2.msra.mxu0 0.0
      %730 = vmatprep.subr.mxu0 0.0
      %731 = vmatpush2.msra.mxu0 0.0
      %732 = vmatprep.subr.mxu0 0.0
      %733 = vmatpush2.msra.mxu0 0.0
      %734 = vmatprep.subr.mxu0 0.0
      %735 = vmatpush2.msra.mxu0 0.0
      %736 = vmatprep.subr.mxu0 0.0
      %737 = vmatpush2.msra.mxu0 0.0
      %738 = vmatprep.subr.mxu0 0.0
      %739 = vmatpush2.msra.mxu0 0.0
      %740 = vmatprep.subr.mxu0 0.0
      %741 = vmatpush2.msra.mxu0 %v358
      %742 = vmatprep.subr.mxu0 0.0
      %743 = vmatpush2.msra.mxu0 %v357
      %744 = vmatprep.subr.mxu0 0.0
      %745 = vmatpush2.msra.mxu0 %v356
      %746 = vmatprep.subr.mxu0 0.0
      %747 = vmatpush2.msra.mxu0 %v355
      %748 = vmatprep.subr.mxu0 0.0
      %749 = vmatpush2.msra.mxu0 %v354
      %750 = vmatprep.subr.mxu0 0.0
      %751 = vmatpush2.msra.mxu0 %v353
      %752 = vmatprep.mubr.f32.mxu0 %v368
      %753 = vmatmul.mubr.f32.gmra.mxu0 %v179
      %v754 = vpop.f32.mrf.mxu0
      %v755 = vadd.f32 %v530, %v754
      %v756 = vpop.f32.mrf.mxu0
      %757 = vmatprep.mubr.f32.mxu0 %v371
      %758 = vmatmul.mubr.f32.gmra.mxu0 %v183
      %v759 = vpop.f32.mrf.mxu0
      %v760 = vadd.f32 %v535, %v759
      %v761 = vpop.f32.mrf.mxu0
      %762 = vmatprep.mubr.f32.mxu0 %v374
      %763 = vmatmul.mubr.f32.gmra.mxu0 %v187
      %v764 = vpop.f32.mrf.mxu0
      %v765 = vadd.f32 %v540, %v764
      %v766 = vpop.f32.mrf.mxu0
      %767 = vmatprep.mubr.f32.mxu0 %v377
      %768 = vmatmul.mubr.f32.gmra.mxu0 %v191
      %v769 = vpop.f32.mrf.mxu0
      %v770 = vadd.f32 %v545, %v769
      %v771 = vpop.f32.mrf.mxu0
      %772 = vmatprep.mubr.f32.mxu0 %v380
      %773 = vmatmul.mubr.f32.gmra.mxu0 %v195
      %v774 = vpop.f32.mrf.mxu0
      %v775 = vadd.f32 %v550, %v774
      %v776 = vpop.f32.mrf.mxu0
      %777 = vmatprep.mubr.f32.mxu0 %v383
      %778 = vmatmul.mubr.f32.gmra.mxu0 %v199
      %v779 = vpop.f32.mrf.mxu0
      %v780 = vadd.f32 %v555, %v779
      %v781 = vpop.f32.mrf.mxu0
      %782 = vmatprep.mubr.f32.mxu0 %v386
      %783 = vmatmul.mubr.f32.gmra.mxu0 %v203
      %v784 = vpop.f32.mrf.mxu0
      %v785 = vadd.f32 %v560, %v784
      %v786 = vpop.f32.mrf.mxu0
      %787 = vmatprep.mubr.f32.mxu0 %v389
      %788 = vmatmul.mubr.f32.gmra.mxu0 %v207
      %v789 = vpop.f32.mrf.mxu0
      %v790 = vadd.f32 %v565, %v789
      %v791 = vpop.f32.mrf.mxu0
      %792 = vmatprep.mubr.f32.mxu0 %v392
      %793 = vmatmul.mubr.f32.gmra.mxu0 %v211
      %v794 = vpop.f32.mrf.mxu0
      %v795 = vadd.f32 %v570, %v794
      %v796 = vpop.f32.mrf.mxu0
      %797 = vmatprep.mubr.f32.mxu0 %v395
      %798 = vmatmul.mubr.f32.gmra.mxu0 %v215
      %v799 = vpop.f32.mrf.mxu0
      %v800 = vadd.f32 %v575, %v799
      %v801 = vpop.f32.mrf.mxu0
      %802 = vmatprep.mubr.f32.mxu0 %v398
      %803 = vmatmul.mubr.f32.gmra.mxu0 %v219
      %v804 = vpop.f32.mrf.mxu0
      %v805 = vadd.f32 %v580, %v804
      %v806 = vpop.f32.mrf.mxu0
      %807 = vmatprep.mubr.f32.mxu0 %v401
      %808 = vmatmul.mubr.f32.gmra.mxu0 %v223
      %v809 = vpop.f32.mrf.mxu0
      %v810 = vadd.f32 %v585, %v809
      %v811 = vpop.f32.mrf.mxu0
      %812 = vmatprep.mubr.f32.mxu0 %v404
      %813 = vmatmul.mubr.f32.gmra.mxu0 %v227
      %v814 = vpop.f32.mrf.mxu0
      %v815 = vadd.f32 %v590, %v814
      %v816 = vpop.f32.mrf.mxu0
      %817 = vmatprep.mubr.f32.mxu0 %v407
      %818 = vmatmul.mubr.f32.gmra.mxu0 %v231
      %v819 = vpop.f32.mrf.mxu0
      %v820 = vadd.f32 %v595, %v819
      %v821 = vpop.f32.mrf.mxu0
      %822 = vmatprep.mubr.f32.mxu0 %v410
      %823 = vmatmul.mubr.f32.gmra.mxu0 %v235
      %v824 = vpop.f32.mrf.mxu0
      %v825 = vadd.f32 %v600, %v824
      %v826 = vpop.f32.mrf.mxu0
      %827 = vmatprep.mubr.f32.mxu0 %v413
      %828 = vmatmul.mubr.f32.gmra.mxu0 %v239
      %v829 = vpop.f32.mrf.mxu0
      %v830 = vadd.f32 %v605, %v829
      %v831 = vpop.f32.mrf.mxu0
      %832 = vmatprep.mubr.f32.mxu0 %v416
      %833 = vmatmul.mubr.f32.gmra.mxu0 %v243
      %v834 = vpop.f32.mrf.mxu0
      %v835 = vadd.f32 %v610, %v834
      %v836 = vpop.f32.mrf.mxu0
      %837 = vmatprep.mubr.f32.mxu0 %v419
      %838 = vmatmul.mubr.f32.gmra.mxu0 %v247
      %v839 = vpop.f32.mrf.mxu0
      %v840 = vadd.f32 %v615, %v839
      %v841 = vpop.f32.mrf.mxu0
      %842 = vmatprep.mubr.f32.mxu0 %v422
      %843 = vmatmul.mubr.f32.gmra.mxu0 %v251
      %v844 = vpop.f32.mrf.mxu0
      %v845 = vadd.f32 %v620, %v844
      %v846 = vpop.f32.mrf.mxu0
      %847 = vmatprep.mubr.f32.mxu0 %v425
      %848 = vmatmul.mubr.f32.gmra.mxu0 %v255
      %v849 = vpop.f32.mrf.mxu0
      %v850 = vadd.f32 %v625, %v849
      %v851 = vpop.f32.mrf.mxu0
      %852 = vmatprep.mubr.f32.mxu0 %v428
      %853 = vmatmul.mubr.f32.gmra.mxu0 %v259
      %v854 = vpop.f32.mrf.mxu0
      %v855 = vadd.f32 %v630, %v854
      %v856 = vpop.f32.mrf.mxu0
      %857 = vmatprep.mubr.f32.mxu0 %v431
      %858 = vmatmul.mubr.f32.gmra.mxu0 %v263
      %v859 = vpop.f32.mrf.mxu0
      %v860 = vadd.f32 %v635, %v859
      %v861 = vpop.f32.mrf.mxu0
      %862 = vmatprep.mubr.f32.mxu0 %v434
      %863 = vmatmul.mubr.f32.gmra.mxu0 %v267
      %v864 = vpop.f32.mrf.mxu0
      %v865 = vadd.f32 %v640, %v864
      %v866 = vpop.f32.mrf.mxu0
      %867 = vmatprep.mubr.f32.mxu0 %v437
      %868 = vmatmul.mubr.f32.gmra.mxu0 %v271
      %v869 = vpop.f32.mrf.mxu0
      %v870 = vadd.f32 %v645, %v869
      %v871 = vpop.f32.mrf.mxu0
      %872 = vmatprep.mubr.f32.mxu0 %v440
      %873 = vmatmul.mubr.f32.gmra.mxu0 %v275
      %v874 = vpop.f32.mrf.mxu0
      %v875 = vadd.f32 %v650, %v874
      %v876 = vpop.f32.mrf.mxu0
      %877 = vmatprep.mubr.f32.mxu0 %v443
      %878 = vmatmul.mubr.f32.gmra.mxu0 %v279
      %v879 = vpop.f32.mrf.mxu0
      %v880 = vadd.f32 %v655, %v879
      %v881 = vpop.f32.mrf.mxu0
      %882 = vmatprep.mubr.f32.mxu0 %v446
      %883 = vmatmul.mubr.f32.gmra.mxu0 %v283
      %v884 = vpop.f32.mrf.mxu0
      %v885 = vadd.f32 %v660, %v884
      %v886 = vpop.f32.mrf.mxu0
      %887 = vmatprep.mubr.f32.mxu0 %v449
      %888 = vmatmul.mubr.f32.gmra.mxu0 %v287
      %v889 = vpop.f32.mrf.mxu0
      %v890 = vadd.f32 %v665, %v889
      %v891 = vpop.f32.mrf.mxu0
      %892 = vmatprep.mubr.f32.mxu0 %v452
      %893 = vmatmul.mubr.f32.gmra.mxu0 %v291
      %v894 = vpop.f32.mrf.mxu0
      %v895 = vadd.f32 %v670, %v894
      %v896 = vpop.f32.mrf.mxu0
      %897 = vmatprep.mubr.f32.mxu0 %v455
      %898 = vmatmul.mubr.f32.gmra.mxu0 %v295
      %v899 = vpop.f32.mrf.mxu0
      %v900 = vadd.f32 %v675, %v899
      %v901 = vpop.f32.mrf.mxu0
      %902 = vmatprep.mubr.f32.mxu0 %v458
      %903 = vmatmul.mubr.f32.gmra.mxu0 %v299
      %v904 = vpop.f32.mrf.mxu0
      %v905 = vadd.f32 %v680, %v904
      %v906 = vpop.f32.mrf.mxu0
      %907 = vmatprep.mubr.f32.mxu0 %v461
      %908 = vmatmul.mubr.f32.gmra.mxu0 %v303
      %v909 = vpop.f32.mrf.mxu0
      %v910 = vadd.f32 %v685, %v909
      %v911 = vpop.f32.mrf.mxu0
      %912 = vdwg.mxu0
      %vm913 = vcmp.gt.f32.partialorder %v755, 0.0
      %vm914 = vcmp.gt.f32.partialorder %v760, 0.0
      %vm915 = vcmp.gt.f32.partialorder %v765, 0.0
      %vm916 = vcmp.gt.f32.partialorder %v770, 0.0
      %vm917 = vcmp.gt.f32.partialorder %v775, 0.0
      %vm918 = vcmp.gt.f32.partialorder %v780, 0.0
      %vm919 = vcmp.gt.f32.partialorder %v785, 0.0
      %vm920 = vcmp.gt.f32.partialorder %v790, 0.0
      %vm921 = vcmp.gt.f32.partialorder %v795, 0.0
      %vm922 = vcmp.gt.f32.partialorder %v800, 0.0
      %vm923 = vcmp.gt.f32.partialorder %v805, 0.0
      %vm924 = vcmp.gt.f32.partialorder %v810, 0.0
      %vm925 = vcmp.gt.f32.partialorder %v815, 0.0
      %vm926 = vcmp.gt.f32.partialorder %v820, 0.0
      %vm927 = vcmp.gt.f32.partialorder %v825, 0.0
      %vm928 = vcmp.gt.f32.partialorder %v830, 0.0
      %vm929 = vcmp.gt.f32.partialorder %v835, 0.0
      %vm930 = vcmp.gt.f32.partialorder %v840, 0.0
      %vm931 = vcmp.gt.f32.partialorder %v845, 0.0
      %vm932 = vcmp.gt.f32.partialorder %v850, 0.0
      %vm933 = vcmp.gt.f32.partialorder %v855, 0.0
      %vm934 = vcmp.gt.f32.partialorder %v860, 0.0
      %vm935 = vcmp.gt.f32.partialorder %v865, 0.0
      %vm936 = vcmp.gt.f32.partialorder %v870, 0.0
      %vm937 = vcmp.gt.f32.partialorder %v875, 0.0
      %vm938 = vcmp.gt.f32.partialorder %v880, 0.0
      %vm939 = vcmp.gt.f32.partialorder %v885, 0.0
      %vm940 = vcmp.gt.f32.partialorder %v890, 0.0
      %vm941 = vcmp.gt.f32.partialorder %v895, 0.0
      %vm942 = vcmp.gt.f32.partialorder %v900, 0.0
      %vm943 = vcmp.gt.f32.partialorder %v905, 0.0
      %vm944 = vcmp.gt.f32.partialorder %v910, 0.0
      %v945 = vmul.f32 %v755, 0.01
      %v946 = vmul.f32 %v760, 0.01
      %v947 = vmul.f32 %v765, 0.01
      %v948 = vmul.f32 %v770, 0.01
      %v949 = vmul.f32 %v775, 0.01
      %v950 = vmul.f32 %v780, 0.01
      %v951 = vmul.f32 %v785, 0.01
      %v952 = vmul.f32 %v790, 0.01
      %v953 = vmul.f32 %v795, 0.01
      %v954 = vmul.f32 %v800, 0.01
      %v955 = vmul.f32 %v805, 0.01
      %v956 = vmul.f32 %v810, 0.01
      %v957 = vmul.f32 %v815, 0.01
      %v958 = vmul.f32 %v820, 0.01
      %v959 = vmul.f32 %v825, 0.01
      %v960 = vmul.f32 %v830, 0.01
      %v961 = vmul.f32 %v835, 0.01
      %v962 = vmul.f32 %v840, 0.01
      %v963 = vmul.f32 %v845, 0.01
      %v964 = vmul.f32 %v850, 0.01
      %v965 = vmul.f32 %v855, 0.01
      %v966 = vmul.f32 %v860, 0.01
      %v967 = vmul.f32 %v865, 0.01
      %v968 = vmul.f32 %v870, 0.01
      %v969 = vmul.f32 %v875, 0.01
      %v970 = vmul.f32 %v880, 0.01
      %v971 = vmul.f32 %v885, 0.01
      %v972 = vmul.f32 %v890, 0.01
      %v973 = vmul.f32 %v895, 0.01
      %v974 = vmul.f32 %v900, 0.01
      %v975 = vmul.f32 %v905, 0.01
      %v976 = vmul.f32 %v910, 0.01
      %v977 = vsel %vm913, %v755, %v945
      %v978 = vsel %vm914, %v760, %v946
      %v979 = vsel %vm915, %v765, %v947
      %v980 = vsel %vm916, %v770, %v948
      %v981 = vsel %vm917, %v775, %v949
      %v982 = vsel %vm918, %v780, %v950
      %v983 = vsel %vm919, %v785, %v951
      %v984 = vsel %vm920, %v790, %v952
      %v985 = vsel %vm921, %v795, %v953
      %v986 = vsel %vm922, %v800, %v954
      %v987 = vsel %vm923, %v805, %v955
      %v988 = vsel %vm924, %v810, %v956
      %v989 = vsel %vm925, %v815, %v957
      %v990 = vsel %vm926, %v820, %v958
      %v991 = vsel %vm927, %v825, %v959
      %v992 = vsel %vm928, %v830, %v960
      %v993 = vsel %vm929, %v835, %v961
      %v994 = vsel %vm930, %v840, %v962
      %v995 = vsel %vm931, %v845, %v963
      %v996 = vsel %vm932, %v850, %v964
      %v997 = vsel %vm933, %v855, %v965
      %v998 = vsel %vm934, %v860, %v966
      %v999 = vsel %vm935, %v865, %v967
      %v1000 = vsel %vm936, %v870, %v968
      %v1001 = vsel %vm937, %v875, %v969
      %v1002 = vsel %vm938, %v880, %v970
      %v1003 = vsel %vm939, %v885, %v971
      %v1004 = vsel %vm940, %v890, %v972
      %v1005 = vsel %vm941, %v895, %v973
      %v1006 = vsel %vm942, %v900, %v974
      %v1007 = vsel %vm943, %v905, %v975
      %v1008 = vsel %vm944, %v910, %v976
      %vm1009 = vcmask 130048
      %1010 = vst.msk [vmem:[%s175] sm:$0xff] %vm1009, %v977
      %1011 = vst.msk [vmem:[%s175 + $0x8] sm:$0xff] %vm1009, %v978
      %1012 = vst.msk [vmem:[%s175 + $0x10] sm:$0xff] %vm1009, %v979
      %1013 = vst.msk [vmem:[%s175 + $0x18] sm:$0xff] %vm1009, %v980
      %1014 = vst.msk [vmem:[%s175 + $0x20] sm:$0xff] %vm1009, %v981
      %1015 = vst.msk [vmem:[%s175 + $0x28] sm:$0xff] %vm1009, %v982
      %1016 = vst.msk [vmem:[%s175 + $0x30] sm:$0xff] %vm1009, %v983
      %1017 = vst.msk [vmem:[%s175 + $0x38] sm:$0xff] %vm1009, %v984
      %1018 = vst.msk [vmem:[%s175 + $0x40] sm:$0xff] %vm1009, %v985
      %1019 = vst.msk [vmem:[%s175 + $0x48] sm:$0xff] %vm1009, %v986
      %1020 = vst.msk [vmem:[%s175 + $0x50] sm:$0xff] %vm1009, %v987
      %1021 = vst.msk [vmem:[%s175 + $0x58] sm:$0xff] %vm1009, %v988
      %1022 = vst.msk [vmem:[%s175 + $0x60] sm:$0xff] %vm1009, %v989
      %1023 = vst.msk [vmem:[%s175 + $0x68] sm:$0xff] %vm1009, %v990
      %1024 = vst.msk [vmem:[%s175 + $0x70] sm:$0xff] %vm1009, %v991
      %1025 = vst.msk [vmem:[%s175 + $0x78] sm:$0xff] %vm1009, %v992
      %1026 = vst.msk [vmem:[%s175 + $0x80] sm:$0xff] %vm1009, %v993
      %1027 = vst.msk [vmem:[%s175 + $0x88] sm:$0xff] %vm1009, %v994
      %1028 = vst.msk [vmem:[%s175 + $0x90] sm:$0xff] %vm1009, %v995
      %1029 = vst.msk [vmem:[%s175 + $0x98] sm:$0xff] %vm1009, %v996
      %1030 = vst.msk [vmem:[%s175 + $0xa0] sm:$0xff] %vm1009, %v997
      %1031 = vst.msk [vmem:[%s175 + $0xa8] sm:$0xff] %vm1009, %v998
      %1032 = vst.msk [vmem:[%s175 + $0xb0] sm:$0xff] %vm1009, %v999
      %1033 = vst.msk [vmem:[%s175 + $0xb8] sm:$0xff] %vm1009, %v1000
      %1034 = vst.msk [vmem:[%s175 + $0xc0] sm:$0xff] %vm1009, %v1001
      %1035 = vst.msk [vmem:[%s175 + $0xc8] sm:$0xff] %vm1009, %v1002
      %1036 = vst.msk [vmem:[%s175 + $0xd0] sm:$0xff] %vm1009, %v1003
      %1037 = vst.msk [vmem:[%s175 + $0xd8] sm:$0xff] %vm1009, %v1004
      %1038 = vst.msk [vmem:[%s175 + $0xe0] sm:$0xff] %vm1009, %v1005
      %1039 = vst.msk [vmem:[%s175 + $0xe8] sm:$0xff] %vm1009, %v1006
      %1040 = vst.msk [vmem:[%s175 + $0xf0] sm:$0xff] %vm1009, %v1007
      %1041 = vst.msk [vmem:[%s175 + $0xf8] sm:$0xff] %vm1009, %v1008
      %s1042 = smul.u32 32, %s14
      %p1043 = scmp.lt.s32.totalorder %s1042, 63
      %s1044 = scalar_select %p1043, %s1042, 63
      %s1045 = smul.addr %s1044, 8
      %s1046 = scalar_lea.vmem %s3, %s1045
      // Predicated region
      $region33: #{_lambda_.24} parent=31 // pred_check
        %p1047 = pneg %p100
      $region34: #{_lambda_.24} parent=31 // pred_check_branch
        %1049 = sbr.rel (%p1047) target = $region36
      $region35: #{_lambda_.24} parent=31 // pred_region
        %s1050 = smul.u32 32, %s14
      $region36: #{_lambda_.24} parent=31 // pred_fallthru
        _
    $region32: #{_lambda_.24} parent=5 // pred_fallthru
      _
    %p1051 = scmp.le.s32.totalorder 2, %s9
    // Predicated region
    $region37: #{_lambda_.24} parent=5 // pred_check
      %p1052 = pneg %p1051
    $region38: #{_lambda_.24} parent=5 // pred_check_branch
      %1054 = sbr.rel (%p1052) target = $region40
    $region39: #{_lambda_.24} parent=5 // pred_region
      %s1055 = ssub.s32 %s9, 2
      // Predicated region
      $region41: #{_lambda_.24} parent=39 // pred_check
        %p1056 = pneg %p106
      $region42: #{_lambda_.24} parent=39 // pred_check_branch
        %1058 = sbr.rel (%p1056) target = $region44
      $region43: #{_lambda_.24} parent=39 // pred_region
        %s1059 = smul.u32 32, %s15
        %p1060 = scmp.lt.s32.totalorder %s1059, 63
        %s1061 = scalar_select %p1060, %s1059, 63
        %s1062 = smul.addr %s1061, 8
        %s1063 = scalar_lea.vmem %s3, %s1062
      $region44: #{_lambda_.24} parent=39 // pred_fallthru
        _
    $region40: #{_lambda_.24} parent=5 // pred_fallthru
      _
  $region6: #{_lambda_.24} parent=0 // loop_footer
    %s13 = sadd.s32 1, %s9
  $region7: #{_lambda_.24} parent=0 // loop_footer_branch
    %8 = sbr.rel target = $region3
  $region8: #{_lambda_.24} parent=0 // loop_exit
    _

// kernel: _lambda_.26
$region0: #{_lambda_.26}
  #allocation0 [shape = 'u32[]', space=smem, size = 0x4, offset = 0x4, fixed_abs, tag = 'smem constant byte address 0x4 - core index']
  #allocation1 [shape = 'u32[144,128]{1,0:T(1,128)}', space=vmem, size = 0x12000, scoped, tag = 'internal scratch']
  %s0 = inlined_call_operand.vmem [shape: f32[512,144], index: 0, kind: input, shape index: {}]
  %s1 = inlined_call_operand.vmem [shape: f32[144,3], index: 1, kind: input, shape index: {}]
  %s2 = inlined_call_operand.vmem [shape: f32[1,3], index: 2, kind: input, shape index: {}]
  %s3 = inlined_call_operand.vmem [shape: f32[512,3], index: 3, kind: output, shape index: {}]
  %s4 = sld [smem:[#allocation0]]
  $region45: #{_lambda_.26} parent=0
    _
  %s6 = ssub.s32 1, %s4
  %s7 = scalar_select 0, %s6, %s4
  loop: start=0, step=1, limit=4
  $region2: #{_lambda_.26} parent=0 // loop_pre_header
    _
  $region3: #{_lambda_.26} parent=0 // loop_header
    %s9 = sphi 0, %s13
    %p10 = scmp.ge.s32.totalorder %s9, 4
    %s19 = sphi 0, %s21
    %s22 = sphi 0, %s19
    %s23 = sphi 0, %s22
    %s39 = sphi 0, %s23
    %s43 = sphi 0, %s43
    %s45 = sphi 0, %s43
    %s46 = sphi 0, %s45
    %s60 = sphi 0, %s46
    %s64 = sphi 0, %s64
    %s66 = sphi 0, %s64
    %s67 = sphi 0, %s66
    %s81 = sphi 0, %s67
    %s87 = sphi 0, %s89
    %s90 = sphi 0, %s87
    %s91 = sphi 0, %s90
    %s107 = sphi 0, %s91
  $region4: #{_lambda_.26} parent=0 // loop_header_branch
    %12 = sbr.rel (%p10) target = $region8
  $region5: #{_lambda_.26} parent=0 // loop_body
    %s14 = ssub.s32 %s9, 1
    %s15 = ssub.s32 %s9, 2
    %s16 = sadd.s32 %s9, 1
    %s17 = ssub.s32 %s9, %s16
    %p18 = scmp.eq.s32.totalorder %s17, 0
    %s20 = sadd.s32 %s19, 1
    %s21 = scalar_select %p18, %s19, %s20
    %p24 = pneg %p18
    %p25 = scmp.eq.s32.totalorder %s9, 1
    %p26 = por %p24, %p25
    %p27 = scmp.ne.s32.totalorder %s19, %s22
    %p28 = scmp.eq.s32.totalorder %s9, 0
    %p29 = por %p27, %p28
    %p30 = scmp.ne.s32.totalorder %s19, %s22
    %p31 = scmp.eq.s32.totalorder %s14, 1
    %p32 = por %p30, %p31
    %p33 = scmp.ne.s32.totalorder %s22, %s23
    %p34 = scmp.eq.s32.totalorder %s14, 0
    %p35 = por %p33, %p34
    %p36 = scmp.ne.s32.totalorder %s22, %s23
    %p37 = scmp.eq.s32.totalorder %s15, 1
    %p38 = por %p36, %p37
    %p40 = scmp.ne.s32.totalorder %s23, %s39
    %p41 = scmp.eq.s32.totalorder %s15, 0
    %p42 = por %p40, %p41
    %s44 = sadd.s32 %s43, 1
    %p47 = scmp.eq.s32.totalorder %s9, 1
    %p48 = scmp.ne.s32.totalorder %s43, %s45
    %p49 = scmp.eq.s32.totalorder %s9, 0
    %p50 = por %p48, %p49
    %p51 = scmp.ne.s32.totalorder %s43, %s45
    %p52 = scmp.eq.s32.totalorder %s14, 1
    %p53 = por %p51, %p52
    %p54 = scmp.ne.s32.totalorder %s45, %s46
    %p55 = scmp.eq.s32.totalorder %s14, 0
    %p56 = por %p54, %p55
    %p57 = scmp.ne.s32.totalorder %s45, %s46
    %p58 = scmp.eq.s32.totalorder %s15, 1
    %p59 = por %p57, %p58
    %p61 = scmp.ne.s32.totalorder %s46, %s60
    %p62 = scmp.eq.s32.totalorder %s15, 0
    %p63 = por %p61, %p62
    %s65 = sadd.s32 %s64, 1
    %p68 = scmp.eq.s32.totalorder %s9, 1
    %p69 = scmp.ne.s32.totalorder %s64, %s66
    %p70 = scmp.eq.s32.totalorder %s9, 0
    %p71 = por %p69, %p70
    %p72 = scmp.ne.s32.totalorder %s64, %s66
    %p73 = scmp.eq.s32.totalorder %s14, 1
    %p74 = por %p72, %p73
    %p75 = scmp.ne.s32.totalorder %s66, %s67
    %p76 = scmp.eq.s32.totalorder %s14, 0
    %p77 = por %p75, %p76
    %p78 = scmp.ne.s32.totalorder %s66, %s67
    %p79 = scmp.eq.s32.totalorder %s15, 1
    %p80 = por %p78, %p79
    %p82 = scmp.ne.s32.totalorder %s67, %s81
    %p83 = scmp.eq.s32.totalorder %s15, 0
    %p84 = por %p82, %p83
    %s85 = ssub.s32 %s9, %s16
    %p86 = scmp.eq.s32.totalorder %s85, 0
    %s88 = sadd.s32 %s87, 1
    %s89 = scalar_select %p86, %s87, %s88
    %p92 = pneg %p86
    %p93 = scmp.eq.s32.totalorder %s9, 1
    %p94 = por %p92, %p93
    %p95 = scmp.ne.s32.totalorder %s87, %s90
    %p96 = scmp.eq.s32.totalorder %s9, 0
    %p97 = por %p95, %p96
    %p98 = scmp.ne.s32.totalorder %s87, %s90
    %p99 = scmp.eq.s32.totalorder %s14, 1
    %p100 = por %p98, %p99
    %p101 = scmp.ne.s32.totalorder %s90, %s91
    %p102 = scmp.eq.s32.totalorder %s14, 0
    %p103 = por %p101, %p102
    %p104 = scmp.ne.s32.totalorder %s90, %s91
    %p105 = scmp.eq.s32.totalorder %s15, 1
    %p106 = por %p104, %p105
    %p108 = scmp.ne.s32.totalorder %s91, %s107
    %p109 = scmp.eq.s32.totalorder %s15, 0
    %p110 = por %p108, %p109
    %p111 = scmp.le.s32.totalorder 1, %s9
    %p112 = scmp.lt.s32.totalorder %s9, 3
    %p113 = pnand %p111, %p112
    %p114 = pneg %p113
    // Predicated region
    $region9: #{_lambda_.26} parent=5 // pred_check
      _
    $region10: #{_lambda_.26} parent=5 // pred_check_branch
      %116 = sbr.rel (%p113) target = $region12
    $region11: #{_lambda_.26} parent=5 // pred_region
      %s117 = ssub.s32 %s9, 1
      // Predicated region
      $region13: #{_lambda_.26} parent=11 // pred_check
        %p118 = pneg %p56
      $region14: #{_lambda_.26} parent=11 // pred_check_branch
        %120 = sbr.rel (%p118) target = $region16
      $region15: #{_lambda_.26} parent=11 // pred_region
        _
      $region16: #{_lambda_.26} parent=11 // pred_fallthru
        _
      // Predicated region
      $region17: #{_lambda_.26} parent=11 // pred_check
        %p121 = pneg %p77
      $region18: #{_lambda_.26} parent=11 // pred_check_branch
        %123 = sbr.rel (%p121) target = $region20
      $region19: #{_lambda_.26} parent=11 // pred_region
        _
      $region20: #{_lambda_.26} parent=11 // pred_fallthru
        _
    $region12: #{_lambda_.26} parent=5 // pred_fallthru
      _
    %p124 = scmp.lt.s32.totalorder %s9, 2
    // Predicated region
    $region21: #{_lambda_.26} parent=5 // pred_check
      %p125 = pneg %p124
    $region22: #{_lambda_.26} parent=5 // pred_check_branch
      %127 = sbr.rel (%p125) target = $region24
    $region23: #{_lambda_.26} parent=5 // pred_region
      // Predicated region
      $region25: #{_lambda_.26} parent=23 // pred_check
        %p128 = pneg %p29
      $region26: #{_lambda_.26} parent=23 // pred_check_branch
        %130 = sbr.rel (%p128) target = $region28
      $region27: #{_lambda_.26} parent=23 // pred_region
        %s131 = smul.u32 32, %s9
        %p132 = scmp.lt.s32.totalorder %s131, 63
        %s133 = scalar_select %p132, %s131, 63
        %s134 = smul.addr %s133, 2
        %s135 = smul.addr %s134, 8
        %s136 = scalar_lea.vmem %s0, %s135
        %s137 = smul.u32 32, %s9
      $region28: #{_lambda_.26} parent=23 // pred_fallthru
        _
    $region24: #{_lambda_.26} parent=5 // pred_fallthru
      _
    %p138 = scmp.le.s32.totalorder 1, %s9
    %p139 = scmp.lt.s32.totalorder %s9, 3
    %p140 = pnand %p138, %p139
    %p141 = pneg %p140
    // Predicated region
    $region29: #{_lambda_.26} parent=5 // pred_check
      _
    $region30: #{_lambda_.26} parent=5 // pred_check_branch
      %143 = sbr.rel (%p140) target = $region32
    $region31: #{_lambda_.26} parent=5 // pred_region
      %s144 = ssub.s32 %s9, 1
      %s145 = smul.u32 32, %s14
      %p146 = scmp.lt.s32.totalorder %s145, 63
      %s147 = scalar_select %p146, %s145, 63
      %s148 = smul.addr %s147, 2
      %s149 = smul.addr %s148, 8
      %s150 = scalar_lea.vmem %s0, %s149
      %p151 = pneg %p35
      %p152 = pneg %p32
      %p153 = pneg %p56
      %p154 = pneg %p53
      %p155 = pneg %p77
      %p156 = pneg %p74
      %p157 = pneg %p103
      %p158 = pneg %p100
      %s159 = smul.u32 32, %s14
      %p160 = scmp.lt.s32.totalorder %s159, 63
      %s161 = scalar_select %p160, %s159, 63
      %s162 = smul.addr %s161, 8
      %s163 = scalar_lea.vmem %s3, %s162
      %s164 = smul.u32 32, %s14
      %p165 = scmp.lt.s32.totalorder %s164, 63
      %s166 = scalar_select %p165, %s164, 63
      %s167 = smul.addr %s166, 2
      %s168 = smul.addr %s167, 8
      %s169 = scalar_lea.vmem %s0, %s168
      %s170 = smul.u32 32, %s14
      %s171 = smul.u32 32, %s14
      %p172 = scmp.lt.s32.totalorder %s171, 63
      %s173 = scalar_select %p172, %s171, 63
      %s174 = smul.addr %s173, 8
      %s175 = scalar_lea.vmem %s3, %s174
      %s176 = smul.u32 32, %s14
      %v177 = vld [vmem:[%s169] sm:$0xff]
      %v178 = vld [vmem:[%s169 + $0x8] sm:$0xff]
      %v179 = vld [vmem:[%s169 + $0x10] sm:$0xff]
      %v180 = vld [vmem:[%s169 + $0x18] sm:$0xff]
      %v181 = vld [vmem:[%s169 + $0x20] sm:$0xff]
      %v182 = vld [vmem:[%s169 + $0x28] sm:$0xff]
      %v183 = vld [vmem:[%s169 + $0x30] sm:$0xff]
      %v184 = vld [vmem:[%s169 + $0x38] sm:$0xff]
      %v185 = vld [vmem:[%s169 + $0x40] sm:$0xff]
      %v186 = vld [vmem:[%s169 + $0x48] sm:$0xff]
      %v187 = vld [vmem:[%s169 + $0x50] sm:$0xff]
      %v188 = vld [vmem:[%s169 + $0x58] sm:$0xff]
      %v189 = vld [vmem:[%s169 + $0x60] sm:$0xff]
      %v190 = vld [vmem:[%s169 + $0x68] sm:$0xff]
      %v191 = vld [vmem:[%s169 + $0x70] sm:$0xff]
      %v192 = vld [vmem:[%s169 + $0x78] sm:$0xff]
      %v193 = vld [vmem:[%s169 + $0x80] sm:$0xff]
      %v194 = vld [vmem:[%s169 + $0x88] sm:$0xff]
      %v195 = vld [vmem:[%s169 + $0x90] sm:$0xff]
      %v196 = vld [vmem:[%s169 + $0x98] sm:$0xff]
      %v197 = vld [vmem:[%s169 + $0xa0] sm:$0xff]
      %v198 = vld [vmem:[%s169 + $0xa8] sm:$0xff]
      %v199 = vld [vmem:[%s169 + $0xb0] sm:$0xff]
      %v200 = vld [vmem:[%s169 + $0xb8] sm:$0xff]
      %v201 = vld [vmem:[%s169 + $0xc0] sm:$0xff]
      %v202 = vld [vmem:[%s169 + $0xc8] sm:$0xff]
      %v203 = vld [vmem:[%s169 + $0xd0] sm:$0xff]
      %v204 = vld [vmem:[%s169 + $0xd8] sm:$0xff]
      %v205 = vld [vmem:[%s169 + $0xe0] sm:$0xff]
      %v206 = vld [vmem:[%s169 + $0xe8] sm:$0xff]
      %v207 = vld [vmem:[%s169 + $0xf0] sm:$0xff]
      %v208 = vld [vmem:[%s169 + $0xf8] sm:$0xff]
      %v209 = vld [vmem:[%s169 + $0x100] sm:$0xff]
      %v210 = vld [vmem:[%s169 + $0x108] sm:$0xff]
      %v211 = vld [vmem:[%s169 + $0x110] sm:$0xff]
      %v212 = vld [vmem:[%s169 + $0x118] sm:$0xff]
      %v213 = vld [vmem:[%s169 + $0x120] sm:$0xff]
      %v214 = vld [vmem:[%s169 + $0x128] sm:$0xff]
      %v215 = vld [vmem:[%s169 + $0x130] sm:$0xff]
      %v216 = vld [vmem:[%s169 + $0x138] sm:$0xff]
      %v217 = vld [vmem:[%s169 + $0x140] sm:$0xff]
      %v218 = vld [vmem:[%s169 + $0x148] sm:$0xff]
      %v219 = vld [vmem:[%s169 + $0x150] sm:$0xff]
      %v220 = vld [vmem:[%s169 + $0x158] sm:$0xff]
      %v221 = vld [vmem:[%s169 + $0x160] sm:$0xff]
      %v222 = vld [vmem:[%s169 + $0x168] sm:$0xff]
      %v223 = vld [vmem:[%s169 + $0x170] sm:$0xff]
      %v224 = vld [vmem:[%s169 + $0x178] sm:$0xff]
      %v225 = vld [vmem:[%s169 + $0x180] sm:$0xff]
      %v226 = vld [vmem:[%s169 + $0x188] sm:$0xff]
      %v227 = vld [vmem:[%s169 + $0x190] sm:$0xff]
      %v228 = vld [vmem:[%s169 + $0x198] sm:$0xff]
      %v229 = vld [vmem:[%s169 + $0x1a0] sm:$0xff]
      %v230 = vld [vmem:[%s169 + $0x1a8] sm:$0xff]
      %v231 = vld [vmem:[%s169 + $0x1b0] sm:$0xff]
      %v232 = vld [vmem:[%s169 + $0x1b8] sm:$0xff]
      %v233 = vld [vmem:[%s169 + $0x1c0] sm:$0xff]
      %v234 = vld [vmem:[%s169 + $0x1c8] sm:$0xff]
      %v235 = vld [vmem:[%s169 + $0x1d0] sm:$0xff]
      %v236 = vld [vmem:[%s169 + $0x1d8] sm:$0xff]
      %v237 = vld [vmem:[%s169 + $0x1e0] sm:$0xff]
      %v238 = vld [vmem:[%s169 + $0x1e8] sm:$0xff]
      %v239 = vld [vmem:[%s169 + $0x1f0] sm:$0xff]
      %v240 = vld [vmem:[%s169 + $0x1f8] sm:$0xff]
      %v241 = vld [vmem:[%s1] sm:$0xff]
      %v242 = vld [vmem:[%s1 + $0x8] sm:$0xff]
      %v243 = vld [vmem:[%s1 + $0x10] sm:$0xff]
      %v244 = vld [vmem:[%s1 + $0x18] sm:$0xff]
      %v245 = vld [vmem:[%s1 + $0x20] sm:$0xff]
      %v246 = vld [vmem:[%s1 + $0x28] sm:$0xff]
      %v247 = vld [vmem:[%s1 + $0x30] sm:$0xff]
      %v248 = vld [vmem:[%s1 + $0x38] sm:$0xff]
      %v249 = vld [vmem:[%s1 + $0x40] sm:$0xff]
      %v250 = vld [vmem:[%s1 + $0x48] sm:$0xff]
      %v251 = vld [vmem:[%s1 + $0x50] sm:$0xff]
      %v252 = vld [vmem:[%s1 + $0x58] sm:$0xff]
      %v253 = vld [vmem:[%s1 + $0x60] sm:$0xff]
      %v254 = vld [vmem:[%s1 + $0x68] sm:$0xff]
      %v255 = vld [vmem:[%s1 + $0x70] sm:$0xff]
      %v256 = vld [vmem:[%s1 + $0x78] sm:$0xff]
      %v257 = vld [vmem:[%s1 + $0x80] sm:$0xff]
      %v258 = vld [vmem:[%s1 + $0x88] sm:$0xff]
      %v259 = vld [vmem:[%s2] sm:$0x1]
      %v261 = vlaneseq
      %v262 = vshrl.u32 %v261, 7
      %v263 = vsub.s32 0, %v262
      %v264 = vrot.slane %v259, %v263
      %vm266 = vcmask 130048
      %v268 = vsel %vm266, %v178, 0
      %v271 = vsel %vm266, %v180, 0
      %v274 = vsel %vm266, %v182, 0
      %v277 = vsel %vm266, %v184, 0
      %v280 = vsel %vm266, %v186, 0
      %v283 = vsel %vm266, %v188, 0
      %v286 = vsel %vm266, %v190, 0
      %v289 = vsel %vm266, %v192, 0
      %v292 = vsel %vm266, %v194, 0
      %v295 = vsel %vm266, %v196, 0
      %v298 = vsel %vm266, %v198, 0
      %v301 = vsel %vm266, %v200, 0
      %v304 = vsel %vm266, %v202, 0
      %v307 = vsel %vm266, %v204, 0
      %v310 = vsel %vm266, %v206, 0
      %v313 = vsel %vm266, %v208, 0
      %v316 = vsel %vm266, %v210, 0
      %v319 = vsel %vm266, %v212, 0
      %v322 = vsel %vm266, %v214, 0
      %v325 = vsel %vm266, %v216, 0
      %v328 = vsel %vm266, %v218, 0
      %v331 = vsel %vm266, %v220, 0
      %v334 = vsel %vm266, %v222, 0
      %v337 = vsel %vm266, %v224, 0
      %v340 = vsel %vm266, %v226, 0
      %v343 = vsel %vm266, %v228, 0
      %v346 = vsel %vm266, %v230, 0
      %v349 = vsel %vm266, %v232, 0
      %v352 = vsel %vm266, %v234, 0
      %v355 = vsel %vm266, %v236, 0
      %v358 = vsel %vm266, %v238, 0
      %v361 = vsel %vm266, %v240, 0
      %363 = vmatprep.subr.mxu0 0.0
      %364 = vmatpush1.msra.mxu0 %v256
      %365 = vmatprep.subr.mxu0 0.0
      %366 = vmatpush1.msra.mxu0 %v255
      %367 = vmatprep.subr.mxu0 0.0
      %368 = vmatpush1.msra.mxu0 %v254
      %369 = vmatprep.subr.mxu0 0.0
      %370 = vmatpush1.msra.mxu0 %v253
      %371 = vmatprep.subr.mxu0 0.0
      %372 = vmatpush1.msra.mxu0 %v252
      %373 = vmatprep.subr.mxu0 0.0
      %374 = vmatpush1.msra.mxu0 %v251
      %375 = vmatprep.subr.mxu0 0.0
      %376 = vmatpush1.msra.mxu0 %v250
      %377 = vmatprep.subr.mxu0 0.0
      %378 = vmatpush1.msra.mxu0 %v249
      %379 = vmatprep.subr.mxu0 0.0
      %380 = vmatpush1.msra.mxu0 %v248
      %381 = vmatprep.subr.mxu0 0.0
      %382 = vmatpush1.msra.mxu0 %v247
      %383 = vmatprep.subr.mxu0 0.0
      %384 = vmatpush1.msra.mxu0 %v246
      %385 = vmatprep.subr.mxu0 0.0
      %386 = vmatpush1.msra.mxu0 %v245
      %387 = vmatprep.subr.mxu0 0.0
      %388 = vmatpush1.msra.mxu0 %v244
      %389 = vmatprep.subr.mxu0 0.0
      %390 = vmatpush1.msra.mxu0 %v243
      %391 = vmatprep.subr.mxu0 0.0
      %392 = vmatpush1.msra.mxu0 %v242
      %393 = vmatprep.subr.mxu0 0.0
      %394 = vmatpush1.msra.mxu0 %v241
      %395 = vmatprep.subr.mxu0 0.0
      %396 = vmatpush2.msra.mxu0 0.0
      %397 = vmatprep.subr.mxu0 0.0
      %398 = vmatpush2.msra.mxu0 0.0
      %399 = vmatprep.subr.mxu0 0.0
      %400 = vmatpush2.msra.mxu0 0.0
      %401 = vmatprep.subr.mxu0 0.0
      %402 = vmatpush2.msra.mxu0 0.0
      %403 = vmatprep.subr.mxu0 0.0
      %404 = vmatpush2.msra.mxu0 0.0
      %405 = vmatprep.subr.mxu0 0.0
      %406 = vmatpush2.msra.mxu0 0.0
      %407 = vmatprep.subr.mxu0 0.0
      %408 = vmatpush2.msra.mxu0 0.0
      %409 = vmatprep.subr.mxu0 0.0
      %410 = vmatpush2.msra.mxu0 0.0
      %411 = vmatprep.subr.mxu0 0.0
      %412 = vmatpush2.msra.mxu0 0.0
      %413 = vmatprep.subr.mxu0 0.0
      %414 = vmatpush2.msra.mxu0 0.0
      %415 = vmatprep.subr.mxu0 0.0
      %416 = vmatpush2.msra.mxu0 0.0
      %417 = vmatprep.subr.mxu0 0.0
      %418 = vmatpush2.msra.mxu0 0.0
      %419 = vmatprep.subr.mxu0 0.0
      %420 = vmatpush2.msra.mxu0 0.0
      %421 = vmatprep.subr.mxu0 0.0
      %422 = vmatpush2.msra.mxu0 0.0
      %423 = vmatprep.subr.mxu0 0.0
      %424 = vmatpush2.msra.mxu0 %v258
      %425 = vmatprep.subr.mxu0 0.0
      %426 = vmatpush2.msra.mxu0 %v257
      %427 = vmatprep.mubr.f32.mxu0 %v268
      %428 = vmatmul.mubr.f32.gmra.mxu0 %v177
      %v429 = vpop.f32.mrf.mxu0
      %v430 = vadd.f32 %v264, %v429
      %v431 = vpop.f32.mrf.mxu0
      %432 = vmatprep.mubr.f32.mxu0 %v271
      %433 = vmatmul.mubr.f32.gmra.mxu0 %v179
      %v434 = vpop.f32.mrf.mxu0
      %v435 = vadd.f32 %v264, %v434
      %v436 = vpop.f32.mrf.mxu0
      %437 = vmatprep.mubr.f32.mxu0 %v274
      %438 = vmatmul.mubr.f32.gmra.mxu0 %v181
      %v439 = vpop.f32.mrf.mxu0
      %v440 = vadd.f32 %v264, %v439
      %v441 = vpop.f32.mrf.mxu0
      %442 = vmatprep.mubr.f32.mxu0 %v277
      %443 = vmatmul.mubr.f32.gmra.mxu0 %v183
      %v444 = vpop.f32.mrf.mxu0
      %v445 = vadd.f32 %v264, %v444
      %v446 = vpop.f32.mrf.mxu0
      %447 = vmatprep.mubr.f32.mxu0 %v280
      %448 = vmatmul.mubr.f32.gmra.mxu0 %v185
      %v449 = vpop.f32.mrf.mxu0
      %v450 = vadd.f32 %v264, %v449
      %v451 = vpop.f32.mrf.mxu0
      %452 = vmatprep.mubr.f32.mxu0 %v283
      %453 = vmatmul.mubr.f32.gmra.mxu0 %v187
      %v454 = vpop.f32.mrf.mxu0
      %v455 = vadd.f32 %v264, %v454
      %v456 = vpop.f32.mrf.mxu0
      %457 = vmatprep.mubr.f32.mxu0 %v286
      %458 = vmatmul.mubr.f32.gmra.mxu0 %v189
      %v459 = vpop.f32.mrf.mxu0
      %v460 = vadd.f32 %v264, %v459
      %v461 = vpop.f32.mrf.mxu0
      %462 = vmatprep.mubr.f32.mxu0 %v289
      %463 = vmatmul.mubr.f32.gmra.mxu0 %v191
      %v464 = vpop.f32.mrf.mxu0
      %v465 = vadd.f32 %v264, %v464
      %v466 = vpop.f32.mrf.mxu0
      %467 = vmatprep.mubr.f32.mxu0 %v292
      %468 = vmatmul.mubr.f32.gmra.mxu0 %v193
      %v469 = vpop.f32.mrf.mxu0
      %v470 = vadd.f32 %v264, %v469
      %v471 = vpop.f32.mrf.mxu0
      %472 = vmatprep.mubr.f32.mxu0 %v295
      %473 = vmatmul.mubr.f32.gmra.mxu0 %v195
      %v474 = vpop.f32.mrf.mxu0
      %v475 = vadd.f32 %v264, %v474
      %v476 = vpop.f32.mrf.mxu0
      %477 = vmatprep.mubr.f32.mxu0 %v298
      %478 = vmatmul.mubr.f32.gmra.mxu0 %v197
      %v479 = vpop.f32.mrf.mxu0
      %v480 = vadd.f32 %v264, %v479
      %v481 = vpop.f32.mrf.mxu0
      %482 = vmatprep.mubr.f32.mxu0 %v301
      %483 = vmatmul.mubr.f32.gmra.mxu0 %v199
      %v484 = vpop.f32.mrf.mxu0
      %v485 = vadd.f32 %v264, %v484
      %v486 = vpop.f32.mrf.mxu0
      %487 = vmatprep.mubr.f32.mxu0 %v304
      %488 = vmatmul.mubr.f32.gmra.mxu0 %v201
      %v489 = vpop.f32.mrf.mxu0
      %v490 = vadd.f32 %v264, %v489
      %v491 = vpop.f32.mrf.mxu0
      %492 = vmatprep.mubr.f32.mxu0 %v307
      %493 = vmatmul.mubr.f32.gmra.mxu0 %v203
      %v494 = vpop.f32.mrf.mxu0
      %v495 = vadd.f32 %v264, %v494
      %v496 = vpop.f32.mrf.mxu0
      %497 = vmatprep.mubr.f32.mxu0 %v310
      %498 = vmatmul.mubr.f32.gmra.mxu0 %v205
      %v499 = vpop.f32.mrf.mxu0
      %v500 = vadd.f32 %v264, %v499
      %v501 = vpop.f32.mrf.mxu0
      %502 = vmatprep.mubr.f32.mxu0 %v313
      %503 = vmatmul.mubr.f32.gmra.mxu0 %v207
      %v504 = vpop.f32.mrf.mxu0
      %v505 = vadd.f32 %v264, %v504
      %v506 = vpop.f32.mrf.mxu0
      %507 = vmatprep.mubr.f32.mxu0 %v316
      %508 = vmatmul.mubr.f32.gmra.mxu0 %v209
      %v509 = vpop.f32.mrf.mxu0
      %v510 = vadd.f32 %v264, %v509
      %v511 = vpop.f32.mrf.mxu0
      %512 = vmatprep.mubr.f32.mxu0 %v319
      %513 = vmatmul.mubr.f32.gmra.mxu0 %v211
      %v514 = vpop.f32.mrf.mxu0
      %v515 = vadd.f32 %v264, %v514
      %v516 = vpop.f32.mrf.mxu0
      %517 = vmatprep.mubr.f32.mxu0 %v322
      %518 = vmatmul.mubr.f32.gmra.mxu0 %v213
      %v519 = vpop.f32.mrf.mxu0
      %v520 = vadd.f32 %v264, %v519
      %v521 = vpop.f32.mrf.mxu0
      %522 = vmatprep.mubr.f32.mxu0 %v325
      %523 = vmatmul.mubr.f32.gmra.mxu0 %v215
      %v524 = vpop.f32.mrf.mxu0
      %v525 = vadd.f32 %v264, %v524
      %v526 = vpop.f32.mrf.mxu0
      %527 = vmatprep.mubr.f32.mxu0 %v328
      %528 = vmatmul.mubr.f32.gmra.mxu0 %v217
      %v529 = vpop.f32.mrf.mxu0
      %v530 = vadd.f32 %v264, %v529
      %v531 = vpop.f32.mrf.mxu0
      %532 = vmatprep.mubr.f32.mxu0 %v331
      %533 = vmatmul.mubr.f32.gmra.mxu0 %v219
      %v534 = vpop.f32.mrf.mxu0
      %v535 = vadd.f32 %v264, %v534
      %v536 = vpop.f32.mrf.mxu0
      %537 = vmatprep.mubr.f32.mxu0 %v334
      %538 = vmatmul.mubr.f32.gmra.mxu0 %v221
      %v539 = vpop.f32.mrf.mxu0
      %v540 = vadd.f32 %v264, %v539
      %v541 = vpop.f32.mrf.mxu0
      %542 = vmatprep.mubr.f32.mxu0 %v337
      %543 = vmatmul.mubr.f32.gmra.mxu0 %v223
      %v544 = vpop.f32.mrf.mxu0
      %v545 = vadd.f32 %v264, %v544
      %v546 = vpop.f32.mrf.mxu0
      %547 = vmatprep.mubr.f32.mxu0 %v340
      %548 = vmatmul.mubr.f32.gmra.mxu0 %v225
      %v549 = vpop.f32.mrf.mxu0
      %v550 = vadd.f32 %v264, %v549
      %v551 = vpop.f32.mrf.mxu0
      %552 = vmatprep.mubr.f32.mxu0 %v343
      %553 = vmatmul.mubr.f32.gmra.mxu0 %v227
      %v554 = vpop.f32.mrf.mxu0
      %v555 = vadd.f32 %v264, %v554
      %v556 = vpop.f32.mrf.mxu0
      %557 = vmatprep.mubr.f32.mxu0 %v346
      %558 = vmatmul.mubr.f32.gmra.mxu0 %v229
      %v559 = vpop.f32.mrf.mxu0
      %v560 = vadd.f32 %v264, %v559
      %v561 = vpop.f32.mrf.mxu0
      %562 = vmatprep.mubr.f32.mxu0 %v349
      %563 = vmatmul.mubr.f32.gmra.mxu0 %v231
      %v564 = vpop.f32.mrf.mxu0
      %v565 = vadd.f32 %v264, %v564
      %v566 = vpop.f32.mrf.mxu0
      %567 = vmatprep.mubr.f32.mxu0 %v352
      %568 = vmatmul.mubr.f32.gmra.mxu0 %v233
      %v569 = vpop.f32.mrf.mxu0
      %v570 = vadd.f32 %v264, %v569
      %v571 = vpop.f32.mrf.mxu0
      %572 = vmatprep.mubr.f32.mxu0 %v355
      %573 = vmatmul.mubr.f32.gmra.mxu0 %v235
      %v574 = vpop.f32.mrf.mxu0
      %v575 = vadd.f32 %v264, %v574
      %v576 = vpop.f32.mrf.mxu0
      %577 = vmatprep.mubr.f32.mxu0 %v358
      %578 = vmatmul.mubr.f32.gmra.mxu0 %v237
      %v579 = vpop.f32.mrf.mxu0
      %v580 = vadd.f32 %v264, %v579
      %v581 = vpop.f32.mrf.mxu0
      %582 = vmatprep.mubr.f32.mxu0 %v361
      %583 = vmatmul.mubr.f32.gmra.mxu0 %v239
      %v584 = vpop.f32.mrf.mxu0
      %v585 = vadd.f32 %v264, %v584
      %v586 = vpop.f32.mrf.mxu0
      %587 = vdwg.mxu0
      %vm588 = vcmp.gt.f32.partialorder %v430, 0.0
      %vm589 = vcmp.gt.f32.partialorder %v435, 0.0
      %vm590 = vcmp.gt.f32.partialorder %v440, 0.0
      %vm591 = vcmp.gt.f32.partialorder %v445, 0.0
      %vm592 = vcmp.gt.f32.partialorder %v450, 0.0
      %vm593 = vcmp.gt.f32.partialorder %v455, 0.0
      %vm594 = vcmp.gt.f32.partialorder %v460, 0.0
      %vm595 = vcmp.gt.f32.partialorder %v465, 0.0
      %vm596 = vcmp.gt.f32.partialorder %v470, 0.0
      %vm597 = vcmp.gt.f32.partialorder %v475, 0.0
      %vm598 = vcmp.gt.f32.partialorder %v480, 0.0
      %vm599 = vcmp.gt.f32.partialorder %v485, 0.0
      %vm600 = vcmp.gt.f32.partialorder %v490, 0.0
      %vm601 = vcmp.gt.f32.partialorder %v495, 0.0
      %vm602 = vcmp.gt.f32.partialorder %v500, 0.0
      %vm603 = vcmp.gt.f32.partialorder %v505, 0.0
      %vm604 = vcmp.gt.f32.partialorder %v510, 0.0
      %vm605 = vcmp.gt.f32.partialorder %v515, 0.0
      %vm606 = vcmp.gt.f32.partialorder %v520, 0.0
      %vm607 = vcmp.gt.f32.partialorder %v525, 0.0
      %vm608 = vcmp.gt.f32.partialorder %v530, 0.0
      %vm609 = vcmp.gt.f32.partialorder %v535, 0.0
      %vm610 = vcmp.gt.f32.partialorder %v540, 0.0
      %vm611 = vcmp.gt.f32.partialorder %v545, 0.0
      %vm612 = vcmp.gt.f32.partialorder %v550, 0.0
      %vm613 = vcmp.gt.f32.partialorder %v555, 0.0
      %vm614 = vcmp.gt.f32.partialorder %v560, 0.0
      %vm615 = vcmp.gt.f32.partialorder %v565, 0.0
      %vm616 = vcmp.gt.f32.partialorder %v570, 0.0
      %vm617 = vcmp.gt.f32.partialorder %v575, 0.0
      %vm618 = vcmp.gt.f32.partialorder %v580, 0.0
      %vm619 = vcmp.gt.f32.partialorder %v585, 0.0
      %v620 = vmul.f32 %v430, 0.01
      %v621 = vmul.f32 %v435, 0.01
      %v622 = vmul.f32 %v440, 0.01
      %v623 = vmul.f32 %v445, 0.01
      %v624 = vmul.f32 %v450, 0.01
      %v625 = vmul.f32 %v455, 0.01
      %v626 = vmul.f32 %v460, 0.01
      %v627 = vmul.f32 %v465, 0.01
      %v628 = vmul.f32 %v470, 0.01
      %v629 = vmul.f32 %v475, 0.01
      %v630 = vmul.f32 %v480, 0.01
      %v631 = vmul.f32 %v485, 0.01
      %v632 = vmul.f32 %v490, 0.01
      %v633 = vmul.f32 %v495, 0.01
      %v634 = vmul.f32 %v500, 0.01
      %v635 = vmul.f32 %v505, 0.01
      %v636 = vmul.f32 %v510, 0.01
      %v637 = vmul.f32 %v515, 0.01
      %v638 = vmul.f32 %v520, 0.01
      %v639 = vmul.f32 %v525, 0.01
      %v640 = vmul.f32 %v530, 0.01
      %v641 = vmul.f32 %v535, 0.01
      %v642 = vmul.f32 %v540, 0.01
      %v643 = vmul.f32 %v545, 0.01
      %v644 = vmul.f32 %v550, 0.01
      %v645 = vmul.f32 %v555, 0.01
      %v646 = vmul.f32 %v560, 0.01
      %v647 = vmul.f32 %v565, 0.01
      %v648 = vmul.f32 %v570, 0.01
      %v649 = vmul.f32 %v575, 0.01
      %v650 = vmul.f32 %v580, 0.01
      %v651 = vmul.f32 %v585, 0.01
      %v652 = vsel %vm588, %v430, %v620
      %v653 = vsel %vm589, %v435, %v621
      %v654 = vsel %vm590, %v440, %v622
      %v655 = vsel %vm591, %v445, %v623
      %v656 = vsel %vm592, %v450, %v624
      %v657 = vsel %vm593, %v455, %v625
      %v658 = vsel %vm594, %v460, %v626
      %v659 = vsel %vm595, %v465, %v627
      %v660 = vsel %vm596, %v470, %v628
      %v661 = vsel %vm597, %v475, %v629
      %v662 = vsel %vm598, %v480, %v630
      %v663 = vsel %vm599, %v485, %v631
      %v664 = vsel %vm600, %v490, %v632
      %v665 = vsel %vm601, %v495, %v633
      %v666 = vsel %vm602, %v500, %v634
      %v667 = vsel %vm603, %v505, %v635
      %v668 = vsel %vm604, %v510, %v636
      %v669 = vsel %vm605, %v515, %v637
      %v670 = vsel %vm606, %v520, %v638
      %v671 = vsel %vm607, %v525, %v639
      %v672 = vsel %vm608, %v530, %v640
      %v673 = vsel %vm609, %v535, %v641
      %v674 = vsel %vm610, %v540, %v642
      %v675 = vsel %vm611, %v545, %v643
      %v676 = vsel %vm612, %v550, %v644
      %v677 = vsel %vm613, %v555, %v645
      %v678 = vsel %vm614, %v560, %v646
      %v679 = vsel %vm615, %v565, %v647
      %v680 = vsel %vm616, %v570, %v648
      %v681 = vsel %vm617, %v575, %v649
      %v682 = vsel %vm618, %v580, %v650
      %v683 = vsel %vm619, %v585, %v651
      %vm684 = vcmask 23552
      %685 = vst.msk [vmem:[%s175] sm:$0xff] %vm684, %v652
      %686 = vst.msk [vmem:[%s175 + $0x8] sm:$0xff] %vm684, %v653
      %687 = vst.msk [vmem:[%s175 + $0x10] sm:$0xff] %vm684, %v654
      %688 = vst.msk [vmem:[%s175 + $0x18] sm:$0xff] %vm684, %v655
      %689 = vst.msk [vmem:[%s175 + $0x20] sm:$0xff] %vm684, %v656
      %690 = vst.msk [vmem:[%s175 + $0x28] sm:$0xff] %vm684, %v657
      %691 = vst.msk [vmem:[%s175 + $0x30] sm:$0xff] %vm684, %v658
      %692 = vst.msk [vmem:[%s175 + $0x38] sm:$0xff] %vm684, %v659
      %693 = vst.msk [vmem:[%s175 + $0x40] sm:$0xff] %vm684, %v660
      %694 = vst.msk [vmem:[%s175 + $0x48] sm:$0xff] %vm684, %v661
      %695 = vst.msk [vmem:[%s175 + $0x50] sm:$0xff] %vm684, %v662
      %696 = vst.msk [vmem:[%s175 + $0x58] sm:$0xff] %vm684, %v663
      %697 = vst.msk [vmem:[%s175 + $0x60] sm:$0xff] %vm684, %v664
      %698 = vst.msk [vmem:[%s175 + $0x68] sm:$0xff] %vm684, %v665
      %699 = vst.msk [vmem:[%s175 + $0x70] sm:$0xff] %vm684, %v666
      %700 = vst.msk [vmem:[%s175 + $0x78] sm:$0xff] %vm684, %v667
      %701 = vst.msk [vmem:[%s175 + $0x80] sm:$0xff] %vm684, %v668
      %702 = vst.msk [vmem:[%s175 + $0x88] sm:$0xff] %vm684, %v669
      %703 = vst.msk [vmem:[%s175 + $0x90] sm:$0xff] %vm684, %v670
      %704 = vst.msk [vmem:[%s175 + $0x98] sm:$0xff] %vm684, %v671
      %705 = vst.msk [vmem:[%s175 + $0xa0] sm:$0xff] %vm684, %v672
      %706 = vst.msk [vmem:[%s175 + $0xa8] sm:$0xff] %vm684, %v673
      %707 = vst.msk [vmem:[%s175 + $0xb0] sm:$0xff] %vm684, %v674
      %708 = vst.msk [vmem:[%s175 + $0xb8] sm:$0xff] %vm684, %v675
      %709 = vst.msk [vmem:[%s175 + $0xc0] sm:$0xff] %vm684, %v676
      %710 = vst.msk [vmem:[%s175 + $0xc8] sm:$0xff] %vm684, %v677
      %711 = vst.msk [vmem:[%s175 + $0xd0] sm:$0xff] %vm684, %v678
      %712 = vst.msk [vmem:[%s175 + $0xd8] sm:$0xff] %vm684, %v679
      %713 = vst.msk [vmem:[%s175 + $0xe0] sm:$0xff] %vm684, %v680
      %714 = vst.msk [vmem:[%s175 + $0xe8] sm:$0xff] %vm684, %v681
      %715 = vst.msk [vmem:[%s175 + $0xf0] sm:$0xff] %vm684, %v682
      %716 = vst.msk [vmem:[%s175 + $0xf8] sm:$0xff] %vm684, %v683
      %s717 = smul.u32 32, %s14
      %p718 = scmp.lt.s32.totalorder %s717, 63
      %s719 = scalar_select %p718, %s717, 63
      %s720 = smul.addr %s719, 8
      %s721 = scalar_lea.vmem %s3, %s720
      // Predicated region
      $region33: #{_lambda_.26} parent=31 // pred_check
        %p722 = pneg %p100
      $region34: #{_lambda_.26} parent=31 // pred_check_branch
        %724 = sbr.rel (%p722) target = $region36
      $region35: #{_lambda_.26} parent=31 // pred_region
        %s725 = smul.u32 32, %s14
      $region36: #{_lambda_.26} parent=31 // pred_fallthru
        _
    $region32: #{_lambda_.26} parent=5 // pred_fallthru
      _
    %p726 = scmp.le.s32.totalorder 2, %s9
    // Predicated region
    $region37: #{_lambda_.26} parent=5 // pred_check
      %p727 = pneg %p726
    $region38: #{_lambda_.26} parent=5 // pred_check_branch
      %729 = sbr.rel (%p727) target = $region40
    $region39: #{_lambda_.26} parent=5 // pred_region
      %s730 = ssub.s32 %s9, 2
      // Predicated region
      $region41: #{_lambda_.26} parent=39 // pred_check
        %p731 = pneg %p106
      $region42: #{_lambda_.26} parent=39 // pred_check_branch
        %733 = sbr.rel (%p731) target = $region44
      $region43: #{_lambda_.26} parent=39 // pred_region
        %s734 = smul.u32 32, %s15
        %p735 = scmp.lt.s32.totalorder %s734, 63
        %s736 = scalar_select %p735, %s734, 63
        %s737 = smul.addr %s736, 8
        %s738 = scalar_lea.vmem %s3, %s737
      $region44: #{_lambda_.26} parent=39 // pred_fallthru
        _
    $region40: #{_lambda_.26} parent=5 // pred_fallthru
      _
  $region6: #{_lambda_.26} parent=0 // loop_footer
    %s13 = sadd.s32 1, %s9
  $region7: #{_lambda_.26} parent=0 // loop_footer_branch
    %8 = sbr.rel target = $region3
  $region8: #{_lambda_.26} parent=0 // loop_exit
    _

// kernel: _lambda_.27
$region0: #{_lambda_.27}
  #allocation0 [shape = 'u32[]', space=smem, size = 0x4, offset = 0x4, fixed_abs, tag = 'smem constant byte address 0x4 - core index']
  #allocation1 [shape = 'u32[144,128]{1,0:T(1,128)}', space=vmem, size = 0x12000, scoped, tag = 'internal scratch']
  %s0 = inlined_call_operand.vmem [shape: f32[512,27], index: 0, kind: input, shape index: {}]
  %s1 = inlined_call_operand.vmem [shape: f32[27,3], index: 1, kind: input, shape index: {}]
  %s2 = inlined_call_operand.vmem [shape: f32[1,3], index: 2, kind: input, shape index: {}]
  %s3 = inlined_call_operand.vmem [shape: f32[512,3], index: 3, kind: output, shape index: {}]
  %s4 = sld [smem:[#allocation0]]
  $region45: #{_lambda_.27} parent=0
    _
  %s6 = ssub.s32 1, %s4
  %s7 = scalar_select 0, %s6, %s4
  loop: start=0, step=1, limit=4
  $region2: #{_lambda_.27} parent=0 // loop_pre_header
    _
  $region3: #{_lambda_.27} parent=0 // loop_header
    %s9 = sphi 0, %s13
    %p10 = scmp.ge.s32.totalorder %s9, 4
    %s19 = sphi 0, %s21
    %s22 = sphi 0, %s19
    %s23 = sphi 0, %s22
    %s39 = sphi 0, %s23
    %s43 = sphi 0, %s43
    %s45 = sphi 0, %s43
    %s46 = sphi 0, %s45
    %s60 = sphi 0, %s46
    %s64 = sphi 0, %s64
    %s66 = sphi 0, %s64
    %s67 = sphi 0, %s66
    %s81 = sphi 0, %s67
    %s87 = sphi 0, %s89
    %s90 = sphi 0, %s87
    %s91 = sphi 0, %s90
    %s107 = sphi 0, %s91
  $region4: #{_lambda_.27} parent=0 // loop_header_branch
    %12 = sbr.rel (%p10) target = $region8
  $region5: #{_lambda_.27} parent=0 // loop_body
    %s14 = ssub.s32 %s9, 1
    %s15 = ssub.s32 %s9, 2
    %s16 = sadd.s32 %s9, 1
    %s17 = ssub.s32 %s9, %s16
    %p18 = scmp.eq.s32.totalorder %s17, 0
    %s20 = sadd.s32 %s19, 1
    %s21 = scalar_select %p18, %s19, %s20
    %p24 = pneg %p18
    %p25 = scmp.eq.s32.totalorder %s9, 1
    %p26 = por %p24, %p25
    %p27 = scmp.ne.s32.totalorder %s19, %s22
    %p28 = scmp.eq.s32.totalorder %s9, 0
    %p29 = por %p27, %p28
    %p30 = scmp.ne.s32.totalorder %s19, %s22
    %p31 = scmp.eq.s32.totalorder %s14, 1
    %p32 = por %p30, %p31
    %p33 = scmp.ne.s32.totalorder %s22, %s23
    %p34 = scmp.eq.s32.totalorder %s14, 0
    %p35 = por %p33, %p34
    %p36 = scmp.ne.s32.totalorder %s22, %s23
    %p37 = scmp.eq.s32.totalorder %s15, 1
    %p38 = por %p36, %p37
    %p40 = scmp.ne.s32.totalorder %s23, %s39
    %p41 = scmp.eq.s32.totalorder %s15, 0
    %p42 = por %p40, %p41
    %s44 = sadd.s32 %s43, 1
    %p47 = scmp.eq.s32.totalorder %s9, 1
    %p48 = scmp.ne.s32.totalorder %s43, %s45
    %p49 = scmp.eq.s32.totalorder %s9, 0
    %p50 = por %p48, %p49
    %p51 = scmp.ne.s32.totalorder %s43, %s45
    %p52 = scmp.eq.s32.totalorder %s14, 1
    %p53 = por %p51, %p52
    %p54 = scmp.ne.s32.totalorder %s45, %s46
    %p55 = scmp.eq.s32.totalorder %s14, 0
    %p56 = por %p54, %p55
    %p57 = scmp.ne.s32.totalorder %s45, %s46
    %p58 = scmp.eq.s32.totalorder %s15, 1
    %p59 = por %p57, %p58
    %p61 = scmp.ne.s32.totalorder %s46, %s60
    %p62 = scmp.eq.s32.totalorder %s15, 0
    %p63 = por %p61, %p62
    %s65 = sadd.s32 %s64, 1
    %p68 = scmp.eq.s32.totalorder %s9, 1
    %p69 = scmp.ne.s32.totalorder %s64, %s66
    %p70 = scmp.eq.s32.totalorder %s9, 0
    %p71 = por %p69, %p70
    %p72 = scmp.ne.s32.totalorder %s64, %s66
    %p73 = scmp.eq.s32.totalorder %s14, 1
    %p74 = por %p72, %p73
    %p75 = scmp.ne.s32.totalorder %s66, %s67
    %p76 = scmp.eq.s32.totalorder %s14, 0
    %p77 = por %p75, %p76
    %p78 = scmp.ne.s32.totalorder %s66, %s67
    %p79 = scmp.eq.s32.totalorder %s15, 1
    %p80 = por %p78, %p79
    %p82 = scmp.ne.s32.totalorder %s67, %s81
    %p83 = scmp.eq.s32.totalorder %s15, 0
    %p84 = por %p82, %p83
    %s85 = ssub.s32 %s9, %s16
    %p86 = scmp.eq.s32.totalorder %s85, 0
    %s88 = sadd.s32 %s87, 1
    %s89 = scalar_select %p86, %s87, %s88
    %p92 = pneg %p86
    %p93 = scmp.eq.s32.totalorder %s9, 1
    %p94 = por %p92, %p93
    %p95 = scmp.ne.s32.totalorder %s87, %s90
    %p96 = scmp.eq.s32.totalorder %s9, 0
    %p97 = por %p95, %p96
    %p98 = scmp.ne.s32.totalorder %s87, %s90
    %p99 = scmp.eq.s32.totalorder %s14, 1
    %p100 = por %p98, %p99
    %p101 = scmp.ne.s32.totalorder %s90, %s91
    %p102 = scmp.eq.s32.totalorder %s14, 0
    %p103 = por %p101, %p102
    %p104 = scmp.ne.s32.totalorder %s90, %s91
    %p105 = scmp.eq.s32.totalorder %s15, 1
    %p106 = por %p104, %p105
    %p108 = scmp.ne.s32.totalorder %s91, %s107
    %p109 = scmp.eq.s32.totalorder %s15, 0
    %p110 = por %p108, %p109
    %p111 = scmp.le.s32.totalorder 1, %s9
    %p112 = scmp.lt.s32.totalorder %s9, 3
    %p113 = pnand %p111, %p112
    %p114 = pneg %p113
    // Predicated region
    $region9: #{_lambda_.27} parent=5 // pred_check
      _
    $region10: #{_lambda_.27} parent=5 // pred_check_branch
      %116 = sbr.rel (%p113) target = $region12
    $region11: #{_lambda_.27} parent=5 // pred_region
      %s117 = ssub.s32 %s9, 1
      // Predicated region
      $region13: #{_lambda_.27} parent=11 // pred_check
        %p118 = pneg %p56
      $region14: #{_lambda_.27} parent=11 // pred_check_branch
        %120 = sbr.rel (%p118) target = $region16
      $region15: #{_lambda_.27} parent=11 // pred_region
        _
      $region16: #{_lambda_.27} parent=11 // pred_fallthru
        _
      // Predicated region
      $region17: #{_lambda_.27} parent=11 // pred_check
        %p121 = pneg %p77
      $region18: #{_lambda_.27} parent=11 // pred_check_branch
        %123 = sbr.rel (%p121) target = $region20
      $region19: #{_lambda_.27} parent=11 // pred_region
        _
      $region20: #{_lambda_.27} parent=11 // pred_fallthru
        _
    $region12: #{_lambda_.27} parent=5 // pred_fallthru
      _
    %p124 = scmp.lt.s32.totalorder %s9, 2
    // Predicated region
    $region21: #{_lambda_.27} parent=5 // pred_check
      %p125 = pneg %p124
    $region22: #{_lambda_.27} parent=5 // pred_check_branch
      %127 = sbr.rel (%p125) target = $region24
    $region23: #{_lambda_.27} parent=5 // pred_region
      // Predicated region
      $region25: #{_lambda_.27} parent=23 // pred_check
        %p128 = pneg %p29
      $region26: #{_lambda_.27} parent=23 // pred_check_branch
        %130 = sbr.rel (%p128) target = $region28
      $region27: #{_lambda_.27} parent=23 // pred_region
        %s131 = smul.u32 32, %s9
        %p132 = scmp.lt.s32.totalorder %s131, 63
        %s133 = scalar_select %p132, %s131, 63
        %s134 = smul.addr %s133, 8
        %s135 = scalar_lea.vmem %s0, %s134
        %s136 = smul.u32 32, %s9
      $region28: #{_lambda_.27} parent=23 // pred_fallthru
        _
    $region24: #{_lambda_.27} parent=5 // pred_fallthru
      _
    %p137 = scmp.le.s32.totalorder 1, %s9
    %p138 = scmp.lt.s32.totalorder %s9, 3
    %p139 = pnand %p137, %p138
    %p140 = pneg %p139
    // Predicated region
    $region29: #{_lambda_.27} parent=5 // pred_check
      _
    $region30: #{_lambda_.27} parent=5 // pred_check_branch
      %142 = sbr.rel (%p139) target = $region32
    $region31: #{_lambda_.27} parent=5 // pred_region
      %s143 = ssub.s32 %s9, 1
      %s144 = smul.u32 32, %s14
      %p145 = scmp.lt.s32.totalorder %s144, 63
      %s146 = scalar_select %p145, %s144, 63
      %s147 = smul.addr %s146, 8
      %s148 = scalar_lea.vmem %s0, %s147
      %p149 = pneg %p35
      %p150 = pneg %p32
      %p151 = pneg %p56
      %p152 = pneg %p53
      %p153 = pneg %p77
      %p154 = pneg %p74
      %p155 = pneg %p103
      %p156 = pneg %p100
      %s157 = smul.u32 32, %s14
      %p158 = scmp.lt.s32.totalorder %s157, 63
      %s159 = scalar_select %p158, %s157, 63
      %s160 = smul.addr %s159, 8
      %s161 = scalar_lea.vmem %s3, %s160
      %s162 = smul.u32 32, %s14
      %p163 = scmp.lt.s32.totalorder %s162, 63
      %s164 = scalar_select %p163, %s162, 63
      %s165 = smul.addr %s164, 8
      %s166 = scalar_lea.vmem %s0, %s165
      %s167 = smul.u32 32, %s14
      %s168 = smul.u32 32, %s14
      %p169 = scmp.lt.s32.totalorder %s168, 63
      %s170 = scalar_select %p169, %s168, 63
      %s171 = smul.addr %s170, 8
      %s172 = scalar_lea.vmem %s3, %s171
      %s173 = smul.u32 32, %s14
      %v174 = vld [vmem:[%s166] sm:$0xff]
      %v175 = vld [vmem:[%s166 + $0x8] sm:$0xff]
      %v176 = vld [vmem:[%s166 + $0x10] sm:$0xff]
      %v177 = vld [vmem:[%s166 + $0x18] sm:$0xff]
      %v178 = vld [vmem:[%s166 + $0x20] sm:$0xff]
      %v179 = vld [vmem:[%s166 + $0x28] sm:$0xff]
      %v180 = vld [vmem:[%s166 + $0x30] sm:$0xff]
      %v181 = vld [vmem:[%s166 + $0x38] sm:$0xff]
      %v182 = vld [vmem:[%s166 + $0x40] sm:$0xff]
      %v183 = vld [vmem:[%s166 + $0x48] sm:$0xff]
      %v184 = vld [vmem:[%s166 + $0x50] sm:$0xff]
      %v185 = vld [vmem:[%s166 + $0x58] sm:$0xff]
      %v186 = vld [vmem:[%s166 + $0x60] sm:$0xff]
      %v187 = vld [vmem:[%s166 + $0x68] sm:$0xff]
      %v188 = vld [vmem:[%s166 + $0x70] sm:$0xff]
      %v189 = vld [vmem:[%s166 + $0x78] sm:$0xff]
      %v190 = vld [vmem:[%s166 + $0x80] sm:$0xff]
      %v191 = vld [vmem:[%s166 + $0x88] sm:$0xff]
      %v192 = vld [vmem:[%s166 + $0x90] sm:$0xff]
      %v193 = vld [vmem:[%s166 + $0x98] sm:$0xff]
      %v194 = vld [vmem:[%s166 + $0xa0] sm:$0xff]
      %v195 = vld [vmem:[%s166 + $0xa8] sm:$0xff]
      %v196 = vld [vmem:[%s166 + $0xb0] sm:$0xff]
      %v197 = vld [vmem:[%s166 + $0xb8] sm:$0xff]
      %v198 = vld [vmem:[%s166 + $0xc0] sm:$0xff]
      %v199 = vld [vmem:[%s166 + $0xc8] sm:$0xff]
      %v200 = vld [vmem:[%s166 + $0xd0] sm:$0xff]
      %v201 = vld [vmem:[%s166 + $0xd8] sm:$0xff]
      %v202 = vld [vmem:[%s166 + $0xe0] sm:$0xff]
      %v203 = vld [vmem:[%s166 + $0xe8] sm:$0xff]
      %v204 = vld [vmem:[%s166 + $0xf0] sm:$0xff]
      %v205 = vld [vmem:[%s166 + $0xf8] sm:$0xff]
      %v206 = vld [vmem:[%s1] sm:$0xff]
      %v207 = vld [vmem:[%s1 + $0x8] sm:$0xff]
      %v208 = vld [vmem:[%s1 + $0x10] sm:$0xff]
      %v209 = vld [vmem:[%s1 + $0x18] sm:$0x7]
      %v210 = vld [vmem:[%s2] sm:$0x1]
      %v212 = vlaneseq
      %v213 = vshrl.u32 %v212, 7
      %v214 = vsub.s32 0, %v213
      %v215 = vrot.slane %v210, %v214
      %vm217 = vcmask 220160
      %v219 = vsel %vm217, %v174, 0
      %v222 = vsel %vm217, %v175, 0
      %v225 = vsel %vm217, %v176, 0
      %v228 = vsel %vm217, %v177, 0
      %v231 = vsel %vm217, %v178, 0
      %v234 = vsel %vm217, %v179, 0
      %v237 = vsel %vm217, %v180, 0
      %v240 = vsel %vm217, %v181, 0
      %v243 = vsel %vm217, %v182, 0
      %v246 = vsel %vm217, %v183, 0
      %v249 = vsel %vm217, %v184, 0
      %v252 = vsel %vm217, %v185, 0
      %v255 = vsel %vm217, %v186, 0
      %v258 = vsel %vm217, %v187, 0
      %v261 = vsel %vm217, %v188, 0
      %v264 = vsel %vm217, %v189, 0
      %v267 = vsel %vm217, %v190, 0
      %v270 = vsel %vm217, %v191, 0
      %v273 = vsel %vm217, %v192, 0
      %v276 = vsel %vm217, %v193, 0
      %v279 = vsel %vm217, %v194, 0
      %v282 = vsel %vm217, %v195, 0
      %v285 = vsel %vm217, %v196, 0
      %v288 = vsel %vm217, %v197, 0
      %v291 = vsel %vm217, %v198, 0
      %v294 = vsel %vm217, %v199, 0
      %v297 = vsel %vm217, %v200, 0
      %v300 = vsel %vm217, %v201, 0
      %v303 = vsel %vm217, %v202, 0
      %v306 = vsel %vm217, %v203, 0
      %v309 = vsel %vm217, %v204, 0
      %v312 = vsel %vm217, %v205, 0
      %vm314 = vcmask 1042432
      %v316 = vsel %vm314, %v209, 0
      %318 = vmatprep.subr.mxu0 0.0
      %319 = vmatpush1.msra.mxu0 0.0
      %320 = vmatprep.subr.mxu0 0.0
      %321 = vmatpush1.msra.mxu0 0.0
      %322 = vmatprep.subr.mxu0 0.0
      %323 = vmatpush1.msra.mxu0 0.0
      %324 = vmatprep.subr.mxu0 0.0
      %325 = vmatpush1.msra.mxu0 0.0
      %326 = vmatprep.subr.mxu0 0.0
      %327 = vmatpush1.msra.mxu0 0.0
      %328 = vmatprep.subr.mxu0 0.0
      %329 = vmatpush1.msra.mxu0 0.0
      %330 = vmatprep.subr.mxu0 0.0
      %331 = vmatpush1.msra.mxu0 0.0
      %332 = vmatprep.subr.mxu0 0.0
      %333 = vmatpush1.msra.mxu0 0.0
      %334 = vmatprep.subr.mxu0 0.0
      %335 = vmatpush1.msra.mxu0 0.0
      %336 = vmatprep.subr.mxu0 0.0
      %337 = vmatpush1.msra.mxu0 0.0
      %338 = vmatprep.subr.mxu0 0.0
      %339 = vmatpush1.msra.mxu0 0.0
      %340 = vmatprep.subr.mxu0 0.0
      %341 = vmatpush1.msra.mxu0 0.0
      %342 = vmatprep.subr.mxu0 0.0
      %343 = vmatpush1.msra.mxu0 %v316
      %344 = vmatprep.subr.mxu0 0.0
      %345 = vmatpush1.msra.mxu0 %v208
      %346 = vmatprep.subr.mxu0 0.0
      %347 = vmatpush1.msra.mxu0 %v207
      %348 = vmatprep.subr.mxu0 0.0
      %349 = vmatpush1.msra.mxu0 %v206
      %350 = vmatprep.subr.mxu0 0.0
      %351 = vmatpush2.msra.mxu0 0.0
      %352 = vmatprep.subr.mxu0 0.0
      %353 = vmatpush2.msra.mxu0 0.0
      %354 = vmatprep.subr.mxu0 0.0
      %355 = vmatpush2.msra.mxu0 0.0
      %356 = vmatprep.subr.mxu0 0.0
      %357 = vmatpush2.msra.mxu0 0.0
      %358 = vmatprep.subr.mxu0 0.0
      %359 = vmatpush2.msra.mxu0 0.0
      %360 = vmatprep.subr.mxu0 0.0
      %361 = vmatpush2.msra.mxu0 0.0
      %362 = vmatprep.subr.mxu0 0.0
      %363 = vmatpush2.msra.mxu0 0.0
      %364 = vmatprep.subr.mxu0 0.0
      %365 = vmatpush2.msra.mxu0 0.0
      %366 = vmatprep.subr.mxu0 0.0
      %367 = vmatpush2.msra.mxu0 0.0
      %368 = vmatprep.subr.mxu0 0.0
      %369 = vmatpush2.msra.mxu0 0.0
      %370 = vmatprep.subr.mxu0 0.0
      %371 = vmatpush2.msra.mxu0 0.0
      %372 = vmatprep.subr.mxu0 0.0
      %373 = vmatpush2.msra.mxu0 0.0
      %374 = vmatprep.subr.mxu0 0.0
      %375 = vmatpush2.msra.mxu0 0.0
      %376 = vmatprep.subr.mxu0 0.0
      %377 = vmatpush2.msra.mxu0 0.0
      %378 = vmatprep.subr.mxu0 0.0
      %379 = vmatpush2.msra.mxu0 0.0
      %380 = vmatprep.subr.mxu0 0.0
      %381 = vmatpush2.msra.mxu0 0.0
      %382 = vmatprep.mubr.f32.mxu0 0.0
      %383 = vmatmul.mubr.f32.gmra.mxu0 %v219
      %v384 = vpop.f32.mrf.mxu0
      %v385 = vadd.f32 %v215, %v384
      %v386 = vpop.f32.mrf.mxu0
      %387 = vmatprep.mubr.f32.mxu0 0.0
      %388 = vmatmul.mubr.f32.gmra.mxu0 %v222
      %v389 = vpop.f32.mrf.mxu0
      %v390 = vadd.f32 %v215, %v389
      %v391 = vpop.f32.mrf.mxu0
      %392 = vmatprep.mubr.f32.mxu0 0.0
      %393 = vmatmul.mubr.f32.gmra.mxu0 %v225
      %v394 = vpop.f32.mrf.mxu0
      %v395 = vadd.f32 %v215, %v394
      %v396 = vpop.f32.mrf.mxu0
      %397 = vmatprep.mubr.f32.mxu0 0.0
      %398 = vmatmul.mubr.f32.gmra.mxu0 %v228
      %v399 = vpop.f32.mrf.mxu0
      %v400 = vadd.f32 %v215, %v399
      %v401 = vpop.f32.mrf.mxu0
      %402 = vmatprep.mubr.f32.mxu0 0.0
      %403 = vmatmul.mubr.f32.gmra.mxu0 %v231
      %v404 = vpop.f32.mrf.mxu0
      %v405 = vadd.f32 %v215, %v404
      %v406 = vpop.f32.mrf.mxu0
      %407 = vmatprep.mubr.f32.mxu0 0.0
      %408 = vmatmul.mubr.f32.gmra.mxu0 %v234
      %v409 = vpop.f32.mrf.mxu0
      %v410 = vadd.f32 %v215, %v409
      %v411 = vpop.f32.mrf.mxu0
      %412 = vmatprep.mubr.f32.mxu0 0.0
      %413 = vmatmul.mubr.f32.gmra.mxu0 %v237
      %v414 = vpop.f32.mrf.mxu0
      %v415 = vadd.f32 %v215, %v414
      %v416 = vpop.f32.mrf.mxu0
      %417 = vmatprep.mubr.f32.mxu0 0.0
      %418 = vmatmul.mubr.f32.gmra.mxu0 %v240
      %v419 = vpop.f32.mrf.mxu0
      %v420 = vadd.f32 %v215, %v419
      %v421 = vpop.f32.mrf.mxu0
      %422 = vmatprep.mubr.f32.mxu0 0.0
      %423 = vmatmul.mubr.f32.gmra.mxu0 %v243
      %v424 = vpop.f32.mrf.mxu0
      %v425 = vadd.f32 %v215, %v424
      %v426 = vpop.f32.mrf.mxu0
      %427 = vmatprep.mubr.f32.mxu0 0.0
      %428 = vmatmul.mubr.f32.gmra.mxu0 %v246
      %v429 = vpop.f32.mrf.mxu0
      %v430 = vadd.f32 %v215, %v429
      %v431 = vpop.f32.mrf.mxu0
      %432 = vmatprep.mubr.f32.mxu0 0.0
      %433 = vmatmul.mubr.f32.gmra.mxu0 %v249
      %v434 = vpop.f32.mrf.mxu0
      %v435 = vadd.f32 %v215, %v434
      %v436 = vpop.f32.mrf.mxu0
      %437 = vmatprep.mubr.f32.mxu0 0.0
      %438 = vmatmul.mubr.f32.gmra.mxu0 %v252
      %v439 = vpop.f32.mrf.mxu0
      %v440 = vadd.f32 %v215, %v439
      %v441 = vpop.f32.mrf.mxu0
      %442 = vmatprep.mubr.f32.mxu0 0.0
      %443 = vmatmul.mubr.f32.gmra.mxu0 %v255
      %v444 = vpop.f32.mrf.mxu0
      %v445 = vadd.f32 %v215, %v444
      %v446 = vpop.f32.mrf.mxu0
      %447 = vmatprep.mubr.f32.mxu0 0.0
      %448 = vmatmul.mubr.f32.gmra.mxu0 %v258
      %v449 = vpop.f32.mrf.mxu0
      %v450 = vadd.f32 %v215, %v449
      %v451 = vpop.f32.mrf.mxu0
      %452 = vmatprep.mubr.f32.mxu0 0.0
      %453 = vmatmul.mubr.f32.gmra.mxu0 %v261
      %v454 = vpop.f32.mrf.mxu0
      %v455 = vadd.f32 %v215, %v454
      %v456 = vpop.f32.mrf.mxu0
      %457 = vmatprep.mubr.f32.mxu0 0.0
      %458 = vmatmul.mubr.f32.gmra.mxu0 %v264
      %v459 = vpop.f32.mrf.mxu0
      %v460 = vadd.f32 %v215, %v459
      %v461 = vpop.f32.mrf.mxu0
      %462 = vmatprep.mubr.f32.mxu0 0.0
      %463 = vmatmul.mubr.f32.gmra.mxu0 %v267
      %v464 = vpop.f32.mrf.mxu0
      %v465 = vadd.f32 %v215, %v464
      %v466 = vpop.f32.mrf.mxu0
      %467 = vmatprep.mubr.f32.mxu0 0.0
      %468 = vmatmul.mubr.f32.gmra.mxu0 %v270
      %v469 = vpop.f32.mrf.mxu0
      %v470 = vadd.f32 %v215, %v469
      %v471 = vpop.f32.mrf.mxu0
      %472 = vmatprep.mubr.f32.mxu0 0.0
      %473 = vmatmul.mubr.f32.gmra.mxu0 %v273
      %v474 = vpop.f32.mrf.mxu0
      %v475 = vadd.f32 %v215, %v474
      %v476 = vpop.f32.mrf.mxu0
      %477 = vmatprep.mubr.f32.mxu0 0.0
      %478 = vmatmul.mubr.f32.gmra.mxu0 %v276
      %v479 = vpop.f32.mrf.mxu0
      %v480 = vadd.f32 %v215, %v479
      %v481 = vpop.f32.mrf.mxu0
      %482 = vmatprep.mubr.f32.mxu0 0.0
      %483 = vmatmul.mubr.f32.gmra.mxu0 %v279
      %v484 = vpop.f32.mrf.mxu0
      %v485 = vadd.f32 %v215, %v484
      %v486 = vpop.f32.mrf.mxu0
      %487 = vmatprep.mubr.f32.mxu0 0.0
      %488 = vmatmul.mubr.f32.gmra.mxu0 %v282
      %v489 = vpop.f32.mrf.mxu0
      %v490 = vadd.f32 %v215, %v489
      %v491 = vpop.f32.mrf.mxu0
      %492 = vmatprep.mubr.f32.mxu0 0.0
      %493 = vmatmul.mubr.f32.gmra.mxu0 %v285
      %v494 = vpop.f32.mrf.mxu0
      %v495 = vadd.f32 %v215, %v494
      %v496 = vpop.f32.mrf.mxu0
      %497 = vmatprep.mubr.f32.mxu0 0.0
      %498 = vmatmul.mubr.f32.gmra.mxu0 %v288
      %v499 = vpop.f32.mrf.mxu0
      %v500 = vadd.f32 %v215, %v499
      %v501 = vpop.f32.mrf.mxu0
      %502 = vmatprep.mubr.f32.mxu0 0.0
      %503 = vmatmul.mubr.f32.gmra.mxu0 %v291
      %v504 = vpop.f32.mrf.mxu0
      %v505 = vadd.f32 %v215, %v504
      %v506 = vpop.f32.mrf.mxu0
      %507 = vmatprep.mubr.f32.mxu0 0.0
      %508 = vmatmul.mubr.f32.gmra.mxu0 %v294
      %v509 = vpop.f32.mrf.mxu0
      %v510 = vadd.f32 %v215, %v509
      %v511 = vpop.f32.mrf.mxu0
      %512 = vmatprep.mubr.f32.mxu0 0.0
      %513 = vmatmul.mubr.f32.gmra.mxu0 %v297
      %v514 = vpop.f32.mrf.mxu0
      %v515 = vadd.f32 %v215, %v514
      %v516 = vpop.f32.mrf.mxu0
      %517 = vmatprep.mubr.f32.mxu0 0.0
      %518 = vmatmul.mubr.f32.gmra.mxu0 %v300
      %v519 = vpop.f32.mrf.mxu0
      %v520 = vadd.f32 %v215, %v519
      %v521 = vpop.f32.mrf.mxu0
      %522 = vmatprep.mubr.f32.mxu0 0.0
      %523 = vmatmul.mubr.f32.gmra.mxu0 %v303
      %v524 = vpop.f32.mrf.mxu0
      %v525 = vadd.f32 %v215, %v524
      %v526 = vpop.f32.mrf.mxu0
      %527 = vmatprep.mubr.f32.mxu0 0.0
      %528 = vmatmul.mubr.f32.gmra.mxu0 %v306
      %v529 = vpop.f32.mrf.mxu0
      %v530 = vadd.f32 %v215, %v529
      %v531 = vpop.f32.mrf.mxu0
      %532 = vmatprep.mubr.f32.mxu0 0.0
      %533 = vmatmul.mubr.f32.gmra.mxu0 %v309
      %v534 = vpop.f32.mrf.mxu0
      %v535 = vadd.f32 %v215, %v534
      %v536 = vpop.f32.mrf.mxu0
      %537 = vmatprep.mubr.f32.mxu0 0.0
      %538 = vmatmul.mubr.f32.gmra.mxu0 %v312
      %v539 = vpop.f32.mrf.mxu0
      %v540 = vadd.f32 %v215, %v539
      %v541 = vpop.f32.mrf.mxu0
      %542 = vdwg.mxu0
      %vm543 = vcmp.gt.f32.partialorder %v385, 0.0
      %vm544 = vcmp.gt.f32.partialorder %v390, 0.0
      %vm545 = vcmp.gt.f32.partialorder %v395, 0.0
      %vm546 = vcmp.gt.f32.partialorder %v400, 0.0
      %vm547 = vcmp.gt.f32.partialorder %v405, 0.0
      %vm548 = vcmp.gt.f32.partialorder %v410, 0.0
      %vm549 = vcmp.gt.f32.partialorder %v415, 0.0
      %vm550 = vcmp.gt.f32.partialorder %v420, 0.0
      %vm551 = vcmp.gt.f32.partialorder %v425, 0.0
      %vm552 = vcmp.gt.f32.partialorder %v430, 0.0
      %vm553 = vcmp.gt.f32.partialorder %v435, 0.0
      %vm554 = vcmp.gt.f32.partialorder %v440, 0.0
      %vm555 = vcmp.gt.f32.partialorder %v445, 0.0
      %vm556 = vcmp.gt.f32.partialorder %v450, 0.0
      %vm557 = vcmp.gt.f32.partialorder %v455, 0.0
      %vm558 = vcmp.gt.f32.partialorder %v460, 0.0
      %vm559 = vcmp.gt.f32.partialorder %v465, 0.0
      %vm560 = vcmp.gt.f32.partialorder %v470, 0.0
      %vm561 = vcmp.gt.f32.partialorder %v475, 0.0
      %vm562 = vcmp.gt.f32.partialorder %v480, 0.0
      %vm563 = vcmp.gt.f32.partialorder %v485, 0.0
      %vm564 = vcmp.gt.f32.partialorder %v490, 0.0
      %vm565 = vcmp.gt.f32.partialorder %v495, 0.0
      %vm566 = vcmp.gt.f32.partialorder %v500, 0.0
      %vm567 = vcmp.gt.f32.partialorder %v505, 0.0
      %vm568 = vcmp.gt.f32.partialorder %v510, 0.0
      %vm569 = vcmp.gt.f32.partialorder %v515, 0.0
      %vm570 = vcmp.gt.f32.partialorder %v520, 0.0
      %vm571 = vcmp.gt.f32.partialorder %v525, 0.0
      %vm572 = vcmp.gt.f32.partialorder %v530, 0.0
      %vm573 = vcmp.gt.f32.partialorder %v535, 0.0
      %vm574 = vcmp.gt.f32.partialorder %v540, 0.0
      %v575 = vmul.f32 %v385, 0.01
      %v576 = vmul.f32 %v390, 0.01
      %v577 = vmul.f32 %v395, 0.01
      %v578 = vmul.f32 %v400, 0.01
      %v579 = vmul.f32 %v405, 0.01
      %v580 = vmul.f32 %v410, 0.01
      %v581 = vmul.f32 %v415, 0.01
      %v582 = vmul.f32 %v420, 0.01
      %v583 = vmul.f32 %v425, 0.01
      %v584 = vmul.f32 %v430, 0.01
      %v585 = vmul.f32 %v435, 0.01
      %v586 = vmul.f32 %v440, 0.01
      %v587 = vmul.f32 %v445, 0.01
      %v588 = vmul.f32 %v450, 0.01
      %v589 = vmul.f32 %v455, 0.01
      %v590 = vmul.f32 %v460, 0.01
      %v591 = vmul.f32 %v465, 0.01
      %v592 = vmul.f32 %v470, 0.01
      %v593 = vmul.f32 %v475, 0.01
      %v594 = vmul.f32 %v480, 0.01
      %v595 = vmul.f32 %v485, 0.01
      %v596 = vmul.f32 %v490, 0.01
      %v597 = vmul.f32 %v495, 0.01
      %v598 = vmul.f32 %v500, 0.01
      %v599 = vmul.f32 %v505, 0.01
      %v600 = vmul.f32 %v510, 0.01
      %v601 = vmul.f32 %v515, 0.01
      %v602 = vmul.f32 %v520, 0.01
      %v603 = vmul.f32 %v525, 0.01
      %v604 = vmul.f32 %v530, 0.01
      %v605 = vmul.f32 %v535, 0.01
      %v606 = vmul.f32 %v540, 0.01
      %v607 = vsel %vm543, %v385, %v575
      %v608 = vsel %vm544, %v390, %v576
      %v609 = vsel %vm545, %v395, %v577
      %v610 = vsel %vm546, %v400, %v578
      %v611 = vsel %vm547, %v405, %v579
      %v612 = vsel %vm548, %v410, %v580
      %v613 = vsel %vm549, %v415, %v581
      %v614 = vsel %vm550, %v420, %v582
      %v615 = vsel %vm551, %v425, %v583
      %v616 = vsel %vm552, %v430, %v584
      %v617 = vsel %vm553, %v435, %v585
      %v618 = vsel %vm554, %v440, %v586
      %v619 = vsel %vm555, %v445, %v587
      %v620 = vsel %vm556, %v450, %v588
      %v621 = vsel %vm557, %v455, %v589
      %v622 = vsel %vm558, %v460, %v590
      %v623 = vsel %vm559, %v465, %v591
      %v624 = vsel %vm560, %v470, %v592
      %v625 = vsel %vm561, %v475, %v593
      %v626 = vsel %vm562, %v480, %v594
      %v627 = vsel %vm563, %v485, %v595
      %v628 = vsel %vm564, %v490, %v596
      %v629 = vsel %vm565, %v495, %v597
      %v630 = vsel %vm566, %v500, %v598
      %v631 = vsel %vm567, %v505, %v599
      %v632 = vsel %vm568, %v510, %v600
      %v633 = vsel %vm569, %v515, %v601
      %v634 = vsel %vm570, %v520, %v602
      %v635 = vsel %vm571, %v525, %v603
      %v636 = vsel %vm572, %v530, %v604
      %v637 = vsel %vm573, %v535, %v605
      %v638 = vsel %vm574, %v540, %v606
      %v639 = vtanh.pop %v607
      %v640 = vtanh.pop %v608
      %v641 = vtanh.pop %v609
      %v642 = vtanh.pop %v610
      %v643 = vtanh.pop %v611
      %v644 = vtanh.pop %v612
      %v645 = vtanh.pop %v613
      %v646 = vtanh.pop %v614
      %v647 = vtanh.pop %v615
      %v648 = vtanh.pop %v616
      %v649 = vtanh.pop %v617
      %v650 = vtanh.pop %v618
      %v651 = vtanh.pop %v619
      %v652 = vtanh.pop %v620
      %v653 = vtanh.pop %v621
      %v654 = vtanh.pop %v622
      %v655 = vtanh.pop %v623
      %v656 = vtanh.pop %v624
      %v657 = vtanh.pop %v625
      %v658 = vtanh.pop %v626
      %v659 = vtanh.pop %v627
      %v660 = vtanh.pop %v628
      %v661 = vtanh.pop %v629
      %v662 = vtanh.pop %v630
      %v663 = vtanh.pop %v631
      %v664 = vtanh.pop %v632
      %v665 = vtanh.pop %v633
      %v666 = vtanh.pop %v634
      %v667 = vtanh.pop %v635
      %v668 = vtanh.pop %v636
      %v669 = vtanh.pop %v637
      %v670 = vtanh.pop %v638
      %vm671 = vcmask 23552
      %672 = vst.msk [vmem:[%s172] sm:$0xff] %vm671, %v639
      %673 = vst.msk [vmem:[%s172 + $0x8] sm:$0xff] %vm671, %v640
      %674 = vst.msk [vmem:[%s172 + $0x10] sm:$0xff] %vm671, %v641
      %675 = vst.msk [vmem:[%s172 + $0x18] sm:$0xff] %vm671, %v642
      %676 = vst.msk [vmem:[%s172 + $0x20] sm:$0xff] %vm671, %v643
      %677 = vst.msk [vmem:[%s172 + $0x28] sm:$0xff] %vm671, %v644
      %678 = vst.msk [vmem:[%s172 + $0x30] sm:$0xff] %vm671, %v645
      %679 = vst.msk [vmem:[%s172 + $0x38] sm:$0xff] %vm671, %v646
      %680 = vst.msk [vmem:[%s172 + $0x40] sm:$0xff] %vm671, %v647
      %681 = vst.msk [vmem:[%s172 + $0x48] sm:$0xff] %vm671, %v648
      %682 = vst.msk [vmem:[%s172 + $0x50] sm:$0xff] %vm671, %v649
      %683 = vst.msk [vmem:[%s172 + $0x58] sm:$0xff] %vm671, %v650
      %684 = vst.msk [vmem:[%s172 + $0x60] sm:$0xff] %vm671, %v651
      %685 = vst.msk [vmem:[%s172 + $0x68] sm:$0xff] %vm671, %v652
      %686 = vst.msk [vmem:[%s172 + $0x70] sm:$0xff] %vm671, %v653
      %687 = vst.msk [vmem:[%s172 + $0x78] sm:$0xff] %vm671, %v654
      %688 = vst.msk [vmem:[%s172 + $0x80] sm:$0xff] %vm671, %v655
      %689 = vst.msk [vmem:[%s172 + $0x88] sm:$0xff] %vm671, %v656
      %690 = vst.msk [vmem:[%s172 + $0x90] sm:$0xff] %vm671, %v657
      %691 = vst.msk [vmem:[%s172 + $0x98] sm:$0xff] %vm671, %v658
      %692 = vst.msk [vmem:[%s172 + $0xa0] sm:$0xff] %vm671, %v659
      %693 = vst.msk [vmem:[%s172 + $0xa8] sm:$0xff] %vm671, %v660
      %694 = vst.msk [vmem:[%s172 + $0xb0] sm:$0xff] %vm671, %v661
      %695 = vst.msk [vmem:[%s172 + $0xb8] sm:$0xff] %vm671, %v662
      %696 = vst.msk [vmem:[%s172 + $0xc0] sm:$0xff] %vm671, %v663
      %697 = vst.msk [vmem:[%s172 + $0xc8] sm:$0xff] %vm671, %v664
      %698 = vst.msk [vmem:[%s172 + $0xd0] sm:$0xff] %vm671, %v665
      %699 = vst.msk [vmem:[%s172 + $0xd8] sm:$0xff] %vm671, %v666
      %700 = vst.msk [vmem:[%s172 + $0xe0] sm:$0xff] %vm671, %v667
      %701 = vst.msk [vmem:[%s172 + $0xe8] sm:$0xff] %vm671, %v668
      %702 = vst.msk [vmem:[%s172 + $0xf0] sm:$0xff] %vm671, %v669
      %703 = vst.msk [vmem:[%s172 + $0xf8] sm:$0xff] %vm671, %v670
      %s704 = smul.u32 32, %s14
      %p705 = scmp.lt.s32.totalorder %s704, 63
      %s706 = scalar_select %p705, %s704, 63
      %s707 = smul.addr %s706, 8
      %s708 = scalar_lea.vmem %s3, %s707
      // Predicated region
      $region33: #{_lambda_.27} parent=31 // pred_check
        %p709 = pneg %p100
      $region34: #{_lambda_.27} parent=31 // pred_check_branch
        %711 = sbr.rel (%p709) target = $region36
      $region35: #{_lambda_.27} parent=31 // pred_region
        %s712 = smul.u32 32, %s14
      $region36: #{_lambda_.27} parent=31 // pred_fallthru
        _
    $region32: #{_lambda_.27} parent=5 // pred_fallthru
      _
    %p713 = scmp.le.s32.totalorder 2, %s9
    // Predicated region
    $region37: #{_lambda_.27} parent=5 // pred_check
      %p714 = pneg %p713
    $region38: #{_lambda_.27} parent=5 // pred_check_branch
      %716 = sbr.rel (%p714) target = $region40
    $region39: #{_lambda_.27} parent=5 // pred_region
      %s717 = ssub.s32 %s9, 2
      // Predicated region
      $region41: #{_lambda_.27} parent=39 // pred_check
        %p718 = pneg %p106
      $region42: #{_lambda_.27} parent=39 // pred_check_branch
        %720 = sbr.rel (%p718) target = $region44
      $region43: #{_lambda_.27} parent=39 // pred_region
        %s721 = smul.u32 32, %s15
        %p722 = scmp.lt.s32.totalorder %s721, 63
        %s723 = scalar_select %p722, %s721, 63
        %s724 = smul.addr %s723, 8
        %s725 = scalar_lea.vmem %s3, %s724
      $region44: #{_lambda_.27} parent=39 // pred_fallthru
        _
    $region40: #{_lambda_.27} parent=5 // pred_fallthru
      _
  $region6: #{_lambda_.27} parent=0 // loop_footer
    %s13 = sadd.s32 1, %s9
  $region7: #{_lambda_.27} parent=0 // loop_footer_branch
    %8 = sbr.rel target = $region3
  $region8: #{_lambda_.27} parent=0 // loop_exit
    _

</llo_original>
